<compile_context>
chip_gen: v5e
topology: v5e:2x2
jax: 0.10.0
libtpu: 0.0.40
codegen_flags: <defaults>
</compile_context>

<pallas_src>
import functools
import math

import jax
import jax.numpy as jnp
import numpy as np
from jax import lax
from jax.experimental import pallas as pl
from jax.experimental.pallas import tpu as pltpu


def kernel_size(in_channel):
    k = int((math.log2(in_channel) + 1) // 2)
    return k + 1 if k % 2 == 0 else k


# ----------------------------------------------------------------------------
# Small layout helpers (built only from slices + concatenates, which are known
# to lower cleanly in Mosaic; avoids relying on general lane<->sublane reshape).
# ----------------------------------------------------------------------------
def _rows_from_flat(flat, H, W):
    """(1, H*W) -> (H, W) via static lane slices + sublane concat."""
    return jnp.concatenate([flat[:, y * W:(y + 1) * W] for y in range(H)], axis=0)


def _flat_from_rows(plane, H, W):
    """(H, W) -> (1, H*W) via static sublane slices + lane concat."""
    return jnp.concatenate([plane[y:y + 1, :] for y in range(H)], axis=1)


# ----------------------------------------------------------------------------
# Pallas kernel: one (Bt, C, H*W) block per grid step.
# ----------------------------------------------------------------------------
def tfam_kernel(t1_ref, t2_ref, wc_ref, ws_ref, bias_ref, out_ref, sp_scr,
                *, Bt, C, H, W, K1):
    f32 = jnp.float32
    HW = H * W
    pad_c = K1 // 2

    # Hoist all SMEM scalar reads once (sreg reuse across the unrolled loops
    # and across the Bt batch elements).
    wcd = [wc_ref[t] for t in range(4 * K1)]     # diff conv1d weights (wc1 - wc2)
    wsd = [ws_ref[t] for t in range(4 * 49)]     # diff conv2d weights (ws1 - ws2)
    bcd = bias_ref[0]                            # bc1 - bc2
    bsd = bias_ref[1]                            # bs1 - bs2

    # Zero the padded spatial-conv scratch once per grid step.  Only its
    # interior rows (3:3+H) are rewritten per batch element; the zero halo
    # stays valid across the Bt loop.
    sp_scr[...] = jnp.zeros(sp_scr.shape, f32)

    for bi in range(Bt):
        t1 = t1_ref[bi].astype(f32)              # (C, H*W), lane-dense
        t2 = t2_ref[bi].astype(f32)

        # ---------------- channel attention (difference branch) ------------
        pooled = jnp.stack(
            [jnp.mean(t1, axis=1), jnp.max(t1, axis=1),
             jnp.mean(t2, axis=1), jnp.max(t2, axis=1)], axis=0)   # (4, C)
        if pad_c > 0:
            zc = jnp.zeros((4, pad_c), f32)
            pooled_p = jnp.concatenate([zc, pooled, zc], axis=1)   # (4, C+2*pad)
        else:
            pooled_p = pooled

        dca = jnp.full((C,), bcd, f32)
        for i in range(4):
            for j in range(K1):
                dca = dca + wcd[i * K1 + j] * pooled_p[i, j:j + C]
        # softmax over the 2-stack (dim=0) == sigmoid of the difference
        cw1 = 1.0 / (1.0 + jnp.exp(-dca))                          # (C,)

        # ---------------- spatial attention (difference branch) ------------
        # Cross-channel pools computed lane-dense, then laid out as (H, W)
        # planes for the 7x7 conv.
        planes = [
            _rows_from_flat(jnp.mean(t1, axis=0, keepdims=True), H, W),
            _rows_from_flat(jnp.max(t1, axis=0, keepdims=True), H, W),
            _rows_from_flat(jnp.mean(t2, axis=0, keepdims=True), H, W),
            _rows_from_flat(jnp.max(t2, axis=0, keepdims=True), H, W),
        ]

        # dx (lane) shifts are applied once per plane into the VMEM scratch;
        # the dy offsets below are then cheap sublane-offset loads.
        zlr = jnp.zeros((H, 3), f32)
        for i in range(4):
            hp = jnp.concatenate([zlr, planes[i], zlr], axis=1)    # (H, W+6)
            for dx in range(7):
                sp_scr[i, dx, 3:3 + H, :] = hp[:, dx:dx + W]

        dsa = jnp.full((H, W), bsd, f32)
        for i in range(4):
            for dy in range(7):
                base = i * 49 + dy * 7
                for dx in range(7):
                    dsa = dsa + wsd[base + dx] * sp_scr[i, dx, dy:dy + H, :]
        sw1 = 1.0 / (1.0 + jnp.exp(-dsa))                          # (H, W)
        sw1_flat = _flat_from_rows(sw1, H, W)                      # (1, H*W)

        # ---------------- fuse ----------------
        # a1 = cw1 + sw1 + 1 ; a2 = 4 - a1  =>  out = a1*(t1 - t2) + 4*t2
        a1 = cw1.reshape(C, 1) + sw1_flat + 1.0                    # (C, H*W)
        out_ref[bi] = (a1 * (t1 - t2) + 4.0 * t2).astype(out_ref.dtype)


# ----------------------------------------------------------------------------
# Wrapper
# ----------------------------------------------------------------------------
def _pick_batch_tile(B, C, HW, itemsize):
    # Target ~1 MiB per input block, keep >=2 grid steps when B >= 2 (so the
    # "parallel" batch axis can use both v7x TensorCores), and cap the static
    # in-kernel unroll.
    per = max(1, C * HW * itemsize)
    bt = max(1, min(B, (1 << 20) // per))
    if B >= 2:
        bt = max(1, min(bt, B // 2))
    bt = min(bt, 8)
    while B % bt:
        bt -= 1
    return bt


def tfam_pallas(t1, t2, params):
    B, C, H, W = t1.shape
    K1 = params["K1"]
    HW = H * W

    # Lane-dense layout for the heavy slabs.
    t1f = t1.reshape(B, C, HW)
    t2f = t2.reshape(B, C, HW)

    Bt = _pick_batch_tile(B, C, HW, t1.dtype.itemsize)
    grid = (B // Bt,)

    kernel = functools.partial(tfam_kernel, Bt=Bt, C=C, H=H, W=W, K1=K1)

    # Explicit VMEM budget: double-buffered in/out blocks + f32 temporaries
    # + spatial scratch, with headroom.  Clamped to stay valid on v7x (64 MiB).
    block_bytes = Bt * C * HW * t1.dtype.itemsize
    scratch_bytes = 4 * 7 * (H + 8) * max(W, 128) * 4
    need = 6 * block_bytes + 10 * Bt * C * HW * 4 + scratch_bytes + (2 << 20)
    vmem_limit = int(min(64 << 20, max(need, 16 << 20)))

    out = pl.pallas_call(
        kernel,
        out_shape=jax.ShapeDtypeStruct((B, C, HW), t1.dtype),
        grid=grid,
        in_specs=[
            pl.BlockSpec((Bt, C, HW), lambda b: (b, 0, 0)),
            pl.BlockSpec((Bt, C, HW), lambda b: (b, 0, 0)),
            pl.BlockSpec(memory_space=pltpu.MemorySpace.SMEM),  # (4*K1,) diff conv1d w
            pl.BlockSpec(memory_space=pltpu.MemorySpace.SMEM),  # (196,)  diff conv2d w
            pl.BlockSpec(memory_space=pltpu.MemorySpace.SMEM),  # (2,)    diff biases
        ],
        out_specs=pl.BlockSpec((Bt, C, HW), lambda b: (b, 0, 0)),
        scratch_shapes=[pltpu.VMEM((4, 7, H + 6, W), jnp.float32)],
        compiler_params=pltpu.CompilerParams(
            dimension_semantics=("parallel",),
            vmem_limit_bytes=vmem_limit),
    )(t1f, t2f, params["wc_d"], params["ws_d"], params["bias_d"])
    return out.reshape(B, C, H, W)


# ----------------------------------------------------------------------------
# Pure-JAX reference (mirrors the PyTorch forward) for validation.
# ----------------------------------------------------------------------------
def tfam_ref(t1, t2, raw):
    K1 = raw["K1"]
    # channel attention
    t1_avg = t1.mean(axis=(2, 3))
    t1_max = t1.max(axis=(2, 3))
    t2_avg = t2.mean(axis=(2, 3))
    t2_max = t2.max(axis=(2, 3))
    channel_pool = jnp.stack([t1_avg, t1_max, t2_avg, t2_max], axis=1)  # (B,4,C)

    def conv1d(x, w, b):
        y = lax.conv_general_dilated(
            x, w, window_strides=(1,), padding=[(K1 // 2, K1 // 2)],
            dimension_numbers=("NCH", "OIH", "NCH"))
        return y + b[None, :, None]

    a1 = conv1d(channel_pool, raw["wc1"], raw["bc1"])  # (B,1,C)
    a2 = conv1d(channel_pool, raw["wc2"], raw["bc2"])
    cs = jax.nn.softmax(jnp.stack([a1, a2], axis=0), axis=0)       # (2,B,1,C)
    cs = jnp.swapaxes(cs, -1, -2)[..., None]                       # (2,B,C,1,1)

    # spatial attention
    sp = jnp.concatenate(
        [t1.mean(axis=1, keepdims=True), t1.max(axis=1, keepdims=True),
         t2.mean(axis=1, keepdims=True), t2.max(axis=1, keepdims=True)], axis=1)

    def conv2d(x, w, b):
        y = lax.conv_general_dilated(
            x, w, window_strides=(1, 1), padding=[(3, 3), (3, 3)],
            dimension_numbers=("NCHW", "OIHW", "NCHW"))
        return y + b[None, :, None, None]

    s1 = conv2d(sp, raw["ws1"], raw["bs1"])  # (B,1,H,W)
    s2 = conv2d(sp, raw["ws2"], raw["bs2"])
    ss = jax.nn.softmax(jnp.stack([s1, s2], axis=0), axis=0)       # (2,B,1,H,W)

    sa = cs + ss + 1.0                                             # (2,B,C,H,W)
    return sa[0] * t1 + sa[1] * t2


# ----------------------------------------------------------------------------
def make_params(in_channel, key):
    K1 = kernel_size(in_channel)
    ks = jax.random.split(key, 8)
    wc1 = (0.1 * jax.random.normal(ks[0], (1, 4, K1))).astype(jnp.float32)
    wc2 = (0.1 * jax.random.normal(ks[1], (1, 4, K1))).astype(jnp.float32)
    bc1 = (0.1 * jax.random.normal(ks[2], (1,))).astype(jnp.float32)
    bc2 = (0.1 * jax.random.normal(ks[3], (1,))).astype(jnp.float32)
    ws1 = (0.05 * jax.random.normal(ks[4], (1, 4, 7, 7))).astype(jnp.float32)
    ws2 = (0.05 * jax.random.normal(ks[5], (1, 4, 7, 7))).astype(jnp.float32)
    bs1 = (0.1 * jax.random.normal(ks[6], (1,))).astype(jnp.float32)
    bs2 = (0.1 * jax.random.normal(ks[7], (1,))).astype(jnp.float32)

    raw = dict(K1=K1, wc1=wc1, wc2=wc2, bc1=bc1, bc2=bc2,
               ws1=ws1, ws2=ws2, bs1=bs1, bs2=bs2)
    packed = dict(
        K1=K1,
        wc_d=(wc1 - wc2).reshape(4 * K1).astype(jnp.float32),
        ws_d=(ws1 - ws2).reshape(4 * 49).astype(jnp.float32),
        bias_d=jnp.array([bc1[0] - bc2[0], bs1[0] - bs2[0]], dtype=jnp.float32),
    )
    return raw, packed


if __name__ == "__main__":
    B, C, H, W = 2, 8, 16, 16
    key = jax.random.PRNGKey(0)
    k1, k2, kp = jax.random.split(key, 3)
    t1 = jax.random.normal(k1, (B, C, H, W), dtype=jnp.float32)
    t2 = jax.random.normal(k2, (B, C, H, W), dtype=jnp.float32)

    raw, packed = make_params(C, kp)

    out = tfam_pallas(t1, t2, packed)
    out = jax.block_until_ready(out)

    ref = jax.block_until_ready(tfam_ref(t1, t2, raw))
    np.testing.assert_allclose(np.asarray(out), np.asarray(ref), rtol=1e-4, atol=1e-5)

    print("KERNEL_OK")
</pallas_src>

<mosaic_0001>
module attributes {stable_mosaic.version = 11 : i64} {
  func.func @tfam_kernel(%arg0: i32, %arg1: memref<1x8x256xf32, #tpu.memory_space<vmem>>, %arg2: memref<1x8x256xf32, #tpu.memory_space<vmem>>, %arg3: memref<12xf32, #tpu.memory_space<smem>>, %arg4: memref<196xf32, #tpu.memory_space<smem>>, %arg5: memref<2xf32, #tpu.memory_space<smem>>, %arg6: memref<1x8x256xf32, #tpu.memory_space<vmem>>, %arg7: memref<4x7x22x16xf32, #tpu.memory_space<vmem>>) attributes {dimension_semantics = [#tpu.dimension_semantics<parallel>], iteration_bounds = array<i64: 2>, scalar_prefetch = 0 : i64, scratch_operands = 1 : i64, tpu.core_type = #tpu.core_type<tc>, window_params = [{transform_indices = @transform_0, window_bounds = array<i64: 1, 8, 256>}, {transform_indices = @transform_1, window_bounds = array<i64: 1, 8, 256>}, {transform_indices = @transform_2, window_bounds = array<i64: 12>}, {transform_indices = @transform_3, window_bounds = array<i64: 196>}, {transform_indices = @transform_4, window_bounds = array<i64: 2>}, {transform_indices = @transform_5, window_bounds = array<i64: 1, 8, 256>}]} {
    %c0 = arith.constant 0 : index
    %0 = memref.load %arg3[%c0] : memref<12xf32, #tpu.memory_space<smem>>
    %c1 = arith.constant 1 : index
    %1 = memref.load %arg3[%c1] : memref<12xf32, #tpu.memory_space<smem>>
    %c2 = arith.constant 2 : index
    %2 = memref.load %arg3[%c2] : memref<12xf32, #tpu.memory_space<smem>>
    %c3 = arith.constant 3 : index
    %3 = memref.load %arg3[%c3] : memref<12xf32, #tpu.memory_space<smem>>
    %c4 = arith.constant 4 : index
    %4 = memref.load %arg3[%c4] : memref<12xf32, #tpu.memory_space<smem>>
    %c5 = arith.constant 5 : index
    %5 = memref.load %arg3[%c5] : memref<12xf32, #tpu.memory_space<smem>>
    %c6 = arith.constant 6 : index
    %6 = memref.load %arg3[%c6] : memref<12xf32, #tpu.memory_space<smem>>
    %c7 = arith.constant 7 : index
    %7 = memref.load %arg3[%c7] : memref<12xf32, #tpu.memory_space<smem>>
    %c8 = arith.constant 8 : index
    %8 = memref.load %arg3[%c8] : memref<12xf32, #tpu.memory_space<smem>>
    %c9 = arith.constant 9 : index
    %9 = memref.load %arg3[%c9] : memref<12xf32, #tpu.memory_space<smem>>
    %c10 = arith.constant 10 : index
    %10 = memref.load %arg3[%c10] : memref<12xf32, #tpu.memory_space<smem>>
    %c11 = arith.constant 11 : index
    %11 = memref.load %arg3[%c11] : memref<12xf32, #tpu.memory_space<smem>>
    %c0_0 = arith.constant 0 : index
    %12 = memref.load %arg4[%c0_0] : memref<196xf32, #tpu.memory_space<smem>>
    %c1_1 = arith.constant 1 : index
    %13 = memref.load %arg4[%c1_1] : memref<196xf32, #tpu.memory_space<smem>>
    %c2_2 = arith.constant 2 : index
    %14 = memref.load %arg4[%c2_2] : memref<196xf32, #tpu.memory_space<smem>>
    %c3_3 = arith.constant 3 : index
    %15 = memref.load %arg4[%c3_3] : memref<196xf32, #tpu.memory_space<smem>>
    %c4_4 = arith.constant 4 : index
    %16 = memref.load %arg4[%c4_4] : memref<196xf32, #tpu.memory_space<smem>>
    %c5_5 = arith.constant 5 : index
    %17 = memref.load %arg4[%c5_5] : memref<196xf32, #tpu.memory_space<smem>>
    %c6_6 = arith.constant 6 : index
    %18 = memref.load %arg4[%c6_6] : memref<196xf32, #tpu.memory_space<smem>>
    %c7_7 = arith.constant 7 : index
    %19 = memref.load %arg4[%c7_7] : memref<196xf32, #tpu.memory_space<smem>>
    %c8_8 = arith.constant 8 : index
    %20 = memref.load %arg4[%c8_8] : memref<196xf32, #tpu.memory_space<smem>>
    %c9_9 = arith.constant 9 : index
    %21 = memref.load %arg4[%c9_9] : memref<196xf32, #tpu.memory_space<smem>>
    %c10_10 = arith.constant 10 : index
    %22 = memref.load %arg4[%c10_10] : memref<196xf32, #tpu.memory_space<smem>>
    %c11_11 = arith.constant 11 : index
    %23 = memref.load %arg4[%c11_11] : memref<196xf32, #tpu.memory_space<smem>>
    %c12 = arith.constant 12 : index
    %24 = memref.load %arg4[%c12] : memref<196xf32, #tpu.memory_space<smem>>
    %c13 = arith.constant 13 : index
    %25 = memref.load %arg4[%c13] : memref<196xf32, #tpu.memory_space<smem>>
    %c14 = arith.constant 14 : index
    %26 = memref.load %arg4[%c14] : memref<196xf32, #tpu.memory_space<smem>>
    %c15 = arith.constant 15 : index
    %27 = memref.load %arg4[%c15] : memref<196xf32, #tpu.memory_space<smem>>
    %c16 = arith.constant 16 : index
    %28 = memref.load %arg4[%c16] : memref<196xf32, #tpu.memory_space<smem>>
    %c17 = arith.constant 17 : index
    %29 = memref.load %arg4[%c17] : memref<196xf32, #tpu.memory_space<smem>>
    %c18 = arith.constant 18 : index
    %30 = memref.load %arg4[%c18] : memref<196xf32, #tpu.memory_space<smem>>
    %c19 = arith.constant 19 : index
    %31 = memref.load %arg4[%c19] : memref<196xf32, #tpu.memory_space<smem>>
    %c20 = arith.constant 20 : index
    %32 = memref.load %arg4[%c20] : memref<196xf32, #tpu.memory_space<smem>>
    %c21 = arith.constant 21 : index
    %33 = memref.load %arg4[%c21] : memref<196xf32, #tpu.memory_space<smem>>
    %c22 = arith.constant 22 : index
    %34 = memref.load %arg4[%c22] : memref<196xf32, #tpu.memory_space<smem>>
    %c23 = arith.constant 23 : index
    %35 = memref.load %arg4[%c23] : memref<196xf32, #tpu.memory_space<smem>>
    %c24 = arith.constant 24 : index
    %36 = memref.load %arg4[%c24] : memref<196xf32, #tpu.memory_space<smem>>
    %c25 = arith.constant 25 : index
    %37 = memref.load %arg4[%c25] : memref<196xf32, #tpu.memory_space<smem>>
    %c26 = arith.constant 26 : index
    %38 = memref.load %arg4[%c26] : memref<196xf32, #tpu.memory_space<smem>>
    %c27 = arith.constant 27 : index
    %39 = memref.load %arg4[%c27] : memref<196xf32, #tpu.memory_space<smem>>
    %c28 = arith.constant 28 : index
    %40 = memref.load %arg4[%c28] : memref<196xf32, #tpu.memory_space<smem>>
    %c29 = arith.constant 29 : index
    %41 = memref.load %arg4[%c29] : memref<196xf32, #tpu.memory_space<smem>>
    %c30 = arith.constant 30 : index
    %42 = memref.load %arg4[%c30] : memref<196xf32, #tpu.memory_space<smem>>
    %c31 = arith.constant 31 : index
    %43 = memref.load %arg4[%c31] : memref<196xf32, #tpu.memory_space<smem>>
    %c32 = arith.constant 32 : index
    %44 = memref.load %arg4[%c32] : memref<196xf32, #tpu.memory_space<smem>>
    %c33 = arith.constant 33 : index
    %45 = memref.load %arg4[%c33] : memref<196xf32, #tpu.memory_space<smem>>
    %c34 = arith.constant 34 : index
    %46 = memref.load %arg4[%c34] : memref<196xf32, #tpu.memory_space<smem>>
    %c35 = arith.constant 35 : index
    %47 = memref.load %arg4[%c35] : memref<196xf32, #tpu.memory_space<smem>>
    %c36 = arith.constant 36 : index
    %48 = memref.load %arg4[%c36] : memref<196xf32, #tpu.memory_space<smem>>
    %c37 = arith.constant 37 : index
    %49 = memref.load %arg4[%c37] : memref<196xf32, #tpu.memory_space<smem>>
    %c38 = arith.constant 38 : index
    %50 = memref.load %arg4[%c38] : memref<196xf32, #tpu.memory_space<smem>>
    %c39 = arith.constant 39 : index
    %51 = memref.load %arg4[%c39] : memref<196xf32, #tpu.memory_space<smem>>
    %c40 = arith.constant 40 : index
    %52 = memref.load %arg4[%c40] : memref<196xf32, #tpu.memory_space<smem>>
    %c41 = arith.constant 41 : index
    %53 = memref.load %arg4[%c41] : memref<196xf32, #tpu.memory_space<smem>>
    %c42 = arith.constant 42 : index
    %54 = memref.load %arg4[%c42] : memref<196xf32, #tpu.memory_space<smem>>
    %c43 = arith.constant 43 : index
    %55 = memref.load %arg4[%c43] : memref<196xf32, #tpu.memory_space<smem>>
    %c44 = arith.constant 44 : index
    %56 = memref.load %arg4[%c44] : memref<196xf32, #tpu.memory_space<smem>>
    %c45 = arith.constant 45 : index
    %57 = memref.load %arg4[%c45] : memref<196xf32, #tpu.memory_space<smem>>
    %c46 = arith.constant 46 : index
    %58 = memref.load %arg4[%c46] : memref<196xf32, #tpu.memory_space<smem>>
    %c47 = arith.constant 47 : index
    %59 = memref.load %arg4[%c47] : memref<196xf32, #tpu.memory_space<smem>>
    %c48 = arith.constant 48 : index
    %60 = memref.load %arg4[%c48] : memref<196xf32, #tpu.memory_space<smem>>
    %c49 = arith.constant 49 : index
    %61 = memref.load %arg4[%c49] : memref<196xf32, #tpu.memory_space<smem>>
    %c50 = arith.constant 50 : index
    %62 = memref.load %arg4[%c50] : memref<196xf32, #tpu.memory_space<smem>>
    %c51 = arith.constant 51 : index
    %63 = memref.load %arg4[%c51] : memref<196xf32, #tpu.memory_space<smem>>
    %c52 = arith.constant 52 : index
    %64 = memref.load %arg4[%c52] : memref<196xf32, #tpu.memory_space<smem>>
    %c53 = arith.constant 53 : index
    %65 = memref.load %arg4[%c53] : memref<196xf32, #tpu.memory_space<smem>>
    %c54 = arith.constant 54 : index
    %66 = memref.load %arg4[%c54] : memref<196xf32, #tpu.memory_space<smem>>
    %c55 = arith.constant 55 : index
    %67 = memref.load %arg4[%c55] : memref<196xf32, #tpu.memory_space<smem>>
    %c56 = arith.constant 56 : index
    %68 = memref.load %arg4[%c56] : memref<196xf32, #tpu.memory_space<smem>>
    %c57 = arith.constant 57 : index
    %69 = memref.load %arg4[%c57] : memref<196xf32, #tpu.memory_space<smem>>
    %c58 = arith.constant 58 : index
    %70 = memref.load %arg4[%c58] : memref<196xf32, #tpu.memory_space<smem>>
    %c59 = arith.constant 59 : index
    %71 = memref.load %arg4[%c59] : memref<196xf32, #tpu.memory_space<smem>>
    %c60 = arith.constant 60 : index
    %72 = memref.load %arg4[%c60] : memref<196xf32, #tpu.memory_space<smem>>
    %c61 = arith.constant 61 : index
    %73 = memref.load %arg4[%c61] : memref<196xf32, #tpu.memory_space<smem>>
    %c62 = arith.constant 62 : index
    %74 = memref.load %arg4[%c62] : memref<196xf32, #tpu.memory_space<smem>>
    %c63 = arith.constant 63 : index
    %75 = memref.load %arg4[%c63] : memref<196xf32, #tpu.memory_space<smem>>
    %c64 = arith.constant 64 : index
    %76 = memref.load %arg4[%c64] : memref<196xf32, #tpu.memory_space<smem>>
    %c65 = arith.constant 65 : index
    %77 = memref.load %arg4[%c65] : memref<196xf32, #tpu.memory_space<smem>>
    %c66 = arith.constant 66 : index
    %78 = memref.load %arg4[%c66] : memref<196xf32, #tpu.memory_space<smem>>
    %c67 = arith.constant 67 : index
    %79 = memref.load %arg4[%c67] : memref<196xf32, #tpu.memory_space<smem>>
    %c68 = arith.constant 68 : index
    %80 = memref.load %arg4[%c68] : memref<196xf32, #tpu.memory_space<smem>>
    %c69 = arith.constant 69 : index
    %81 = memref.load %arg4[%c69] : memref<196xf32, #tpu.memory_space<smem>>
    %c70 = arith.constant 70 : index
    %82 = memref.load %arg4[%c70] : memref<196xf32, #tpu.memory_space<smem>>
    %c71 = arith.constant 71 : index
    %83 = memref.load %arg4[%c71] : memref<196xf32, #tpu.memory_space<smem>>
    %c72 = arith.constant 72 : index
    %84 = memref.load %arg4[%c72] : memref<196xf32, #tpu.memory_space<smem>>
    %c73 = arith.constant 73 : index
    %85 = memref.load %arg4[%c73] : memref<196xf32, #tpu.memory_space<smem>>
    %c74 = arith.constant 74 : index
    %86 = memref.load %arg4[%c74] : memref<196xf32, #tpu.memory_space<smem>>
    %c75 = arith.constant 75 : index
    %87 = memref.load %arg4[%c75] : memref<196xf32, #tpu.memory_space<smem>>
    %c76 = arith.constant 76 : index
    %88 = memref.load %arg4[%c76] : memref<196xf32, #tpu.memory_space<smem>>
    %c77 = arith.constant 77 : index
    %89 = memref.load %arg4[%c77] : memref<196xf32, #tpu.memory_space<smem>>
    %c78 = arith.constant 78 : index
    %90 = memref.load %arg4[%c78] : memref<196xf32, #tpu.memory_space<smem>>
    %c79 = arith.constant 79 : index
    %91 = memref.load %arg4[%c79] : memref<196xf32, #tpu.memory_space<smem>>
    %c80 = arith.constant 80 : index
    %92 = memref.load %arg4[%c80] : memref<196xf32, #tpu.memory_space<smem>>
    %c81 = arith.constant 81 : index
    %93 = memref.load %arg4[%c81] : memref<196xf32, #tpu.memory_space<smem>>
    %c82 = arith.constant 82 : index
    %94 = memref.load %arg4[%c82] : memref<196xf32, #tpu.memory_space<smem>>
    %c83 = arith.constant 83 : index
    %95 = memref.load %arg4[%c83] : memref<196xf32, #tpu.memory_space<smem>>
    %c84 = arith.constant 84 : index
    %96 = memref.load %arg4[%c84] : memref<196xf32, #tpu.memory_space<smem>>
    %c85 = arith.constant 85 : index
    %97 = memref.load %arg4[%c85] : memref<196xf32, #tpu.memory_space<smem>>
    %c86 = arith.constant 86 : index
    %98 = memref.load %arg4[%c86] : memref<196xf32, #tpu.memory_space<smem>>
    %c87 = arith.constant 87 : index
    %99 = memref.load %arg4[%c87] : memref<196xf32, #tpu.memory_space<smem>>
    %c88 = arith.constant 88 : index
    %100 = memref.load %arg4[%c88] : memref<196xf32, #tpu.memory_space<smem>>
    %c89 = arith.constant 89 : index
    %101 = memref.load %arg4[%c89] : memref<196xf32, #tpu.memory_space<smem>>
    %c90 = arith.constant 90 : index
    %102 = memref.load %arg4[%c90] : memref<196xf32, #tpu.memory_space<smem>>
    %c91 = arith.constant 91 : index
    %103 = memref.load %arg4[%c91] : memref<196xf32, #tpu.memory_space<smem>>
    %c92 = arith.constant 92 : index
    %104 = memref.load %arg4[%c92] : memref<196xf32, #tpu.memory_space<smem>>
    %c93 = arith.constant 93 : index
    %105 = memref.load %arg4[%c93] : memref<196xf32, #tpu.memory_space<smem>>
    %c94 = arith.constant 94 : index
    %106 = memref.load %arg4[%c94] : memref<196xf32, #tpu.memory_space<smem>>
    %c95 = arith.constant 95 : index
    %107 = memref.load %arg4[%c95] : memref<196xf32, #tpu.memory_space<smem>>
    %c96 = arith.constant 96 : index
    %108 = memref.load %arg4[%c96] : memref<196xf32, #tpu.memory_space<smem>>
    %c97 = arith.constant 97 : index
    %109 = memref.load %arg4[%c97] : memref<196xf32, #tpu.memory_space<smem>>
    %c98 = arith.constant 98 : index
    %110 = memref.load %arg4[%c98] : memref<196xf32, #tpu.memory_space<smem>>
    %c99 = arith.constant 99 : index
    %111 = memref.load %arg4[%c99] : memref<196xf32, #tpu.memory_space<smem>>
    %c100 = arith.constant 100 : index
    %112 = memref.load %arg4[%c100] : memref<196xf32, #tpu.memory_space<smem>>
    %c101 = arith.constant 101 : index
    %113 = memref.load %arg4[%c101] : memref<196xf32, #tpu.memory_space<smem>>
    %c102 = arith.constant 102 : index
    %114 = memref.load %arg4[%c102] : memref<196xf32, #tpu.memory_space<smem>>
    %c103 = arith.constant 103 : index
    %115 = memref.load %arg4[%c103] : memref<196xf32, #tpu.memory_space<smem>>
    %c104 = arith.constant 104 : index
    %116 = memref.load %arg4[%c104] : memref<196xf32, #tpu.memory_space<smem>>
    %c105 = arith.constant 105 : index
    %117 = memref.load %arg4[%c105] : memref<196xf32, #tpu.memory_space<smem>>
    %c106 = arith.constant 106 : index
    %118 = memref.load %arg4[%c106] : memref<196xf32, #tpu.memory_space<smem>>
    %c107 = arith.constant 107 : index
    %119 = memref.load %arg4[%c107] : memref<196xf32, #tpu.memory_space<smem>>
    %c108 = arith.constant 108 : index
    %120 = memref.load %arg4[%c108] : memref<196xf32, #tpu.memory_space<smem>>
    %c109 = arith.constant 109 : index
    %121 = memref.load %arg4[%c109] : memref<196xf32, #tpu.memory_space<smem>>
    %c110 = arith.constant 110 : index
    %122 = memref.load %arg4[%c110] : memref<196xf32, #tpu.memory_space<smem>>
    %c111 = arith.constant 111 : index
    %123 = memref.load %arg4[%c111] : memref<196xf32, #tpu.memory_space<smem>>
    %c112 = arith.constant 112 : index
    %124 = memref.load %arg4[%c112] : memref<196xf32, #tpu.memory_space<smem>>
    %c113 = arith.constant 113 : index
    %125 = memref.load %arg4[%c113] : memref<196xf32, #tpu.memory_space<smem>>
    %c114 = arith.constant 114 : index
    %126 = memref.load %arg4[%c114] : memref<196xf32, #tpu.memory_space<smem>>
    %c115 = arith.constant 115 : index
    %127 = memref.load %arg4[%c115] : memref<196xf32, #tpu.memory_space<smem>>
    %c116 = arith.constant 116 : index
    %128 = memref.load %arg4[%c116] : memref<196xf32, #tpu.memory_space<smem>>
    %c117 = arith.constant 117 : index
    %129 = memref.load %arg4[%c117] : memref<196xf32, #tpu.memory_space<smem>>
    %c118 = arith.constant 118 : index
    %130 = memref.load %arg4[%c118] : memref<196xf32, #tpu.memory_space<smem>>
    %c119 = arith.constant 119 : index
    %131 = memref.load %arg4[%c119] : memref<196xf32, #tpu.memory_space<smem>>
    %c120 = arith.constant 120 : index
    %132 = memref.load %arg4[%c120] : memref<196xf32, #tpu.memory_space<smem>>
    %c121 = arith.constant 121 : index
    %133 = memref.load %arg4[%c121] : memref<196xf32, #tpu.memory_space<smem>>
    %c122 = arith.constant 122 : index
    %134 = memref.load %arg4[%c122] : memref<196xf32, #tpu.memory_space<smem>>
    %c123 = arith.constant 123 : index
    %135 = memref.load %arg4[%c123] : memref<196xf32, #tpu.memory_space<smem>>
    %c124 = arith.constant 124 : index
    %136 = memref.load %arg4[%c124] : memref<196xf32, #tpu.memory_space<smem>>
    %c125 = arith.constant 125 : index
    %137 = memref.load %arg4[%c125] : memref<196xf32, #tpu.memory_space<smem>>
    %c126 = arith.constant 126 : index
    %138 = memref.load %arg4[%c126] : memref<196xf32, #tpu.memory_space<smem>>
    %c127 = arith.constant 127 : index
    %139 = memref.load %arg4[%c127] : memref<196xf32, #tpu.memory_space<smem>>
    %c128 = arith.constant 128 : index
    %140 = memref.load %arg4[%c128] : memref<196xf32, #tpu.memory_space<smem>>
    %c129 = arith.constant 129 : index
    %141 = memref.load %arg4[%c129] : memref<196xf32, #tpu.memory_space<smem>>
    %c130 = arith.constant 130 : index
    %142 = memref.load %arg4[%c130] : memref<196xf32, #tpu.memory_space<smem>>
    %c131 = arith.constant 131 : index
    %143 = memref.load %arg4[%c131] : memref<196xf32, #tpu.memory_space<smem>>
    %c132 = arith.constant 132 : index
    %144 = memref.load %arg4[%c132] : memref<196xf32, #tpu.memory_space<smem>>
    %c133 = arith.constant 133 : index
    %145 = memref.load %arg4[%c133] : memref<196xf32, #tpu.memory_space<smem>>
    %c134 = arith.constant 134 : index
    %146 = memref.load %arg4[%c134] : memref<196xf32, #tpu.memory_space<smem>>
    %c135 = arith.constant 135 : index
    %147 = memref.load %arg4[%c135] : memref<196xf32, #tpu.memory_space<smem>>
    %c136 = arith.constant 136 : index
    %148 = memref.load %arg4[%c136] : memref<196xf32, #tpu.memory_space<smem>>
    %c137 = arith.constant 137 : index
    %149 = memref.load %arg4[%c137] : memref<196xf32, #tpu.memory_space<smem>>
    %c138 = arith.constant 138 : index
    %150 = memref.load %arg4[%c138] : memref<196xf32, #tpu.memory_space<smem>>
    %c139 = arith.constant 139 : index
    %151 = memref.load %arg4[%c139] : memref<196xf32, #tpu.memory_space<smem>>
    %c140 = arith.constant 140 : index
    %152 = memref.load %arg4[%c140] : memref<196xf32, #tpu.memory_space<smem>>
    %c141 = arith.constant 141 : index
    %153 = memref.load %arg4[%c141] : memref<196xf32, #tpu.memory_space<smem>>
    %c142 = arith.constant 142 : index
    %154 = memref.load %arg4[%c142] : memref<196xf32, #tpu.memory_space<smem>>
    %c143 = arith.constant 143 : index
    %155 = memref.load %arg4[%c143] : memref<196xf32, #tpu.memory_space<smem>>
    %c144 = arith.constant 144 : index
    %156 = memref.load %arg4[%c144] : memref<196xf32, #tpu.memory_space<smem>>
    %c145 = arith.constant 145 : index
    %157 = memref.load %arg4[%c145] : memref<196xf32, #tpu.memory_space<smem>>
    %c146 = arith.constant 146 : index
    %158 = memref.load %arg4[%c146] : memref<196xf32, #tpu.memory_space<smem>>
    %c147 = arith.constant 147 : index
    %159 = memref.load %arg4[%c147] : memref<196xf32, #tpu.memory_space<smem>>
    %c148 = arith.constant 148 : index
    %160 = memref.load %arg4[%c148] : memref<196xf32, #tpu.memory_space<smem>>
    %c149 = arith.constant 149 : index
    %161 = memref.load %arg4[%c149] : memref<196xf32, #tpu.memory_space<smem>>
    %c150 = arith.constant 150 : index
    %162 = memref.load %arg4[%c150] : memref<196xf32, #tpu.memory_space<smem>>
    %c151 = arith.constant 151 : index
    %163 = memref.load %arg4[%c151] : memref<196xf32, #tpu.memory_space<smem>>
    %c152 = arith.constant 152 : index
    %164 = memref.load %arg4[%c152] : memref<196xf32, #tpu.memory_space<smem>>
    %c153 = arith.constant 153 : index
    %165 = memref.load %arg4[%c153] : memref<196xf32, #tpu.memory_space<smem>>
    %c154 = arith.constant 154 : index
    %166 = memref.load %arg4[%c154] : memref<196xf32, #tpu.memory_space<smem>>
    %c155 = arith.constant 155 : index
    %167 = memref.load %arg4[%c155] : memref<196xf32, #tpu.memory_space<smem>>
    %c156 = arith.constant 156 : index
    %168 = memref.load %arg4[%c156] : memref<196xf32, #tpu.memory_space<smem>>
    %c157 = arith.constant 157 : index
    %169 = memref.load %arg4[%c157] : memref<196xf32, #tpu.memory_space<smem>>
    %c158 = arith.constant 158 : index
    %170 = memref.load %arg4[%c158] : memref<196xf32, #tpu.memory_space<smem>>
    %c159 = arith.constant 159 : index
    %171 = memref.load %arg4[%c159] : memref<196xf32, #tpu.memory_space<smem>>
    %c160 = arith.constant 160 : index
    %172 = memref.load %arg4[%c160] : memref<196xf32, #tpu.memory_space<smem>>
    %c161 = arith.constant 161 : index
    %173 = memref.load %arg4[%c161] : memref<196xf32, #tpu.memory_space<smem>>
    %c162 = arith.constant 162 : index
    %174 = memref.load %arg4[%c162] : memref<196xf32, #tpu.memory_space<smem>>
    %c163 = arith.constant 163 : index
    %175 = memref.load %arg4[%c163] : memref<196xf32, #tpu.memory_space<smem>>
    %c164 = arith.constant 164 : index
    %176 = memref.load %arg4[%c164] : memref<196xf32, #tpu.memory_space<smem>>
    %c165 = arith.constant 165 : index
    %177 = memref.load %arg4[%c165] : memref<196xf32, #tpu.memory_space<smem>>
    %c166 = arith.constant 166 : index
    %178 = memref.load %arg4[%c166] : memref<196xf32, #tpu.memory_space<smem>>
    %c167 = arith.constant 167 : index
    %179 = memref.load %arg4[%c167] : memref<196xf32, #tpu.memory_space<smem>>
    %c168 = arith.constant 168 : index
    %180 = memref.load %arg4[%c168] : memref<196xf32, #tpu.memory_space<smem>>
    %c169 = arith.constant 169 : index
    %181 = memref.load %arg4[%c169] : memref<196xf32, #tpu.memory_space<smem>>
    %c170 = arith.constant 170 : index
    %182 = memref.load %arg4[%c170] : memref<196xf32, #tpu.memory_space<smem>>
    %c171 = arith.constant 171 : index
    %183 = memref.load %arg4[%c171] : memref<196xf32, #tpu.memory_space<smem>>
    %c172 = arith.constant 172 : index
    %184 = memref.load %arg4[%c172] : memref<196xf32, #tpu.memory_space<smem>>
    %c173 = arith.constant 173 : index
    %185 = memref.load %arg4[%c173] : memref<196xf32, #tpu.memory_space<smem>>
    %c174 = arith.constant 174 : index
    %186 = memref.load %arg4[%c174] : memref<196xf32, #tpu.memory_space<smem>>
    %c175 = arith.constant 175 : index
    %187 = memref.load %arg4[%c175] : memref<196xf32, #tpu.memory_space<smem>>
    %c176 = arith.constant 176 : index
    %188 = memref.load %arg4[%c176] : memref<196xf32, #tpu.memory_space<smem>>
    %c177 = arith.constant 177 : index
    %189 = memref.load %arg4[%c177] : memref<196xf32, #tpu.memory_space<smem>>
    %c178 = arith.constant 178 : index
    %190 = memref.load %arg4[%c178] : memref<196xf32, #tpu.memory_space<smem>>
    %c179 = arith.constant 179 : index
    %191 = memref.load %arg4[%c179] : memref<196xf32, #tpu.memory_space<smem>>
    %c180 = arith.constant 180 : index
    %192 = memref.load %arg4[%c180] : memref<196xf32, #tpu.memory_space<smem>>
    %c181 = arith.constant 181 : index
    %193 = memref.load %arg4[%c181] : memref<196xf32, #tpu.memory_space<smem>>
    %c182 = arith.constant 182 : index
    %194 = memref.load %arg4[%c182] : memref<196xf32, #tpu.memory_space<smem>>
    %c183 = arith.constant 183 : index
    %195 = memref.load %arg4[%c183] : memref<196xf32, #tpu.memory_space<smem>>
    %c184 = arith.constant 184 : index
    %196 = memref.load %arg4[%c184] : memref<196xf32, #tpu.memory_space<smem>>
    %c185 = arith.constant 185 : index
    %197 = memref.load %arg4[%c185] : memref<196xf32, #tpu.memory_space<smem>>
    %c186 = arith.constant 186 : index
    %198 = memref.load %arg4[%c186] : memref<196xf32, #tpu.memory_space<smem>>
    %c187 = arith.constant 187 : index
    %199 = memref.load %arg4[%c187] : memref<196xf32, #tpu.memory_space<smem>>
    %c188 = arith.constant 188 : index
    %200 = memref.load %arg4[%c188] : memref<196xf32, #tpu.memory_space<smem>>
    %c189 = arith.constant 189 : index
    %201 = memref.load %arg4[%c189] : memref<196xf32, #tpu.memory_space<smem>>
    %c190 = arith.constant 190 : index
    %202 = memref.load %arg4[%c190] : memref<196xf32, #tpu.memory_space<smem>>
    %c191 = arith.constant 191 : index
    %203 = memref.load %arg4[%c191] : memref<196xf32, #tpu.memory_space<smem>>
    %c192 = arith.constant 192 : index
    %204 = memref.load %arg4[%c192] : memref<196xf32, #tpu.memory_space<smem>>
    %c193 = arith.constant 193 : index
    %205 = memref.load %arg4[%c193] : memref<196xf32, #tpu.memory_space<smem>>
    %c194 = arith.constant 194 : index
    %206 = memref.load %arg4[%c194] : memref<196xf32, #tpu.memory_space<smem>>
    %c195 = arith.constant 195 : index
    %207 = memref.load %arg4[%c195] : memref<196xf32, #tpu.memory_space<smem>>
    %c0_12 = arith.constant 0 : index
    %208 = memref.load %arg5[%c0_12] : memref<2xf32, #tpu.memory_space<smem>>
    %c1_13 = arith.constant 1 : index
    %209 = memref.load %arg5[%c1_13] : memref<2xf32, #tpu.memory_space<smem>>
    %cst = arith.constant 0.000000e+00 : f32
    %210 = vector.broadcast %cst : f32 to vector<4x7x22x16xf32>
    %c0_14 = arith.constant 0 : index
    %c0_15 = arith.constant 0 : index
    %c0_16 = arith.constant 0 : index
    %c0_17 = arith.constant 0 : index
    %211 = vector.load %arg7[%c0_14, %c0_15, %c0_16, %c0_17] : memref<4x7x22x16xf32, #tpu.memory_space<vmem>>, vector<4x7x22x16xf32>
    tpu.vector_store %arg7[%c0_14, %c0_15, %c0_16, %c0_17], %210 {strides = array<i32>} : memref<4x7x22x16xf32, #tpu.memory_space<vmem>>, vector<4x7x22x16xf32>,
    %c0_18 = arith.constant 0 : index
    %c0_19 = arith.constant 0 : index
    %c0_20 = arith.constant 0 : index
    %212 = vector.load %arg1[%c0_18, %c0_19, %c0_20] : memref<1x8x256xf32, #tpu.memory_space<vmem>>, vector<1x8x256xf32>
    %213 = vector.shape_cast %212 : vector<1x8x256xf32> to vector<8x256xf32>
    %c0_21 = arith.constant 0 : index
    %c0_22 = arith.constant 0 : index
    %c0_23 = arith.constant 0 : index
    %214 = vector.load %arg2[%c0_21, %c0_22, %c0_23] : memref<1x8x256xf32, #tpu.memory_space<vmem>>, vector<1x8x256xf32>
    %215 = vector.shape_cast %214 : vector<1x8x256xf32> to vector<8x256xf32>
    %cst_24 = arith.constant dense<0.000000e+00> : vector<8xf32>
    %216 = vector.multi_reduction <add>, %213, %cst_24 [1] : vector<8x256xf32> to vector<8xf32>
    %cst_25 = arith.constant 2.560000e+02 : f32
    %217 = vector.broadcast %cst_25 : f32 to vector<8xf32>
    %218 = arith.divf %216, %217 : vector<8xf32>
    %cst_26 = arith.constant dense<0xFF800000> : vector<8xf32>
    %219 = vector.multi_reduction <maximumf>, %213, %cst_26 [1] : vector<8x256xf32> to vector<8xf32>
    %cst_27 = arith.constant dense<0.000000e+00> : vector<8xf32>
    %220 = vector.multi_reduction <add>, %215, %cst_27 [1] : vector<8x256xf32> to vector<8xf32>
    %cst_28 = arith.constant 2.560000e+02 : f32
    %221 = vector.broadcast %cst_28 : f32 to vector<8xf32>
    %222 = arith.divf %220, %221 : vector<8xf32>
    %cst_29 = arith.constant dense<0xFF800000> : vector<8xf32>
    %223 = vector.multi_reduction <maximumf>, %215, %cst_29 [1] : vector<8x256xf32> to vector<8xf32>
    %224 = vector.shape_cast %218 : vector<8xf32> to vector<1x8xf32>
    %225 = vector.shape_cast %219 : vector<8xf32> to vector<1x8xf32>
    %226 = vector.shape_cast %222 : vector<8xf32> to vector<1x8xf32>
    %227 = vector.shape_cast %223 : vector<8xf32> to vector<1x8xf32>
    %228 = tpu.concatenate %224, %225, %226, %227 in 0 : vector<1x8xf32>, vector<1x8xf32>, vector<1x8xf32>, vector<1x8xf32> -> vector<4x8xf32>
    %cst_30 = arith.constant 0.000000e+00 : f32
    %229 = vector.broadcast %cst_30 : f32 to vector<4x1xf32>
    %230 = tpu.concatenate %229, %228, %229 in 1 : vector<4x1xf32>, vector<4x8xf32>, vector<4x1xf32> -> vector<4x10xf32>
    %231 = vector.broadcast %208 : f32 to vector<8xf32>
    %232 = vector.extract_strided_slice %230 {offsets = [0, 0], sizes = [1, 8], strides = [1, 1]} : vector<4x10xf32> to vector<1x8xf32>
    %233 = vector.shape_cast %232 : vector<1x8xf32> to vector<8xf32>
    %234 = vector.broadcast %0 : f32 to vector<8xf32>
    %235 = arith.mulf %234, %233 : vector<8xf32>
    %236 = arith.addf %231, %235 : vector<8xf32>
    %237 = vector.extract_strided_slice %230 {offsets = [0, 1], sizes = [1, 8], strides = [1, 1]} : vector<4x10xf32> to vector<1x8xf32>
    %238 = vector.shape_cast %237 : vector<1x8xf32> to vector<8xf32>
    %239 = vector.broadcast %1 : f32 to vector<8xf32>
    %240 = arith.mulf %239, %238 : vector<8xf32>
    %241 = arith.addf %236, %240 : vector<8xf32>
    %242 = vector.extract_strided_slice %230 {offsets = [0, 2], sizes = [1, 8], strides = [1, 1]} : vector<4x10xf32> to vector<1x8xf32>
    %243 = vector.shape_cast %242 : vector<1x8xf32> to vector<8xf32>
    %244 = vector.broadcast %2 : f32 to vector<8xf32>
    %245 = arith.mulf %244, %243 : vector<8xf32>
    %246 = arith.addf %241, %245 : vector<8xf32>
    %247 = vector.extract_strided_slice %230 {offsets = [1, 0], sizes = [1, 8], strides = [1, 1]} : vector<4x10xf32> to vector<1x8xf32>
    %248 = vector.shape_cast %247 : vector<1x8xf32> to vector<8xf32>
    %249 = vector.broadcast %3 : f32 to vector<8xf32>
    %250 = arith.mulf %249, %248 : vector<8xf32>
    %251 = arith.addf %246, %250 : vector<8xf32>
    %252 = vector.extract_strided_slice %230 {offsets = [1, 1], sizes = [1, 8], strides = [1, 1]} : vector<4x10xf32> to vector<1x8xf32>
    %253 = vector.shape_cast %252 : vector<1x8xf32> to vector<8xf32>
    %254 = vector.broadcast %4 : f32 to vector<8xf32>
    %255 = arith.mulf %254, %253 : vector<8xf32>
    %256 = arith.addf %251, %255 : vector<8xf32>
    %257 = vector.extract_strided_slice %230 {offsets = [1, 2], sizes = [1, 8], strides = [1, 1]} : vector<4x10xf32> to vector<1x8xf32>
    %258 = vector.shape_cast %257 : vector<1x8xf32> to vector<8xf32>
    %259 = vector.broadcast %5 : f32 to vector<8xf32>
    %260 = arith.mulf %259, %258 : vector<8xf32>
    %261 = arith.addf %256, %260 : vector<8xf32>
    %262 = vector.extract_strided_slice %230 {offsets = [2, 0], sizes = [1, 8], strides = [1, 1]} : vector<4x10xf32> to vector<1x8xf32>
    %263 = vector.shape_cast %262 : vector<1x8xf32> to vector<8xf32>
    %264 = vector.broadcast %6 : f32 to vector<8xf32>
    %265 = arith.mulf %264, %263 : vector<8xf32>
    %266 = arith.addf %261, %265 : vector<8xf32>
    %267 = vector.extract_strided_slice %230 {offsets = [2, 1], sizes = [1, 8], strides = [1, 1]} : vector<4x10xf32> to vector<1x8xf32>
    %268 = vector.shape_cast %267 : vector<1x8xf32> to vector<8xf32>
    %269 = vector.broadcast %7 : f32 to vector<8xf32>
    %270 = arith.mulf %269, %268 : vector<8xf32>
    %271 = arith.addf %266, %270 : vector<8xf32>
    %272 = vector.extract_strided_slice %230 {offsets = [2, 2], sizes = [1, 8], strides = [1, 1]} : vector<4x10xf32> to vector<1x8xf32>
    %273 = vector.shape_cast %272 : vector<1x8xf32> to vector<8xf32>
    %274 = vector.broadcast %8 : f32 to vector<8xf32>
    %275 = arith.mulf %274, %273 : vector<8xf32>
    %276 = arith.addf %271, %275 : vector<8xf32>
    %277 = vector.extract_strided_slice %230 {offsets = [3, 0], sizes = [1, 8], strides = [1, 1]} : vector<4x10xf32> to vector<1x8xf32>
    %278 = vector.shape_cast %277 : vector<1x8xf32> to vector<8xf32>
    %279 = vector.broadcast %9 : f32 to vector<8xf32>
    %280 = arith.mulf %279, %278 : vector<8xf32>
    %281 = arith.addf %276, %280 : vector<8xf32>
    %282 = vector.extract_strided_slice %230 {offsets = [3, 1], sizes = [1, 8], strides = [1, 1]} : vector<4x10xf32> to vector<1x8xf32>
    %283 = vector.shape_cast %282 : vector<1x8xf32> to vector<8xf32>
    %284 = vector.broadcast %10 : f32 to vector<8xf32>
    %285 = arith.mulf %284, %283 : vector<8xf32>
    %286 = arith.addf %281, %285 : vector<8xf32>
    %287 = vector.extract_strided_slice %230 {offsets = [3, 2], sizes = [1, 8], strides = [1, 1]} : vector<4x10xf32> to vector<1x8xf32>
    %288 = vector.shape_cast %287 : vector<1x8xf32> to vector<8xf32>
    %289 = vector.broadcast %11 : f32 to vector<8xf32>
    %290 = arith.mulf %289, %288 : vector<8xf32>
    %291 = arith.addf %286, %290 : vector<8xf32>
    %cst_31 = arith.constant 0.000000e+00 : f32
    %292 = vector.broadcast %cst_31 : f32 to vector<8xf32>
    %293 = arith.subf %292, %291 : vector<8xf32>
    %294 = math.exp %293 : vector<8xf32>
    %cst_32 = arith.constant 1.000000e+00 : f32
    %295 = vector.broadcast %cst_32 : f32 to vector<8xf32>
    %296 = arith.addf %295, %294 : vector<8xf32>
    %cst_33 = arith.constant 1.000000e+00 : f32
    %297 = vector.broadcast %cst_33 : f32 to vector<8xf32>
    %298 = arith.divf %297, %296 : vector<8xf32>
    %cst_34 = arith.constant dense<0.000000e+00> : vector<256xf32>
    %299 = vector.multi_reduction <add>, %213, %cst_34 [0] : vector<8x256xf32> to vector<256xf32>
    %300 = vector.shape_cast %299 : vector<256xf32> to vector<1x256xf32>
    %cst_35 = arith.constant 8.000000e+00 : f32
    %301 = vector.broadcast %cst_35 : f32 to vector<1x256xf32>
    %302 = arith.divf %300, %301 : vector<1x256xf32>
    %303 = vector.extract_strided_slice %302 {offsets = [0, 0], sizes = [1, 16], strides = [1, 1]} : vector<1x256xf32> to vector<1x16xf32>
    %304 = vector.extract_strided_slice %302 {offsets = [0, 16], sizes = [1, 16], strides = [1, 1]} : vector<1x256xf32> to vector<1x16xf32>
    %305 = vector.extract_strided_slice %302 {offsets = [0, 32], sizes = [1, 16], strides = [1, 1]} : vector<1x256xf32> to vector<1x16xf32>
    %306 = vector.extract_strided_slice %302 {offsets = [0, 48], sizes = [1, 16], strides = [1, 1]} : vector<1x256xf32> to vector<1x16xf32>
    %307 = vector.extract_strided_slice %302 {offsets = [0, 64], sizes = [1, 16], strides = [1, 1]} : vector<1x256xf32> to vector<1x16xf32>
    %308 = vector.extract_strided_slice %302 {offsets = [0, 80], sizes = [1, 16], strides = [1, 1]} : vector<1x256xf32> to vector<1x16xf32>
    %309 = vector.extract_strided_slice %302 {offsets = [0, 96], sizes = [1, 16], strides = [1, 1]} : vector<1x256xf32> to vector<1x16xf32>
    %310 = vector.extract_strided_slice %302 {offsets = [0, 112], sizes = [1, 16], strides = [1, 1]} : vector<1x256xf32> to vector<1x16xf32>
    %311 = vector.extract_strided_slice %302 {offsets = [0, 128], sizes = [1, 16], strides = [1, 1]} : vector<1x256xf32> to vector<1x16xf32>
    %312 = vector.extract_strided_slice %302 {offsets = [0, 144], sizes = [1, 16], strides = [1, 1]} : vector<1x256xf32> to vector<1x16xf32>
    %313 = vector.extract_strided_slice %302 {offsets = [0, 160], sizes = [1, 16], strides = [1, 1]} : vector<1x256xf32> to vector<1x16xf32>
    %314 = vector.extract_strided_slice %302 {offsets = [0, 176], sizes = [1, 16], strides = [1, 1]} : vector<1x256xf32> to vector<1x16xf32>
    %315 = vector.extract_strided_slice %302 {offsets = [0, 192], sizes = [1, 16], strides = [1, 1]} : vector<1x256xf32> to vector<1x16xf32>
    %316 = vector.extract_strided_slice %302 {offsets = [0, 208], sizes = [1, 16], strides = [1, 1]} : vector<1x256xf32> to vector<1x16xf32>
    %317 = vector.extract_strided_slice %302 {offsets = [0, 224], sizes = [1, 16], strides = [1, 1]} : vector<1x256xf32> to vector<1x16xf32>
    %318 = vector.extract_strided_slice %302 {offsets = [0, 240], sizes = [1, 16], strides = [1, 1]} : vector<1x256xf32> to vector<1x16xf32>
    %319 = tpu.concatenate %303, %304, %305, %306, %307, %308, %309, %310, %311, %312, %313, %314, %315, %316, %317, %318 in 0 : vector<1x16xf32>, vector<1x16xf32>, vector<1x16xf32>, vector<1x16xf32>, vector<1x16xf32>, vector<1x16xf32>, vector<1x16xf32>, vector<1x16xf32>, vector<1x16xf32>, vector<1x16xf32>, vector<1x16xf32>, vector<1x16xf32>, vector<1x16xf32>, vector<1x16xf32>, vector<1x16xf32>, vector<1x16xf32> -> vector<16x16xf32>
    %cst_36 = arith.constant dense<0xFF800000> : vector<256xf32>
    %320 = vector.multi_reduction <maximumf>, %213, %cst_36 [0] : vector<8x256xf32> to vector<256xf32>
    %321 = vector.shape_cast %320 : vector<256xf32> to vector<1x256xf32>
    %322 = vector.extract_strided_slice %321 {offsets = [0, 0], sizes = [1, 16], strides = [1, 1]} : vector<1x256xf32> to vector<1x16xf32>
    %323 = vector.extract_strided_slice %321 {offsets = [0, 16], sizes = [1, 16], strides = [1, 1]} : vector<1x256xf32> to vector<1x16xf32>
    %324 = vector.extract_strided_slice %321 {offsets = [0, 32], sizes = [1, 16], strides = [1, 1]} : vector<1x256xf32> to vector<1x16xf32>
    %325 = vector.extract_strided_slice %321 {offsets = [0, 48], sizes = [1, 16], strides = [1, 1]} : vector<1x256xf32> to vector<1x16xf32>
    %326 = vector.extract_strided_slice %321 {offsets = [0, 64], sizes = [1, 16], strides = [1, 1]} : vector<1x256xf32> to vector<1x16xf32>
    %327 = vector.extract_strided_slice %321 {offsets = [0, 80], sizes = [1, 16], strides = [1, 1]} : vector<1x256xf32> to vector<1x16xf32>
    %328 = vector.extract_strided_slice %321 {offsets = [0, 96], sizes = [1, 16], strides = [1, 1]} : vector<1x256xf32> to vector<1x16xf32>
    %329 = vector.extract_strided_slice %321 {offsets = [0, 112], sizes = [1, 16], strides = [1, 1]} : vector<1x256xf32> to vector<1x16xf32>
    %330 = vector.extract_strided_slice %321 {offsets = [0, 128], sizes = [1, 16], strides = [1, 1]} : vector<1x256xf32> to vector<1x16xf32>
    %331 = vector.extract_strided_slice %321 {offsets = [0, 144], sizes = [1, 16], strides = [1, 1]} : vector<1x256xf32> to vector<1x16xf32>
    %332 = vector.extract_strided_slice %321 {offsets = [0, 160], sizes = [1, 16], strides = [1, 1]} : vector<1x256xf32> to vector<1x16xf32>
    %333 = vector.extract_strided_slice %321 {offsets = [0, 176], sizes = [1, 16], strides = [1, 1]} : vector<1x256xf32> to vector<1x16xf32>
    %334 = vector.extract_strided_slice %321 {offsets = [0, 192], sizes = [1, 16], strides = [1, 1]} : vector<1x256xf32> to vector<1x16xf32>
    %335 = vector.extract_strided_slice %321 {offsets = [0, 208], sizes = [1, 16], strides = [1, 1]} : vector<1x256xf32> to vector<1x16xf32>
    %336 = vector.extract_strided_slice %321 {offsets = [0, 224], sizes = [1, 16], strides = [1, 1]} : vector<1x256xf32> to vector<1x16xf32>
    %337 = vector.extract_strided_slice %321 {offsets = [0, 240], sizes = [1, 16], strides = [1, 1]} : vector<1x256xf32> to vector<1x16xf32>
    %338 = tpu.concatenate %322, %323, %324, %325, %326, %327, %328, %329, %330, %331, %332, %333, %334, %335, %336, %337 in 0 : vector<1x16xf32>, vector<1x16xf32>, vector<1x16xf32>, vector<1x16xf32>, vector<1x16xf32>, vector<1x16xf32>, vector<1x16xf32>, vector<1x16xf32>, vector<1x16xf32>, vector<1x16xf32>, vector<1x16xf32>, vector<1x16xf32>, vector<1x16xf32>, vector<1x16xf32>, vector<1x16xf32>, vector<1x16xf32> -> vector<16x16xf32>
    %cst_37 = arith.constant dense<0.000000e+00> : vector<256xf32>
    %339 = vector.multi_reduction <add>, %215, %cst_37 [0] : vector<8x256xf32> to vector<256xf32>
    %340 = vector.shape_cast %339 : vector<256xf32> to vector<1x256xf32>
    %cst_38 = arith.constant 8.000000e+00 : f32
    %341 = vector.broadcast %cst_38 : f32 to vector<1x256xf32>
    %342 = arith.divf %340, %341 : vector<1x256xf32>
    %343 = vector.extract_strided_slice %342 {offsets = [0, 0], sizes = [1, 16], strides = [1, 1]} : vector<1x256xf32> to vector<1x16xf32>
    %344 = vector.extract_strided_slice %342 {offsets = [0, 16], sizes = [1, 16], strides = [1, 1]} : vector<1x256xf32> to vector<1x16xf32>
    %345 = vector.extract_strided_slice %342 {offsets = [0, 32], sizes = [1, 16], strides = [1, 1]} : vector<1x256xf32> to vector<1x16xf32>
    %346 = vector.extract_strided_slice %342 {offsets = [0, 48], sizes = [1, 16], strides = [1, 1]} : vector<1x256xf32> to vector<1x16xf32>
    %347 = vector.extract_strided_slice %342 {offsets = [0, 64], sizes = [1, 16], strides = [1, 1]} : vector<1x256xf32> to vector<1x16xf32>
    %348 = vector.extract_strided_slice %342 {offsets = [0, 80], sizes = [1, 16], strides = [1, 1]} : vector<1x256xf32> to vector<1x16xf32>
    %349 = vector.extract_strided_slice %342 {offsets = [0, 96], sizes = [1, 16], strides = [1, 1]} : vector<1x256xf32> to vector<1x16xf32>
    %350 = vector.extract_strided_slice %342 {offsets = [0, 112], sizes = [1, 16], strides = [1, 1]} : vector<1x256xf32> to vector<1x16xf32>
    %351 = vector.extract_strided_slice %342 {offsets = [0, 128], sizes = [1, 16], strides = [1, 1]} : vector<1x256xf32> to vector<1x16xf32>
    %352 = vector.extract_strided_slice %342 {offsets = [0, 144], sizes = [1, 16], strides = [1, 1]} : vector<1x256xf32> to vector<1x16xf32>
    %353 = vector.extract_strided_slice %342 {offsets = [0, 160], sizes = [1, 16], strides = [1, 1]} : vector<1x256xf32> to vector<1x16xf32>
    %354 = vector.extract_strided_slice %342 {offsets = [0, 176], sizes = [1, 16], strides = [1, 1]} : vector<1x256xf32> to vector<1x16xf32>
    %355 = vector.extract_strided_slice %342 {offsets = [0, 192], sizes = [1, 16], strides = [1, 1]} : vector<1x256xf32> to vector<1x16xf32>
    %356 = vector.extract_strided_slice %342 {offsets = [0, 208], sizes = [1, 16], strides = [1, 1]} : vector<1x256xf32> to vector<1x16xf32>
    %357 = vector.extract_strided_slice %342 {offsets = [0, 224], sizes = [1, 16], strides = [1, 1]} : vector<1x256xf32> to vector<1x16xf32>
    %358 = vector.extract_strided_slice %342 {offsets = [0, 240], sizes = [1, 16], strides = [1, 1]} : vector<1x256xf32> to vector<1x16xf32>
    %359 = tpu.concatenate %343, %344, %345, %346, %347, %348, %349, %350, %351, %352, %353, %354, %355, %356, %357, %358 in 0 : vector<1x16xf32>, vector<1x16xf32>, vector<1x16xf32>, vector<1x16xf32>, vector<1x16xf32>, vector<1x16xf32>, vector<1x16xf32>, vector<1x16xf32>, vector<1x16xf32>, vector<1x16xf32>, vector<1x16xf32>, vector<1x16xf32>, vector<1x16xf32>, vector<1x16xf32>, vector<1x16xf32>, vector<1x16xf32> -> vector<16x16xf32>
    %cst_39 = arith.constant dense<0xFF800000> : vector<256xf32>
    %360 = vector.multi_reduction <maximumf>, %215, %cst_39 [0] : vector<8x256xf32> to vector<256xf32>
    %361 = vector.shape_cast %360 : vector<256xf32> to vector<1x256xf32>
    %362 = vector.extract_strided_slice %361 {offsets = [0, 0], sizes = [1, 16], strides = [1, 1]} : vector<1x256xf32> to vector<1x16xf32>
    %363 = vector.extract_strided_slice %361 {offsets = [0, 16], sizes = [1, 16], strides = [1, 1]} : vector<1x256xf32> to vector<1x16xf32>
    %364 = vector.extract_strided_slice %361 {offsets = [0, 32], sizes = [1, 16], strides = [1, 1]} : vector<1x256xf32> to vector<1x16xf32>
    %365 = vector.extract_strided_slice %361 {offsets = [0, 48], sizes = [1, 16], strides = [1, 1]} : vector<1x256xf32> to vector<1x16xf32>
    %366 = vector.extract_strided_slice %361 {offsets = [0, 64], sizes = [1, 16], strides = [1, 1]} : vector<1x256xf32> to vector<1x16xf32>
    %367 = vector.extract_strided_slice %361 {offsets = [0, 80], sizes = [1, 16], strides = [1, 1]} : vector<1x256xf32> to vector<1x16xf32>
    %368 = vector.extract_strided_slice %361 {offsets = [0, 96], sizes = [1, 16], strides = [1, 1]} : vector<1x256xf32> to vector<1x16xf32>
    %369 = vector.extract_strided_slice %361 {offsets = [0, 112], sizes = [1, 16], strides = [1, 1]} : vector<1x256xf32> to vector<1x16xf32>
    %370 = vector.extract_strided_slice %361 {offsets = [0, 128], sizes = [1, 16], strides = [1, 1]} : vector<1x256xf32> to vector<1x16xf32>
    %371 = vector.extract_strided_slice %361 {offsets = [0, 144], sizes = [1, 16], strides = [1, 1]} : vector<1x256xf32> to vector<1x16xf32>
    %372 = vector.extract_strided_slice %361 {offsets = [0, 160], sizes = [1, 16], strides = [1, 1]} : vector<1x256xf32> to vector<1x16xf32>
    %373 = vector.extract_strided_slice %361 {offsets = [0, 176], sizes = [1, 16], strides = [1, 1]} : vector<1x256xf32> to vector<1x16xf32>
    %374 = vector.extract_strided_slice %361 {offsets = [0, 192], sizes = [1, 16], strides = [1, 1]} : vector<1x256xf32> to vector<1x16xf32>
    %375 = vector.extract_strided_slice %361 {offsets = [0, 208], sizes = [1, 16], strides = [1, 1]} : vector<1x256xf32> to vector<1x16xf32>
    %376 = vector.extract_strided_slice %361 {offsets = [0, 224], sizes = [1, 16], strides = [1, 1]} : vector<1x256xf32> to vector<1x16xf32>
    %377 = vector.extract_strided_slice %361 {offsets = [0, 240], sizes = [1, 16], strides = [1, 1]} : vector<1x256xf32> to vector<1x16xf32>
    %378 = tpu.concatenate %362, %363, %364, %365, %366, %367, %368, %369, %370, %371, %372, %373, %374, %375, %376, %377 in 0 : vector<1x16xf32>, vector<1x16xf32>, vector<1x16xf32>, vector<1x16xf32>, vector<1x16xf32>, vector<1x16xf32>, vector<1x16xf32>, vector<1x16xf32>, vector<1x16xf32>, vector<1x16xf32>, vector<1x16xf32>, vector<1x16xf32>, vector<1x16xf32>, vector<1x16xf32>, vector<1x16xf32>, vector<1x16xf32> -> vector<16x16xf32>
    %cst_40 = arith.constant 0.000000e+00 : f32
    %379 = vector.broadcast %cst_40 : f32 to vector<16x3xf32>
    %380 = tpu.concatenate %379, %319, %379 in 1 : vector<16x3xf32>, vector<16x16xf32>, vector<16x3xf32> -> vector<16x22xf32>
    %381 = vector.extract_strided_slice %380 {offsets = [0, 0], sizes = [16, 16], strides = [1, 1]} : vector<16x22xf32> to vector<16x16xf32>
    %c0_41 = arith.constant 0 : index
    %c0_42 = arith.constant 0 : index
    %c3_43 = arith.constant 3 : index
    %c0_44 = arith.constant 0 : index
    %382 = vector.load %arg7[%c0_41, %c0_42, %c3_43, %c0_44] : memref<4x7x22x16xf32, #tpu.memory_space<vmem>>, vector<1x1x16x16xf32>
    %383 = vector.shape_cast %382 : vector<1x1x16x16xf32> to vector<16x16xf32>
    %384 = vector.shape_cast %381 : vector<16x16xf32> to vector<1x1x16x16xf32>
    tpu.vector_store %arg7[%c0_41, %c0_42, %c3_43, %c0_44], %384 {strides = array<i32>} : memref<4x7x22x16xf32, #tpu.memory_space<vmem>>, vector<1x1x16x16xf32>,
    %385 = vector.extract_strided_slice %380 {offsets = [0, 1], sizes = [16, 16], strides = [1, 1]} : vector<16x22xf32> to vector<16x16xf32>
    %c0_45 = arith.constant 0 : index
    %c1_46 = arith.constant 1 : index
    %c3_47 = arith.constant 3 : index
    %c0_48 = arith.constant 0 : index
    %386 = vector.load %arg7[%c0_45, %c1_46, %c3_47, %c0_48] : memref<4x7x22x16xf32, #tpu.memory_space<vmem>>, vector<1x1x16x16xf32>
    %387 = vector.shape_cast %386 : vector<1x1x16x16xf32> to vector<16x16xf32>
    %388 = vector.shape_cast %385 : vector<16x16xf32> to vector<1x1x16x16xf32>
    tpu.vector_store %arg7[%c0_45, %c1_46, %c3_47, %c0_48], %388 {strides = array<i32>} : memref<4x7x22x16xf32, #tpu.memory_space<vmem>>, vector<1x1x16x16xf32>,
    %389 = vector.extract_strided_slice %380 {offsets = [0, 2], sizes = [16, 16], strides = [1, 1]} : vector<16x22xf32> to vector<16x16xf32>
    %c0_49 = arith.constant 0 : index
    %c2_50 = arith.constant 2 : index
    %c3_51 = arith.constant 3 : index
    %c0_52 = arith.constant 0 : index
    %390 = vector.load %arg7[%c0_49, %c2_50, %c3_51, %c0_52] : memref<4x7x22x16xf32, #tpu.memory_space<vmem>>, vector<1x1x16x16xf32>
    %391 = vector.shape_cast %390 : vector<1x1x16x16xf32> to vector<16x16xf32>
    %392 = vector.shape_cast %389 : vector<16x16xf32> to vector<1x1x16x16xf32>
    tpu.vector_store %arg7[%c0_49, %c2_50, %c3_51, %c0_52], %392 {strides = array<i32>} : memref<4x7x22x16xf32, #tpu.memory_space<vmem>>, vector<1x1x16x16xf32>,
    %393 = vector.extract_strided_slice %380 {offsets = [0, 3], sizes = [16, 16], strides = [1, 1]} : vector<16x22xf32> to vector<16x16xf32>
    %c0_53 = arith.constant 0 : index
    %c3_54 = arith.constant 3 : index
    %c3_55 = arith.constant 3 : index
    %c0_56 = arith.constant 0 : index
    %394 = vector.load %arg7[%c0_53, %c3_54, %c3_55, %c0_56] : memref<4x7x22x16xf32, #tpu.memory_space<vmem>>, vector<1x1x16x16xf32>
    %395 = vector.shape_cast %394 : vector<1x1x16x16xf32> to vector<16x16xf32>
    %396 = vector.shape_cast %393 : vector<16x16xf32> to vector<1x1x16x16xf32>
    tpu.vector_store %arg7[%c0_53, %c3_54, %c3_55, %c0_56], %396 {strides = array<i32>} : memref<4x7x22x16xf32, #tpu.memory_space<vmem>>, vector<1x1x16x16xf32>,
    %397 = vector.extract_strided_slice %380 {offsets = [0, 4], sizes = [16, 16], strides = [1, 1]} : vector<16x22xf32> to vector<16x16xf32>
    %c0_57 = arith.constant 0 : index
    %c4_58 = arith.constant 4 : index
    %c3_59 = arith.constant 3 : index
    %c0_60 = arith.constant 0 : index
    %398 = vector.load %arg7[%c0_57, %c4_58, %c3_59, %c0_60] : memref<4x7x22x16xf32, #tpu.memory_space<vmem>>, vector<1x1x16x16xf32>
    %399 = vector.shape_cast %398 : vector<1x1x16x16xf32> to vector<16x16xf32>
    %400 = vector.shape_cast %397 : vector<16x16xf32> to vector<1x1x16x16xf32>
    tpu.vector_store %arg7[%c0_57, %c4_58, %c3_59, %c0_60], %400 {strides = array<i32>} : memref<4x7x22x16xf32, #tpu.memory_space<vmem>>, vector<1x1x16x16xf32>,
    %401 = vector.extract_strided_slice %380 {offsets = [0, 5], sizes = [16, 16], strides = [1, 1]} : vector<16x22xf32> to vector<16x16xf32>
    %c0_61 = arith.constant 0 : index
    %c5_62 = arith.constant 5 : index
    %c3_63 = arith.constant 3 : index
    %c0_64 = arith.constant 0 : index
    %402 = vector.load %arg7[%c0_61, %c5_62, %c3_63, %c0_64] : memref<4x7x22x16xf32, #tpu.memory_space<vmem>>, vector<1x1x16x16xf32>
    %403 = vector.shape_cast %402 : vector<1x1x16x16xf32> to vector<16x16xf32>
    %404 = vector.shape_cast %401 : vector<16x16xf32> to vector<1x1x16x16xf32>
    tpu.vector_store %arg7[%c0_61, %c5_62, %c3_63, %c0_64], %404 {strides = array<i32>} : memref<4x7x22x16xf32, #tpu.memory_space<vmem>>, vector<1x1x16x16xf32>,
    %405 = vector.extract_strided_slice %380 {offsets = [0, 6], sizes = [16, 16], strides = [1, 1]} : vector<16x22xf32> to vector<16x16xf32>
    %c0_65 = arith.constant 0 : index
    %c6_66 = arith.constant 6 : index
    %c3_67 = arith.constant 3 : index
    %c0_68 = arith.constant 0 : index
    %406 = vector.load %arg7[%c0_65, %c6_66, %c3_67, %c0_68] : memref<4x7x22x16xf32, #tpu.memory_space<vmem>>, vector<1x1x16x16xf32>
    %407 = vector.shape_cast %406 : vector<1x1x16x16xf32> to vector<16x16xf32>
    %408 = vector.shape_cast %405 : vector<16x16xf32> to vector<1x1x16x16xf32>
    tpu.vector_store %arg7[%c0_65, %c6_66, %c3_67, %c0_68], %408 {strides = array<i32>} : memref<4x7x22x16xf32, #tpu.memory_space<vmem>>, vector<1x1x16x16xf32>,
    %409 = tpu.concatenate %379, %338, %379 in 1 : vector<16x3xf32>, vector<16x16xf32>, vector<16x3xf32> -> vector<16x22xf32>
    %410 = vector.extract_strided_slice %409 {offsets = [0, 0], sizes = [16, 16], strides = [1, 1]} : vector<16x22xf32> to vector<16x16xf32>
    %c1_69 = arith.constant 1 : index
    %c0_70 = arith.constant 0 : index
    %c3_71 = arith.constant 3 : index
    %c0_72 = arith.constant 0 : index
    %411 = vector.load %arg7[%c1_69, %c0_70, %c3_71, %c0_72] : memref<4x7x22x16xf32, #tpu.memory_space<vmem>>, vector<1x1x16x16xf32>
    %412 = vector.shape_cast %411 : vector<1x1x16x16xf32> to vector<16x16xf32>
    %413 = vector.shape_cast %410 : vector<16x16xf32> to vector<1x1x16x16xf32>
    tpu.vector_store %arg7[%c1_69, %c0_70, %c3_71, %c0_72], %413 {strides = array<i32>} : memref<4x7x22x16xf32, #tpu.memory_space<vmem>>, vector<1x1x16x16xf32>,
    %414 = vector.extract_strided_slice %409 {offsets = [0, 1], sizes = [16, 16], strides = [1, 1]} : vector<16x22xf32> to vector<16x16xf32>
    %c1_73 = arith.constant 1 : index
    %c1_74 = arith.constant 1 : index
    %c3_75 = arith.constant 3 : index
    %c0_76 = arith.constant 0 : index
    %415 = vector.load %arg7[%c1_73, %c1_74, %c3_75, %c0_76] : memref<4x7x22x16xf32, #tpu.memory_space<vmem>>, vector<1x1x16x16xf32>
    %416 = vector.shape_cast %415 : vector<1x1x16x16xf32> to vector<16x16xf32>
    %417 = vector.shape_cast %414 : vector<16x16xf32> to vector<1x1x16x16xf32>
    tpu.vector_store %arg7[%c1_73, %c1_74, %c3_75, %c0_76], %417 {strides = array<i32>} : memref<4x7x22x16xf32, #tpu.memory_space<vmem>>, vector<1x1x16x16xf32>,
    %418 = vector.extract_strided_slice %409 {offsets = [0, 2], sizes = [16, 16], strides = [1, 1]} : vector<16x22xf32> to vector<16x16xf32>
    %c1_77 = arith.constant 1 : index
    %c2_78 = arith.constant 2 : index
    %c3_79 = arith.constant 3 : index
    %c0_80 = arith.constant 0 : index
    %419 = vector.load %arg7[%c1_77, %c2_78, %c3_79, %c0_80] : memref<4x7x22x16xf32, #tpu.memory_space<vmem>>, vector<1x1x16x16xf32>
    %420 = vector.shape_cast %419 : vector<1x1x16x16xf32> to vector<16x16xf32>
    %421 = vector.shape_cast %418 : vector<16x16xf32> to vector<1x1x16x16xf32>
    tpu.vector_store %arg7[%c1_77, %c2_78, %c3_79, %c0_80], %421 {strides = array<i32>} : memref<4x7x22x16xf32, #tpu.memory_space<vmem>>, vector<1x1x16x16xf32>,
    %422 = vector.extract_strided_slice %409 {offsets = [0, 3], sizes = [16, 16], strides = [1, 1]} : vector<16x22xf32> to vector<16x16xf32>
    %c1_81 = arith.constant 1 : index
    %c3_82 = arith.constant 3 : index
    %c3_83 = arith.constant 3 : index
    %c0_84 = arith.constant 0 : index
    %423 = vector.load %arg7[%c1_81, %c3_82, %c3_83, %c0_84] : memref<4x7x22x16xf32, #tpu.memory_space<vmem>>, vector<1x1x16x16xf32>
    %424 = vector.shape_cast %423 : vector<1x1x16x16xf32> to vector<16x16xf32>
    %425 = vector.shape_cast %422 : vector<16x16xf32> to vector<1x1x16x16xf32>
    tpu.vector_store %arg7[%c1_81, %c3_82, %c3_83, %c0_84], %425 {strides = array<i32>} : memref<4x7x22x16xf32, #tpu.memory_space<vmem>>, vector<1x1x16x16xf32>,
    %426 = vector.extract_strided_slice %409 {offsets = [0, 4], sizes = [16, 16], strides = [1, 1]} : vector<16x22xf32> to vector<16x16xf32>
    %c1_85 = arith.constant 1 : index
    %c4_86 = arith.constant 4 : index
    %c3_87 = arith.constant 3 : index
    %c0_88 = arith.constant 0 : index
    %427 = vector.load %arg7[%c1_85, %c4_86, %c3_87, %c0_88] : memref<4x7x22x16xf32, #tpu.memory_space<vmem>>, vector<1x1x16x16xf32>
    %428 = vector.shape_cast %427 : vector<1x1x16x16xf32> to vector<16x16xf32>
    %429 = vector.shape_cast %426 : vector<16x16xf32> to vector<1x1x16x16xf32>
    tpu.vector_store %arg7[%c1_85, %c4_86, %c3_87, %c0_88], %429 {strides = array<i32>} : memref<4x7x22x16xf32, #tpu.memory_space<vmem>>, vector<1x1x16x16xf32>,
    %430 = vector.extract_strided_slice %409 {offsets = [0, 5], sizes = [16, 16], strides = [1, 1]} : vector<16x22xf32> to vector<16x16xf32>
    %c1_89 = arith.constant 1 : index
    %c5_90 = arith.constant 5 : index
    %c3_91 = arith.constant 3 : index
    %c0_92 = arith.constant 0 : index
    %431 = vector.load %arg7[%c1_89, %c5_90, %c3_91, %c0_92] : memref<4x7x22x16xf32, #tpu.memory_space<vmem>>, vector<1x1x16x16xf32>
    %432 = vector.shape_cast %431 : vector<1x1x16x16xf32> to vector<16x16xf32>
    %433 = vector.shape_cast %430 : vector<16x16xf32> to vector<1x1x16x16xf32>
    tpu.vector_store %arg7[%c1_89, %c5_90, %c3_91, %c0_92], %433 {strides = array<i32>} : memref<4x7x22x16xf32, #tpu.memory_space<vmem>>, vector<1x1x16x16xf32>,
    %434 = vector.extract_strided_slice %409 {offsets = [0, 6], sizes = [16, 16], strides = [1, 1]} : vector<16x22xf32> to vector<16x16xf32>
    %c1_93 = arith.constant 1 : index
    %c6_94 = arith.constant 6 : index
    %c3_95 = arith.constant 3 : index
    %c0_96 = arith.constant 0 : index
    %435 = vector.load %arg7[%c1_93, %c6_94, %c3_95, %c0_96] : memref<4x7x22x16xf32, #tpu.memory_space<vmem>>, vector<1x1x16x16xf32>
    %436 = vector.shape_cast %435 : vector<1x1x16x16xf32> to vector<16x16xf32>
    %437 = vector.shape_cast %434 : vector<16x16xf32> to vector<1x1x16x16xf32>
    tpu.vector_store %arg7[%c1_93, %c6_94, %c3_95, %c0_96], %437 {strides = array<i32>} : memref<4x7x22x16xf32, #tpu.memory_space<vmem>>, vector<1x1x16x16xf32>,
    %438 = tpu.concatenate %379, %359, %379 in 1 : vector<16x3xf32>, vector<16x16xf32>, vector<16x3xf32> -> vector<16x22xf32>
    %439 = vector.extract_strided_slice %438 {offsets = [0, 0], sizes = [16, 16], strides = [1, 1]} : vector<16x22xf32> to vector<16x16xf32>
    %c2_97 = arith.constant 2 : index
    %c0_98 = arith.constant 0 : index
    %c3_99 = arith.constant 3 : index
    %c0_100 = arith.constant 0 : index
    %440 = vector.load %arg7[%c2_97, %c0_98, %c3_99, %c0_100] : memref<4x7x22x16xf32, #tpu.memory_space<vmem>>, vector<1x1x16x16xf32>
    %441 = vector.shape_cast %440 : vector<1x1x16x16xf32> to vector<16x16xf32>
    %442 = vector.shape_cast %439 : vector<16x16xf32> to vector<1x1x16x16xf32>
    tpu.vector_store %arg7[%c2_97, %c0_98, %c3_99, %c0_100], %442 {strides = array<i32>} : memref<4x7x22x16xf32, #tpu.memory_space<vmem>>, vector<1x1x16x16xf32>,
    %443 = vector.extract_strided_slice %438 {offsets = [0, 1], sizes = [16, 16], strides = [1, 1]} : vector<16x22xf32> to vector<16x16xf32>
    %c2_101 = arith.constant 2 : index
    %c1_102 = arith.constant 1 : index
    %c3_103 = arith.constant 3 : index
    %c0_104 = arith.constant 0 : index
    %444 = vector.load %arg7[%c2_101, %c1_102, %c3_103, %c0_104] : memref<4x7x22x16xf32, #tpu.memory_space<vmem>>, vector<1x1x16x16xf32>
    %445 = vector.shape_cast %444 : vector<1x1x16x16xf32> to vector<16x16xf32>
    %446 = vector.shape_cast %443 : vector<16x16xf32> to vector<1x1x16x16xf32>
    tpu.vector_store %arg7[%c2_101, %c1_102, %c3_103, %c0_104], %446 {strides = array<i32>} : memref<4x7x22x16xf32, #tpu.memory_space<vmem>>, vector<1x1x16x16xf32>,
    %447 = vector.extract_strided_slice %438 {offsets = [0, 2], sizes = [16, 16], strides = [1, 1]} : vector<16x22xf32> to vector<16x16xf32>
    %c2_105 = arith.constant 2 : index
    %c2_106 = arith.constant 2 : index
    %c3_107 = arith.constant 3 : index
    %c0_108 = arith.constant 0 : index
    %448 = vector.load %arg7[%c2_105, %c2_106, %c3_107, %c0_108] : memref<4x7x22x16xf32, #tpu.memory_space<vmem>>, vector<1x1x16x16xf32>
    %449 = vector.shape_cast %448 : vector<1x1x16x16xf32> to vector<16x16xf32>
    %450 = vector.shape_cast %447 : vector<16x16xf32> to vector<1x1x16x16xf32>
    tpu.vector_store %arg7[%c2_105, %c2_106, %c3_107, %c0_108], %450 {strides = array<i32>} : memref<4x7x22x16xf32, #tpu.memory_space<vmem>>, vector<1x1x16x16xf32>,
    %451 = vector.extract_strided_slice %438 {offsets = [0, 3], sizes = [16, 16], strides = [1, 1]} : vector<16x22xf32> to vector<16x16xf32>
    %c2_109 = arith.constant 2 : index
    %c3_110 = arith.constant 3 : index
    %c3_111 = arith.constant 3 : index
    %c0_112 = arith.constant 0 : index
    %452 = vector.load %arg7[%c2_109, %c3_110, %c3_111, %c0_112] : memref<4x7x22x16xf32, #tpu.memory_space<vmem>>, vector<1x1x16x16xf32>
    %453 = vector.shape_cast %452 : vector<1x1x16x16xf32> to vector<16x16xf32>
    %454 = vector.shape_cast %451 : vector<16x16xf32> to vector<1x1x16x16xf32>
    tpu.vector_store %arg7[%c2_109, %c3_110, %c3_111, %c0_112], %454 {strides = array<i32>} : memref<4x7x22x16xf32, #tpu.memory_space<vmem>>, vector<1x1x16x16xf32>,
    %455 = vector.extract_strided_slice %438 {offsets = [0, 4], sizes = [16, 16], strides = [1, 1]} : vector<16x22xf32> to vector<16x16xf32>
    %c2_113 = arith.constant 2 : index
    %c4_114 = arith.constant 4 : index
    %c3_115 = arith.constant 3 : index
    %c0_116 = arith.constant 0 : index
    %456 = vector.load %arg7[%c2_113, %c4_114, %c3_115, %c0_116] : memref<4x7x22x16xf32, #tpu.memory_space<vmem>>, vector<1x1x16x16xf32>
    %457 = vector.shape_cast %456 : vector<1x1x16x16xf32> to vector<16x16xf32>
    %458 = vector.shape_cast %455 : vector<16x16xf32> to vector<1x1x16x16xf32>
    tpu.vector_store %arg7[%c2_113, %c4_114, %c3_115, %c0_116], %458 {strides = array<i32>} : memref<4x7x22x16xf32, #tpu.memory_space<vmem>>, vector<1x1x16x16xf32>,
    %459 = vector.extract_strided_slice %438 {offsets = [0, 5], sizes = [16, 16], strides = [1, 1]} : vector<16x22xf32> to vector<16x16xf32>
    %c2_117 = arith.constant 2 : index
    %c5_118 = arith.constant 5 : index
    %c3_119 = arith.constant 3 : index
    %c0_120 = arith.constant 0 : index
    %460 = vector.load %arg7[%c2_117, %c5_118, %c3_119, %c0_120] : memref<4x7x22x16xf32, #tpu.memory_space<vmem>>, vector<1x1x16x16xf32>
    %461 = vector.shape_cast %460 : vector<1x1x16x16xf32> to vector<16x16xf32>
    %462 = vector.shape_cast %459 : vector<16x16xf32> to vector<1x1x16x16xf32>
    tpu.vector_store %arg7[%c2_117, %c5_118, %c3_119, %c0_120], %462 {strides = array<i32>} : memref<4x7x22x16xf32, #tpu.memory_space<vmem>>, vector<1x1x16x16xf32>,
    %463 = vector.extract_strided_slice %438 {offsets = [0, 6], sizes = [16, 16], strides = [1, 1]} : vector<16x22xf32> to vector<16x16xf32>
    %c2_121 = arith.constant 2 : index
    %c6_122 = arith.constant 6 : index
    %c3_123 = arith.constant 3 : index
    %c0_124 = arith.constant 0 : index
    %464 = vector.load %arg7[%c2_121, %c6_122, %c3_123, %c0_124] : memref<4x7x22x16xf32, #tpu.memory_space<vmem>>, vector<1x1x16x16xf32>
    %465 = vector.shape_cast %464 : vector<1x1x16x16xf32> to vector<16x16xf32>
    %466 = vector.shape_cast %463 : vector<16x16xf32> to vector<1x1x16x16xf32>
    tpu.vector_store %arg7[%c2_121, %c6_122, %c3_123, %c0_124], %466 {strides = array<i32>} : memref<4x7x22x16xf32, #tpu.memory_space<vmem>>, vector<1x1x16x16xf32>,
    %467 = tpu.concatenate %379, %378, %379 in 1 : vector<16x3xf32>, vector<16x16xf32>, vector<16x3xf32> -> vector<16x22xf32>
    %468 = vector.extract_strided_slice %467 {offsets = [0, 0], sizes = [16, 16], strides = [1, 1]} : vector<16x22xf32> to vector<16x16xf32>
    %c3_125 = arith.constant 3 : index
    %c0_126 = arith.constant 0 : index
    %c3_127 = arith.constant 3 : index
    %c0_128 = arith.constant 0 : index
    %469 = vector.load %arg7[%c3_125, %c0_126, %c3_127, %c0_128] : memref<4x7x22x16xf32, #tpu.memory_space<vmem>>, vector<1x1x16x16xf32>
    %470 = vector.shape_cast %469 : vector<1x1x16x16xf32> to vector<16x16xf32>
    %471 = vector.shape_cast %468 : vector<16x16xf32> to vector<1x1x16x16xf32>
    tpu.vector_store %arg7[%c3_125, %c0_126, %c3_127, %c0_128], %471 {strides = array<i32>} : memref<4x7x22x16xf32, #tpu.memory_space<vmem>>, vector<1x1x16x16xf32>,
    %472 = vector.extract_strided_slice %467 {offsets = [0, 1], sizes = [16, 16], strides = [1, 1]} : vector<16x22xf32> to vector<16x16xf32>
    %c3_129 = arith.constant 3 : index
    %c1_130 = arith.constant 1 : index
    %c3_131 = arith.constant 3 : index
    %c0_132 = arith.constant 0 : index
    %473 = vector.load %arg7[%c3_129, %c1_130, %c3_131, %c0_132] : memref<4x7x22x16xf32, #tpu.memory_space<vmem>>, vector<1x1x16x16xf32>
    %474 = vector.shape_cast %473 : vector<1x1x16x16xf32> to vector<16x16xf32>
    %475 = vector.shape_cast %472 : vector<16x16xf32> to vector<1x1x16x16xf32>
    tpu.vector_store %arg7[%c3_129, %c1_130, %c3_131, %c0_132], %475 {strides = array<i32>} : memref<4x7x22x16xf32, #tpu.memory_space<vmem>>, vector<1x1x16x16xf32>,
    %476 = vector.extract_strided_slice %467 {offsets = [0, 2], sizes = [16, 16], strides = [1, 1]} : vector<16x22xf32> to vector<16x16xf32>
    %c3_133 = arith.constant 3 : index
    %c2_134 = arith.constant 2 : index
    %c3_135 = arith.constant 3 : index
    %c0_136 = arith.constant 0 : index
    %477 = vector.load %arg7[%c3_133, %c2_134, %c3_135, %c0_136] : memref<4x7x22x16xf32, #tpu.memory_space<vmem>>, vector<1x1x16x16xf32>
    %478 = vector.shape_cast %477 : vector<1x1x16x16xf32> to vector<16x16xf32>
    %479 = vector.shape_cast %476 : vector<16x16xf32> to vector<1x1x16x16xf32>
    tpu.vector_store %arg7[%c3_133, %c2_134, %c3_135, %c0_136], %479 {strides = array<i32>} : memref<4x7x22x16xf32, #tpu.memory_space<vmem>>, vector<1x1x16x16xf32>,
    %480 = vector.extract_strided_slice %467 {offsets = [0, 3], sizes = [16, 16], strides = [1, 1]} : vector<16x22xf32> to vector<16x16xf32>
    %c3_137 = arith.constant 3 : index
    %c3_138 = arith.constant 3 : index
    %c3_139 = arith.constant 3 : index
    %c0_140 = arith.constant 0 : index
    %481 = vector.load %arg7[%c3_137, %c3_138, %c3_139, %c0_140] : memref<4x7x22x16xf32, #tpu.memory_space<vmem>>, vector<1x1x16x16xf32>
    %482 = vector.shape_cast %481 : vector<1x1x16x16xf32> to vector<16x16xf32>
    %483 = vector.shape_cast %480 : vector<16x16xf32> to vector<1x1x16x16xf32>
    tpu.vector_store %arg7[%c3_137, %c3_138, %c3_139, %c0_140], %483 {strides = array<i32>} : memref<4x7x22x16xf32, #tpu.memory_space<vmem>>, vector<1x1x16x16xf32>,
    %484 = vector.extract_strided_slice %467 {offsets = [0, 4], sizes = [16, 16], strides = [1, 1]} : vector<16x22xf32> to vector<16x16xf32>
    %c3_141 = arith.constant 3 : index
    %c4_142 = arith.constant 4 : index
    %c3_143 = arith.constant 3 : index
    %c0_144 = arith.constant 0 : index
    %485 = vector.load %arg7[%c3_141, %c4_142, %c3_143, %c0_144] : memref<4x7x22x16xf32, #tpu.memory_space<vmem>>, vector<1x1x16x16xf32>
    %486 = vector.shape_cast %485 : vector<1x1x16x16xf32> to vector<16x16xf32>
    %487 = vector.shape_cast %484 : vector<16x16xf32> to vector<1x1x16x16xf32>
    tpu.vector_store %arg7[%c3_141, %c4_142, %c3_143, %c0_144], %487 {strides = array<i32>} : memref<4x7x22x16xf32, #tpu.memory_space<vmem>>, vector<1x1x16x16xf32>,
    %488 = vector.extract_strided_slice %467 {offsets = [0, 5], sizes = [16, 16], strides = [1, 1]} : vector<16x22xf32> to vector<16x16xf32>
    %c3_145 = arith.constant 3 : index
    %c5_146 = arith.constant 5 : index
    %c3_147 = arith.constant 3 : index
    %c0_148 = arith.constant 0 : index
    %489 = vector.load %arg7[%c3_145, %c5_146, %c3_147, %c0_148] : memref<4x7x22x16xf32, #tpu.memory_space<vmem>>, vector<1x1x16x16xf32>
    %490 = vector.shape_cast %489 : vector<1x1x16x16xf32> to vector<16x16xf32>
    %491 = vector.shape_cast %488 : vector<16x16xf32> to vector<1x1x16x16xf32>
    tpu.vector_store %arg7[%c3_145, %c5_146, %c3_147, %c0_148], %491 {strides = array<i32>} : memref<4x7x22x16xf32, #tpu.memory_space<vmem>>, vector<1x1x16x16xf32>,
    %492 = vector.extract_strided_slice %467 {offsets = [0, 6], sizes = [16, 16], strides = [1, 1]} : vector<16x22xf32> to vector<16x16xf32>
    %c3_149 = arith.constant 3 : index
    %c6_150 = arith.constant 6 : index
    %c3_151 = arith.constant 3 : index
    %c0_152 = arith.constant 0 : index
    %493 = vector.load %arg7[%c3_149, %c6_150, %c3_151, %c0_152] : memref<4x7x22x16xf32, #tpu.memory_space<vmem>>, vector<1x1x16x16xf32>
    %494 = vector.shape_cast %493 : vector<1x1x16x16xf32> to vector<16x16xf32>
    %495 = vector.shape_cast %492 : vector<16x16xf32> to vector<1x1x16x16xf32>
    tpu.vector_store %arg7[%c3_149, %c6_150, %c3_151, %c0_152], %495 {strides = array<i32>} : memref<4x7x22x16xf32, #tpu.memory_space<vmem>>, vector<1x1x16x16xf32>,
    %496 = vector.broadcast %209 : f32 to vector<16x16xf32>
    %c0_153 = arith.constant 0 : index
    %c0_154 = arith.constant 0 : index
    %c0_155 = arith.constant 0 : index
    %c0_156 = arith.constant 0 : index
    %497 = vector.load %arg7[%c0_153, %c0_154, %c0_155, %c0_156] : memref<4x7x22x16xf32, #tpu.memory_space<vmem>>, vector<1x1x16x16xf32>
    %498 = vector.shape_cast %497 : vector<1x1x16x16xf32> to vector<16x16xf32>
    %499 = vector.broadcast %12 : f32 to vector<16x16xf32>
    %500 = arith.mulf %499, %498 : vector<16x16xf32>
    %501 = arith.addf %496, %500 : vector<16x16xf32>
    %c0_157 = arith.constant 0 : index
    %c1_158 = arith.constant 1 : index
    %c0_159 = arith.constant 0 : index
    %c0_160 = arith.constant 0 : index
    %502 = vector.load %arg7[%c0_157, %c1_158, %c0_159, %c0_160] : memref<4x7x22x16xf32, #tpu.memory_space<vmem>>, vector<1x1x16x16xf32>
    %503 = vector.shape_cast %502 : vector<1x1x16x16xf32> to vector<16x16xf32>
    %504 = vector.broadcast %13 : f32 to vector<16x16xf32>
    %505 = arith.mulf %504, %503 : vector<16x16xf32>
    %506 = arith.addf %501, %505 : vector<16x16xf32>
    %c0_161 = arith.constant 0 : index
    %c2_162 = arith.constant 2 : index
    %c0_163 = arith.constant 0 : index
    %c0_164 = arith.constant 0 : index
    %507 = vector.load %arg7[%c0_161, %c2_162, %c0_163, %c0_164] : memref<4x7x22x16xf32, #tpu.memory_space<vmem>>, vector<1x1x16x16xf32>
    %508 = vector.shape_cast %507 : vector<1x1x16x16xf32> to vector<16x16xf32>
    %509 = vector.broadcast %14 : f32 to vector<16x16xf32>
    %510 = arith.mulf %509, %508 : vector<16x16xf32>
    %511 = arith.addf %506, %510 : vector<16x16xf32>
    %c0_165 = arith.constant 0 : index
    %c3_166 = arith.constant 3 : index
    %c0_167 = arith.constant 0 : index
    %c0_168 = arith.constant 0 : index
    %512 = vector.load %arg7[%c0_165, %c3_166, %c0_167, %c0_168] : memref<4x7x22x16xf32, #tpu.memory_space<vmem>>, vector<1x1x16x16xf32>
    %513 = vector.shape_cast %512 : vector<1x1x16x16xf32> to vector<16x16xf32>
    %514 = vector.broadcast %15 : f32 to vector<16x16xf32>
    %515 = arith.mulf %514, %513 : vector<16x16xf32>
    %516 = arith.addf %511, %515 : vector<16x16xf32>
    %c0_169 = arith.constant 0 : index
    %c4_170 = arith.constant 4 : index
    %c0_171 = arith.constant 0 : index
    %c0_172 = arith.constant 0 : index
    %517 = vector.load %arg7[%c0_169, %c4_170, %c0_171, %c0_172] : memref<4x7x22x16xf32, #tpu.memory_space<vmem>>, vector<1x1x16x16xf32>
    %518 = vector.shape_cast %517 : vector<1x1x16x16xf32> to vector<16x16xf32>
    %519 = vector.broadcast %16 : f32 to vector<16x16xf32>
    %520 = arith.mulf %519, %518 : vector<16x16xf32>
    %521 = arith.addf %516, %520 : vector<16x16xf32>
    %c0_173 = arith.constant 0 : index
    %c5_174 = arith.constant 5 : index
    %c0_175 = arith.constant 0 : index
    %c0_176 = arith.constant 0 : index
    %522 = vector.load %arg7[%c0_173, %c5_174, %c0_175, %c0_176] : memref<4x7x22x16xf32, #tpu.memory_space<vmem>>, vector<1x1x16x16xf32>
    %523 = vector.shape_cast %522 : vector<1x1x16x16xf32> to vector<16x16xf32>
    %524 = vector.broadcast %17 : f32 to vector<16x16xf32>
    %525 = arith.mulf %524, %523 : vector<16x16xf32>
    %526 = arith.addf %521, %525 : vector<16x16xf32>
    %c0_177 = arith.constant 0 : index
    %c6_178 = arith.constant 6 : index
    %c0_179 = arith.constant 0 : index
    %c0_180 = arith.constant 0 : index
    %527 = vector.load %arg7[%c0_177, %c6_178, %c0_179, %c0_180] : memref<4x7x22x16xf32, #tpu.memory_space<vmem>>, vector<1x1x16x16xf32>
    %528 = vector.shape_cast %527 : vector<1x1x16x16xf32> to vector<16x16xf32>
    %529 = vector.broadcast %18 : f32 to vector<16x16xf32>
    %530 = arith.mulf %529, %528 : vector<16x16xf32>
    %531 = arith.addf %526, %530 : vector<16x16xf32>
    %c0_181 = arith.constant 0 : index
    %c0_182 = arith.constant 0 : index
    %c1_183 = arith.constant 1 : index
    %c0_184 = arith.constant 0 : index
    %532 = vector.load %arg7[%c0_181, %c0_182, %c1_183, %c0_184] : memref<4x7x22x16xf32, #tpu.memory_space<vmem>>, vector<1x1x16x16xf32>
    %533 = vector.shape_cast %532 : vector<1x1x16x16xf32> to vector<16x16xf32>
    %534 = vector.broadcast %19 : f32 to vector<16x16xf32>
    %535 = arith.mulf %534, %533 : vector<16x16xf32>
    %536 = arith.addf %531, %535 : vector<16x16xf32>
    %c0_185 = arith.constant 0 : index
    %c1_186 = arith.constant 1 : index
    %c1_187 = arith.constant 1 : index
    %c0_188 = arith.constant 0 : index
    %537 = vector.load %arg7[%c0_185, %c1_186, %c1_187, %c0_188] : memref<4x7x22x16xf32, #tpu.memory_space<vmem>>, vector<1x1x16x16xf32>
    %538 = vector.shape_cast %537 : vector<1x1x16x16xf32> to vector<16x16xf32>
    %539 = vector.broadcast %20 : f32 to vector<16x16xf32>
    %540 = arith.mulf %539, %538 : vector<16x16xf32>
    %541 = arith.addf %536, %540 : vector<16x16xf32>
    %c0_189 = arith.constant 0 : index
    %c2_190 = arith.constant 2 : index
    %c1_191 = arith.constant 1 : index
    %c0_192 = arith.constant 0 : index
    %542 = vector.load %arg7[%c0_189, %c2_190, %c1_191, %c0_192] : memref<4x7x22x16xf32, #tpu.memory_space<vmem>>, vector<1x1x16x16xf32>
    %543 = vector.shape_cast %542 : vector<1x1x16x16xf32> to vector<16x16xf32>
    %544 = vector.broadcast %21 : f32 to vector<16x16xf32>
    %545 = arith.mulf %544, %543 : vector<16x16xf32>
    %546 = arith.addf %541, %545 : vector<16x16xf32>
    %c0_193 = arith.constant 0 : index
    %c3_194 = arith.constant 3 : index
    %c1_195 = arith.constant 1 : index
    %c0_196 = arith.constant 0 : index
    %547 = vector.load %arg7[%c0_193, %c3_194, %c1_195, %c0_196] : memref<4x7x22x16xf32, #tpu.memory_space<vmem>>, vector<1x1x16x16xf32>
    %548 = vector.shape_cast %547 : vector<1x1x16x16xf32> to vector<16x16xf32>
    %549 = vector.broadcast %22 : f32 to vector<16x16xf32>
    %550 = arith.mulf %549, %548 : vector<16x16xf32>
    %551 = arith.addf %546, %550 : vector<16x16xf32>
    %c0_197 = arith.constant 0 : index
    %c4_198 = arith.constant 4 : index
    %c1_199 = arith.constant 1 : index
    %c0_200 = arith.constant 0 : index
    %552 = vector.load %arg7[%c0_197, %c4_198, %c1_199, %c0_200] : memref<4x7x22x16xf32, #tpu.memory_space<vmem>>, vector<1x1x16x16xf32>
    %553 = vector.shape_cast %552 : vector<1x1x16x16xf32> to vector<16x16xf32>
    %554 = vector.broadcast %23 : f32 to vector<16x16xf32>
    %555 = arith.mulf %554, %553 : vector<16x16xf32>
    %556 = arith.addf %551, %555 : vector<16x16xf32>
    %c0_201 = arith.constant 0 : index
    %c5_202 = arith.constant 5 : index
    %c1_203 = arith.constant 1 : index
    %c0_204 = arith.constant 0 : index
    %557 = vector.load %arg7[%c0_201, %c5_202, %c1_203, %c0_204] : memref<4x7x22x16xf32, #tpu.memory_space<vmem>>, vector<1x1x16x16xf32>
    %558 = vector.shape_cast %557 : vector<1x1x16x16xf32> to vector<16x16xf32>
    %559 = vector.broadcast %24 : f32 to vector<16x16xf32>
    %560 = arith.mulf %559, %558 : vector<16x16xf32>
    %561 = arith.addf %556, %560 : vector<16x16xf32>
    %c0_205 = arith.constant 0 : index
    %c6_206 = arith.constant 6 : index
    %c1_207 = arith.constant 1 : index
    %c0_208 = arith.constant 0 : index
    %562 = vector.load %arg7[%c0_205, %c6_206, %c1_207, %c0_208] : memref<4x7x22x16xf32, #tpu.memory_space<vmem>>, vector<1x1x16x16xf32>
    %563 = vector.shape_cast %562 : vector<1x1x16x16xf32> to vector<16x16xf32>
    %564 = vector.broadcast %25 : f32 to vector<16x16xf32>
    %565 = arith.mulf %564, %563 : vector<16x16xf32>
    %566 = arith.addf %561, %565 : vector<16x16xf32>
    %c0_209 = arith.constant 0 : index
    %c0_210 = arith.constant 0 : index
    %c2_211 = arith.constant 2 : index
    %c0_212 = arith.constant 0 : index
    %567 = vector.load %arg7[%c0_209, %c0_210, %c2_211, %c0_212] : memref<4x7x22x16xf32, #tpu.memory_space<vmem>>, vector<1x1x16x16xf32>
    %568 = vector.shape_cast %567 : vector<1x1x16x16xf32> to vector<16x16xf32>
    %569 = vector.broadcast %26 : f32 to vector<16x16xf32>
    %570 = arith.mulf %569, %568 : vector<16x16xf32>
    %571 = arith.addf %566, %570 : vector<16x16xf32>
    %c0_213 = arith.constant 0 : index
    %c1_214 = arith.constant 1 : index
    %c2_215 = arith.constant 2 : index
    %c0_216 = arith.constant 0 : index
    %572 = vector.load %arg7[%c0_213, %c1_214, %c2_215, %c0_216] : memref<4x7x22x16xf32, #tpu.memory_space<vmem>>, vector<1x1x16x16xf32>
    %573 = vector.shape_cast %572 : vector<1x1x16x16xf32> to vector<16x16xf32>
    %574 = vector.broadcast %27 : f32 to vector<16x16xf32>
    %575 = arith.mulf %574, %573 : vector<16x16xf32>
    %576 = arith.addf %571, %575 : vector<16x16xf32>
    %c0_217 = arith.constant 0 : index
    %c2_218 = arith.constant 2 : index
    %c2_219 = arith.constant 2 : index
    %c0_220 = arith.constant 0 : index
    %577 = vector.load %arg7[%c0_217, %c2_218, %c2_219, %c0_220] : memref<4x7x22x16xf32, #tpu.memory_space<vmem>>, vector<1x1x16x16xf32>
    %578 = vector.shape_cast %577 : vector<1x1x16x16xf32> to vector<16x16xf32>
    %579 = vector.broadcast %28 : f32 to vector<16x16xf32>
    %580 = arith.mulf %579, %578 : vector<16x16xf32>
    %581 = arith.addf %576, %580 : vector<16x16xf32>
    %c0_221 = arith.constant 0 : index
    %c3_222 = arith.constant 3 : index
    %c2_223 = arith.constant 2 : index
    %c0_224 = arith.constant 0 : index
    %582 = vector.load %arg7[%c0_221, %c3_222, %c2_223, %c0_224] : memref<4x7x22x16xf32, #tpu.memory_space<vmem>>, vector<1x1x16x16xf32>
    %583 = vector.shape_cast %582 : vector<1x1x16x16xf32> to vector<16x16xf32>
    %584 = vector.broadcast %29 : f32 to vector<16x16xf32>
    %585 = arith.mulf %584, %583 : vector<16x16xf32>
    %586 = arith.addf %581, %585 : vector<16x16xf32>
    %c0_225 = arith.constant 0 : index
    %c4_226 = arith.constant 4 : index
    %c2_227 = arith.constant 2 : index
    %c0_228 = arith.constant 0 : index
    %587 = vector.load %arg7[%c0_225, %c4_226, %c2_227, %c0_228] : memref<4x7x22x16xf32, #tpu.memory_space<vmem>>, vector<1x1x16x16xf32>
    %588 = vector.shape_cast %587 : vector<1x1x16x16xf32> to vector<16x16xf32>
    %589 = vector.broadcast %30 : f32 to vector<16x16xf32>
    %590 = arith.mulf %589, %588 : vector<16x16xf32>
    %591 = arith.addf %586, %590 : vector<16x16xf32>
    %c0_229 = arith.constant 0 : index
    %c5_230 = arith.constant 5 : index
    %c2_231 = arith.constant 2 : index
    %c0_232 = arith.constant 0 : index
    %592 = vector.load %arg7[%c0_229, %c5_230, %c2_231, %c0_232] : memref<4x7x22x16xf32, #tpu.memory_space<vmem>>, vector<1x1x16x16xf32>
    %593 = vector.shape_cast %592 : vector<1x1x16x16xf32> to vector<16x16xf32>
    %594 = vector.broadcast %31 : f32 to vector<16x16xf32>
    %595 = arith.mulf %594, %593 : vector<16x16xf32>
    %596 = arith.addf %591, %595 : vector<16x16xf32>
    %c0_233 = arith.constant 0 : index
    %c6_234 = arith.constant 6 : index
    %c2_235 = arith.constant 2 : index
    %c0_236 = arith.constant 0 : index
    %597 = vector.load %arg7[%c0_233, %c6_234, %c2_235, %c0_236] : memref<4x7x22x16xf32, #tpu.memory_space<vmem>>, vector<1x1x16x16xf32>
    %598 = vector.shape_cast %597 : vector<1x1x16x16xf32> to vector<16x16xf32>
    %599 = vector.broadcast %32 : f32 to vector<16x16xf32>
    %600 = arith.mulf %599, %598 : vector<16x16xf32>
    %601 = arith.addf %596, %600 : vector<16x16xf32>
    %c0_237 = arith.constant 0 : index
    %c0_238 = arith.constant 0 : index
    %c3_239 = arith.constant 3 : index
    %c0_240 = arith.constant 0 : index
    %602 = vector.load %arg7[%c0_237, %c0_238, %c3_239, %c0_240] : memref<4x7x22x16xf32, #tpu.memory_space<vmem>>, vector<1x1x16x16xf32>
    %603 = vector.shape_cast %602 : vector<1x1x16x16xf32> to vector<16x16xf32>
    %604 = vector.broadcast %33 : f32 to vector<16x16xf32>
    %605 = arith.mulf %604, %603 : vector<16x16xf32>
    %606 = arith.addf %601, %605 : vector<16x16xf32>
    %c0_241 = arith.constant 0 : index
    %c1_242 = arith.constant 1 : index
    %c3_243 = arith.constant 3 : index
    %c0_244 = arith.constant 0 : index
    %607 = vector.load %arg7[%c0_241, %c1_242, %c3_243, %c0_244] : memref<4x7x22x16xf32, #tpu.memory_space<vmem>>, vector<1x1x16x16xf32>
    %608 = vector.shape_cast %607 : vector<1x1x16x16xf32> to vector<16x16xf32>
    %609 = vector.broadcast %34 : f32 to vector<16x16xf32>
    %610 = arith.mulf %609, %608 : vector<16x16xf32>
    %611 = arith.addf %606, %610 : vector<16x16xf32>
    %c0_245 = arith.constant 0 : index
    %c2_246 = arith.constant 2 : index
    %c3_247 = arith.constant 3 : index
    %c0_248 = arith.constant 0 : index
    %612 = vector.load %arg7[%c0_245, %c2_246, %c3_247, %c0_248] : memref<4x7x22x16xf32, #tpu.memory_space<vmem>>, vector<1x1x16x16xf32>
    %613 = vector.shape_cast %612 : vector<1x1x16x16xf32> to vector<16x16xf32>
    %614 = vector.broadcast %35 : f32 to vector<16x16xf32>
    %615 = arith.mulf %614, %613 : vector<16x16xf32>
    %616 = arith.addf %611, %615 : vector<16x16xf32>
    %c0_249 = arith.constant 0 : index
    %c3_250 = arith.constant 3 : index
    %c3_251 = arith.constant 3 : index
    %c0_252 = arith.constant 0 : index
    %617 = vector.load %arg7[%c0_249, %c3_250, %c3_251, %c0_252] : memref<4x7x22x16xf32, #tpu.memory_space<vmem>>, vector<1x1x16x16xf32>
    %618 = vector.shape_cast %617 : vector<1x1x16x16xf32> to vector<16x16xf32>
    %619 = vector.broadcast %36 : f32 to vector<16x16xf32>
    %620 = arith.mulf %619, %618 : vector<16x16xf32>
    %621 = arith.addf %616, %620 : vector<16x16xf32>
    %c0_253 = arith.constant 0 : index
    %c4_254 = arith.constant 4 : index
    %c3_255 = arith.constant 3 : index
    %c0_256 = arith.constant 0 : index
    %622 = vector.load %arg7[%c0_253, %c4_254, %c3_255, %c0_256] : memref<4x7x22x16xf32, #tpu.memory_space<vmem>>, vector<1x1x16x16xf32>
    %623 = vector.shape_cast %622 : vector<1x1x16x16xf32> to vector<16x16xf32>
    %624 = vector.broadcast %37 : f32 to vector<16x16xf32>
    %625 = arith.mulf %624, %623 : vector<16x16xf32>
    %626 = arith.addf %621, %625 : vector<16x16xf32>
    %c0_257 = arith.constant 0 : index
    %c5_258 = arith.constant 5 : index
    %c3_259 = arith.constant 3 : index
    %c0_260 = arith.constant 0 : index
    %627 = vector.load %arg7[%c0_257, %c5_258, %c3_259, %c0_260] : memref<4x7x22x16xf32, #tpu.memory_space<vmem>>, vector<1x1x16x16xf32>
    %628 = vector.shape_cast %627 : vector<1x1x16x16xf32> to vector<16x16xf32>
    %629 = vector.broadcast %38 : f32 to vector<16x16xf32>
    %630 = arith.mulf %629, %628 : vector<16x16xf32>
    %631 = arith.addf %626, %630 : vector<16x16xf32>
    %c0_261 = arith.constant 0 : index
    %c6_262 = arith.constant 6 : index
    %c3_263 = arith.constant 3 : index
    %c0_264 = arith.constant 0 : index
    %632 = vector.load %arg7[%c0_261, %c6_262, %c3_263, %c0_264] : memref<4x7x22x16xf32, #tpu.memory_space<vmem>>, vector<1x1x16x16xf32>
    %633 = vector.shape_cast %632 : vector<1x1x16x16xf32> to vector<16x16xf32>
    %634 = vector.broadcast %39 : f32 to vector<16x16xf32>
    %635 = arith.mulf %634, %633 : vector<16x16xf32>
    %636 = arith.addf %631, %635 : vector<16x16xf32>
    %c0_265 = arith.constant 0 : index
    %c0_266 = arith.constant 0 : index
    %c4_267 = arith.constant 4 : index
    %c0_268 = arith.constant 0 : index
    %637 = vector.load %arg7[%c0_265, %c0_266, %c4_267, %c0_268] : memref<4x7x22x16xf32, #tpu.memory_space<vmem>>, vector<1x1x16x16xf32>
    %638 = vector.shape_cast %637 : vector<1x1x16x16xf32> to vector<16x16xf32>
    %639 = vector.broadcast %40 : f32 to vector<16x16xf32>
    %640 = arith.mulf %639, %638 : vector<16x16xf32>
    %641 = arith.addf %636, %640 : vector<16x16xf32>
    %c0_269 = arith.constant 0 : index
    %c1_270 = arith.constant 1 : index
    %c4_271 = arith.constant 4 : index
    %c0_272 = arith.constant 0 : index
    %642 = vector.load %arg7[%c0_269, %c1_270, %c4_271, %c0_272] : memref<4x7x22x16xf32, #tpu.memory_space<vmem>>, vector<1x1x16x16xf32>
    %643 = vector.shape_cast %642 : vector<1x1x16x16xf32> to vector<16x16xf32>
    %644 = vector.broadcast %41 : f32 to vector<16x16xf32>
    %645 = arith.mulf %644, %643 : vector<16x16xf32>
    %646 = arith.addf %641, %645 : vector<16x16xf32>
    %c0_273 = arith.constant 0 : index
    %c2_274 = arith.constant 2 : index
    %c4_275 = arith.constant 4 : index
    %c0_276 = arith.constant 0 : index
    %647 = vector.load %arg7[%c0_273, %c2_274, %c4_275, %c0_276] : memref<4x7x22x16xf32, #tpu.memory_space<vmem>>, vector<1x1x16x16xf32>
    %648 = vector.shape_cast %647 : vector<1x1x16x16xf32> to vector<16x16xf32>
    %649 = vector.broadcast %42 : f32 to vector<16x16xf32>
    %650 = arith.mulf %649, %648 : vector<16x16xf32>
    %651 = arith.addf %646, %650 : vector<16x16xf32>
    %c0_277 = arith.constant 0 : index
    %c3_278 = arith.constant 3 : index
    %c4_279 = arith.constant 4 : index
    %c0_280 = arith.constant 0 : index
    %652 = vector.load %arg7[%c0_277, %c3_278, %c4_279, %c0_280] : memref<4x7x22x16xf32, #tpu.memory_space<vmem>>, vector<1x1x16x16xf32>
    %653 = vector.shape_cast %652 : vector<1x1x16x16xf32> to vector<16x16xf32>
    %654 = vector.broadcast %43 : f32 to vector<16x16xf32>
    %655 = arith.mulf %654, %653 : vector<16x16xf32>
    %656 = arith.addf %651, %655 : vector<16x16xf32>
    %c0_281 = arith.constant 0 : index
    %c4_282 = arith.constant 4 : index
    %c4_283 = arith.constant 4 : index
    %c0_284 = arith.constant 0 : index
    %657 = vector.load %arg7[%c0_281, %c4_282, %c4_283, %c0_284] : memref<4x7x22x16xf32, #tpu.memory_space<vmem>>, vector<1x1x16x16xf32>
    %658 = vector.shape_cast %657 : vector<1x1x16x16xf32> to vector<16x16xf32>
    %659 = vector.broadcast %44 : f32 to vector<16x16xf32>
    %660 = arith.mulf %659, %658 : vector<16x16xf32>
    %661 = arith.addf %656, %660 : vector<16x16xf32>
    %c0_285 = arith.constant 0 : index
    %c5_286 = arith.constant 5 : index
    %c4_287 = arith.constant 4 : index
    %c0_288 = arith.constant 0 : index
    %662 = vector.load %arg7[%c0_285, %c5_286, %c4_287, %c0_288] : memref<4x7x22x16xf32, #tpu.memory_space<vmem>>, vector<1x1x16x16xf32>
    %663 = vector.shape_cast %662 : vector<1x1x16x16xf32> to vector<16x16xf32>
    %664 = vector.broadcast %45 : f32 to vector<16x16xf32>
    %665 = arith.mulf %664, %663 : vector<16x16xf32>
    %666 = arith.addf %661, %665 : vector<16x16xf32>
    %c0_289 = arith.constant 0 : index
    %c6_290 = arith.constant 6 : index
    %c4_291 = arith.constant 4 : index
    %c0_292 = arith.constant 0 : index
    %667 = vector.load %arg7[%c0_289, %c6_290, %c4_291, %c0_292] : memref<4x7x22x16xf32, #tpu.memory_space<vmem>>, vector<1x1x16x16xf32>
    %668 = vector.shape_cast %667 : vector<1x1x16x16xf32> to vector<16x16xf32>
    %669 = vector.broadcast %46 : f32 to vector<16x16xf32>
    %670 = arith.mulf %669, %668 : vector<16x16xf32>
    %671 = arith.addf %666, %670 : vector<16x16xf32>
    %c0_293 = arith.constant 0 : index
    %c0_294 = arith.constant 0 : index
    %c5_295 = arith.constant 5 : index
    %c0_296 = arith.constant 0 : index
    %672 = vector.load %arg7[%c0_293, %c0_294, %c5_295, %c0_296] : memref<4x7x22x16xf32, #tpu.memory_space<vmem>>, vector<1x1x16x16xf32>
    %673 = vector.shape_cast %672 : vector<1x1x16x16xf32> to vector<16x16xf32>
    %674 = vector.broadcast %47 : f32 to vector<16x16xf32>
    %675 = arith.mulf %674, %673 : vector<16x16xf32>
    %676 = arith.addf %671, %675 : vector<16x16xf32>
    %c0_297 = arith.constant 0 : index
    %c1_298 = arith.constant 1 : index
    %c5_299 = arith.constant 5 : index
    %c0_300 = arith.constant 0 : index
    %677 = vector.load %arg7[%c0_297, %c1_298, %c5_299, %c0_300] : memref<4x7x22x16xf32, #tpu.memory_space<vmem>>, vector<1x1x16x16xf32>
    %678 = vector.shape_cast %677 : vector<1x1x16x16xf32> to vector<16x16xf32>
    %679 = vector.broadcast %48 : f32 to vector<16x16xf32>
    %680 = arith.mulf %679, %678 : vector<16x16xf32>
    %681 = arith.addf %676, %680 : vector<16x16xf32>
    %c0_301 = arith.constant 0 : index
    %c2_302 = arith.constant 2 : index
    %c5_303 = arith.constant 5 : index
    %c0_304 = arith.constant 0 : index
    %682 = vector.load %arg7[%c0_301, %c2_302, %c5_303, %c0_304] : memref<4x7x22x16xf32, #tpu.memory_space<vmem>>, vector<1x1x16x16xf32>
    %683 = vector.shape_cast %682 : vector<1x1x16x16xf32> to vector<16x16xf32>
    %684 = vector.broadcast %49 : f32 to vector<16x16xf32>
    %685 = arith.mulf %684, %683 : vector<16x16xf32>
    %686 = arith.addf %681, %685 : vector<16x16xf32>
    %c0_305 = arith.constant 0 : index
    %c3_306 = arith.constant 3 : index
    %c5_307 = arith.constant 5 : index
    %c0_308 = arith.constant 0 : index
    %687 = vector.load %arg7[%c0_305, %c3_306, %c5_307, %c0_308] : memref<4x7x22x16xf32, #tpu.memory_space<vmem>>, vector<1x1x16x16xf32>
    %688 = vector.shape_cast %687 : vector<1x1x16x16xf32> to vector<16x16xf32>
    %689 = vector.broadcast %50 : f32 to vector<16x16xf32>
    %690 = arith.mulf %689, %688 : vector<16x16xf32>
    %691 = arith.addf %686, %690 : vector<16x16xf32>
    %c0_309 = arith.constant 0 : index
    %c4_310 = arith.constant 4 : index
    %c5_311 = arith.constant 5 : index
    %c0_312 = arith.constant 0 : index
    %692 = vector.load %arg7[%c0_309, %c4_310, %c5_311, %c0_312] : memref<4x7x22x16xf32, #tpu.memory_space<vmem>>, vector<1x1x16x16xf32>
    %693 = vector.shape_cast %692 : vector<1x1x16x16xf32> to vector<16x16xf32>
    %694 = vector.broadcast %51 : f32 to vector<16x16xf32>
    %695 = arith.mulf %694, %693 : vector<16x16xf32>
    %696 = arith.addf %691, %695 : vector<16x16xf32>
    %c0_313 = arith.constant 0 : index
    %c5_314 = arith.constant 5 : index
    %c5_315 = arith.constant 5 : index
    %c0_316 = arith.constant 0 : index
    %697 = vector.load %arg7[%c0_313, %c5_314, %c5_315, %c0_316] : memref<4x7x22x16xf32, #tpu.memory_space<vmem>>, vector<1x1x16x16xf32>
    %698 = vector.shape_cast %697 : vector<1x1x16x16xf32> to vector<16x16xf32>
    %699 = vector.broadcast %52 : f32 to vector<16x16xf32>
    %700 = arith.mulf %699, %698 : vector<16x16xf32>
    %701 = arith.addf %696, %700 : vector<16x16xf32>
    %c0_317 = arith.constant 0 : index
    %c6_318 = arith.constant 6 : index
    %c5_319 = arith.constant 5 : index
    %c0_320 = arith.constant 0 : index
    %702 = vector.load %arg7[%c0_317, %c6_318, %c5_319, %c0_320] : memref<4x7x22x16xf32, #tpu.memory_space<vmem>>, vector<1x1x16x16xf32>
    %703 = vector.shape_cast %702 : vector<1x1x16x16xf32> to vector<16x16xf32>
    %704 = vector.broadcast %53 : f32 to vector<16x16xf32>
    %705 = arith.mulf %704, %703 : vector<16x16xf32>
    %706 = arith.addf %701, %705 : vector<16x16xf32>
    %c0_321 = arith.constant 0 : index
    %c0_322 = arith.constant 0 : index
    %c6_323 = arith.constant 6 : index
    %c0_324 = arith.constant 0 : index
    %707 = vector.load %arg7[%c0_321, %c0_322, %c6_323, %c0_324] : memref<4x7x22x16xf32, #tpu.memory_space<vmem>>, vector<1x1x16x16xf32>
    %708 = vector.shape_cast %707 : vector<1x1x16x16xf32> to vector<16x16xf32>
    %709 = vector.broadcast %54 : f32 to vector<16x16xf32>
    %710 = arith.mulf %709, %708 : vector<16x16xf32>
    %711 = arith.addf %706, %710 : vector<16x16xf32>
    %c0_325 = arith.constant 0 : index
    %c1_326 = arith.constant 1 : index
    %c6_327 = arith.constant 6 : index
    %c0_328 = arith.constant 0 : index
    %712 = vector.load %arg7[%c0_325, %c1_326, %c6_327, %c0_328] : memref<4x7x22x16xf32, #tpu.memory_space<vmem>>, vector<1x1x16x16xf32>
    %713 = vector.shape_cast %712 : vector<1x1x16x16xf32> to vector<16x16xf32>
    %714 = vector.broadcast %55 : f32 to vector<16x16xf32>
    %715 = arith.mulf %714, %713 : vector<16x16xf32>
    %716 = arith.addf %711, %715 : vector<16x16xf32>
    %c0_329 = arith.constant 0 : index
    %c2_330 = arith.constant 2 : index
    %c6_331 = arith.constant 6 : index
    %c0_332 = arith.constant 0 : index
    %717 = vector.load %arg7[%c0_329, %c2_330, %c6_331, %c0_332] : memref<4x7x22x16xf32, #tpu.memory_space<vmem>>, vector<1x1x16x16xf32>
    %718 = vector.shape_cast %717 : vector<1x1x16x16xf32> to vector<16x16xf32>
    %719 = vector.broadcast %56 : f32 to vector<16x16xf32>
    %720 = arith.mulf %719, %718 : vector<16x16xf32>
    %721 = arith.addf %716, %720 : vector<16x16xf32>
    %c0_333 = arith.constant 0 : index
    %c3_334 = arith.constant 3 : index
    %c6_335 = arith.constant 6 : index
    %c0_336 = arith.constant 0 : index
    %722 = vector.load %arg7[%c0_333, %c3_334, %c6_335, %c0_336] : memref<4x7x22x16xf32, #tpu.memory_space<vmem>>, vector<1x1x16x16xf32>
    %723 = vector.shape_cast %722 : vector<1x1x16x16xf32> to vector<16x16xf32>
    %724 = vector.broadcast %57 : f32 to vector<16x16xf32>
    %725 = arith.mulf %724, %723 : vector<16x16xf32>
    %726 = arith.addf %721, %725 : vector<16x16xf32>
    %c0_337 = arith.constant 0 : index
    %c4_338 = arith.constant 4 : index
    %c6_339 = arith.constant 6 : index
    %c0_340 = arith.constant 0 : index
    %727 = vector.load %arg7[%c0_337, %c4_338, %c6_339, %c0_340] : memref<4x7x22x16xf32, #tpu.memory_space<vmem>>, vector<1x1x16x16xf32>
    %728 = vector.shape_cast %727 : vector<1x1x16x16xf32> to vector<16x16xf32>
    %729 = vector.broadcast %58 : f32 to vector<16x16xf32>
    %730 = arith.mulf %729, %728 : vector<16x16xf32>
    %731 = arith.addf %726, %730 : vector<16x16xf32>
    %c0_341 = arith.constant 0 : index
    %c5_342 = arith.constant 5 : index
    %c6_343 = arith.constant 6 : index
    %c0_344 = arith.constant 0 : index
    %732 = vector.load %arg7[%c0_341, %c5_342, %c6_343, %c0_344] : memref<4x7x22x16xf32, #tpu.memory_space<vmem>>, vector<1x1x16x16xf32>
    %733 = vector.shape_cast %732 : vector<1x1x16x16xf32> to vector<16x16xf32>
    %734 = vector.broadcast %59 : f32 to vector<16x16xf32>
    %735 = arith.mulf %734, %733 : vector<16x16xf32>
    %736 = arith.addf %731, %735 : vector<16x16xf32>
    %c0_345 = arith.constant 0 : index
    %c6_346 = arith.constant 6 : index
    %c6_347 = arith.constant 6 : index
    %c0_348 = arith.constant 0 : index
    %737 = vector.load %arg7[%c0_345, %c6_346, %c6_347, %c0_348] : memref<4x7x22x16xf32, #tpu.memory_space<vmem>>, vector<1x1x16x16xf32>
    %738 = vector.shape_cast %737 : vector<1x1x16x16xf32> to vector<16x16xf32>
    %739 = vector.broadcast %60 : f32 to vector<16x16xf32>
    %740 = arith.mulf %739, %738 : vector<16x16xf32>
    %741 = arith.addf %736, %740 : vector<16x16xf32>
    %c1_349 = arith.constant 1 : index
    %c0_350 = arith.constant 0 : index
    %c0_351 = arith.constant 0 : index
    %c0_352 = arith.constant 0 : index
    %742 = vector.load %arg7[%c1_349, %c0_350, %c0_351, %c0_352] : memref<4x7x22x16xf32, #tpu.memory_space<vmem>>, vector<1x1x16x16xf32>
    %743 = vector.shape_cast %742 : vector<1x1x16x16xf32> to vector<16x16xf32>
    %744 = vector.broadcast %61 : f32 to vector<16x16xf32>
    %745 = arith.mulf %744, %743 : vector<16x16xf32>
    %746 = arith.addf %741, %745 : vector<16x16xf32>
    %c1_353 = arith.constant 1 : index
    %c1_354 = arith.constant 1 : index
    %c0_355 = arith.constant 0 : index
    %c0_356 = arith.constant 0 : index
    %747 = vector.load %arg7[%c1_353, %c1_354, %c0_355, %c0_356] : memref<4x7x22x16xf32, #tpu.memory_space<vmem>>, vector<1x1x16x16xf32>
    %748 = vector.shape_cast %747 : vector<1x1x16x16xf32> to vector<16x16xf32>
    %749 = vector.broadcast %62 : f32 to vector<16x16xf32>
    %750 = arith.mulf %749, %748 : vector<16x16xf32>
    %751 = arith.addf %746, %750 : vector<16x16xf32>
    %c1_357 = arith.constant 1 : index
    %c2_358 = arith.constant 2 : index
    %c0_359 = arith.constant 0 : index
    %c0_360 = arith.constant 0 : index
    %752 = vector.load %arg7[%c1_357, %c2_358, %c0_359, %c0_360] : memref<4x7x22x16xf32, #tpu.memory_space<vmem>>, vector<1x1x16x16xf32>
    %753 = vector.shape_cast %752 : vector<1x1x16x16xf32> to vector<16x16xf32>
    %754 = vector.broadcast %63 : f32 to vector<16x16xf32>
    %755 = arith.mulf %754, %753 : vector<16x16xf32>
    %756 = arith.addf %751, %755 : vector<16x16xf32>
    %c1_361 = arith.constant 1 : index
    %c3_362 = arith.constant 3 : index
    %c0_363 = arith.constant 0 : index
    %c0_364 = arith.constant 0 : index
    %757 = vector.load %arg7[%c1_361, %c3_362, %c0_363, %c0_364] : memref<4x7x22x16xf32, #tpu.memory_space<vmem>>, vector<1x1x16x16xf32>
    %758 = vector.shape_cast %757 : vector<1x1x16x16xf32> to vector<16x16xf32>
    %759 = vector.broadcast %64 : f32 to vector<16x16xf32>
    %760 = arith.mulf %759, %758 : vector<16x16xf32>
    %761 = arith.addf %756, %760 : vector<16x16xf32>
    %c1_365 = arith.constant 1 : index
    %c4_366 = arith.constant 4 : index
    %c0_367 = arith.constant 0 : index
    %c0_368 = arith.constant 0 : index
    %762 = vector.load %arg7[%c1_365, %c4_366, %c0_367, %c0_368] : memref<4x7x22x16xf32, #tpu.memory_space<vmem>>, vector<1x1x16x16xf32>
    %763 = vector.shape_cast %762 : vector<1x1x16x16xf32> to vector<16x16xf32>
    %764 = vector.broadcast %65 : f32 to vector<16x16xf32>
    %765 = arith.mulf %764, %763 : vector<16x16xf32>
    %766 = arith.addf %761, %765 : vector<16x16xf32>
    %c1_369 = arith.constant 1 : index
    %c5_370 = arith.constant 5 : index
    %c0_371 = arith.constant 0 : index
    %c0_372 = arith.constant 0 : index
    %767 = vector.load %arg7[%c1_369, %c5_370, %c0_371, %c0_372] : memref<4x7x22x16xf32, #tpu.memory_space<vmem>>, vector<1x1x16x16xf32>
    %768 = vector.shape_cast %767 : vector<1x1x16x16xf32> to vector<16x16xf32>
    %769 = vector.broadcast %66 : f32 to vector<16x16xf32>
    %770 = arith.mulf %769, %768 : vector<16x16xf32>
    %771 = arith.addf %766, %770 : vector<16x16xf32>
    %c1_373 = arith.constant 1 : index
    %c6_374 = arith.constant 6 : index
    %c0_375 = arith.constant 0 : index
    %c0_376 = arith.constant 0 : index
    %772 = vector.load %arg7[%c1_373, %c6_374, %c0_375, %c0_376] : memref<4x7x22x16xf32, #tpu.memory_space<vmem>>, vector<1x1x16x16xf32>
    %773 = vector.shape_cast %772 : vector<1x1x16x16xf32> to vector<16x16xf32>
    %774 = vector.broadcast %67 : f32 to vector<16x16xf32>
    %775 = arith.mulf %774, %773 : vector<16x16xf32>
    %776 = arith.addf %771, %775 : vector<16x16xf32>
    %c1_377 = arith.constant 1 : index
    %c0_378 = arith.constant 0 : index
    %c1_379 = arith.constant 1 : index
    %c0_380 = arith.constant 0 : index
    %777 = vector.load %arg7[%c1_377, %c0_378, %c1_379, %c0_380] : memref<4x7x22x16xf32, #tpu.memory_space<vmem>>, vector<1x1x16x16xf32>
    %778 = vector.shape_cast %777 : vector<1x1x16x16xf32> to vector<16x16xf32>
    %779 = vector.broadcast %68 : f32 to vector<16x16xf32>
    %780 = arith.mulf %779, %778 : vector<16x16xf32>
    %781 = arith.addf %776, %780 : vector<16x16xf32>
    %c1_381 = arith.constant 1 : index
    %c1_382 = arith.constant 1 : index
    %c1_383 = arith.constant 1 : index
    %c0_384 = arith.constant 0 : index
    %782 = vector.load %arg7[%c1_381, %c1_382, %c1_383, %c0_384] : memref<4x7x22x16xf32, #tpu.memory_space<vmem>>, vector<1x1x16x16xf32>
    %783 = vector.shape_cast %782 : vector<1x1x16x16xf32> to vector<16x16xf32>
    %784 = vector.broadcast %69 : f32 to vector<16x16xf32>
    %785 = arith.mulf %784, %783 : vector<16x16xf32>
    %786 = arith.addf %781, %785 : vector<16x16xf32>
    %c1_385 = arith.constant 1 : index
    %c2_386 = arith.constant 2 : index
    %c1_387 = arith.constant 1 : index
    %c0_388 = arith.constant 0 : index
    %787 = vector.load %arg7[%c1_385, %c2_386, %c1_387, %c0_388] : memref<4x7x22x16xf32, #tpu.memory_space<vmem>>, vector<1x1x16x16xf32>
    %788 = vector.shape_cast %787 : vector<1x1x16x16xf32> to vector<16x16xf32>
    %789 = vector.broadcast %70 : f32 to vector<16x16xf32>
    %790 = arith.mulf %789, %788 : vector<16x16xf32>
    %791 = arith.addf %786, %790 : vector<16x16xf32>
    %c1_389 = arith.constant 1 : index
    %c3_390 = arith.constant 3 : index
    %c1_391 = arith.constant 1 : index
    %c0_392 = arith.constant 0 : index
    %792 = vector.load %arg7[%c1_389, %c3_390, %c1_391, %c0_392] : memref<4x7x22x16xf32, #tpu.memory_space<vmem>>, vector<1x1x16x16xf32>
    %793 = vector.shape_cast %792 : vector<1x1x16x16xf32> to vector<16x16xf32>
    %794 = vector.broadcast %71 : f32 to vector<16x16xf32>
    %795 = arith.mulf %794, %793 : vector<16x16xf32>
    %796 = arith.addf %791, %795 : vector<16x16xf32>
    %c1_393 = arith.constant 1 : index
    %c4_394 = arith.constant 4 : index
    %c1_395 = arith.constant 1 : index
    %c0_396 = arith.constant 0 : index
    %797 = vector.load %arg7[%c1_393, %c4_394, %c1_395, %c0_396] : memref<4x7x22x16xf32, #tpu.memory_space<vmem>>, vector<1x1x16x16xf32>
    %798 = vector.shape_cast %797 : vector<1x1x16x16xf32> to vector<16x16xf32>
    %799 = vector.broadcast %72 : f32 to vector<16x16xf32>
    %800 = arith.mulf %799, %798 : vector<16x16xf32>
    %801 = arith.addf %796, %800 : vector<16x16xf32>
    %c1_397 = arith.constant 1 : index
    %c5_398 = arith.constant 5 : index
    %c1_399 = arith.constant 1 : index
    %c0_400 = arith.constant 0 : index
    %802 = vector.load %arg7[%c1_397, %c5_398, %c1_399, %c0_400] : memref<4x7x22x16xf32, #tpu.memory_space<vmem>>, vector<1x1x16x16xf32>
    %803 = vector.shape_cast %802 : vector<1x1x16x16xf32> to vector<16x16xf32>
    %804 = vector.broadcast %73 : f32 to vector<16x16xf32>
    %805 = arith.mulf %804, %803 : vector<16x16xf32>
    %806 = arith.addf %801, %805 : vector<16x16xf32>
    %c1_401 = arith.constant 1 : index
    %c6_402 = arith.constant 6 : index
    %c1_403 = arith.constant 1 : index
    %c0_404 = arith.constant 0 : index
    %807 = vector.load %arg7[%c1_401, %c6_402, %c1_403, %c0_404] : memref<4x7x22x16xf32, #tpu.memory_space<vmem>>, vector<1x1x16x16xf32>
    %808 = vector.shape_cast %807 : vector<1x1x16x16xf32> to vector<16x16xf32>
    %809 = vector.broadcast %74 : f32 to vector<16x16xf32>
    %810 = arith.mulf %809, %808 : vector<16x16xf32>
    %811 = arith.addf %806, %810 : vector<16x16xf32>
    %c1_405 = arith.constant 1 : index
    %c0_406 = arith.constant 0 : index
    %c2_407 = arith.constant 2 : index
    %c0_408 = arith.constant 0 : index
    %812 = vector.load %arg7[%c1_405, %c0_406, %c2_407, %c0_408] : memref<4x7x22x16xf32, #tpu.memory_space<vmem>>, vector<1x1x16x16xf32>
    %813 = vector.shape_cast %812 : vector<1x1x16x16xf32> to vector<16x16xf32>
    %814 = vector.broadcast %75 : f32 to vector<16x16xf32>
    %815 = arith.mulf %814, %813 : vector<16x16xf32>
    %816 = arith.addf %811, %815 : vector<16x16xf32>
    %c1_409 = arith.constant 1 : index
    %c1_410 = arith.constant 1 : index
    %c2_411 = arith.constant 2 : index
    %c0_412 = arith.constant 0 : index
    %817 = vector.load %arg7[%c1_409, %c1_410, %c2_411, %c0_412] : memref<4x7x22x16xf32, #tpu.memory_space<vmem>>, vector<1x1x16x16xf32>
    %818 = vector.shape_cast %817 : vector<1x1x16x16xf32> to vector<16x16xf32>
    %819 = vector.broadcast %76 : f32 to vector<16x16xf32>
    %820 = arith.mulf %819, %818 : vector<16x16xf32>
    %821 = arith.addf %816, %820 : vector<16x16xf32>
    %c1_413 = arith.constant 1 : index
    %c2_414 = arith.constant 2 : index
    %c2_415 = arith.constant 2 : index
    %c0_416 = arith.constant 0 : index
    %822 = vector.load %arg7[%c1_413, %c2_414, %c2_415, %c0_416] : memref<4x7x22x16xf32, #tpu.memory_space<vmem>>, vector<1x1x16x16xf32>
    %823 = vector.shape_cast %822 : vector<1x1x16x16xf32> to vector<16x16xf32>
    %824 = vector.broadcast %77 : f32 to vector<16x16xf32>
    %825 = arith.mulf %824, %823 : vector<16x16xf32>
    %826 = arith.addf %821, %825 : vector<16x16xf32>
    %c1_417 = arith.constant 1 : index
    %c3_418 = arith.constant 3 : index
    %c2_419 = arith.constant 2 : index
    %c0_420 = arith.constant 0 : index
    %827 = vector.load %arg7[%c1_417, %c3_418, %c2_419, %c0_420] : memref<4x7x22x16xf32, #tpu.memory_space<vmem>>, vector<1x1x16x16xf32>
    %828 = vector.shape_cast %827 : vector<1x1x16x16xf32> to vector<16x16xf32>
    %829 = vector.broadcast %78 : f32 to vector<16x16xf32>
    %830 = arith.mulf %829, %828 : vector<16x16xf32>
    %831 = arith.addf %826, %830 : vector<16x16xf32>
    %c1_421 = arith.constant 1 : index
    %c4_422 = arith.constant 4 : index
    %c2_423 = arith.constant 2 : index
    %c0_424 = arith.constant 0 : index
    %832 = vector.load %arg7[%c1_421, %c4_422, %c2_423, %c0_424] : memref<4x7x22x16xf32, #tpu.memory_space<vmem>>, vector<1x1x16x16xf32>
    %833 = vector.shape_cast %832 : vector<1x1x16x16xf32> to vector<16x16xf32>
    %834 = vector.broadcast %79 : f32 to vector<16x16xf32>
    %835 = arith.mulf %834, %833 : vector<16x16xf32>
    %836 = arith.addf %831, %835 : vector<16x16xf32>
    %c1_425 = arith.constant 1 : index
    %c5_426 = arith.constant 5 : index
    %c2_427 = arith.constant 2 : index
    %c0_428 = arith.constant 0 : index
    %837 = vector.load %arg7[%c1_425, %c5_426, %c2_427, %c0_428] : memref<4x7x22x16xf32, #tpu.memory_space<vmem>>, vector<1x1x16x16xf32>
    %838 = vector.shape_cast %837 : vector<1x1x16x16xf32> to vector<16x16xf32>
    %839 = vector.broadcast %80 : f32 to vector<16x16xf32>
    %840 = arith.mulf %839, %838 : vector<16x16xf32>
    %841 = arith.addf %836, %840 : vector<16x16xf32>
    %c1_429 = arith.constant 1 : index
    %c6_430 = arith.constant 6 : index
    %c2_431 = arith.constant 2 : index
    %c0_432 = arith.constant 0 : index
    %842 = vector.load %arg7[%c1_429, %c6_430, %c2_431, %c0_432] : memref<4x7x22x16xf32, #tpu.memory_space<vmem>>, vector<1x1x16x16xf32>
    %843 = vector.shape_cast %842 : vector<1x1x16x16xf32> to vector<16x16xf32>
    %844 = vector.broadcast %81 : f32 to vector<16x16xf32>
    %845 = arith.mulf %844, %843 : vector<16x16xf32>
    %846 = arith.addf %841, %845 : vector<16x16xf32>
    %c1_433 = arith.constant 1 : index
    %c0_434 = arith.constant 0 : index
    %c3_435 = arith.constant 3 : index
    %c0_436 = arith.constant 0 : index
    %847 = vector.load %arg7[%c1_433, %c0_434, %c3_435, %c0_436] : memref<4x7x22x16xf32, #tpu.memory_space<vmem>>, vector<1x1x16x16xf32>
    %848 = vector.shape_cast %847 : vector<1x1x16x16xf32> to vector<16x16xf32>
    %849 = vector.broadcast %82 : f32 to vector<16x16xf32>
    %850 = arith.mulf %849, %848 : vector<16x16xf32>
    %851 = arith.addf %846, %850 : vector<16x16xf32>
    %c1_437 = arith.constant 1 : index
    %c1_438 = arith.constant 1 : index
    %c3_439 = arith.constant 3 : index
    %c0_440 = arith.constant 0 : index
    %852 = vector.load %arg7[%c1_437, %c1_438, %c3_439, %c0_440] : memref<4x7x22x16xf32, #tpu.memory_space<vmem>>, vector<1x1x16x16xf32>
    %853 = vector.shape_cast %852 : vector<1x1x16x16xf32> to vector<16x16xf32>
    %854 = vector.broadcast %83 : f32 to vector<16x16xf32>
    %855 = arith.mulf %854, %853 : vector<16x16xf32>
    %856 = arith.addf %851, %855 : vector<16x16xf32>
    %c1_441 = arith.constant 1 : index
    %c2_442 = arith.constant 2 : index
    %c3_443 = arith.constant 3 : index
    %c0_444 = arith.constant 0 : index
    %857 = vector.load %arg7[%c1_441, %c2_442, %c3_443, %c0_444] : memref<4x7x22x16xf32, #tpu.memory_space<vmem>>, vector<1x1x16x16xf32>
    %858 = vector.shape_cast %857 : vector<1x1x16x16xf32> to vector<16x16xf32>
    %859 = vector.broadcast %84 : f32 to vector<16x16xf32>
    %860 = arith.mulf %859, %858 : vector<16x16xf32>
    %861 = arith.addf %856, %860 : vector<16x16xf32>
    %c1_445 = arith.constant 1 : index
    %c3_446 = arith.constant 3 : index
    %c3_447 = arith.constant 3 : index
    %c0_448 = arith.constant 0 : index
    %862 = vector.load %arg7[%c1_445, %c3_446, %c3_447, %c0_448] : memref<4x7x22x16xf32, #tpu.memory_space<vmem>>, vector<1x1x16x16xf32>
    %863 = vector.shape_cast %862 : vector<1x1x16x16xf32> to vector<16x16xf32>
    %864 = vector.broadcast %85 : f32 to vector<16x16xf32>
    %865 = arith.mulf %864, %863 : vector<16x16xf32>
    %866 = arith.addf %861, %865 : vector<16x16xf32>
    %c1_449 = arith.constant 1 : index
    %c4_450 = arith.constant 4 : index
    %c3_451 = arith.constant 3 : index
    %c0_452 = arith.constant 0 : index
    %867 = vector.load %arg7[%c1_449, %c4_450, %c3_451, %c0_452] : memref<4x7x22x16xf32, #tpu.memory_space<vmem>>, vector<1x1x16x16xf32>
    %868 = vector.shape_cast %867 : vector<1x1x16x16xf32> to vector<16x16xf32>
    %869 = vector.broadcast %86 : f32 to vector<16x16xf32>
    %870 = arith.mulf %869, %868 : vector<16x16xf32>
    %871 = arith.addf %866, %870 : vector<16x16xf32>
    %c1_453 = arith.constant 1 : index
    %c5_454 = arith.constant 5 : index
    %c3_455 = arith.constant 3 : index
    %c0_456 = arith.constant 0 : index
    %872 = vector.load %arg7[%c1_453, %c5_454, %c3_455, %c0_456] : memref<4x7x22x16xf32, #tpu.memory_space<vmem>>, vector<1x1x16x16xf32>
    %873 = vector.shape_cast %872 : vector<1x1x16x16xf32> to vector<16x16xf32>
    %874 = vector.broadcast %87 : f32 to vector<16x16xf32>
    %875 = arith.mulf %874, %873 : vector<16x16xf32>
    %876 = arith.addf %871, %875 : vector<16x16xf32>
    %c1_457 = arith.constant 1 : index
    %c6_458 = arith.constant 6 : index
    %c3_459 = arith.constant 3 : index
    %c0_460 = arith.constant 0 : index
    %877 = vector.load %arg7[%c1_457, %c6_458, %c3_459, %c0_460] : memref<4x7x22x16xf32, #tpu.memory_space<vmem>>, vector<1x1x16x16xf32>
    %878 = vector.shape_cast %877 : vector<1x1x16x16xf32> to vector<16x16xf32>
    %879 = vector.broadcast %88 : f32 to vector<16x16xf32>
    %880 = arith.mulf %879, %878 : vector<16x16xf32>
    %881 = arith.addf %876, %880 : vector<16x16xf32>
    %c1_461 = arith.constant 1 : index
    %c0_462 = arith.constant 0 : index
    %c4_463 = arith.constant 4 : index
    %c0_464 = arith.constant 0 : index
    %882 = vector.load %arg7[%c1_461, %c0_462, %c4_463, %c0_464] : memref<4x7x22x16xf32, #tpu.memory_space<vmem>>, vector<1x1x16x16xf32>
    %883 = vector.shape_cast %882 : vector<1x1x16x16xf32> to vector<16x16xf32>
    %884 = vector.broadcast %89 : f32 to vector<16x16xf32>
    %885 = arith.mulf %884, %883 : vector<16x16xf32>
    %886 = arith.addf %881, %885 : vector<16x16xf32>
    %c1_465 = arith.constant 1 : index
    %c1_466 = arith.constant 1 : index
    %c4_467 = arith.constant 4 : index
    %c0_468 = arith.constant 0 : index
    %887 = vector.load %arg7[%c1_465, %c1_466, %c4_467, %c0_468] : memref<4x7x22x16xf32, #tpu.memory_space<vmem>>, vector<1x1x16x16xf32>
    %888 = vector.shape_cast %887 : vector<1x1x16x16xf32> to vector<16x16xf32>
    %889 = vector.broadcast %90 : f32 to vector<16x16xf32>
    %890 = arith.mulf %889, %888 : vector<16x16xf32>
    %891 = arith.addf %886, %890 : vector<16x16xf32>
    %c1_469 = arith.constant 1 : index
    %c2_470 = arith.constant 2 : index
    %c4_471 = arith.constant 4 : index
    %c0_472 = arith.constant 0 : index
    %892 = vector.load %arg7[%c1_469, %c2_470, %c4_471, %c0_472] : memref<4x7x22x16xf32, #tpu.memory_space<vmem>>, vector<1x1x16x16xf32>
    %893 = vector.shape_cast %892 : vector<1x1x16x16xf32> to vector<16x16xf32>
    %894 = vector.broadcast %91 : f32 to vector<16x16xf32>
    %895 = arith.mulf %894, %893 : vector<16x16xf32>
    %896 = arith.addf %891, %895 : vector<16x16xf32>
    %c1_473 = arith.constant 1 : index
    %c3_474 = arith.constant 3 : index
    %c4_475 = arith.constant 4 : index
    %c0_476 = arith.constant 0 : index
    %897 = vector.load %arg7[%c1_473, %c3_474, %c4_475, %c0_476] : memref<4x7x22x16xf32, #tpu.memory_space<vmem>>, vector<1x1x16x16xf32>
    %898 = vector.shape_cast %897 : vector<1x1x16x16xf32> to vector<16x16xf32>
    %899 = vector.broadcast %92 : f32 to vector<16x16xf32>
    %900 = arith.mulf %899, %898 : vector<16x16xf32>
    %901 = arith.addf %896, %900 : vector<16x16xf32>
    %c1_477 = arith.constant 1 : index
    %c4_478 = arith.constant 4 : index
    %c4_479 = arith.constant 4 : index
    %c0_480 = arith.constant 0 : index
    %902 = vector.load %arg7[%c1_477, %c4_478, %c4_479, %c0_480] : memref<4x7x22x16xf32, #tpu.memory_space<vmem>>, vector<1x1x16x16xf32>
    %903 = vector.shape_cast %902 : vector<1x1x16x16xf32> to vector<16x16xf32>
    %904 = vector.broadcast %93 : f32 to vector<16x16xf32>
    %905 = arith.mulf %904, %903 : vector<16x16xf32>
    %906 = arith.addf %901, %905 : vector<16x16xf32>
    %c1_481 = arith.constant 1 : index
    %c5_482 = arith.constant 5 : index
    %c4_483 = arith.constant 4 : index
    %c0_484 = arith.constant 0 : index
    %907 = vector.load %arg7[%c1_481, %c5_482, %c4_483, %c0_484] : memref<4x7x22x16xf32, #tpu.memory_space<vmem>>, vector<1x1x16x16xf32>
    %908 = vector.shape_cast %907 : vector<1x1x16x16xf32> to vector<16x16xf32>
    %909 = vector.broadcast %94 : f32 to vector<16x16xf32>
    %910 = arith.mulf %909, %908 : vector<16x16xf32>
    %911 = arith.addf %906, %910 : vector<16x16xf32>
    %c1_485 = arith.constant 1 : index
    %c6_486 = arith.constant 6 : index
    %c4_487 = arith.constant 4 : index
    %c0_488 = arith.constant 0 : index
    %912 = vector.load %arg7[%c1_485, %c6_486, %c4_487, %c0_488] : memref<4x7x22x16xf32, #tpu.memory_space<vmem>>, vector<1x1x16x16xf32>
    %913 = vector.shape_cast %912 : vector<1x1x16x16xf32> to vector<16x16xf32>
    %914 = vector.broadcast %95 : f32 to vector<16x16xf32>
    %915 = arith.mulf %914, %913 : vector<16x16xf32>
    %916 = arith.addf %911, %915 : vector<16x16xf32>
    %c1_489 = arith.constant 1 : index
    %c0_490 = arith.constant 0 : index
    %c5_491 = arith.constant 5 : index
    %c0_492 = arith.constant 0 : index
    %917 = vector.load %arg7[%c1_489, %c0_490, %c5_491, %c0_492] : memref<4x7x22x16xf32, #tpu.memory_space<vmem>>, vector<1x1x16x16xf32>
    %918 = vector.shape_cast %917 : vector<1x1x16x16xf32> to vector<16x16xf32>
    %919 = vector.broadcast %96 : f32 to vector<16x16xf32>
    %920 = arith.mulf %919, %918 : vector<16x16xf32>
    %921 = arith.addf %916, %920 : vector<16x16xf32>
    %c1_493 = arith.constant 1 : index
    %c1_494 = arith.constant 1 : index
    %c5_495 = arith.constant 5 : index
    %c0_496 = arith.constant 0 : index
    %922 = vector.load %arg7[%c1_493, %c1_494, %c5_495, %c0_496] : memref<4x7x22x16xf32, #tpu.memory_space<vmem>>, vector<1x1x16x16xf32>
    %923 = vector.shape_cast %922 : vector<1x1x16x16xf32> to vector<16x16xf32>
    %924 = vector.broadcast %97 : f32 to vector<16x16xf32>
    %925 = arith.mulf %924, %923 : vector<16x16xf32>
    %926 = arith.addf %921, %925 : vector<16x16xf32>
    %c1_497 = arith.constant 1 : index
    %c2_498 = arith.constant 2 : index
    %c5_499 = arith.constant 5 : index
    %c0_500 = arith.constant 0 : index
    %927 = vector.load %arg7[%c1_497, %c2_498, %c5_499, %c0_500] : memref<4x7x22x16xf32, #tpu.memory_space<vmem>>, vector<1x1x16x16xf32>
    %928 = vector.shape_cast %927 : vector<1x1x16x16xf32> to vector<16x16xf32>
    %929 = vector.broadcast %98 : f32 to vector<16x16xf32>
    %930 = arith.mulf %929, %928 : vector<16x16xf32>
    %931 = arith.addf %926, %930 : vector<16x16xf32>
    %c1_501 = arith.constant 1 : index
    %c3_502 = arith.constant 3 : index
    %c5_503 = arith.constant 5 : index
    %c0_504 = arith.constant 0 : index
    %932 = vector.load %arg7[%c1_501, %c3_502, %c5_503, %c0_504] : memref<4x7x22x16xf32, #tpu.memory_space<vmem>>, vector<1x1x16x16xf32>
    %933 = vector.shape_cast %932 : vector<1x1x16x16xf32> to vector<16x16xf32>
    %934 = vector.broadcast %99 : f32 to vector<16x16xf32>
    %935 = arith.mulf %934, %933 : vector<16x16xf32>
    %936 = arith.addf %931, %935 : vector<16x16xf32>
    %c1_505 = arith.constant 1 : index
    %c4_506 = arith.constant 4 : index
    %c5_507 = arith.constant 5 : index
    %c0_508 = arith.constant 0 : index
    %937 = vector.load %arg7[%c1_505, %c4_506, %c5_507, %c0_508] : memref<4x7x22x16xf32, #tpu.memory_space<vmem>>, vector<1x1x16x16xf32>
    %938 = vector.shape_cast %937 : vector<1x1x16x16xf32> to vector<16x16xf32>
    %939 = vector.broadcast %100 : f32 to vector<16x16xf32>
    %940 = arith.mulf %939, %938 : vector<16x16xf32>
    %941 = arith.addf %936, %940 : vector<16x16xf32>
    %c1_509 = arith.constant 1 : index
    %c5_510 = arith.constant 5 : index
    %c5_511 = arith.constant 5 : index
    %c0_512 = arith.constant 0 : index
    %942 = vector.load %arg7[%c1_509, %c5_510, %c5_511, %c0_512] : memref<4x7x22x16xf32, #tpu.memory_space<vmem>>, vector<1x1x16x16xf32>
    %943 = vector.shape_cast %942 : vector<1x1x16x16xf32> to vector<16x16xf32>
    %944 = vector.broadcast %101 : f32 to vector<16x16xf32>
    %945 = arith.mulf %944, %943 : vector<16x16xf32>
    %946 = arith.addf %941, %945 : vector<16x16xf32>
    %c1_513 = arith.constant 1 : index
    %c6_514 = arith.constant 6 : index
    %c5_515 = arith.constant 5 : index
    %c0_516 = arith.constant 0 : index
    %947 = vector.load %arg7[%c1_513, %c6_514, %c5_515, %c0_516] : memref<4x7x22x16xf32, #tpu.memory_space<vmem>>, vector<1x1x16x16xf32>
    %948 = vector.shape_cast %947 : vector<1x1x16x16xf32> to vector<16x16xf32>
    %949 = vector.broadcast %102 : f32 to vector<16x16xf32>
    %950 = arith.mulf %949, %948 : vector<16x16xf32>
    %951 = arith.addf %946, %950 : vector<16x16xf32>
    %c1_517 = arith.constant 1 : index
    %c0_518 = arith.constant 0 : index
    %c6_519 = arith.constant 6 : index
    %c0_520 = arith.constant 0 : index
    %952 = vector.load %arg7[%c1_517, %c0_518, %c6_519, %c0_520] : memref<4x7x22x16xf32, #tpu.memory_space<vmem>>, vector<1x1x16x16xf32>
    %953 = vector.shape_cast %952 : vector<1x1x16x16xf32> to vector<16x16xf32>
    %954 = vector.broadcast %103 : f32 to vector<16x16xf32>
    %955 = arith.mulf %954, %953 : vector<16x16xf32>
    %956 = arith.addf %951, %955 : vector<16x16xf32>
    %c1_521 = arith.constant 1 : index
    %c1_522 = arith.constant 1 : index
    %c6_523 = arith.constant 6 : index
    %c0_524 = arith.constant 0 : index
    %957 = vector.load %arg7[%c1_521, %c1_522, %c6_523, %c0_524] : memref<4x7x22x16xf32, #tpu.memory_space<vmem>>, vector<1x1x16x16xf32>
    %958 = vector.shape_cast %957 : vector<1x1x16x16xf32> to vector<16x16xf32>
    %959 = vector.broadcast %104 : f32 to vector<16x16xf32>
    %960 = arith.mulf %959, %958 : vector<16x16xf32>
    %961 = arith.addf %956, %960 : vector<16x16xf32>
    %c1_525 = arith.constant 1 : index
    %c2_526 = arith.constant 2 : index
    %c6_527 = arith.constant 6 : index
    %c0_528 = arith.constant 0 : index
    %962 = vector.load %arg7[%c1_525, %c2_526, %c6_527, %c0_528] : memref<4x7x22x16xf32, #tpu.memory_space<vmem>>, vector<1x1x16x16xf32>
    %963 = vector.shape_cast %962 : vector<1x1x16x16xf32> to vector<16x16xf32>
    %964 = vector.broadcast %105 : f32 to vector<16x16xf32>
    %965 = arith.mulf %964, %963 : vector<16x16xf32>
    %966 = arith.addf %961, %965 : vector<16x16xf32>
    %c1_529 = arith.constant 1 : index
    %c3_530 = arith.constant 3 : index
    %c6_531 = arith.constant 6 : index
    %c0_532 = arith.constant 0 : index
    %967 = vector.load %arg7[%c1_529, %c3_530, %c6_531, %c0_532] : memref<4x7x22x16xf32, #tpu.memory_space<vmem>>, vector<1x1x16x16xf32>
    %968 = vector.shape_cast %967 : vector<1x1x16x16xf32> to vector<16x16xf32>
    %969 = vector.broadcast %106 : f32 to vector<16x16xf32>
    %970 = arith.mulf %969, %968 : vector<16x16xf32>
    %971 = arith.addf %966, %970 : vector<16x16xf32>
    %c1_533 = arith.constant 1 : index
    %c4_534 = arith.constant 4 : index
    %c6_535 = arith.constant 6 : index
    %c0_536 = arith.constant 0 : index
    %972 = vector.load %arg7[%c1_533, %c4_534, %c6_535, %c0_536] : memref<4x7x22x16xf32, #tpu.memory_space<vmem>>, vector<1x1x16x16xf32>
    %973 = vector.shape_cast %972 : vector<1x1x16x16xf32> to vector<16x16xf32>
    %974 = vector.broadcast %107 : f32 to vector<16x16xf32>
    %975 = arith.mulf %974, %973 : vector<16x16xf32>
    %976 = arith.addf %971, %975 : vector<16x16xf32>
    %c1_537 = arith.constant 1 : index
    %c5_538 = arith.constant 5 : index
    %c6_539 = arith.constant 6 : index
    %c0_540 = arith.constant 0 : index
    %977 = vector.load %arg7[%c1_537, %c5_538, %c6_539, %c0_540] : memref<4x7x22x16xf32, #tpu.memory_space<vmem>>, vector<1x1x16x16xf32>
    %978 = vector.shape_cast %977 : vector<1x1x16x16xf32> to vector<16x16xf32>
    %979 = vector.broadcast %108 : f32 to vector<16x16xf32>
    %980 = arith.mulf %979, %978 : vector<16x16xf32>
    %981 = arith.addf %976, %980 : vector<16x16xf32>
    %c1_541 = arith.constant 1 : index
    %c6_542 = arith.constant 6 : index
    %c6_543 = arith.constant 6 : index
    %c0_544 = arith.constant 0 : index
    %982 = vector.load %arg7[%c1_541, %c6_542, %c6_543, %c0_544] : memref<4x7x22x16xf32, #tpu.memory_space<vmem>>, vector<1x1x16x16xf32>
    %983 = vector.shape_cast %982 : vector<1x1x16x16xf32> to vector<16x16xf32>
    %984 = vector.broadcast %109 : f32 to vector<16x16xf32>
    %985 = arith.mulf %984, %983 : vector<16x16xf32>
    %986 = arith.addf %981, %985 : vector<16x16xf32>
    %c2_545 = arith.constant 2 : index
    %c0_546 = arith.constant 0 : index
    %c0_547 = arith.constant 0 : index
    %c0_548 = arith.constant 0 : index
    %987 = vector.load %arg7[%c2_545, %c0_546, %c0_547, %c0_548] : memref<4x7x22x16xf32, #tpu.memory_space<vmem>>, vector<1x1x16x16xf32>
    %988 = vector.shape_cast %987 : vector<1x1x16x16xf32> to vector<16x16xf32>
    %989 = vector.broadcast %110 : f32 to vector<16x16xf32>
    %990 = arith.mulf %989, %988 : vector<16x16xf32>
    %991 = arith.addf %986, %990 : vector<16x16xf32>
    %c2_549 = arith.constant 2 : index
    %c1_550 = arith.constant 1 : index
    %c0_551 = arith.constant 0 : index
    %c0_552 = arith.constant 0 : index
    %992 = vector.load %arg7[%c2_549, %c1_550, %c0_551, %c0_552] : memref<4x7x22x16xf32, #tpu.memory_space<vmem>>, vector<1x1x16x16xf32>
    %993 = vector.shape_cast %992 : vector<1x1x16x16xf32> to vector<16x16xf32>
    %994 = vector.broadcast %111 : f32 to vector<16x16xf32>
    %995 = arith.mulf %994, %993 : vector<16x16xf32>
    %996 = arith.addf %991, %995 : vector<16x16xf32>
    %c2_553 = arith.constant 2 : index
    %c2_554 = arith.constant 2 : index
    %c0_555 = arith.constant 0 : index
    %c0_556 = arith.constant 0 : index
    %997 = vector.load %arg7[%c2_553, %c2_554, %c0_555, %c0_556] : memref<4x7x22x16xf32, #tpu.memory_space<vmem>>, vector<1x1x16x16xf32>
    %998 = vector.shape_cast %997 : vector<1x1x16x16xf32> to vector<16x16xf32>
    %999 = vector.broadcast %112 : f32 to vector<16x16xf32>
    %1000 = arith.mulf %999, %998 : vector<16x16xf32>
    %1001 = arith.addf %996, %1000 : vector<16x16xf32>
    %c2_557 = arith.constant 2 : index
    %c3_558 = arith.constant 3 : index
    %c0_559 = arith.constant 0 : index
    %c0_560 = arith.constant 0 : index
    %1002 = vector.load %arg7[%c2_557, %c3_558, %c0_559, %c0_560] : memref<4x7x22x16xf32, #tpu.memory_space<vmem>>, vector<1x1x16x16xf32>
    %1003 = vector.shape_cast %1002 : vector<1x1x16x16xf32> to vector<16x16xf32>
    %1004 = vector.broadcast %113 : f32 to vector<16x16xf32>
    %1005 = arith.mulf %1004, %1003 : vector<16x16xf32>
    %1006 = arith.addf %1001, %1005 : vector<16x16xf32>
    %c2_561 = arith.constant 2 : index
    %c4_562 = arith.constant 4 : index
    %c0_563 = arith.constant 0 : index
    %c0_564 = arith.constant 0 : index
    %1007 = vector.load %arg7[%c2_561, %c4_562, %c0_563, %c0_564] : memref<4x7x22x16xf32, #tpu.memory_space<vmem>>, vector<1x1x16x16xf32>
    %1008 = vector.shape_cast %1007 : vector<1x1x16x16xf32> to vector<16x16xf32>
    %1009 = vector.broadcast %114 : f32 to vector<16x16xf32>
    %1010 = arith.mulf %1009, %1008 : vector<16x16xf32>
    %1011 = arith.addf %1006, %1010 : vector<16x16xf32>
    %c2_565 = arith.constant 2 : index
    %c5_566 = arith.constant 5 : index
    %c0_567 = arith.constant 0 : index
    %c0_568 = arith.constant 0 : index
    %1012 = vector.load %arg7[%c2_565, %c5_566, %c0_567, %c0_568] : memref<4x7x22x16xf32, #tpu.memory_space<vmem>>, vector<1x1x16x16xf32>
    %1013 = vector.shape_cast %1012 : vector<1x1x16x16xf32> to vector<16x16xf32>
    %1014 = vector.broadcast %115 : f32 to vector<16x16xf32>
    %1015 = arith.mulf %1014, %1013 : vector<16x16xf32>
    %1016 = arith.addf %1011, %1015 : vector<16x16xf32>
    %c2_569 = arith.constant 2 : index
    %c6_570 = arith.constant 6 : index
    %c0_571 = arith.constant 0 : index
    %c0_572 = arith.constant 0 : index
    %1017 = vector.load %arg7[%c2_569, %c6_570, %c0_571, %c0_572] : memref<4x7x22x16xf32, #tpu.memory_space<vmem>>, vector<1x1x16x16xf32>
    %1018 = vector.shape_cast %1017 : vector<1x1x16x16xf32> to vector<16x16xf32>
    %1019 = vector.broadcast %116 : f32 to vector<16x16xf32>
    %1020 = arith.mulf %1019, %1018 : vector<16x16xf32>
    %1021 = arith.addf %1016, %1020 : vector<16x16xf32>
    %c2_573 = arith.constant 2 : index
    %c0_574 = arith.constant 0 : index
    %c1_575 = arith.constant 1 : index
    %c0_576 = arith.constant 0 : index
    %1022 = vector.load %arg7[%c2_573, %c0_574, %c1_575, %c0_576] : memref<4x7x22x16xf32, #tpu.memory_space<vmem>>, vector<1x1x16x16xf32>
    %1023 = vector.shape_cast %1022 : vector<1x1x16x16xf32> to vector<16x16xf32>
    %1024 = vector.broadcast %117 : f32 to vector<16x16xf32>
    %1025 = arith.mulf %1024, %1023 : vector<16x16xf32>
    %1026 = arith.addf %1021, %1025 : vector<16x16xf32>
    %c2_577 = arith.constant 2 : index
    %c1_578 = arith.constant 1 : index
    %c1_579 = arith.constant 1 : index
    %c0_580 = arith.constant 0 : index
    %1027 = vector.load %arg7[%c2_577, %c1_578, %c1_579, %c0_580] : memref<4x7x22x16xf32, #tpu.memory_space<vmem>>, vector<1x1x16x16xf32>
    %1028 = vector.shape_cast %1027 : vector<1x1x16x16xf32> to vector<16x16xf32>
    %1029 = vector.broadcast %118 : f32 to vector<16x16xf32>
    %1030 = arith.mulf %1029, %1028 : vector<16x16xf32>
    %1031 = arith.addf %1026, %1030 : vector<16x16xf32>
    %c2_581 = arith.constant 2 : index
    %c2_582 = arith.constant 2 : index
    %c1_583 = arith.constant 1 : index
    %c0_584 = arith.constant 0 : index
    %1032 = vector.load %arg7[%c2_581, %c2_582, %c1_583, %c0_584] : memref<4x7x22x16xf32, #tpu.memory_space<vmem>>, vector<1x1x16x16xf32>
    %1033 = vector.shape_cast %1032 : vector<1x1x16x16xf32> to vector<16x16xf32>
    %1034 = vector.broadcast %119 : f32 to vector<16x16xf32>
    %1035 = arith.mulf %1034, %1033 : vector<16x16xf32>
    %1036 = arith.addf %1031, %1035 : vector<16x16xf32>
    %c2_585 = arith.constant 2 : index
    %c3_586 = arith.constant 3 : index
    %c1_587 = arith.constant 1 : index
    %c0_588 = arith.constant 0 : index
    %1037 = vector.load %arg7[%c2_585, %c3_586, %c1_587, %c0_588] : memref<4x7x22x16xf32, #tpu.memory_space<vmem>>, vector<1x1x16x16xf32>
    %1038 = vector.shape_cast %1037 : vector<1x1x16x16xf32> to vector<16x16xf32>
    %1039 = vector.broadcast %120 : f32 to vector<16x16xf32>
    %1040 = arith.mulf %1039, %1038 : vector<16x16xf32>
    %1041 = arith.addf %1036, %1040 : vector<16x16xf32>
    %c2_589 = arith.constant 2 : index
    %c4_590 = arith.constant 4 : index
    %c1_591 = arith.constant 1 : index
    %c0_592 = arith.constant 0 : index
    %1042 = vector.load %arg7[%c2_589, %c4_590, %c1_591, %c0_592] : memref<4x7x22x16xf32, #tpu.memory_space<vmem>>, vector<1x1x16x16xf32>
    %1043 = vector.shape_cast %1042 : vector<1x1x16x16xf32> to vector<16x16xf32>
    %1044 = vector.broadcast %121 : f32 to vector<16x16xf32>
    %1045 = arith.mulf %1044, %1043 : vector<16x16xf32>
    %1046 = arith.addf %1041, %1045 : vector<16x16xf32>
    %c2_593 = arith.constant 2 : index
    %c5_594 = arith.constant 5 : index
    %c1_595 = arith.constant 1 : index
    %c0_596 = arith.constant 0 : index
    %1047 = vector.load %arg7[%c2_593, %c5_594, %c1_595, %c0_596] : memref<4x7x22x16xf32, #tpu.memory_space<vmem>>, vector<1x1x16x16xf32>
    %1048 = vector.shape_cast %1047 : vector<1x1x16x16xf32> to vector<16x16xf32>
    %1049 = vector.broadcast %122 : f32 to vector<16x16xf32>
    %1050 = arith.mulf %1049, %1048 : vector<16x16xf32>
    %1051 = arith.addf %1046, %1050 : vector<16x16xf32>
    %c2_597 = arith.constant 2 : index
    %c6_598 = arith.constant 6 : index
    %c1_599 = arith.constant 1 : index
    %c0_600 = arith.constant 0 : index
    %1052 = vector.load %arg7[%c2_597, %c6_598, %c1_599, %c0_600] : memref<4x7x22x16xf32, #tpu.memory_space<vmem>>, vector<1x1x16x16xf32>
    %1053 = vector.shape_cast %1052 : vector<1x1x16x16xf32> to vector<16x16xf32>
    %1054 = vector.broadcast %123 : f32 to vector<16x16xf32>
    %1055 = arith.mulf %1054, %1053 : vector<16x16xf32>
    %1056 = arith.addf %1051, %1055 : vector<16x16xf32>
    %c2_601 = arith.constant 2 : index
    %c0_602 = arith.constant 0 : index
    %c2_603 = arith.constant 2 : index
    %c0_604 = arith.constant 0 : index
    %1057 = vector.load %arg7[%c2_601, %c0_602, %c2_603, %c0_604] : memref<4x7x22x16xf32, #tpu.memory_space<vmem>>, vector<1x1x16x16xf32>
    %1058 = vector.shape_cast %1057 : vector<1x1x16x16xf32> to vector<16x16xf32>
    %1059 = vector.broadcast %124 : f32 to vector<16x16xf32>
    %1060 = arith.mulf %1059, %1058 : vector<16x16xf32>
    %1061 = arith.addf %1056, %1060 : vector<16x16xf32>
    %c2_605 = arith.constant 2 : index
    %c1_606 = arith.constant 1 : index
    %c2_607 = arith.constant 2 : index
    %c0_608 = arith.constant 0 : index
    %1062 = vector.load %arg7[%c2_605, %c1_606, %c2_607, %c0_608] : memref<4x7x22x16xf32, #tpu.memory_space<vmem>>, vector<1x1x16x16xf32>
    %1063 = vector.shape_cast %1062 : vector<1x1x16x16xf32> to vector<16x16xf32>
    %1064 = vector.broadcast %125 : f32 to vector<16x16xf32>
    %1065 = arith.mulf %1064, %1063 : vector<16x16xf32>
    %1066 = arith.addf %1061, %1065 : vector<16x16xf32>
    %c2_609 = arith.constant 2 : index
    %c2_610 = arith.constant 2 : index
    %c2_611 = arith.constant 2 : index
    %c0_612 = arith.constant 0 : index
    %1067 = vector.load %arg7[%c2_609, %c2_610, %c2_611, %c0_612] : memref<4x7x22x16xf32, #tpu.memory_space<vmem>>, vector<1x1x16x16xf32>
    %1068 = vector.shape_cast %1067 : vector<1x1x16x16xf32> to vector<16x16xf32>
    %1069 = vector.broadcast %126 : f32 to vector<16x16xf32>
    %1070 = arith.mulf %1069, %1068 : vector<16x16xf32>
    %1071 = arith.addf %1066, %1070 : vector<16x16xf32>
    %c2_613 = arith.constant 2 : index
    %c3_614 = arith.constant 3 : index
    %c2_615 = arith.constant 2 : index
    %c0_616 = arith.constant 0 : index
    %1072 = vector.load %arg7[%c2_613, %c3_614, %c2_615, %c0_616] : memref<4x7x22x16xf32, #tpu.memory_space<vmem>>, vector<1x1x16x16xf32>
    %1073 = vector.shape_cast %1072 : vector<1x1x16x16xf32> to vector<16x16xf32>
    %1074 = vector.broadcast %127 : f32 to vector<16x16xf32>
    %1075 = arith.mulf %1074, %1073 : vector<16x16xf32>
    %1076 = arith.addf %1071, %1075 : vector<16x16xf32>
    %c2_617 = arith.constant 2 : index
    %c4_618 = arith.constant 4 : index
    %c2_619 = arith.constant 2 : index
    %c0_620 = arith.constant 0 : index
    %1077 = vector.load %arg7[%c2_617, %c4_618, %c2_619, %c0_620] : memref<4x7x22x16xf32, #tpu.memory_space<vmem>>, vector<1x1x16x16xf32>
    %1078 = vector.shape_cast %1077 : vector<1x1x16x16xf32> to vector<16x16xf32>
    %1079 = vector.broadcast %128 : f32 to vector<16x16xf32>
    %1080 = arith.mulf %1079, %1078 : vector<16x16xf32>
    %1081 = arith.addf %1076, %1080 : vector<16x16xf32>
    %c2_621 = arith.constant 2 : index
    %c5_622 = arith.constant 5 : index
    %c2_623 = arith.constant 2 : index
    %c0_624 = arith.constant 0 : index
    %1082 = vector.load %arg7[%c2_621, %c5_622, %c2_623, %c0_624] : memref<4x7x22x16xf32, #tpu.memory_space<vmem>>, vector<1x1x16x16xf32>
    %1083 = vector.shape_cast %1082 : vector<1x1x16x16xf32> to vector<16x16xf32>
    %1084 = vector.broadcast %129 : f32 to vector<16x16xf32>
    %1085 = arith.mulf %1084, %1083 : vector<16x16xf32>
    %1086 = arith.addf %1081, %1085 : vector<16x16xf32>
    %c2_625 = arith.constant 2 : index
    %c6_626 = arith.constant 6 : index
    %c2_627 = arith.constant 2 : index
    %c0_628 = arith.constant 0 : index
    %1087 = vector.load %arg7[%c2_625, %c6_626, %c2_627, %c0_628] : memref<4x7x22x16xf32, #tpu.memory_space<vmem>>, vector<1x1x16x16xf32>
    %1088 = vector.shape_cast %1087 : vector<1x1x16x16xf32> to vector<16x16xf32>
    %1089 = vector.broadcast %130 : f32 to vector<16x16xf32>
    %1090 = arith.mulf %1089, %1088 : vector<16x16xf32>
    %1091 = arith.addf %1086, %1090 : vector<16x16xf32>
    %c2_629 = arith.constant 2 : index
    %c0_630 = arith.constant 0 : index
    %c3_631 = arith.constant 3 : index
    %c0_632 = arith.constant 0 : index
    %1092 = vector.load %arg7[%c2_629, %c0_630, %c3_631, %c0_632] : memref<4x7x22x16xf32, #tpu.memory_space<vmem>>, vector<1x1x16x16xf32>
    %1093 = vector.shape_cast %1092 : vector<1x1x16x16xf32> to vector<16x16xf32>
    %1094 = vector.broadcast %131 : f32 to vector<16x16xf32>
    %1095 = arith.mulf %1094, %1093 : vector<16x16xf32>
    %1096 = arith.addf %1091, %1095 : vector<16x16xf32>
    %c2_633 = arith.constant 2 : index
    %c1_634 = arith.constant 1 : index
    %c3_635 = arith.constant 3 : index
    %c0_636 = arith.constant 0 : index
    %1097 = vector.load %arg7[%c2_633, %c1_634, %c3_635, %c0_636] : memref<4x7x22x16xf32, #tpu.memory_space<vmem>>, vector<1x1x16x16xf32>
    %1098 = vector.shape_cast %1097 : vector<1x1x16x16xf32> to vector<16x16xf32>
    %1099 = vector.broadcast %132 : f32 to vector<16x16xf32>
    %1100 = arith.mulf %1099, %1098 : vector<16x16xf32>
    %1101 = arith.addf %1096, %1100 : vector<16x16xf32>
    %c2_637 = arith.constant 2 : index
    %c2_638 = arith.constant 2 : index
    %c3_639 = arith.constant 3 : index
    %c0_640 = arith.constant 0 : index
    %1102 = vector.load %arg7[%c2_637, %c2_638, %c3_639, %c0_640] : memref<4x7x22x16xf32, #tpu.memory_space<vmem>>, vector<1x1x16x16xf32>
    %1103 = vector.shape_cast %1102 : vector<1x1x16x16xf32> to vector<16x16xf32>
    %1104 = vector.broadcast %133 : f32 to vector<16x16xf32>
    %1105 = arith.mulf %1104, %1103 : vector<16x16xf32>
    %1106 = arith.addf %1101, %1105 : vector<16x16xf32>
    %c2_641 = arith.constant 2 : index
    %c3_642 = arith.constant 3 : index
    %c3_643 = arith.constant 3 : index
    %c0_644 = arith.constant 0 : index
    %1107 = vector.load %arg7[%c2_641, %c3_642, %c3_643, %c0_644] : memref<4x7x22x16xf32, #tpu.memory_space<vmem>>, vector<1x1x16x16xf32>
    %1108 = vector.shape_cast %1107 : vector<1x1x16x16xf32> to vector<16x16xf32>
    %1109 = vector.broadcast %134 : f32 to vector<16x16xf32>
    %1110 = arith.mulf %1109, %1108 : vector<16x16xf32>
    %1111 = arith.addf %1106, %1110 : vector<16x16xf32>
    %c2_645 = arith.constant 2 : index
    %c4_646 = arith.constant 4 : index
    %c3_647 = arith.constant 3 : index
    %c0_648 = arith.constant 0 : index
    %1112 = vector.load %arg7[%c2_645, %c4_646, %c3_647, %c0_648] : memref<4x7x22x16xf32, #tpu.memory_space<vmem>>, vector<1x1x16x16xf32>
    %1113 = vector.shape_cast %1112 : vector<1x1x16x16xf32> to vector<16x16xf32>
    %1114 = vector.broadcast %135 : f32 to vector<16x16xf32>
    %1115 = arith.mulf %1114, %1113 : vector<16x16xf32>
    %1116 = arith.addf %1111, %1115 : vector<16x16xf32>
    %c2_649 = arith.constant 2 : index
    %c5_650 = arith.constant 5 : index
    %c3_651 = arith.constant 3 : index
    %c0_652 = arith.constant 0 : index
    %1117 = vector.load %arg7[%c2_649, %c5_650, %c3_651, %c0_652] : memref<4x7x22x16xf32, #tpu.memory_space<vmem>>, vector<1x1x16x16xf32>
    %1118 = vector.shape_cast %1117 : vector<1x1x16x16xf32> to vector<16x16xf32>
    %1119 = vector.broadcast %136 : f32 to vector<16x16xf32>
    %1120 = arith.mulf %1119, %1118 : vector<16x16xf32>
    %1121 = arith.addf %1116, %1120 : vector<16x16xf32>
    %c2_653 = arith.constant 2 : index
    %c6_654 = arith.constant 6 : index
    %c3_655 = arith.constant 3 : index
    %c0_656 = arith.constant 0 : index
    %1122 = vector.load %arg7[%c2_653, %c6_654, %c3_655, %c0_656] : memref<4x7x22x16xf32, #tpu.memory_space<vmem>>, vector<1x1x16x16xf32>
    %1123 = vector.shape_cast %1122 : vector<1x1x16x16xf32> to vector<16x16xf32>
    %1124 = vector.broadcast %137 : f32 to vector<16x16xf32>
    %1125 = arith.mulf %1124, %1123 : vector<16x16xf32>
    %1126 = arith.addf %1121, %1125 : vector<16x16xf32>
    %c2_657 = arith.constant 2 : index
    %c0_658 = arith.constant 0 : index
    %c4_659 = arith.constant 4 : index
    %c0_660 = arith.constant 0 : index
    %1127 = vector.load %arg7[%c2_657, %c0_658, %c4_659, %c0_660] : memref<4x7x22x16xf32, #tpu.memory_space<vmem>>, vector<1x1x16x16xf32>
    %1128 = vector.shape_cast %1127 : vector<1x1x16x16xf32> to vector<16x16xf32>
    %1129 = vector.broadcast %138 : f32 to vector<16x16xf32>
    %1130 = arith.mulf %1129, %1128 : vector<16x16xf32>
    %1131 = arith.addf %1126, %1130 : vector<16x16xf32>
    %c2_661 = arith.constant 2 : index
    %c1_662 = arith.constant 1 : index
    %c4_663 = arith.constant 4 : index
    %c0_664 = arith.constant 0 : index
    %1132 = vector.load %arg7[%c2_661, %c1_662, %c4_663, %c0_664] : memref<4x7x22x16xf32, #tpu.memory_space<vmem>>, vector<1x1x16x16xf32>
    %1133 = vector.shape_cast %1132 : vector<1x1x16x16xf32> to vector<16x16xf32>
    %1134 = vector.broadcast %139 : f32 to vector<16x16xf32>
    %1135 = arith.mulf %1134, %1133 : vector<16x16xf32>
    %1136 = arith.addf %1131, %1135 : vector<16x16xf32>
    %c2_665 = arith.constant 2 : index
    %c2_666 = arith.constant 2 : index
    %c4_667 = arith.constant 4 : index
    %c0_668 = arith.constant 0 : index
    %1137 = vector.load %arg7[%c2_665, %c2_666, %c4_667, %c0_668] : memref<4x7x22x16xf32, #tpu.memory_space<vmem>>, vector<1x1x16x16xf32>
    %1138 = vector.shape_cast %1137 : vector<1x1x16x16xf32> to vector<16x16xf32>
    %1139 = vector.broadcast %140 : f32 to vector<16x16xf32>
    %1140 = arith.mulf %1139, %1138 : vector<16x16xf32>
    %1141 = arith.addf %1136, %1140 : vector<16x16xf32>
    %c2_669 = arith.constant 2 : index
    %c3_670 = arith.constant 3 : index
    %c4_671 = arith.constant 4 : index
    %c0_672 = arith.constant 0 : index
    %1142 = vector.load %arg7[%c2_669, %c3_670, %c4_671, %c0_672] : memref<4x7x22x16xf32, #tpu.memory_space<vmem>>, vector<1x1x16x16xf32>
    %1143 = vector.shape_cast %1142 : vector<1x1x16x16xf32> to vector<16x16xf32>
    %1144 = vector.broadcast %141 : f32 to vector<16x16xf32>
    %1145 = arith.mulf %1144, %1143 : vector<16x16xf32>
    %1146 = arith.addf %1141, %1145 : vector<16x16xf32>
    %c2_673 = arith.constant 2 : index
    %c4_674 = arith.constant 4 : index
    %c4_675 = arith.constant 4 : index
    %c0_676 = arith.constant 0 : index
    %1147 = vector.load %arg7[%c2_673, %c4_674, %c4_675, %c0_676] : memref<4x7x22x16xf32, #tpu.memory_space<vmem>>, vector<1x1x16x16xf32>
    %1148 = vector.shape_cast %1147 : vector<1x1x16x16xf32> to vector<16x16xf32>
    %1149 = vector.broadcast %142 : f32 to vector<16x16xf32>
    %1150 = arith.mulf %1149, %1148 : vector<16x16xf32>
    %1151 = arith.addf %1146, %1150 : vector<16x16xf32>
    %c2_677 = arith.constant 2 : index
    %c5_678 = arith.constant 5 : index
    %c4_679 = arith.constant 4 : index
    %c0_680 = arith.constant 0 : index
    %1152 = vector.load %arg7[%c2_677, %c5_678, %c4_679, %c0_680] : memref<4x7x22x16xf32, #tpu.memory_space<vmem>>, vector<1x1x16x16xf32>
    %1153 = vector.shape_cast %1152 : vector<1x1x16x16xf32> to vector<16x16xf32>
    %1154 = vector.broadcast %143 : f32 to vector<16x16xf32>
    %1155 = arith.mulf %1154, %1153 : vector<16x16xf32>
    %1156 = arith.addf %1151, %1155 : vector<16x16xf32>
    %c2_681 = arith.constant 2 : index
    %c6_682 = arith.constant 6 : index
    %c4_683 = arith.constant 4 : index
    %c0_684 = arith.constant 0 : index
    %1157 = vector.load %arg7[%c2_681, %c6_682, %c4_683, %c0_684] : memref<4x7x22x16xf32, #tpu.memory_space<vmem>>, vector<1x1x16x16xf32>
    %1158 = vector.shape_cast %1157 : vector<1x1x16x16xf32> to vector<16x16xf32>
    %1159 = vector.broadcast %144 : f32 to vector<16x16xf32>
    %1160 = arith.mulf %1159, %1158 : vector<16x16xf32>
    %1161 = arith.addf %1156, %1160 : vector<16x16xf32>
    %c2_685 = arith.constant 2 : index
    %c0_686 = arith.constant 0 : index
    %c5_687 = arith.constant 5 : index
    %c0_688 = arith.constant 0 : index
    %1162 = vector.load %arg7[%c2_685, %c0_686, %c5_687, %c0_688] : memref<4x7x22x16xf32, #tpu.memory_space<vmem>>, vector<1x1x16x16xf32>
    %1163 = vector.shape_cast %1162 : vector<1x1x16x16xf32> to vector<16x16xf32>
    %1164 = vector.broadcast %145 : f32 to vector<16x16xf32>
    %1165 = arith.mulf %1164, %1163 : vector<16x16xf32>
    %1166 = arith.addf %1161, %1165 : vector<16x16xf32>
    %c2_689 = arith.constant 2 : index
    %c1_690 = arith.constant 1 : index
    %c5_691 = arith.constant 5 : index
    %c0_692 = arith.constant 0 : index
    %1167 = vector.load %arg7[%c2_689, %c1_690, %c5_691, %c0_692] : memref<4x7x22x16xf32, #tpu.memory_space<vmem>>, vector<1x1x16x16xf32>
    %1168 = vector.shape_cast %1167 : vector<1x1x16x16xf32> to vector<16x16xf32>
    %1169 = vector.broadcast %146 : f32 to vector<16x16xf32>
    %1170 = arith.mulf %1169, %1168 : vector<16x16xf32>
    %1171 = arith.addf %1166, %1170 : vector<16x16xf32>
    %c2_693 = arith.constant 2 : index
    %c2_694 = arith.constant 2 : index
    %c5_695 = arith.constant 5 : index
    %c0_696 = arith.constant 0 : index
    %1172 = vector.load %arg7[%c2_693, %c2_694, %c5_695, %c0_696] : memref<4x7x22x16xf32, #tpu.memory_space<vmem>>, vector<1x1x16x16xf32>
    %1173 = vector.shape_cast %1172 : vector<1x1x16x16xf32> to vector<16x16xf32>
    %1174 = vector.broadcast %147 : f32 to vector<16x16xf32>
    %1175 = arith.mulf %1174, %1173 : vector<16x16xf32>
    %1176 = arith.addf %1171, %1175 : vector<16x16xf32>
    %c2_697 = arith.constant 2 : index
    %c3_698 = arith.constant 3 : index
    %c5_699 = arith.constant 5 : index
    %c0_700 = arith.constant 0 : index
    %1177 = vector.load %arg7[%c2_697, %c3_698, %c5_699, %c0_700] : memref<4x7x22x16xf32, #tpu.memory_space<vmem>>, vector<1x1x16x16xf32>
    %1178 = vector.shape_cast %1177 : vector<1x1x16x16xf32> to vector<16x16xf32>
    %1179 = vector.broadcast %148 : f32 to vector<16x16xf32>
    %1180 = arith.mulf %1179, %1178 : vector<16x16xf32>
    %1181 = arith.addf %1176, %1180 : vector<16x16xf32>
    %c2_701 = arith.constant 2 : index
    %c4_702 = arith.constant 4 : index
    %c5_703 = arith.constant 5 : index
    %c0_704 = arith.constant 0 : index
    %1182 = vector.load %arg7[%c2_701, %c4_702, %c5_703, %c0_704] : memref<4x7x22x16xf32, #tpu.memory_space<vmem>>, vector<1x1x16x16xf32>
    %1183 = vector.shape_cast %1182 : vector<1x1x16x16xf32> to vector<16x16xf32>
    %1184 = vector.broadcast %149 : f32 to vector<16x16xf32>
    %1185 = arith.mulf %1184, %1183 : vector<16x16xf32>
    %1186 = arith.addf %1181, %1185 : vector<16x16xf32>
    %c2_705 = arith.constant 2 : index
    %c5_706 = arith.constant 5 : index
    %c5_707 = arith.constant 5 : index
    %c0_708 = arith.constant 0 : index
    %1187 = vector.load %arg7[%c2_705, %c5_706, %c5_707, %c0_708] : memref<4x7x22x16xf32, #tpu.memory_space<vmem>>, vector<1x1x16x16xf32>
    %1188 = vector.shape_cast %1187 : vector<1x1x16x16xf32> to vector<16x16xf32>
    %1189 = vector.broadcast %150 : f32 to vector<16x16xf32>
    %1190 = arith.mulf %1189, %1188 : vector<16x16xf32>
    %1191 = arith.addf %1186, %1190 : vector<16x16xf32>
    %c2_709 = arith.constant 2 : index
    %c6_710 = arith.constant 6 : index
    %c5_711 = arith.constant 5 : index
    %c0_712 = arith.constant 0 : index
    %1192 = vector.load %arg7[%c2_709, %c6_710, %c5_711, %c0_712] : memref<4x7x22x16xf32, #tpu.memory_space<vmem>>, vector<1x1x16x16xf32>
    %1193 = vector.shape_cast %1192 : vector<1x1x16x16xf32> to vector<16x16xf32>
    %1194 = vector.broadcast %151 : f32 to vector<16x16xf32>
    %1195 = arith.mulf %1194, %1193 : vector<16x16xf32>
    %1196 = arith.addf %1191, %1195 : vector<16x16xf32>
    %c2_713 = arith.constant 2 : index
    %c0_714 = arith.constant 0 : index
    %c6_715 = arith.constant 6 : index
    %c0_716 = arith.constant 0 : index
    %1197 = vector.load %arg7[%c2_713, %c0_714, %c6_715, %c0_716] : memref<4x7x22x16xf32, #tpu.memory_space<vmem>>, vector<1x1x16x16xf32>
    %1198 = vector.shape_cast %1197 : vector<1x1x16x16xf32> to vector<16x16xf32>
    %1199 = vector.broadcast %152 : f32 to vector<16x16xf32>
    %1200 = arith.mulf %1199, %1198 : vector<16x16xf32>
    %1201 = arith.addf %1196, %1200 : vector<16x16xf32>
    %c2_717 = arith.constant 2 : index
    %c1_718 = arith.constant 1 : index
    %c6_719 = arith.constant 6 : index
    %c0_720 = arith.constant 0 : index
    %1202 = vector.load %arg7[%c2_717, %c1_718, %c6_719, %c0_720] : memref<4x7x22x16xf32, #tpu.memory_space<vmem>>, vector<1x1x16x16xf32>
    %1203 = vector.shape_cast %1202 : vector<1x1x16x16xf32> to vector<16x16xf32>
    %1204 = vector.broadcast %153 : f32 to vector<16x16xf32>
    %1205 = arith.mulf %1204, %1203 : vector<16x16xf32>
    %1206 = arith.addf %1201, %1205 : vector<16x16xf32>
    %c2_721 = arith.constant 2 : index
    %c2_722 = arith.constant 2 : index
    %c6_723 = arith.constant 6 : index
    %c0_724 = arith.constant 0 : index
    %1207 = vector.load %arg7[%c2_721, %c2_722, %c6_723, %c0_724] : memref<4x7x22x16xf32, #tpu.memory_space<vmem>>, vector<1x1x16x16xf32>
    %1208 = vector.shape_cast %1207 : vector<1x1x16x16xf32> to vector<16x16xf32>
    %1209 = vector.broadcast %154 : f32 to vector<16x16xf32>
    %1210 = arith.mulf %1209, %1208 : vector<16x16xf32>
    %1211 = arith.addf %1206, %1210 : vector<16x16xf32>
    %c2_725 = arith.constant 2 : index
    %c3_726 = arith.constant 3 : index
    %c6_727 = arith.constant 6 : index
    %c0_728 = arith.constant 0 : index
    %1212 = vector.load %arg7[%c2_725, %c3_726, %c6_727, %c0_728] : memref<4x7x22x16xf32, #tpu.memory_space<vmem>>, vector<1x1x16x16xf32>
    %1213 = vector.shape_cast %1212 : vector<1x1x16x16xf32> to vector<16x16xf32>
    %1214 = vector.broadcast %155 : f32 to vector<16x16xf32>
    %1215 = arith.mulf %1214, %1213 : vector<16x16xf32>
    %1216 = arith.addf %1211, %1215 : vector<16x16xf32>
    %c2_729 = arith.constant 2 : index
    %c4_730 = arith.constant 4 : index
    %c6_731 = arith.constant 6 : index
    %c0_732 = arith.constant 0 : index
    %1217 = vector.load %arg7[%c2_729, %c4_730, %c6_731, %c0_732] : memref<4x7x22x16xf32, #tpu.memory_space<vmem>>, vector<1x1x16x16xf32>
    %1218 = vector.shape_cast %1217 : vector<1x1x16x16xf32> to vector<16x16xf32>
    %1219 = vector.broadcast %156 : f32 to vector<16x16xf32>
    %1220 = arith.mulf %1219, %1218 : vector<16x16xf32>
    %1221 = arith.addf %1216, %1220 : vector<16x16xf32>
    %c2_733 = arith.constant 2 : index
    %c5_734 = arith.constant 5 : index
    %c6_735 = arith.constant 6 : index
    %c0_736 = arith.constant 0 : index
    %1222 = vector.load %arg7[%c2_733, %c5_734, %c6_735, %c0_736] : memref<4x7x22x16xf32, #tpu.memory_space<vmem>>, vector<1x1x16x16xf32>
    %1223 = vector.shape_cast %1222 : vector<1x1x16x16xf32> to vector<16x16xf32>
    %1224 = vector.broadcast %157 : f32 to vector<16x16xf32>
    %1225 = arith.mulf %1224, %1223 : vector<16x16xf32>
    %1226 = arith.addf %1221, %1225 : vector<16x16xf32>
    %c2_737 = arith.constant 2 : index
    %c6_738 = arith.constant 6 : index
    %c6_739 = arith.constant 6 : index
    %c0_740 = arith.constant 0 : index
    %1227 = vector.load %arg7[%c2_737, %c6_738, %c6_739, %c0_740] : memref<4x7x22x16xf32, #tpu.memory_space<vmem>>, vector<1x1x16x16xf32>
    %1228 = vector.shape_cast %1227 : vector<1x1x16x16xf32> to vector<16x16xf32>
    %1229 = vector.broadcast %158 : f32 to vector<16x16xf32>
    %1230 = arith.mulf %1229, %1228 : vector<16x16xf32>
    %1231 = arith.addf %1226, %1230 : vector<16x16xf32>
    %c3_741 = arith.constant 3 : index
    %c0_742 = arith.constant 0 : index
    %c0_743 = arith.constant 0 : index
    %c0_744 = arith.constant 0 : index
    %1232 = vector.load %arg7[%c3_741, %c0_742, %c0_743, %c0_744] : memref<4x7x22x16xf32, #tpu.memory_space<vmem>>, vector<1x1x16x16xf32>
    %1233 = vector.shape_cast %1232 : vector<1x1x16x16xf32> to vector<16x16xf32>
    %1234 = vector.broadcast %159 : f32 to vector<16x16xf32>
    %1235 = arith.mulf %1234, %1233 : vector<16x16xf32>
    %1236 = arith.addf %1231, %1235 : vector<16x16xf32>
    %c3_745 = arith.constant 3 : index
    %c1_746 = arith.constant 1 : index
    %c0_747 = arith.constant 0 : index
    %c0_748 = arith.constant 0 : index
    %1237 = vector.load %arg7[%c3_745, %c1_746, %c0_747, %c0_748] : memref<4x7x22x16xf32, #tpu.memory_space<vmem>>, vector<1x1x16x16xf32>
    %1238 = vector.shape_cast %1237 : vector<1x1x16x16xf32> to vector<16x16xf32>
    %1239 = vector.broadcast %160 : f32 to vector<16x16xf32>
    %1240 = arith.mulf %1239, %1238 : vector<16x16xf32>
    %1241 = arith.addf %1236, %1240 : vector<16x16xf32>
    %c3_749 = arith.constant 3 : index
    %c2_750 = arith.constant 2 : index
    %c0_751 = arith.constant 0 : index
    %c0_752 = arith.constant 0 : index
    %1242 = vector.load %arg7[%c3_749, %c2_750, %c0_751, %c0_752] : memref<4x7x22x16xf32, #tpu.memory_space<vmem>>, vector<1x1x16x16xf32>
    %1243 = vector.shape_cast %1242 : vector<1x1x16x16xf32> to vector<16x16xf32>
    %1244 = vector.broadcast %161 : f32 to vector<16x16xf32>
    %1245 = arith.mulf %1244, %1243 : vector<16x16xf32>
    %1246 = arith.addf %1241, %1245 : vector<16x16xf32>
    %c3_753 = arith.constant 3 : index
    %c3_754 = arith.constant 3 : index
    %c0_755 = arith.constant 0 : index
    %c0_756 = arith.constant 0 : index
    %1247 = vector.load %arg7[%c3_753, %c3_754, %c0_755, %c0_756] : memref<4x7x22x16xf32, #tpu.memory_space<vmem>>, vector<1x1x16x16xf32>
    %1248 = vector.shape_cast %1247 : vector<1x1x16x16xf32> to vector<16x16xf32>
    %1249 = vector.broadcast %162 : f32 to vector<16x16xf32>
    %1250 = arith.mulf %1249, %1248 : vector<16x16xf32>
    %1251 = arith.addf %1246, %1250 : vector<16x16xf32>
    %c3_757 = arith.constant 3 : index
    %c4_758 = arith.constant 4 : index
    %c0_759 = arith.constant 0 : index
    %c0_760 = arith.constant 0 : index
    %1252 = vector.load %arg7[%c3_757, %c4_758, %c0_759, %c0_760] : memref<4x7x22x16xf32, #tpu.memory_space<vmem>>, vector<1x1x16x16xf32>
    %1253 = vector.shape_cast %1252 : vector<1x1x16x16xf32> to vector<16x16xf32>
    %1254 = vector.broadcast %163 : f32 to vector<16x16xf32>
    %1255 = arith.mulf %1254, %1253 : vector<16x16xf32>
    %1256 = arith.addf %1251, %1255 : vector<16x16xf32>
    %c3_761 = arith.constant 3 : index
    %c5_762 = arith.constant 5 : index
    %c0_763 = arith.constant 0 : index
    %c0_764 = arith.constant 0 : index
    %1257 = vector.load %arg7[%c3_761, %c5_762, %c0_763, %c0_764] : memref<4x7x22x16xf32, #tpu.memory_space<vmem>>, vector<1x1x16x16xf32>
    %1258 = vector.shape_cast %1257 : vector<1x1x16x16xf32> to vector<16x16xf32>
    %1259 = vector.broadcast %164 : f32 to vector<16x16xf32>
    %1260 = arith.mulf %1259, %1258 : vector<16x16xf32>
    %1261 = arith.addf %1256, %1260 : vector<16x16xf32>
    %c3_765 = arith.constant 3 : index
    %c6_766 = arith.constant 6 : index
    %c0_767 = arith.constant 0 : index
    %c0_768 = arith.constant 0 : index
    %1262 = vector.load %arg7[%c3_765, %c6_766, %c0_767, %c0_768] : memref<4x7x22x16xf32, #tpu.memory_space<vmem>>, vector<1x1x16x16xf32>
    %1263 = vector.shape_cast %1262 : vector<1x1x16x16xf32> to vector<16x16xf32>
    %1264 = vector.broadcast %165 : f32 to vector<16x16xf32>
    %1265 = arith.mulf %1264, %1263 : vector<16x16xf32>
    %1266 = arith.addf %1261, %1265 : vector<16x16xf32>
    %c3_769 = arith.constant 3 : index
    %c0_770 = arith.constant 0 : index
    %c1_771 = arith.constant 1 : index
    %c0_772 = arith.constant 0 : index
    %1267 = vector.load %arg7[%c3_769, %c0_770, %c1_771, %c0_772] : memref<4x7x22x16xf32, #tpu.memory_space<vmem>>, vector<1x1x16x16xf32>
    %1268 = vector.shape_cast %1267 : vector<1x1x16x16xf32> to vector<16x16xf32>
    %1269 = vector.broadcast %166 : f32 to vector<16x16xf32>
    %1270 = arith.mulf %1269, %1268 : vector<16x16xf32>
    %1271 = arith.addf %1266, %1270 : vector<16x16xf32>
    %c3_773 = arith.constant 3 : index
    %c1_774 = arith.constant 1 : index
    %c1_775 = arith.constant 1 : index
    %c0_776 = arith.constant 0 : index
    %1272 = vector.load %arg7[%c3_773, %c1_774, %c1_775, %c0_776] : memref<4x7x22x16xf32, #tpu.memory_space<vmem>>, vector<1x1x16x16xf32>
    %1273 = vector.shape_cast %1272 : vector<1x1x16x16xf32> to vector<16x16xf32>
    %1274 = vector.broadcast %167 : f32 to vector<16x16xf32>
    %1275 = arith.mulf %1274, %1273 : vector<16x16xf32>
    %1276 = arith.addf %1271, %1275 : vector<16x16xf32>
    %c3_777 = arith.constant 3 : index
    %c2_778 = arith.constant 2 : index
    %c1_779 = arith.constant 1 : index
    %c0_780 = arith.constant 0 : index
    %1277 = vector.load %arg7[%c3_777, %c2_778, %c1_779, %c0_780] : memref<4x7x22x16xf32, #tpu.memory_space<vmem>>, vector<1x1x16x16xf32>
    %1278 = vector.shape_cast %1277 : vector<1x1x16x16xf32> to vector<16x16xf32>
    %1279 = vector.broadcast %168 : f32 to vector<16x16xf32>
    %1280 = arith.mulf %1279, %1278 : vector<16x16xf32>
    %1281 = arith.addf %1276, %1280 : vector<16x16xf32>
    %c3_781 = arith.constant 3 : index
    %c3_782 = arith.constant 3 : index
    %c1_783 = arith.constant 1 : index
    %c0_784 = arith.constant 0 : index
    %1282 = vector.load %arg7[%c3_781, %c3_782, %c1_783, %c0_784] : memref<4x7x22x16xf32, #tpu.memory_space<vmem>>, vector<1x1x16x16xf32>
    %1283 = vector.shape_cast %1282 : vector<1x1x16x16xf32> to vector<16x16xf32>
    %1284 = vector.broadcast %169 : f32 to vector<16x16xf32>
    %1285 = arith.mulf %1284, %1283 : vector<16x16xf32>
    %1286 = arith.addf %1281, %1285 : vector<16x16xf32>
    %c3_785 = arith.constant 3 : index
    %c4_786 = arith.constant 4 : index
    %c1_787 = arith.constant 1 : index
    %c0_788 = arith.constant 0 : index
    %1287 = vector.load %arg7[%c3_785, %c4_786, %c1_787, %c0_788] : memref<4x7x22x16xf32, #tpu.memory_space<vmem>>, vector<1x1x16x16xf32>
    %1288 = vector.shape_cast %1287 : vector<1x1x16x16xf32> to vector<16x16xf32>
    %1289 = vector.broadcast %170 : f32 to vector<16x16xf32>
    %1290 = arith.mulf %1289, %1288 : vector<16x16xf32>
    %1291 = arith.addf %1286, %1290 : vector<16x16xf32>
    %c3_789 = arith.constant 3 : index
    %c5_790 = arith.constant 5 : index
    %c1_791 = arith.constant 1 : index
    %c0_792 = arith.constant 0 : index
    %1292 = vector.load %arg7[%c3_789, %c5_790, %c1_791, %c0_792] : memref<4x7x22x16xf32, #tpu.memory_space<vmem>>, vector<1x1x16x16xf32>
    %1293 = vector.shape_cast %1292 : vector<1x1x16x16xf32> to vector<16x16xf32>
    %1294 = vector.broadcast %171 : f32 to vector<16x16xf32>
    %1295 = arith.mulf %1294, %1293 : vector<16x16xf32>
    %1296 = arith.addf %1291, %1295 : vector<16x16xf32>
    %c3_793 = arith.constant 3 : index
    %c6_794 = arith.constant 6 : index
    %c1_795 = arith.constant 1 : index
    %c0_796 = arith.constant 0 : index
    %1297 = vector.load %arg7[%c3_793, %c6_794, %c1_795, %c0_796] : memref<4x7x22x16xf32, #tpu.memory_space<vmem>>, vector<1x1x16x16xf32>
    %1298 = vector.shape_cast %1297 : vector<1x1x16x16xf32> to vector<16x16xf32>
    %1299 = vector.broadcast %172 : f32 to vector<16x16xf32>
    %1300 = arith.mulf %1299, %1298 : vector<16x16xf32>
    %1301 = arith.addf %1296, %1300 : vector<16x16xf32>
    %c3_797 = arith.constant 3 : index
    %c0_798 = arith.constant 0 : index
    %c2_799 = arith.constant 2 : index
    %c0_800 = arith.constant 0 : index
    %1302 = vector.load %arg7[%c3_797, %c0_798, %c2_799, %c0_800] : memref<4x7x22x16xf32, #tpu.memory_space<vmem>>, vector<1x1x16x16xf32>
    %1303 = vector.shape_cast %1302 : vector<1x1x16x16xf32> to vector<16x16xf32>
    %1304 = vector.broadcast %173 : f32 to vector<16x16xf32>
    %1305 = arith.mulf %1304, %1303 : vector<16x16xf32>
    %1306 = arith.addf %1301, %1305 : vector<16x16xf32>
    %c3_801 = arith.constant 3 : index
    %c1_802 = arith.constant 1 : index
    %c2_803 = arith.constant 2 : index
    %c0_804 = arith.constant 0 : index
    %1307 = vector.load %arg7[%c3_801, %c1_802, %c2_803, %c0_804] : memref<4x7x22x16xf32, #tpu.memory_space<vmem>>, vector<1x1x16x16xf32>
    %1308 = vector.shape_cast %1307 : vector<1x1x16x16xf32> to vector<16x16xf32>
    %1309 = vector.broadcast %174 : f32 to vector<16x16xf32>
    %1310 = arith.mulf %1309, %1308 : vector<16x16xf32>
    %1311 = arith.addf %1306, %1310 : vector<16x16xf32>
    %c3_805 = arith.constant 3 : index
    %c2_806 = arith.constant 2 : index
    %c2_807 = arith.constant 2 : index
    %c0_808 = arith.constant 0 : index
    %1312 = vector.load %arg7[%c3_805, %c2_806, %c2_807, %c0_808] : memref<4x7x22x16xf32, #tpu.memory_space<vmem>>, vector<1x1x16x16xf32>
    %1313 = vector.shape_cast %1312 : vector<1x1x16x16xf32> to vector<16x16xf32>
    %1314 = vector.broadcast %175 : f32 to vector<16x16xf32>
    %1315 = arith.mulf %1314, %1313 : vector<16x16xf32>
    %1316 = arith.addf %1311, %1315 : vector<16x16xf32>
    %c3_809 = arith.constant 3 : index
    %c3_810 = arith.constant 3 : index
    %c2_811 = arith.constant 2 : index
    %c0_812 = arith.constant 0 : index
    %1317 = vector.load %arg7[%c3_809, %c3_810, %c2_811, %c0_812] : memref<4x7x22x16xf32, #tpu.memory_space<vmem>>, vector<1x1x16x16xf32>
    %1318 = vector.shape_cast %1317 : vector<1x1x16x16xf32> to vector<16x16xf32>
    %1319 = vector.broadcast %176 : f32 to vector<16x16xf32>
    %1320 = arith.mulf %1319, %1318 : vector<16x16xf32>
    %1321 = arith.addf %1316, %1320 : vector<16x16xf32>
    %c3_813 = arith.constant 3 : index
    %c4_814 = arith.constant 4 : index
    %c2_815 = arith.constant 2 : index
    %c0_816 = arith.constant 0 : index
    %1322 = vector.load %arg7[%c3_813, %c4_814, %c2_815, %c0_816] : memref<4x7x22x16xf32, #tpu.memory_space<vmem>>, vector<1x1x16x16xf32>
    %1323 = vector.shape_cast %1322 : vector<1x1x16x16xf32> to vector<16x16xf32>
    %1324 = vector.broadcast %177 : f32 to vector<16x16xf32>
    %1325 = arith.mulf %1324, %1323 : vector<16x16xf32>
    %1326 = arith.addf %1321, %1325 : vector<16x16xf32>
    %c3_817 = arith.constant 3 : index
    %c5_818 = arith.constant 5 : index
    %c2_819 = arith.constant 2 : index
    %c0_820 = arith.constant 0 : index
    %1327 = vector.load %arg7[%c3_817, %c5_818, %c2_819, %c0_820] : memref<4x7x22x16xf32, #tpu.memory_space<vmem>>, vector<1x1x16x16xf32>
    %1328 = vector.shape_cast %1327 : vector<1x1x16x16xf32> to vector<16x16xf32>
    %1329 = vector.broadcast %178 : f32 to vector<16x16xf32>
    %1330 = arith.mulf %1329, %1328 : vector<16x16xf32>
    %1331 = arith.addf %1326, %1330 : vector<16x16xf32>
    %c3_821 = arith.constant 3 : index
    %c6_822 = arith.constant 6 : index
    %c2_823 = arith.constant 2 : index
    %c0_824 = arith.constant 0 : index
    %1332 = vector.load %arg7[%c3_821, %c6_822, %c2_823, %c0_824] : memref<4x7x22x16xf32, #tpu.memory_space<vmem>>, vector<1x1x16x16xf32>
    %1333 = vector.shape_cast %1332 : vector<1x1x16x16xf32> to vector<16x16xf32>
    %1334 = vector.broadcast %179 : f32 to vector<16x16xf32>
    %1335 = arith.mulf %1334, %1333 : vector<16x16xf32>
    %1336 = arith.addf %1331, %1335 : vector<16x16xf32>
    %c3_825 = arith.constant 3 : index
    %c0_826 = arith.constant 0 : index
    %c3_827 = arith.constant 3 : index
    %c0_828 = arith.constant 0 : index
    %1337 = vector.load %arg7[%c3_825, %c0_826, %c3_827, %c0_828] : memref<4x7x22x16xf32, #tpu.memory_space<vmem>>, vector<1x1x16x16xf32>
    %1338 = vector.shape_cast %1337 : vector<1x1x16x16xf32> to vector<16x16xf32>
    %1339 = vector.broadcast %180 : f32 to vector<16x16xf32>
    %1340 = arith.mulf %1339, %1338 : vector<16x16xf32>
    %1341 = arith.addf %1336, %1340 : vector<16x16xf32>
    %c3_829 = arith.constant 3 : index
    %c1_830 = arith.constant 1 : index
    %c3_831 = arith.constant 3 : index
    %c0_832 = arith.constant 0 : index
    %1342 = vector.load %arg7[%c3_829, %c1_830, %c3_831, %c0_832] : memref<4x7x22x16xf32, #tpu.memory_space<vmem>>, vector<1x1x16x16xf32>
    %1343 = vector.shape_cast %1342 : vector<1x1x16x16xf32> to vector<16x16xf32>
    %1344 = vector.broadcast %181 : f32 to vector<16x16xf32>
    %1345 = arith.mulf %1344, %1343 : vector<16x16xf32>
    %1346 = arith.addf %1341, %1345 : vector<16x16xf32>
    %c3_833 = arith.constant 3 : index
    %c2_834 = arith.constant 2 : index
    %c3_835 = arith.constant 3 : index
    %c0_836 = arith.constant 0 : index
    %1347 = vector.load %arg7[%c3_833, %c2_834, %c3_835, %c0_836] : memref<4x7x22x16xf32, #tpu.memory_space<vmem>>, vector<1x1x16x16xf32>
    %1348 = vector.shape_cast %1347 : vector<1x1x16x16xf32> to vector<16x16xf32>
    %1349 = vector.broadcast %182 : f32 to vector<16x16xf32>
    %1350 = arith.mulf %1349, %1348 : vector<16x16xf32>
    %1351 = arith.addf %1346, %1350 : vector<16x16xf32>
    %c3_837 = arith.constant 3 : index
    %c3_838 = arith.constant 3 : index
    %c3_839 = arith.constant 3 : index
    %c0_840 = arith.constant 0 : index
    %1352 = vector.load %arg7[%c3_837, %c3_838, %c3_839, %c0_840] : memref<4x7x22x16xf32, #tpu.memory_space<vmem>>, vector<1x1x16x16xf32>
    %1353 = vector.shape_cast %1352 : vector<1x1x16x16xf32> to vector<16x16xf32>
    %1354 = vector.broadcast %183 : f32 to vector<16x16xf32>
    %1355 = arith.mulf %1354, %1353 : vector<16x16xf32>
    %1356 = arith.addf %1351, %1355 : vector<16x16xf32>
    %c3_841 = arith.constant 3 : index
    %c4_842 = arith.constant 4 : index
    %c3_843 = arith.constant 3 : index
    %c0_844 = arith.constant 0 : index
    %1357 = vector.load %arg7[%c3_841, %c4_842, %c3_843, %c0_844] : memref<4x7x22x16xf32, #tpu.memory_space<vmem>>, vector<1x1x16x16xf32>
    %1358 = vector.shape_cast %1357 : vector<1x1x16x16xf32> to vector<16x16xf32>
    %1359 = vector.broadcast %184 : f32 to vector<16x16xf32>
    %1360 = arith.mulf %1359, %1358 : vector<16x16xf32>
    %1361 = arith.addf %1356, %1360 : vector<16x16xf32>
    %c3_845 = arith.constant 3 : index
    %c5_846 = arith.constant 5 : index
    %c3_847 = arith.constant 3 : index
    %c0_848 = arith.constant 0 : index
    %1362 = vector.load %arg7[%c3_845, %c5_846, %c3_847, %c0_848] : memref<4x7x22x16xf32, #tpu.memory_space<vmem>>, vector<1x1x16x16xf32>
    %1363 = vector.shape_cast %1362 : vector<1x1x16x16xf32> to vector<16x16xf32>
    %1364 = vector.broadcast %185 : f32 to vector<16x16xf32>
    %1365 = arith.mulf %1364, %1363 : vector<16x16xf32>
    %1366 = arith.addf %1361, %1365 : vector<16x16xf32>
    %c3_849 = arith.constant 3 : index
    %c6_850 = arith.constant 6 : index
    %c3_851 = arith.constant 3 : index
    %c0_852 = arith.constant 0 : index
    %1367 = vector.load %arg7[%c3_849, %c6_850, %c3_851, %c0_852] : memref<4x7x22x16xf32, #tpu.memory_space<vmem>>, vector<1x1x16x16xf32>
    %1368 = vector.shape_cast %1367 : vector<1x1x16x16xf32> to vector<16x16xf32>
    %1369 = vector.broadcast %186 : f32 to vector<16x16xf32>
    %1370 = arith.mulf %1369, %1368 : vector<16x16xf32>
    %1371 = arith.addf %1366, %1370 : vector<16x16xf32>
    %c3_853 = arith.constant 3 : index
    %c0_854 = arith.constant 0 : index
    %c4_855 = arith.constant 4 : index
    %c0_856 = arith.constant 0 : index
    %1372 = vector.load %arg7[%c3_853, %c0_854, %c4_855, %c0_856] : memref<4x7x22x16xf32, #tpu.memory_space<vmem>>, vector<1x1x16x16xf32>
    %1373 = vector.shape_cast %1372 : vector<1x1x16x16xf32> to vector<16x16xf32>
    %1374 = vector.broadcast %187 : f32 to vector<16x16xf32>
    %1375 = arith.mulf %1374, %1373 : vector<16x16xf32>
    %1376 = arith.addf %1371, %1375 : vector<16x16xf32>
    %c3_857 = arith.constant 3 : index
    %c1_858 = arith.constant 1 : index
    %c4_859 = arith.constant 4 : index
    %c0_860 = arith.constant 0 : index
    %1377 = vector.load %arg7[%c3_857, %c1_858, %c4_859, %c0_860] : memref<4x7x22x16xf32, #tpu.memory_space<vmem>>, vector<1x1x16x16xf32>
    %1378 = vector.shape_cast %1377 : vector<1x1x16x16xf32> to vector<16x16xf32>
    %1379 = vector.broadcast %188 : f32 to vector<16x16xf32>
    %1380 = arith.mulf %1379, %1378 : vector<16x16xf32>
    %1381 = arith.addf %1376, %1380 : vector<16x16xf32>
    %c3_861 = arith.constant 3 : index
    %c2_862 = arith.constant 2 : index
    %c4_863 = arith.constant 4 : index
    %c0_864 = arith.constant 0 : index
    %1382 = vector.load %arg7[%c3_861, %c2_862, %c4_863, %c0_864] : memref<4x7x22x16xf32, #tpu.memory_space<vmem>>, vector<1x1x16x16xf32>
    %1383 = vector.shape_cast %1382 : vector<1x1x16x16xf32> to vector<16x16xf32>
    %1384 = vector.broadcast %189 : f32 to vector<16x16xf32>
    %1385 = arith.mulf %1384, %1383 : vector<16x16xf32>
    %1386 = arith.addf %1381, %1385 : vector<16x16xf32>
    %c3_865 = arith.constant 3 : index
    %c3_866 = arith.constant 3 : index
    %c4_867 = arith.constant 4 : index
    %c0_868 = arith.constant 0 : index
    %1387 = vector.load %arg7[%c3_865, %c3_866, %c4_867, %c0_868] : memref<4x7x22x16xf32, #tpu.memory_space<vmem>>, vector<1x1x16x16xf32>
    %1388 = vector.shape_cast %1387 : vector<1x1x16x16xf32> to vector<16x16xf32>
    %1389 = vector.broadcast %190 : f32 to vector<16x16xf32>
    %1390 = arith.mulf %1389, %1388 : vector<16x16xf32>
    %1391 = arith.addf %1386, %1390 : vector<16x16xf32>
    %c3_869 = arith.constant 3 : index
    %c4_870 = arith.constant 4 : index
    %c4_871 = arith.constant 4 : index
    %c0_872 = arith.constant 0 : index
    %1392 = vector.load %arg7[%c3_869, %c4_870, %c4_871, %c0_872] : memref<4x7x22x16xf32, #tpu.memory_space<vmem>>, vector<1x1x16x16xf32>
    %1393 = vector.shape_cast %1392 : vector<1x1x16x16xf32> to vector<16x16xf32>
    %1394 = vector.broadcast %191 : f32 to vector<16x16xf32>
    %1395 = arith.mulf %1394, %1393 : vector<16x16xf32>
    %1396 = arith.addf %1391, %1395 : vector<16x16xf32>
    %c3_873 = arith.constant 3 : index
    %c5_874 = arith.constant 5 : index
    %c4_875 = arith.constant 4 : index
    %c0_876 = arith.constant 0 : index
    %1397 = vector.load %arg7[%c3_873, %c5_874, %c4_875, %c0_876] : memref<4x7x22x16xf32, #tpu.memory_space<vmem>>, vector<1x1x16x16xf32>
    %1398 = vector.shape_cast %1397 : vector<1x1x16x16xf32> to vector<16x16xf32>
    %1399 = vector.broadcast %192 : f32 to vector<16x16xf32>
    %1400 = arith.mulf %1399, %1398 : vector<16x16xf32>
    %1401 = arith.addf %1396, %1400 : vector<16x16xf32>
    %c3_877 = arith.constant 3 : index
    %c6_878 = arith.constant 6 : index
    %c4_879 = arith.constant 4 : index
    %c0_880 = arith.constant 0 : index
    %1402 = vector.load %arg7[%c3_877, %c6_878, %c4_879, %c0_880] : memref<4x7x22x16xf32, #tpu.memory_space<vmem>>, vector<1x1x16x16xf32>
    %1403 = vector.shape_cast %1402 : vector<1x1x16x16xf32> to vector<16x16xf32>
    %1404 = vector.broadcast %193 : f32 to vector<16x16xf32>
    %1405 = arith.mulf %1404, %1403 : vector<16x16xf32>
    %1406 = arith.addf %1401, %1405 : vector<16x16xf32>
    %c3_881 = arith.constant 3 : index
    %c0_882 = arith.constant 0 : index
    %c5_883 = arith.constant 5 : index
    %c0_884 = arith.constant 0 : index
    %1407 = vector.load %arg7[%c3_881, %c0_882, %c5_883, %c0_884] : memref<4x7x22x16xf32, #tpu.memory_space<vmem>>, vector<1x1x16x16xf32>
    %1408 = vector.shape_cast %1407 : vector<1x1x16x16xf32> to vector<16x16xf32>
    %1409 = vector.broadcast %194 : f32 to vector<16x16xf32>
    %1410 = arith.mulf %1409, %1408 : vector<16x16xf32>
    %1411 = arith.addf %1406, %1410 : vector<16x16xf32>
    %c3_885 = arith.constant 3 : index
    %c1_886 = arith.constant 1 : index
    %c5_887 = arith.constant 5 : index
    %c0_888 = arith.constant 0 : index
    %1412 = vector.load %arg7[%c3_885, %c1_886, %c5_887, %c0_888] : memref<4x7x22x16xf32, #tpu.memory_space<vmem>>, vector<1x1x16x16xf32>
    %1413 = vector.shape_cast %1412 : vector<1x1x16x16xf32> to vector<16x16xf32>
    %1414 = vector.broadcast %195 : f32 to vector<16x16xf32>
    %1415 = arith.mulf %1414, %1413 : vector<16x16xf32>
    %1416 = arith.addf %1411, %1415 : vector<16x16xf32>
    %c3_889 = arith.constant 3 : index
    %c2_890 = arith.constant 2 : index
    %c5_891 = arith.constant 5 : index
    %c0_892 = arith.constant 0 : index
    %1417 = vector.load %arg7[%c3_889, %c2_890, %c5_891, %c0_892] : memref<4x7x22x16xf32, #tpu.memory_space<vmem>>, vector<1x1x16x16xf32>
    %1418 = vector.shape_cast %1417 : vector<1x1x16x16xf32> to vector<16x16xf32>
    %1419 = vector.broadcast %196 : f32 to vector<16x16xf32>
    %1420 = arith.mulf %1419, %1418 : vector<16x16xf32>
    %1421 = arith.addf %1416, %1420 : vector<16x16xf32>
    %c3_893 = arith.constant 3 : index
    %c3_894 = arith.constant 3 : index
    %c5_895 = arith.constant 5 : index
    %c0_896 = arith.constant 0 : index
    %1422 = vector.load %arg7[%c3_893, %c3_894, %c5_895, %c0_896] : memref<4x7x22x16xf32, #tpu.memory_space<vmem>>, vector<1x1x16x16xf32>
    %1423 = vector.shape_cast %1422 : vector<1x1x16x16xf32> to vector<16x16xf32>
    %1424 = vector.broadcast %197 : f32 to vector<16x16xf32>
    %1425 = arith.mulf %1424, %1423 : vector<16x16xf32>
    %1426 = arith.addf %1421, %1425 : vector<16x16xf32>
    %c3_897 = arith.constant 3 : index
    %c4_898 = arith.constant 4 : index
    %c5_899 = arith.constant 5 : index
    %c0_900 = arith.constant 0 : index
    %1427 = vector.load %arg7[%c3_897, %c4_898, %c5_899, %c0_900] : memref<4x7x22x16xf32, #tpu.memory_space<vmem>>, vector<1x1x16x16xf32>
    %1428 = vector.shape_cast %1427 : vector<1x1x16x16xf32> to vector<16x16xf32>
    %1429 = vector.broadcast %198 : f32 to vector<16x16xf32>
    %1430 = arith.mulf %1429, %1428 : vector<16x16xf32>
    %1431 = arith.addf %1426, %1430 : vector<16x16xf32>
    %c3_901 = arith.constant 3 : index
    %c5_902 = arith.constant 5 : index
    %c5_903 = arith.constant 5 : index
    %c0_904 = arith.constant 0 : index
    %1432 = vector.load %arg7[%c3_901, %c5_902, %c5_903, %c0_904] : memref<4x7x22x16xf32, #tpu.memory_space<vmem>>, vector<1x1x16x16xf32>
    %1433 = vector.shape_cast %1432 : vector<1x1x16x16xf32> to vector<16x16xf32>
    %1434 = vector.broadcast %199 : f32 to vector<16x16xf32>
    %1435 = arith.mulf %1434, %1433 : vector<16x16xf32>
    %1436 = arith.addf %1431, %1435 : vector<16x16xf32>
    %c3_905 = arith.constant 3 : index
    %c6_906 = arith.constant 6 : index
    %c5_907 = arith.constant 5 : index
    %c0_908 = arith.constant 0 : index
    %1437 = vector.load %arg7[%c3_905, %c6_906, %c5_907, %c0_908] : memref<4x7x22x16xf32, #tpu.memory_space<vmem>>, vector<1x1x16x16xf32>
    %1438 = vector.shape_cast %1437 : vector<1x1x16x16xf32> to vector<16x16xf32>
    %1439 = vector.broadcast %200 : f32 to vector<16x16xf32>
    %1440 = arith.mulf %1439, %1438 : vector<16x16xf32>
    %1441 = arith.addf %1436, %1440 : vector<16x16xf32>
    %c3_909 = arith.constant 3 : index
    %c0_910 = arith.constant 0 : index
    %c6_911 = arith.constant 6 : index
    %c0_912 = arith.constant 0 : index
    %1442 = vector.load %arg7[%c3_909, %c0_910, %c6_911, %c0_912] : memref<4x7x22x16xf32, #tpu.memory_space<vmem>>, vector<1x1x16x16xf32>
    %1443 = vector.shape_cast %1442 : vector<1x1x16x16xf32> to vector<16x16xf32>
    %1444 = vector.broadcast %201 : f32 to vector<16x16xf32>
    %1445 = arith.mulf %1444, %1443 : vector<16x16xf32>
    %1446 = arith.addf %1441, %1445 : vector<16x16xf32>
    %c3_913 = arith.constant 3 : index
    %c1_914 = arith.constant 1 : index
    %c6_915 = arith.constant 6 : index
    %c0_916 = arith.constant 0 : index
    %1447 = vector.load %arg7[%c3_913, %c1_914, %c6_915, %c0_916] : memref<4x7x22x16xf32, #tpu.memory_space<vmem>>, vector<1x1x16x16xf32>
    %1448 = vector.shape_cast %1447 : vector<1x1x16x16xf32> to vector<16x16xf32>
    %1449 = vector.broadcast %202 : f32 to vector<16x16xf32>
    %1450 = arith.mulf %1449, %1448 : vector<16x16xf32>
    %1451 = arith.addf %1446, %1450 : vector<16x16xf32>
    %c3_917 = arith.constant 3 : index
    %c2_918 = arith.constant 2 : index
    %c6_919 = arith.constant 6 : index
    %c0_920 = arith.constant 0 : index
    %1452 = vector.load %arg7[%c3_917, %c2_918, %c6_919, %c0_920] : memref<4x7x22x16xf32, #tpu.memory_space<vmem>>, vector<1x1x16x16xf32>
    %1453 = vector.shape_cast %1452 : vector<1x1x16x16xf32> to vector<16x16xf32>
    %1454 = vector.broadcast %203 : f32 to vector<16x16xf32>
    %1455 = arith.mulf %1454, %1453 : vector<16x16xf32>
    %1456 = arith.addf %1451, %1455 : vector<16x16xf32>
    %c3_921 = arith.constant 3 : index
    %c3_922 = arith.constant 3 : index
    %c6_923 = arith.constant 6 : index
    %c0_924 = arith.constant 0 : index
    %1457 = vector.load %arg7[%c3_921, %c3_922, %c6_923, %c0_924] : memref<4x7x22x16xf32, #tpu.memory_space<vmem>>, vector<1x1x16x16xf32>
    %1458 = vector.shape_cast %1457 : vector<1x1x16x16xf32> to vector<16x16xf32>
    %1459 = vector.broadcast %204 : f32 to vector<16x16xf32>
    %1460 = arith.mulf %1459, %1458 : vector<16x16xf32>
    %1461 = arith.addf %1456, %1460 : vector<16x16xf32>
    %c3_925 = arith.constant 3 : index
    %c4_926 = arith.constant 4 : index
    %c6_927 = arith.constant 6 : index
    %c0_928 = arith.constant 0 : index
    %1462 = vector.load %arg7[%c3_925, %c4_926, %c6_927, %c0_928] : memref<4x7x22x16xf32, #tpu.memory_space<vmem>>, vector<1x1x16x16xf32>
    %1463 = vector.shape_cast %1462 : vector<1x1x16x16xf32> to vector<16x16xf32>
    %1464 = vector.broadcast %205 : f32 to vector<16x16xf32>
    %1465 = arith.mulf %1464, %1463 : vector<16x16xf32>
    %1466 = arith.addf %1461, %1465 : vector<16x16xf32>
    %c3_929 = arith.constant 3 : index
    %c5_930 = arith.constant 5 : index
    %c6_931 = arith.constant 6 : index
    %c0_932 = arith.constant 0 : index
    %1467 = vector.load %arg7[%c3_929, %c5_930, %c6_931, %c0_932] : memref<4x7x22x16xf32, #tpu.memory_space<vmem>>, vector<1x1x16x16xf32>
    %1468 = vector.shape_cast %1467 : vector<1x1x16x16xf32> to vector<16x16xf32>
    %1469 = vector.broadcast %206 : f32 to vector<16x16xf32>
    %1470 = arith.mulf %1469, %1468 : vector<16x16xf32>
    %1471 = arith.addf %1466, %1470 : vector<16x16xf32>
    %c3_933 = arith.constant 3 : index
    %c6_934 = arith.constant 6 : index
    %c6_935 = arith.constant 6 : index
    %c0_936 = arith.constant 0 : index
    %1472 = vector.load %arg7[%c3_933, %c6_934, %c6_935, %c0_936] : memref<4x7x22x16xf32, #tpu.memory_space<vmem>>, vector<1x1x16x16xf32>
    %1473 = vector.shape_cast %1472 : vector<1x1x16x16xf32> to vector<16x16xf32>
    %1474 = vector.broadcast %207 : f32 to vector<16x16xf32>
    %1475 = arith.mulf %1474, %1473 : vector<16x16xf32>
    %1476 = arith.addf %1471, %1475 : vector<16x16xf32>
    %cst_937 = arith.constant 0.000000e+00 : f32
    %1477 = vector.broadcast %cst_937 : f32 to vector<16x16xf32>
    %1478 = arith.subf %1477, %1476 : vector<16x16xf32>
    %1479 = math.exp %1478 : vector<16x16xf32>
    %cst_938 = arith.constant 1.000000e+00 : f32
    %1480 = vector.broadcast %cst_938 : f32 to vector<16x16xf32>
    %1481 = arith.addf %1480, %1479 : vector<16x16xf32>
    %cst_939 = arith.constant 1.000000e+00 : f32
    %1482 = vector.broadcast %cst_939 : f32 to vector<16x16xf32>
    %1483 = arith.divf %1482, %1481 : vector<16x16xf32>
    %1484 = vector.extract_strided_slice %1483 {offsets = [0, 0], sizes = [1, 16], strides = [1, 1]} : vector<16x16xf32> to vector<1x16xf32>
    %1485 = vector.extract_strided_slice %1483 {offsets = [1, 0], sizes = [1, 16], strides = [1, 1]} : vector<16x16xf32> to vector<1x16xf32>
    %1486 = vector.extract_strided_slice %1483 {offsets = [2, 0], sizes = [1, 16], strides = [1, 1]} : vector<16x16xf32> to vector<1x16xf32>
    %1487 = vector.extract_strided_slice %1483 {offsets = [3, 0], sizes = [1, 16], strides = [1, 1]} : vector<16x16xf32> to vector<1x16xf32>
    %1488 = vector.extract_strided_slice %1483 {offsets = [4, 0], sizes = [1, 16], strides = [1, 1]} : vector<16x16xf32> to vector<1x16xf32>
    %1489 = vector.extract_strided_slice %1483 {offsets = [5, 0], sizes = [1, 16], strides = [1, 1]} : vector<16x16xf32> to vector<1x16xf32>
    %1490 = vector.extract_strided_slice %1483 {offsets = [6, 0], sizes = [1, 16], strides = [1, 1]} : vector<16x16xf32> to vector<1x16xf32>
    %1491 = vector.extract_strided_slice %1483 {offsets = [7, 0], sizes = [1, 16], strides = [1, 1]} : vector<16x16xf32> to vector<1x16xf32>
    %1492 = vector.extract_strided_slice %1483 {offsets = [8, 0], sizes = [1, 16], strides = [1, 1]} : vector<16x16xf32> to vector<1x16xf32>
    %1493 = vector.extract_strided_slice %1483 {offsets = [9, 0], sizes = [1, 16], strides = [1, 1]} : vector<16x16xf32> to vector<1x16xf32>
    %1494 = vector.extract_strided_slice %1483 {offsets = [10, 0], sizes = [1, 16], strides = [1, 1]} : vector<16x16xf32> to vector<1x16xf32>
    %1495 = vector.extract_strided_slice %1483 {offsets = [11, 0], sizes = [1, 16], strides = [1, 1]} : vector<16x16xf32> to vector<1x16xf32>
    %1496 = vector.extract_strided_slice %1483 {offsets = [12, 0], sizes = [1, 16], strides = [1, 1]} : vector<16x16xf32> to vector<1x16xf32>
    %1497 = vector.extract_strided_slice %1483 {offsets = [13, 0], sizes = [1, 16], strides = [1, 1]} : vector<16x16xf32> to vector<1x16xf32>
    %1498 = vector.extract_strided_slice %1483 {offsets = [14, 0], sizes = [1, 16], strides = [1, 1]} : vector<16x16xf32> to vector<1x16xf32>
    %1499 = vector.extract_strided_slice %1483 {offsets = [15, 0], sizes = [1, 16], strides = [1, 1]} : vector<16x16xf32> to vector<1x16xf32>
    %1500 = tpu.concatenate %1484, %1485, %1486, %1487, %1488, %1489, %1490, %1491, %1492, %1493, %1494, %1495, %1496, %1497, %1498, %1499 in 1 : vector<1x16xf32>, vector<1x16xf32>, vector<1x16xf32>, vector<1x16xf32>, vector<1x16xf32>, vector<1x16xf32>, vector<1x16xf32>, vector<1x16xf32>, vector<1x16xf32>, vector<1x16xf32>, vector<1x16xf32>, vector<1x16xf32>, vector<1x16xf32>, vector<1x16xf32>, vector<1x16xf32>, vector<1x16xf32> -> vector<1x256xf32>
    %1501 = vector.shape_cast %298 : vector<8xf32> to vector<8x1xf32>
    %1502 = vector.broadcast %1501 : vector<8x1xf32> to vector<8x256xf32>
    %1503 = vector.broadcast %1500 : vector<1x256xf32> to vector<8x256xf32>
    %1504 = arith.addf %1502, %1503 : vector<8x256xf32>
    %cst_940 = arith.constant 1.000000e+00 : f32
    %1505 = vector.broadcast %cst_940 : f32 to vector<8x256xf32>
    %1506 = arith.addf %1504, %1505 : vector<8x256xf32>
    %1507 = arith.subf %213, %215 : vector<8x256xf32>
    %1508 = arith.mulf %1506, %1507 : vector<8x256xf32>
    %cst_941 = arith.constant 4.000000e+00 : f32
    %1509 = vector.broadcast %cst_941 : f32 to vector<8x256xf32>
    %1510 = arith.mulf %1509, %215 : vector<8x256xf32>
    %1511 = arith.addf %1508, %1510 : vector<8x256xf32>
    %c0_942 = arith.constant 0 : index
    %c0_943 = arith.constant 0 : index
    %c0_944 = arith.constant 0 : index
    %1512 = vector.load %arg6[%c0_942, %c0_943, %c0_944] : memref<1x8x256xf32, #tpu.memory_space<vmem>>, vector<1x8x256xf32>
    %1513 = vector.shape_cast %1512 : vector<1x8x256xf32> to vector<8x256xf32>
    %1514 = vector.shape_cast %1511 : vector<8x256xf32> to vector<1x8x256xf32>
    tpu.vector_store %arg6[%c0_942, %c0_943, %c0_944], %1514 {strides = array<i32>} : memref<1x8x256xf32, #tpu.memory_space<vmem>>, vector<1x8x256xf32>,
    return
  }
  func.func @transform_0(%arg0: i32) -> (i32, i32, i32) {
    %c0_i32 = arith.constant 0 : i32
    %c0_i32_0 = arith.constant 0 : i32
    %c0_i32_1 = arith.constant 0 : i32
    return %arg0, %c0_i32, %c0_i32_0 : i32, i32, i32
  }
  func.func @transform_1(%arg0: i32) -> (i32, i32, i32) {
    %c0_i32 = arith.constant 0 : i32
    %c0_i32_0 = arith.constant 0 : i32
    %c0_i32_1 = arith.constant 0 : i32
    return %arg0, %c0_i32, %c0_i32_0 : i32, i32, i32
  }
  func.func @transform_2(%arg0: i32) -> i32 {
    %c0_i32 = arith.constant 0 : i32
    %c0_i32_0 = arith.constant 0 : i32
    return %c0_i32 : i32
  }
  func.func @transform_3(%arg0: i32) -> i32 {
    %c0_i32 = arith.constant 0 : i32
    %c0_i32_0 = arith.constant 0 : i32
    return %c0_i32 : i32
  }
  func.func @transform_4(%arg0: i32) -> i32 {
    %c0_i32 = arith.constant 0 : i32
    %c0_i32_0 = arith.constant 0 : i32
    return %c0_i32 : i32
  }
  func.func @transform_5(%arg0: i32) -> (i32, i32, i32) {
    %c0_i32 = arith.constant 0 : i32
    %c0_i32_0 = arith.constant 0 : i32
    %c0_i32_1 = arith.constant 0 : i32
    return %arg0, %c0_i32, %c0_i32_0 : i32, i32, i32
  }
}

</mosaic_0001>

<llo_original>
// kernel: tpu_custom_call.1
$region0: #{tpu_custom_call.1}
  #allocation0 [shape = 'u32[]', space=smem, size = 0x4, offset = 0x4, fixed_abs, tag = 'smem constant byte address 0x4 - core index']
  #allocation1 [shape = 'u32[72,128]{1,0:T(1,128)}', space=vmem, size = 0x9000, scoped, tag = 'internal scratch']
  #allocation2 [shape = 'f32[4,7,22,16]{3,2,1,0:T(8,128)}', space=vmem, size = 0x54000, scoped, tag = 'scratch operand']
  %s0 = inlined_call_operand.hbm [shape: f32[2,8,256], index: 0, kind: input, shape index: {}]
  %s1 = inlined_call_operand.hbm [shape: f32[2,8,256], index: 1, kind: input, shape index: {}]
  %s2 = inlined_call_operand.hbm [shape: f32[12], index: 2, kind: input, shape index: {}]
  %s3 = inlined_call_operand.vmem [shape: f32[196], index: 3, kind: input, shape index: {}]
  %s4 = inlined_call_operand.vmem [shape: f32[2], index: 4, kind: input, shape index: {}]
  %s5 = inlined_call_operand.hbm [shape: f32[2,8,256], index: 5, kind: output, shape index: {}]
  %s6 = sld [smem:[#allocation0]]
  $region73: #{tpu_custom_call.1} parent=0
    _
  %s8 = ssub.s32 1, %s6
  %s9 = scalar_select 0, %s8, %s6
  $region1: #{tpu_custom_call.1} parent=0
    #allocation3 [shape = 'u8[16384]{0}', space=vmem, size = 0x4000, scoped, tag = 'input window, operand 0']
    #allocation4 [shape = 's32[2]{0}', space=sflag, size = 0x8, scoped, tag = 'scoped memory for tpu_custom_call.1']
    #allocation5 [shape = 's32[2]{0}', space=sflag, size = 0x8, scoped, tag = 'scoped memory for tpu_custom_call.1']
    #allocation6 [shape = 's32[2]{0}', space=sflag, size = 0x8, scoped, tag = 'scoped memory for tpu_custom_call.1']
    #allocation7 [shape = 's32[2]{0}', space=sflag, size = 0x8, scoped, tag = 'scoped memory for tpu_custom_call.1']
    #allocation8 [shape = 'u8[16384]{0}', space=vmem, size = 0x4000, scoped, tag = 'input window, operand 1']
    #allocation9 [shape = 's32[2]{0}', space=sflag, size = 0x8, scoped, tag = 'scoped memory for tpu_custom_call.1']
    #allocation10 [shape = 'u8[512]{0}', space=smem, size = 0x200, scoped, tag = 'input window, operand 2, single buffered']
    #allocation11 [shape = 'u8[1024]{0}', space=smem, size = 0x400, scoped, tag = 'input window, operand 3, single buffered']
    #allocation12 [shape = 'u8[512]{0}', space=smem, size = 0x200, scoped, tag = 'input window, operand 4, single buffered']
    #allocation13 [shape = 's32[1]{0}', space=sflag, size = 0x4, scoped, tag = 'scoped memory for tpu_custom_call.1']
    #allocation14 [shape = 'u8[16384]{0}', space=vmem, size = 0x4000, scoped, tag = 'output window, operand 0']
    %10 = vsyncpa [#allocation4], 0
    %s11 = scalar_lea.sflag [#allocation4], 1
    %12 = vsyncpa %s11, 0
    %13 = vsyncpa [#allocation9], 0
    %s14 = scalar_lea.sflag [#allocation9], 1
    %15 = vsyncpa %s14, 0
    %16 = vsyncpa [#allocation6], 0
    %17 = vsyncpa [#allocation7], 0
    %18 = vsyncpa [#allocation13], 0
    %19 = vsyncpa [#allocation5], 0
    %s20 = scalar_lea.sflag [#allocation5], 1
    %21 = vsyncpa %s20, 0
    loop: start=0, step=1, limit=4
    $region2: #{tpu_custom_call.1} parent=1 // loop_pre_header
      _
    $region3: #{tpu_custom_call.1} parent=1 // loop_header
      %s23 = sphi 0, %s27
      %p24 = scmp.ge.s32.totalorder %s23, 4
      %s33 = sphi 0, %s35
      %s36 = sphi 0, %s33
      %s37 = sphi 0, %s36
      %s53 = sphi 0, %s37
      %s59 = sphi 0, %s61
      %s62 = sphi 0, %s59
      %s63 = sphi 0, %s62
      %s79 = sphi 0, %s63
      %s83 = sphi 0, %s83
      %s85 = sphi 0, %s83
      %s86 = sphi 0, %s85
      %s100 = sphi 0, %s86
      %s104 = sphi 0, %s104
      %s106 = sphi 0, %s104
      %s107 = sphi 0, %s106
      %s121 = sphi 0, %s107
      %s125 = sphi 0, %s125
      %s127 = sphi 0, %s125
      %s128 = sphi 0, %s127
      %s142 = sphi 0, %s128
      %s148 = sphi 0, %s150
      %s151 = sphi 0, %s148
      %s152 = sphi 0, %s151
      %s168 = sphi 0, %s152
    $region4: #{tpu_custom_call.1} parent=1 // loop_header_branch
      %26 = sbr.rel (%p24) target = $region8
    $region5: #{tpu_custom_call.1} parent=1 // loop_body
      %s28 = ssub.s32 %s23, 1
      %s29 = ssub.s32 %s23, 2
      %s30 = sadd.s32 %s23, 1
      %s31 = ssub.s32 %s23, %s30
      %p32 = scmp.eq.s32.totalorder %s31, 0
      %s34 = sadd.s32 %s33, 1
      %s35 = scalar_select %p32, %s33, %s34
      %p38 = pneg %p32
      %p39 = scmp.eq.s32.totalorder %s23, 1
      %p40 = por %p38, %p39
      %p41 = scmp.ne.s32.totalorder %s33, %s36
      %p42 = scmp.eq.s32.totalorder %s23, 0
      %p43 = por %p41, %p42
      %p44 = scmp.ne.s32.totalorder %s33, %s36
      %p45 = scmp.eq.s32.totalorder %s28, 1
      %p46 = por %p44, %p45
      %p47 = scmp.ne.s32.totalorder %s36, %s37
      %p48 = scmp.eq.s32.totalorder %s28, 0
      %p49 = por %p47, %p48
      %p50 = scmp.ne.s32.totalorder %s36, %s37
      %p51 = scmp.eq.s32.totalorder %s29, 1
      %p52 = por %p50, %p51
      %p54 = scmp.ne.s32.totalorder %s37, %s53
      %p55 = scmp.eq.s32.totalorder %s29, 0
      %p56 = por %p54, %p55
      %s57 = ssub.s32 %s23, %s30
      %p58 = scmp.eq.s32.totalorder %s57, 0
      %s60 = sadd.s32 %s59, 1
      %s61 = scalar_select %p58, %s59, %s60
      %p64 = pneg %p58
      %p65 = scmp.eq.s32.totalorder %s23, 1
      %p66 = por %p64, %p65
      %p67 = scmp.ne.s32.totalorder %s59, %s62
      %p68 = scmp.eq.s32.totalorder %s23, 0
      %p69 = por %p67, %p68
      %p70 = scmp.ne.s32.totalorder %s59, %s62
      %p71 = scmp.eq.s32.totalorder %s28, 1
      %p72 = por %p70, %p71
      %p73 = scmp.ne.s32.totalorder %s62, %s63
      %p74 = scmp.eq.s32.totalorder %s28, 0
      %p75 = por %p73, %p74
      %p76 = scmp.ne.s32.totalorder %s62, %s63
      %p77 = scmp.eq.s32.totalorder %s29, 1
      %p78 = por %p76, %p77
      %p80 = scmp.ne.s32.totalorder %s63, %s79
      %p81 = scmp.eq.s32.totalorder %s29, 0
      %p82 = por %p80, %p81
      %s84 = sadd.s32 %s83, 1
      %p87 = scmp.eq.s32.totalorder %s23, 1
      %p88 = scmp.ne.s32.totalorder %s83, %s85
      %p89 = scmp.eq.s32.totalorder %s23, 0
      %p90 = por %p88, %p89
      %p91 = scmp.ne.s32.totalorder %s83, %s85
      %p92 = scmp.eq.s32.totalorder %s28, 1
      %p93 = por %p91, %p92
      %p94 = scmp.ne.s32.totalorder %s85, %s86
      %p95 = scmp.eq.s32.totalorder %s28, 0
      %p96 = por %p94, %p95
      %p97 = scmp.ne.s32.totalorder %s85, %s86
      %p98 = scmp.eq.s32.totalorder %s29, 1
      %p99 = por %p97, %p98
      %p101 = scmp.ne.s32.totalorder %s86, %s100
      %p102 = scmp.eq.s32.totalorder %s29, 0
      %p103 = por %p101, %p102
      %s105 = sadd.s32 %s104, 1
      %p108 = scmp.eq.s32.totalorder %s23, 1
      %p109 = scmp.ne.s32.totalorder %s104, %s106
      %p110 = scmp.eq.s32.totalorder %s23, 0
      %p111 = por %p109, %p110
      %p112 = scmp.ne.s32.totalorder %s104, %s106
      %p113 = scmp.eq.s32.totalorder %s28, 1
      %p114 = por %p112, %p113
      %p115 = scmp.ne.s32.totalorder %s106, %s107
      %p116 = scmp.eq.s32.totalorder %s28, 0
      %p117 = por %p115, %p116
      %p118 = scmp.ne.s32.totalorder %s106, %s107
      %p119 = scmp.eq.s32.totalorder %s29, 1
      %p120 = por %p118, %p119
      %p122 = scmp.ne.s32.totalorder %s107, %s121
      %p123 = scmp.eq.s32.totalorder %s29, 0
      %p124 = por %p122, %p123
      %s126 = sadd.s32 %s125, 1
      %p129 = scmp.eq.s32.totalorder %s23, 1
      %p130 = scmp.ne.s32.totalorder %s125, %s127
      %p131 = scmp.eq.s32.totalorder %s23, 0
      %p132 = por %p130, %p131
      %p133 = scmp.ne.s32.totalorder %s125, %s127
      %p134 = scmp.eq.s32.totalorder %s28, 1
      %p135 = por %p133, %p134
      %p136 = scmp.ne.s32.totalorder %s127, %s128
      %p137 = scmp.eq.s32.totalorder %s28, 0
      %p138 = por %p136, %p137
      %p139 = scmp.ne.s32.totalorder %s127, %s128
      %p140 = scmp.eq.s32.totalorder %s29, 1
      %p141 = por %p139, %p140
      %p143 = scmp.ne.s32.totalorder %s128, %s142
      %p144 = scmp.eq.s32.totalorder %s29, 0
      %p145 = por %p143, %p144
      %s146 = ssub.s32 %s23, %s30
      %p147 = scmp.eq.s32.totalorder %s146, 0
      %s149 = sadd.s32 %s148, 1
      %s150 = scalar_select %p147, %s148, %s149
      %p153 = pneg %p147
      %p154 = scmp.eq.s32.totalorder %s23, 1
      %p155 = por %p153, %p154
      %p156 = scmp.ne.s32.totalorder %s148, %s151
      %p157 = scmp.eq.s32.totalorder %s23, 0
      %p158 = por %p156, %p157
      %p159 = scmp.ne.s32.totalorder %s148, %s151
      %p160 = scmp.eq.s32.totalorder %s28, 1
      %p161 = por %p159, %p160
      %p162 = scmp.ne.s32.totalorder %s151, %s152
      %p163 = scmp.eq.s32.totalorder %s28, 0
      %p164 = por %p162, %p163
      %p165 = scmp.ne.s32.totalorder %s151, %s152
      %p166 = scmp.eq.s32.totalorder %s29, 1
      %p167 = por %p165, %p166
      %p169 = scmp.ne.s32.totalorder %s152, %s168
      %p170 = scmp.eq.s32.totalorder %s29, 0
      %p171 = por %p169, %p170
      %p172 = scmp.le.s32.totalorder 1, %s23
      %p173 = scmp.lt.s32.totalorder %s23, 3
      %p174 = pnand %p172, %p173
      %p175 = pneg %p174
      // Predicated region
      $region9: #{tpu_custom_call.1} parent=5 // pred_check
        _
      $region10: #{tpu_custom_call.1} parent=5 // pred_check_branch
        %177 = sbr.rel (%p174) target = $region12
      $region11: #{tpu_custom_call.1} parent=5 // pred_region
        %s178 = ssub.s32 %s23, 1
        // Predicated region
        $region13: #{tpu_custom_call.1} parent=11 // pred_check
          %p179 = pneg %p96
        $region14: #{tpu_custom_call.1} parent=11 // pred_check_branch
          %181 = sbr.rel (%p179) target = $region16
        $region15: #{tpu_custom_call.1} parent=11 // pred_region
          %183 = vsyncadd [#allocation6], 0
          %s185 = sshll.u32 %s2, 4
          %s186 = int_to_ptr.hbm [resolvable:$true] %s185
          %188 = dma.hbm_to_smem %s186, 16, [#allocation10], [#allocation6]
        $region16: #{tpu_custom_call.1} parent=11 // pred_fallthru
          _
        // Predicated region
        $region17: #{tpu_custom_call.1} parent=11 // pred_check
          %p189 = pneg %p117
        $region18: #{tpu_custom_call.1} parent=11 // pred_check_branch
          %191 = sbr.rel (%p189) target = $region20
        $region19: #{tpu_custom_call.1} parent=11 // pred_region
          %193 = vsyncadd [#allocation7], 0
          %s195 = sshll.u32 %s3, 4
          %s196 = int_to_ptr.vmem [resolvable:$true] %s195
          %198 = dma.vmem_to_smem %s196, 32, [#allocation11], [#allocation7]
        $region20: #{tpu_custom_call.1} parent=11 // pred_fallthru
          _
        // Predicated region
        $region21: #{tpu_custom_call.1} parent=11 // pred_check
          %p199 = pneg %p138
        $region22: #{tpu_custom_call.1} parent=11 // pred_check_branch
          %201 = sbr.rel (%p199) target = $region24
        $region23: #{tpu_custom_call.1} parent=11 // pred_region
          %203 = vsyncadd [#allocation13], 0
          %s205 = sshll.u32 %s4, 4
          %s206 = int_to_ptr.vmem [resolvable:$true] %s205
          %208 = dma.vmem_to_smem %s206, 16, [#allocation12], [#allocation13]
        $region24: #{tpu_custom_call.1} parent=11 // pred_fallthru
          _
      $region12: #{tpu_custom_call.1} parent=5 // pred_fallthru
        _
      %p209 = scmp.lt.s32.totalorder %s23, 2
      // Predicated region
      $region25: #{tpu_custom_call.1} parent=5 // pred_check
        %p210 = pneg %p209
      $region26: #{tpu_custom_call.1} parent=5 // pred_check_branch
        %212 = sbr.rel (%p210) target = $region28
      $region27: #{tpu_custom_call.1} parent=5 // pred_region
        // Predicated region
        $region29: #{tpu_custom_call.1} parent=27 // pred_check
          %p213 = pneg %p43
        $region30: #{tpu_custom_call.1} parent=27 // pred_check_branch
          %215 = sbr.rel (%p213) target = $region32
        $region31: #{tpu_custom_call.1} parent=27 // pred_region
          %s216 = sand.u32 %s33, 1
          %s217 = scalar_lea.sflag [#allocation4], %s216
          %s218 = sand.u32 %s33, 1
          %s219 = smul.addr %s218, 16
          %s220 = scalar_lea.vmem [#allocation3], %s219
          %222 = vsyncadd %s217, 0
          %s223 = smul.addr %s23, 2
          %s224 = smul.addr %s223, 8
          %s225 = scalar_lea.hbm %s0, %s224
          %s227 = sshll.u32 %s225, 4
          %s228 = int_to_ptr.hbm [resolvable:$true] %s227
          %s229 = sshll.u32 %s220, 4
          %s230 = int_to_ptr.vmem [resolvable:$true] %s229
          %232 = dma.hbm_to_vmem [thread:$0]  %s228, 256, %s230, %s217
        $region32: #{tpu_custom_call.1} parent=27 // pred_fallthru
          _
        // Predicated region
        $region33: #{tpu_custom_call.1} parent=27 // pred_check
          %p233 = pneg %p69
        $region34: #{tpu_custom_call.1} parent=27 // pred_check_branch
          %235 = sbr.rel (%p233) target = $region36
        $region35: #{tpu_custom_call.1} parent=27 // pred_region
          %s236 = sand.u32 %s59, 1
          %s237 = scalar_lea.sflag [#allocation9], %s236
          %s238 = sand.u32 %s59, 1
          %s239 = smul.addr %s238, 16
          %s240 = scalar_lea.vmem [#allocation8], %s239
          %242 = vsyncadd %s237, 0
          %s243 = smul.addr %s23, 2
          %s244 = smul.addr %s243, 8
          %s245 = scalar_lea.hbm %s1, %s244
          %s247 = sshll.u32 %s245, 4
          %s248 = int_to_ptr.hbm [resolvable:$true] %s247
          %s249 = sshll.u32 %s240, 4
          %s250 = int_to_ptr.vmem [resolvable:$true] %s249
          %252 = dma.hbm_to_vmem [thread:$0]  %s248, 256, %s250, %s237
        $region36: #{tpu_custom_call.1} parent=27 // pred_fallthru
          _
      $region28: #{tpu_custom_call.1} parent=5 // pred_fallthru
        _
      %p253 = scmp.le.s32.totalorder 1, %s23
      %p254 = scmp.lt.s32.totalorder %s23, 3
      %p255 = pnand %p253, %p254
      %p256 = pneg %p255
      // Predicated region
      $region37: #{tpu_custom_call.1} parent=5 // pred_check
        _
      $region38: #{tpu_custom_call.1} parent=5 // pred_check_branch
        %258 = sbr.rel (%p255) target = $region40
      $region39: #{tpu_custom_call.1} parent=5 // pred_region
        %s259 = ssub.s32 %s23, 1
        %s260 = sand.u32 %s36, 1
        %s261 = scalar_lea.sflag [#allocation4], %s260
        %s262 = sand.u32 %s36, 1
        %s263 = smul.addr %s262, 16
        %s264 = scalar_lea.vmem [#allocation3], %s263
        // Predicated region
        $region41: #{tpu_custom_call.1} parent=39 // pred_check
          %p265 = pneg %p49
        $region42: #{tpu_custom_call.1} parent=39 // pred_check_branch
          %267 = sbr.rel (%p265) target = $region44
        $region43: #{tpu_custom_call.1} parent=39 // pred_region
          %269 = dma.done %s261, 256
        $region44: #{tpu_custom_call.1} parent=39 // pred_fallthru
          _
        %s270 = sand.u32 %s62, 1
        %s271 = scalar_lea.sflag [#allocation9], %s270
        %s272 = sand.u32 %s62, 1
        %s273 = smul.addr %s272, 16
        %s274 = scalar_lea.vmem [#allocation8], %s273
        // Predicated region
        $region45: #{tpu_custom_call.1} parent=39 // pred_check
          %p275 = pneg %p75
        $region46: #{tpu_custom_call.1} parent=39 // pred_check_branch
          %277 = sbr.rel (%p275) target = $region48
        $region47: #{tpu_custom_call.1} parent=39 // pred_region
          %279 = dma.done %s271, 256
        $region48: #{tpu_custom_call.1} parent=39 // pred_fallthru
          _
        // Predicated region
        $region49: #{tpu_custom_call.1} parent=39 // pred_check
          %p280 = pneg %p96
        $region50: #{tpu_custom_call.1} parent=39 // pred_check_branch
          %282 = sbr.rel (%p280) target = $region52
        $region51: #{tpu_custom_call.1} parent=39 // pred_region
          %284 = dma.done [#allocation6], 16
        $region52: #{tpu_custom_call.1} parent=39 // pred_fallthru
          _
        // Predicated region
        $region53: #{tpu_custom_call.1} parent=39 // pred_check
          %p285 = pneg %p117
        $region54: #{tpu_custom_call.1} parent=39 // pred_check_branch
          %287 = sbr.rel (%p285) target = $region56
        $region55: #{tpu_custom_call.1} parent=39 // pred_region
          %289 = dma.done [#allocation7], 32
        $region56: #{tpu_custom_call.1} parent=39 // pred_fallthru
          _
        // Predicated region
        $region57: #{tpu_custom_call.1} parent=39 // pred_check
          %p290 = pneg %p138
        $region58: #{tpu_custom_call.1} parent=39 // pred_check_branch
          %292 = sbr.rel (%p290) target = $region60
        $region59: #{tpu_custom_call.1} parent=39 // pred_region
          %294 = dma.done [#allocation13], 16
        $region60: #{tpu_custom_call.1} parent=39 // pred_fallthru
          _
        %295 = sfence
        %s296 = sand.u32 %s36, 1
        %s297 = scalar_lea.sflag [#allocation4], %s296
        %s298 = sand.u32 %s36, 1
        %s299 = smul.addr %s298, 16
        %s300 = scalar_lea.vmem [#allocation3], %s299
        %p301 = pneg %p49
        %p302 = pneg %p46
        %s303 = sand.u32 %s62, 1
        %s304 = scalar_lea.sflag [#allocation9], %s303
        %s305 = sand.u32 %s62, 1
        %s306 = smul.addr %s305, 16
        %s307 = scalar_lea.vmem [#allocation8], %s306
        %p308 = pneg %p75
        %p309 = pneg %p72
        %p310 = pneg %p96
        %p311 = pneg %p93
        %p312 = pneg %p117
        %p313 = pneg %p114
        %p314 = pneg %p138
        %p315 = pneg %p135
        %p316 = pneg %p164
        %p317 = pneg %p161
        %s318 = sand.u32 %s151, 1
        %s319 = scalar_lea.sflag [#allocation5], %s318
        %s320 = sand.u32 %s151, 1
        %s321 = smul.addr %s320, 16
        %s322 = scalar_lea.vmem [#allocation14], %s321
        %s323 = sld [smem:[#allocation10]]
        %s324 = sld [smem:[#allocation10 + $0x1]]
        %s325 = sld [smem:[#allocation10 + $0x2]]
        %s326 = sld [smem:[#allocation10 + $0x3]]
        %s327 = sld [smem:[#allocation10 + $0x4]]
        %s328 = sld [smem:[#allocation10 + $0x5]]
        %s329 = sld [smem:[#allocation10 + $0x6]]
        %s330 = sld [smem:[#allocation10 + $0x7]]
        %s331 = sld [smem:[#allocation10 + $0x8]]
        %s332 = sld [smem:[#allocation10 + $0x9]]
        %s333 = sld [smem:[#allocation10 + $0xa]]
        %s334 = sld [smem:[#allocation10 + $0xb]]
        %s335 = sld [smem:[#allocation11]]
        %s336 = sld [smem:[#allocation11 + $0x1]]
        %s337 = sld [smem:[#allocation11 + $0x2]]
        %s338 = sld [smem:[#allocation11 + $0x3]]
        %s339 = sld [smem:[#allocation11 + $0x4]]
        %s340 = sld [smem:[#allocation11 + $0x5]]
        %s341 = sld [smem:[#allocation11 + $0x6]]
        %s342 = sld [smem:[#allocation11 + $0x7]]
        %s343 = sld [smem:[#allocation11 + $0x8]]
        %s344 = sld [smem:[#allocation11 + $0x9]]
        %s345 = sld [smem:[#allocation11 + $0xa]]
        %s346 = sld [smem:[#allocation11 + $0xb]]
        %s347 = sld [smem:[#allocation11 + $0xc]]
        %s348 = sld [smem:[#allocation11 + $0xd]]
        %s349 = sld [smem:[#allocation11 + $0xe]]
        %s350 = sld [smem:[#allocation11 + $0xf]]
        %s351 = sld [smem:[#allocation11 + $0x10]]
        %s352 = sld [smem:[#allocation11 + $0x11]]
        %s353 = sld [smem:[#allocation11 + $0x12]]
        %s354 = sld [smem:[#allocation11 + $0x13]]
        %s355 = sld [smem:[#allocation11 + $0x14]]
        %s356 = sld [smem:[#allocation11 + $0x15]]
        %s357 = sld [smem:[#allocation11 + $0x16]]
        %s358 = sld [smem:[#allocation11 + $0x17]]
        %s359 = sld [smem:[#allocation11 + $0x18]]
        %s360 = sld [smem:[#allocation11 + $0x19]]
        %s361 = sld [smem:[#allocation11 + $0x1a]]
        %s362 = sld [smem:[#allocation11 + $0x1b]]
        %s363 = sld [smem:[#allocation11 + $0x1c]]
        %s364 = sld [smem:[#allocation11 + $0x1d]]
        %s365 = sld [smem:[#allocation11 + $0x1e]]
        %s366 = sld [smem:[#allocation11 + $0x1f]]
        %s367 = sld [smem:[#allocation11 + $0x20]]
        %s368 = sld [smem:[#allocation11 + $0x21]]
        %s369 = sld [smem:[#allocation11 + $0x22]]
        %s370 = sld [smem:[#allocation11 + $0x23]]
        %s371 = sld [smem:[#allocation11 + $0x24]]
        %s372 = sld [smem:[#allocation11 + $0x25]]
        %s373 = sld [smem:[#allocation11 + $0x26]]
        %s374 = sld [smem:[#allocation11 + $0x27]]
        %s375 = sld [smem:[#allocation11 + $0x28]]
        %s376 = sld [smem:[#allocation11 + $0x29]]
        %s377 = sld [smem:[#allocation11 + $0x2a]]
        %s378 = sld [smem:[#allocation11 + $0x2b]]
        %s379 = sld [smem:[#allocation11 + $0x2c]]
        %s380 = sld [smem:[#allocation11 + $0x2d]]
        %s381 = sld [smem:[#allocation11 + $0x2e]]
        %s382 = sld [smem:[#allocation11 + $0x2f]]
        %s383 = sld [smem:[#allocation11 + $0x30]]
        %s384 = sld [smem:[#allocation11 + $0x31]]
        %s385 = sld [smem:[#allocation11 + $0x32]]
        %s386 = sld [smem:[#allocation11 + $0x33]]
        %s387 = sld [smem:[#allocation11 + $0x34]]
        %s388 = sld [smem:[#allocation11 + $0x35]]
        %s389 = sld [smem:[#allocation11 + $0x36]]
        %s390 = sld [smem:[#allocation11 + $0x37]]
        %s391 = sld [smem:[#allocation11 + $0x38]]
        %s392 = sld [smem:[#allocation11 + $0x39]]
        %s393 = sld [smem:[#allocation11 + $0x3a]]
        %s394 = sld [smem:[#allocation11 + $0x3b]]
        %s395 = sld [smem:[#allocation11 + $0x3c]]
        %s396 = sld [smem:[#allocation11 + $0x3d]]
        %s397 = sld [smem:[#allocation11 + $0x3e]]
        %s398 = sld [smem:[#allocation11 + $0x3f]]
        %s399 = sld [smem:[#allocation11 + $0x40]]
        %s400 = sld [smem:[#allocation11 + $0x41]]
        %s401 = sld [smem:[#allocation11 + $0x42]]
        %s402 = sld [smem:[#allocation11 + $0x43]]
        %s403 = sld [smem:[#allocation11 + $0x44]]
        %s404 = sld [smem:[#allocation11 + $0x45]]
        %s405 = sld [smem:[#allocation11 + $0x46]]
        %s406 = sld [smem:[#allocation11 + $0x47]]
        %s407 = sld [smem:[#allocation11 + $0x48]]
        %s408 = sld [smem:[#allocation11 + $0x49]]
        %s409 = sld [smem:[#allocation11 + $0x4a]]
        %s410 = sld [smem:[#allocation11 + $0x4b]]
        %s411 = sld [smem:[#allocation11 + $0x4c]]
        %s412 = sld [smem:[#allocation11 + $0x4d]]
        %s413 = sld [smem:[#allocation11 + $0x4e]]
        %s414 = sld [smem:[#allocation11 + $0x4f]]
        %s415 = sld [smem:[#allocation11 + $0x50]]
        %s416 = sld [smem:[#allocation11 + $0x51]]
        %s417 = sld [smem:[#allocation11 + $0x52]]
        %s418 = sld [smem:[#allocation11 + $0x53]]
        %s419 = sld [smem:[#allocation11 + $0x54]]
        %s420 = sld [smem:[#allocation11 + $0x55]]
        %s421 = sld [smem:[#allocation11 + $0x56]]
        %s422 = sld [smem:[#allocation11 + $0x57]]
        %s423 = sld [smem:[#allocation11 + $0x58]]
        %s424 = sld [smem:[#allocation11 + $0x59]]
        %s425 = sld [smem:[#allocation11 + $0x5a]]
        %s426 = sld [smem:[#allocation11 + $0x5b]]
        %s427 = sld [smem:[#allocation11 + $0x5c]]
        %s428 = sld [smem:[#allocation11 + $0x5d]]
        %s429 = sld [smem:[#allocation11 + $0x5e]]
        %s430 = sld [smem:[#allocation11 + $0x5f]]
        %s431 = sld [smem:[#allocation11 + $0x60]]
        %s432 = sld [smem:[#allocation11 + $0x61]]
        %s433 = sld [smem:[#allocation11 + $0x62]]
        %s434 = sld [smem:[#allocation11 + $0x63]]
        %s435 = sld [smem:[#allocation11 + $0x64]]
        %s436 = sld [smem:[#allocation11 + $0x65]]
        %s437 = sld [smem:[#allocation11 + $0x66]]
        %s438 = sld [smem:[#allocation11 + $0x67]]
        %s439 = sld [smem:[#allocation11 + $0x68]]
        %s440 = sld [smem:[#allocation11 + $0x69]]
        %s441 = sld [smem:[#allocation11 + $0x6a]]
        %s442 = sld [smem:[#allocation11 + $0x6b]]
        %s443 = sld [smem:[#allocation11 + $0x6c]]
        %s444 = sld [smem:[#allocation11 + $0x6d]]
        %s445 = sld [smem:[#allocation11 + $0x6e]]
        %s446 = sld [smem:[#allocation11 + $0x6f]]
        %s447 = sld [smem:[#allocation11 + $0x70]]
        %s448 = sld [smem:[#allocation11 + $0x71]]
        %s449 = sld [smem:[#allocation11 + $0x72]]
        %s450 = sld [smem:[#allocation11 + $0x73]]
        %s451 = sld [smem:[#allocation11 + $0x74]]
        %s452 = sld [smem:[#allocation11 + $0x75]]
        %s453 = sld [smem:[#allocation11 + $0x76]]
        %s454 = sld [smem:[#allocation11 + $0x77]]
        %s455 = sld [smem:[#allocation11 + $0x78]]
        %s456 = sld [smem:[#allocation11 + $0x79]]
        %s457 = sld [smem:[#allocation11 + $0x7a]]
        %s458 = sld [smem:[#allocation11 + $0x7b]]
        %s459 = sld [smem:[#allocation11 + $0x7c]]
        %s460 = sld [smem:[#allocation11 + $0x7d]]
        %s461 = sld [smem:[#allocation11 + $0x7e]]
        %s462 = sld [smem:[#allocation11 + $0x7f]]
        %s463 = sld [smem:[#allocation11 + $0x80]]
        %s464 = sld [smem:[#allocation11 + $0x81]]
        %s465 = sld [smem:[#allocation11 + $0x82]]
        %s466 = sld [smem:[#allocation11 + $0x83]]
        %s467 = sld [smem:[#allocation11 + $0x84]]
        %s468 = sld [smem:[#allocation11 + $0x85]]
        %s469 = sld [smem:[#allocation11 + $0x86]]
        %s470 = sld [smem:[#allocation11 + $0x87]]
        %s471 = sld [smem:[#allocation11 + $0x88]]
        %s472 = sld [smem:[#allocation11 + $0x89]]
        %s473 = sld [smem:[#allocation11 + $0x8a]]
        %s474 = sld [smem:[#allocation11 + $0x8b]]
        %s475 = sld [smem:[#allocation11 + $0x8c]]
        %s476 = sld [smem:[#allocation11 + $0x8d]]
        %s477 = sld [smem:[#allocation11 + $0x8e]]
        %s478 = sld [smem:[#allocation11 + $0x8f]]
        %s479 = sld [smem:[#allocation11 + $0x90]]
        %s480 = sld [smem:[#allocation11 + $0x91]]
        %s481 = sld [smem:[#allocation11 + $0x92]]
        %s482 = sld [smem:[#allocation11 + $0x93]]
        %s483 = sld [smem:[#allocation11 + $0x94]]
        %s484 = sld [smem:[#allocation11 + $0x95]]
        %s485 = sld [smem:[#allocation11 + $0x96]]
        %s486 = sld [smem:[#allocation11 + $0x97]]
        %s487 = sld [smem:[#allocation11 + $0x98]]
        %s488 = sld [smem:[#allocation11 + $0x99]]
        %s489 = sld [smem:[#allocation11 + $0x9a]]
        %s490 = sld [smem:[#allocation11 + $0x9b]]
        %s491 = sld [smem:[#allocation11 + $0x9c]]
        %s492 = sld [smem:[#allocation11 + $0x9d]]
        %s493 = sld [smem:[#allocation11 + $0x9e]]
        %s494 = sld [smem:[#allocation11 + $0x9f]]
        %s495 = sld [smem:[#allocation11 + $0xa0]]
        %s496 = sld [smem:[#allocation11 + $0xa1]]
        %s497 = sld [smem:[#allocation11 + $0xa2]]
        %s498 = sld [smem:[#allocation11 + $0xa3]]
        %s499 = sld [smem:[#allocation11 + $0xa4]]
        %s500 = sld [smem:[#allocation11 + $0xa5]]
        %s501 = sld [smem:[#allocation11 + $0xa6]]
        %s502 = sld [smem:[#allocation11 + $0xa7]]
        %s503 = sld [smem:[#allocation11 + $0xa8]]
        %s504 = sld [smem:[#allocation11 + $0xa9]]
        %s505 = sld [smem:[#allocation11 + $0xaa]]
        %s506 = sld [smem:[#allocation11 + $0xab]]
        %s507 = sld [smem:[#allocation11 + $0xac]]
        %s508 = sld [smem:[#allocation11 + $0xad]]
        %s509 = sld [smem:[#allocation11 + $0xae]]
        %s510 = sld [smem:[#allocation11 + $0xaf]]
        %s511 = sld [smem:[#allocation11 + $0xb0]]
        %s512 = sld [smem:[#allocation11 + $0xb1]]
        %s513 = sld [smem:[#allocation11 + $0xb2]]
        %s514 = sld [smem:[#allocation11 + $0xb3]]
        %s515 = sld [smem:[#allocation11 + $0xb4]]
        %s516 = sld [smem:[#allocation11 + $0xb5]]
        %s517 = sld [smem:[#allocation11 + $0xb6]]
        %s518 = sld [smem:[#allocation11 + $0xb7]]
        %s519 = sld [smem:[#allocation11 + $0xb8]]
        %s520 = sld [smem:[#allocation11 + $0xb9]]
        %s521 = sld [smem:[#allocation11 + $0xba]]
        %s522 = sld [smem:[#allocation11 + $0xbb]]
        %s523 = sld [smem:[#allocation11 + $0xbc]]
        %s524 = sld [smem:[#allocation11 + $0xbd]]
        %s525 = sld [smem:[#allocation11 + $0xbe]]
        %s526 = sld [smem:[#allocation11 + $0xbf]]
        %s527 = sld [smem:[#allocation11 + $0xc0]]
        %s528 = sld [smem:[#allocation11 + $0xc1]]
        %s529 = sld [smem:[#allocation11 + $0xc2]]
        %s530 = sld [smem:[#allocation11 + $0xc3]]
        %s531 = sld [smem:[#allocation12]]
        %s532 = sld [smem:[#allocation12 + $0x1]]
        %vm533 = vcmask 130048
        %534 = vst.msk [vmem:[#allocation2] sm:$0xff] %vm533, 0.0
        %535 = vst.msk [vmem:[#allocation2 + $0x8] sm:$0xff] %vm533, 0.0
        %vm536 = vcmask 128000
        %537 = vst.msk [vmem:[#allocation2 + $0x10] sm:$0x3f] %vm536, 0.0
        %538 = vst.msk [vmem:[#allocation2 + $0x18] sm:$0xff] %vm533, 0.0
        %539 = vst.msk [vmem:[#allocation2 + $0x20] sm:$0xff] %vm533, 0.0
        %540 = vst.msk [vmem:[#allocation2 + $0x28] sm:$0x3f] %vm536, 0.0
        %541 = vst.msk [vmem:[#allocation2 + $0x30] sm:$0xff] %vm533, 0.0
        %542 = vst.msk [vmem:[#allocation2 + $0x38] sm:$0xff] %vm533, 0.0
        %543 = vst.msk [vmem:[#allocation2 + $0x40] sm:$0x3f] %vm536, 0.0
        %544 = vst.msk [vmem:[#allocation2 + $0x48] sm:$0xff] %vm533, 0.0
        %545 = vst.msk [vmem:[#allocation2 + $0x50] sm:$0xff] %vm533, 0.0
        %546 = vst.msk [vmem:[#allocation2 + $0x58] sm:$0x3f] %vm536, 0.0
        %547 = vst.msk [vmem:[#allocation2 + $0x60] sm:$0xff] %vm533, 0.0
        %548 = vst.msk [vmem:[#allocation2 + $0x68] sm:$0xff] %vm533, 0.0
        %549 = vst.msk [vmem:[#allocation2 + $0x70] sm:$0x3f] %vm536, 0.0
        %550 = vst.msk [vmem:[#allocation2 + $0x78] sm:$0xff] %vm533, 0.0
        %551 = vst.msk [vmem:[#allocation2 + $0x80] sm:$0xff] %vm533, 0.0
        %552 = vst.msk [vmem:[#allocation2 + $0x88] sm:$0x3f] %vm536, 0.0
        %553 = vst.msk [vmem:[#allocation2 + $0x90] sm:$0xff] %vm533, 0.0
        %554 = vst.msk [vmem:[#allocation2 + $0x98] sm:$0xff] %vm533, 0.0
        %555 = vst.msk [vmem:[#allocation2 + $0xa0] sm:$0x3f] %vm536, 0.0
        %556 = vst.msk [vmem:[#allocation2 + $0xa8] sm:$0xff] %vm533, 0.0
        %557 = vst.msk [vmem:[#allocation2 + $0xb0] sm:$0xff] %vm533, 0.0
        %558 = vst.msk [vmem:[#allocation2 + $0xb8] sm:$0x3f] %vm536, 0.0
        %559 = vst.msk [vmem:[#allocation2 + $0xc0] sm:$0xff] %vm533, 0.0
        %560 = vst.msk [vmem:[#allocation2 + $0xc8] sm:$0xff] %vm533, 0.0
        %561 = vst.msk [vmem:[#allocation2 + $0xd0] sm:$0x3f] %vm536, 0.0
        %562 = vst.msk [vmem:[#allocation2 + $0xd8] sm:$0xff] %vm533, 0.0
        %563 = vst.msk [vmem:[#allocation2 + $0xe0] sm:$0xff] %vm533, 0.0
        %564 = vst.msk [vmem:[#allocation2 + $0xe8] sm:$0x3f] %vm536, 0.0
        %565 = vst.msk [vmem:[#allocation2 + $0xf0] sm:$0xff] %vm533, 0.0
        %566 = vst.msk [vmem:[#allocation2 + $0xf8] sm:$0xff] %vm533, 0.0
        %567 = vst.msk [vmem:[#allocation2 + $0x100] sm:$0x3f] %vm536, 0.0
        %568 = vst.msk [vmem:[#allocation2 + $0x108] sm:$0xff] %vm533, 0.0
        %569 = vst.msk [vmem:[#allocation2 + $0x110] sm:$0xff] %vm533, 0.0
        %570 = vst.msk [vmem:[#allocation2 + $0x118] sm:$0x3f] %vm536, 0.0
        %571 = vst.msk [vmem:[#allocation2 + $0x120] sm:$0xff] %vm533, 0.0
        %572 = vst.msk [vmem:[#allocation2 + $0x128] sm:$0xff] %vm533, 0.0
        %573 = vst.msk [vmem:[#allocation2 + $0x130] sm:$0x3f] %vm536, 0.0
        %574 = vst.msk [vmem:[#allocation2 + $0x138] sm:$0xff] %vm533, 0.0
        %575 = vst.msk [vmem:[#allocation2 + $0x140] sm:$0xff] %vm533, 0.0
        %576 = vst.msk [vmem:[#allocation2 + $0x148] sm:$0x3f] %vm536, 0.0
        %577 = vst.msk [vmem:[#allocation2 + $0x150] sm:$0xff] %vm533, 0.0
        %578 = vst.msk [vmem:[#allocation2 + $0x158] sm:$0xff] %vm533, 0.0
        %579 = vst.msk [vmem:[#allocation2 + $0x160] sm:$0x3f] %vm536, 0.0
        %580 = vst.msk [vmem:[#allocation2 + $0x168] sm:$0xff] %vm533, 0.0
        %581 = vst.msk [vmem:[#allocation2 + $0x170] sm:$0xff] %vm533, 0.0
        %582 = vst.msk [vmem:[#allocation2 + $0x178] sm:$0x3f] %vm536, 0.0
        %583 = vst.msk [vmem:[#allocation2 + $0x180] sm:$0xff] %vm533, 0.0
        %584 = vst.msk [vmem:[#allocation2 + $0x188] sm:$0xff] %vm533, 0.0
        %585 = vst.msk [vmem:[#allocation2 + $0x190] sm:$0x3f] %vm536, 0.0
        %586 = vst.msk [vmem:[#allocation2 + $0x198] sm:$0xff] %vm533, 0.0
        %587 = vst.msk [vmem:[#allocation2 + $0x1a0] sm:$0xff] %vm533, 0.0
        %588 = vst.msk [vmem:[#allocation2 + $0x1a8] sm:$0x3f] %vm536, 0.0
        %589 = vst.msk [vmem:[#allocation2 + $0x1b0] sm:$0xff] %vm533, 0.0
        %590 = vst.msk [vmem:[#allocation2 + $0x1b8] sm:$0xff] %vm533, 0.0
        %591 = vst.msk [vmem:[#allocation2 + $0x1c0] sm:$0x3f] %vm536, 0.0
        %592 = vst.msk [vmem:[#allocation2 + $0x1c8] sm:$0xff] %vm533, 0.0
        %593 = vst.msk [vmem:[#allocation2 + $0x1d0] sm:$0xff] %vm533, 0.0
        %594 = vst.msk [vmem:[#allocation2 + $0x1d8] sm:$0x3f] %vm536, 0.0
        %595 = vst.msk [vmem:[#allocation2 + $0x1e0] sm:$0xff] %vm533, 0.0
        %596 = vst.msk [vmem:[#allocation2 + $0x1e8] sm:$0xff] %vm533, 0.0
        %597 = vst.msk [vmem:[#allocation2 + $0x1f0] sm:$0x3f] %vm536, 0.0
        %598 = vst.msk [vmem:[#allocation2 + $0x1f8] sm:$0xff] %vm533, 0.0
        %599 = vst.msk [vmem:[#allocation2 + $0x200] sm:$0xff] %vm533, 0.0
        %600 = vst.msk [vmem:[#allocation2 + $0x208] sm:$0x3f] %vm536, 0.0
        %601 = vst.msk [vmem:[#allocation2 + $0x210] sm:$0xff] %vm533, 0.0
        %602 = vst.msk [vmem:[#allocation2 + $0x218] sm:$0xff] %vm533, 0.0
        %603 = vst.msk [vmem:[#allocation2 + $0x220] sm:$0x3f] %vm536, 0.0
        %604 = vst.msk [vmem:[#allocation2 + $0x228] sm:$0xff] %vm533, 0.0
        %605 = vst.msk [vmem:[#allocation2 + $0x230] sm:$0xff] %vm533, 0.0
        %606 = vst.msk [vmem:[#allocation2 + $0x238] sm:$0x3f] %vm536, 0.0
        %607 = vst.msk [vmem:[#allocation2 + $0x240] sm:$0xff] %vm533, 0.0
        %608 = vst.msk [vmem:[#allocation2 + $0x248] sm:$0xff] %vm533, 0.0
        %609 = vst.msk [vmem:[#allocation2 + $0x250] sm:$0x3f] %vm536, 0.0
        %610 = vst.msk [vmem:[#allocation2 + $0x258] sm:$0xff] %vm533, 0.0
        %611 = vst.msk [vmem:[#allocation2 + $0x260] sm:$0xff] %vm533, 0.0
        %612 = vst.msk [vmem:[#allocation2 + $0x268] sm:$0x3f] %vm536, 0.0
        %613 = vst.msk [vmem:[#allocation2 + $0x270] sm:$0xff] %vm533, 0.0
        %614 = vst.msk [vmem:[#allocation2 + $0x278] sm:$0xff] %vm533, 0.0
        %615 = vst.msk [vmem:[#allocation2 + $0x280] sm:$0x3f] %vm536, 0.0
        %616 = vst.msk [vmem:[#allocation2 + $0x288] sm:$0xff] %vm533, 0.0
        %617 = vst.msk [vmem:[#allocation2 + $0x290] sm:$0xff] %vm533, 0.0
        %618 = vst.msk [vmem:[#allocation2 + $0x298] sm:$0x3f] %vm536, 0.0
        %v619 = vld [vmem:[%s264] sm:$0xff]
        %v620 = vld [vmem:[%s264 + $0x8] sm:$0xff]
        %v621 = vld [vmem:[%s274] sm:$0xff]
        %v622 = vld [vmem:[%s274 + $0x8] sm:$0xff]
        %v623 = vadd.f32 %v619, %v620
        %624 = vadd.xlane.f32.xlu0 %v623
        %v625 = vpop.xlane.xlu0 %624
        %v626 = vrcp.pop 256.0
        %v627 = vmul.f32 256.0, %v626
        %v628 = vsub.f32 1.0, %v627
        %v629 = vmul.f32 %v626, %v628
        %v630 = vadd.f32 %v626, %v629
        %vm631 = vweird.f32 %v626
        %v632 = vsel %vm631, %v626, %v630
        %v633 = vmul.f32 %v625, %v632
        %v634 = vmax.f32 %v619, %v620
        %635 = vmax.xlane.f32.xlu0 %v634
        %v636 = vpop.xlane.xlu0 %635
        %v637 = vadd.f32 %v621, %v622
        %638 = vadd.xlane.f32.xlu0 %v637
        %v639 = vpop.xlane.xlu0 %638
        %v640 = vmul.f32 %v639, %v632
        %v641 = vmax.f32 %v621, %v622
        %642 = vmax.xlane.f32.xlu0 %v641
        %v643 = vpop.xlane.xlu0 %642
        %v645 = vlaneseq
        %v646 = vand.u32 %v645, 127
        %v647 = vperm.slane %v633, %v646
        %v650 = vperm.slane %v636, %v646
        %v653 = vperm.slane %v640, %v646
        %v656 = vperm.slane %v643, %v646
        %vm658 = vcmask 1040384
        %v659 = vsel %vm658, %v647, %v650
        %vm660 = vcmask 1041408
        %v661 = vsel %vm660, %v659, %v653
        %vm662 = vcmask 1042432
        %v663 = vsel %vm662, %v661, %v656
        %665 = vrot.lane.b32.xlu0 %v663, 1
        %v666 = vpop.permute.xlu0 %665
        %vm668 = vcmask 7168
        %v669 = vsel %vm668, 0.0, %v666
        %vm670 = vcmask 72704
        %v671 = vsel %vm670, %v669, 0.0
        %v672 = vstv %s531
        %v673 = vstv %s323
        %v674 = vmul.f32 %v673, %v671
        %v675 = vadd.f32 %v672, %v674
        %v676 = vstv %s324
        %v677 = vmul.f32 %v676, %v671
        %679 = vrot.lane.b32.xlu0 %v677, 127
        %v680 = vpop.permute.xlu0 %679
        %v682 = vadd.f32 %v675, %v680
        %v683 = vstv %s325
        %v684 = vmul.f32 %v683, %v671
        %686 = vrot.lane.b32.xlu0 %v684, 126
        %v687 = vpop.permute.xlu0 %686
        %v689 = vadd.f32 %v682, %v687
        %v690 = vstv %s326
        %v691 = vmul.f32 %v690, %v671
        %v693 = vrot.slane %v691, 1
        %v695 = vadd.f32 %v689, %v693
        %v696 = vstv %s327
        %v697 = vmul.f32 %v696, %v671
        %v699 = vrot.slane %v697, 1
        %700 = vrot.lane.b32.xlu0 %v699, 127
        %v701 = vpop.permute.xlu0 %700
        %v703 = vadd.f32 %v695, %v701
        %v704 = vstv %s328
        %v705 = vmul.f32 %v704, %v671
        %v707 = vrot.slane %v705, 1
        %708 = vrot.lane.b32.xlu0 %v707, 126
        %v709 = vpop.permute.xlu0 %708
        %v711 = vadd.f32 %v703, %v709
        %v712 = vstv %s329
        %v713 = vmul.f32 %v712, %v671
        %v715 = vrot.slane %v713, 2
        %v717 = vadd.f32 %v711, %v715
        %v718 = vstv %s330
        %v719 = vmul.f32 %v718, %v671
        %v721 = vrot.slane %v719, 2
        %722 = vrot.lane.b32.xlu0 %v721, 127
        %v723 = vpop.permute.xlu0 %722
        %v725 = vadd.f32 %v717, %v723
        %v726 = vstv %s331
        %v727 = vmul.f32 %v726, %v671
        %v729 = vrot.slane %v727, 2
        %730 = vrot.lane.b32.xlu0 %v729, 126
        %v731 = vpop.permute.xlu0 %730
        %v733 = vadd.f32 %v725, %v731
        %v734 = vstv %s332
        %v735 = vmul.f32 %v734, %v671
        %v737 = vrot.slane %v735, 3
        %v739 = vadd.f32 %v733, %v737
        %v740 = vstv %s333
        %v741 = vmul.f32 %v740, %v671
        %v743 = vrot.slane %v741, 3
        %744 = vrot.lane.b32.xlu0 %v743, 127
        %v745 = vpop.permute.xlu0 %744
        %v747 = vadd.f32 %v739, %v745
        %v748 = vstv %s334
        %v749 = vmul.f32 %v748, %v671
        %v751 = vrot.slane %v749, 3
        %752 = vrot.lane.b32.xlu0 %v751, 126
        %v753 = vpop.permute.xlu0 %752
        %v755 = vadd.f32 %v747, %v753
        %v756 = vsub.f32 0.0, %v755
        %v757 = vmul.f32 %v756, 1.442695
        %v758 = vpow.pop %v757
        %v759 = vadd.f32 %v758, 1.0
        %v760 = vrcp.pop %v759
        %v761 = vmul.f32 %v759, %v760
        %v762 = vsub.f32 1.0, %v761
        %v763 = vmul.f32 %v760, %v762
        %v764 = vadd.f32 %v760, %v763
        %vm765 = vweird.f32 %v759
        %vm766 = vweird.f32 %v760
        %vm767 = vmor %vm765, %vm766
        %v768 = vsel %vm767, %v760, %v764
        %v769 = vand.u32 2147483647, %v759
        %vm770 = vcmp.eq.f32.partialorder %v769, 8.507059e+37
        %v771 = vand.u32 %v759, 2147483648
        %v772 = vor.u32 1.1754944e-38, %v771
        %v773 = vsel %vm770, %v772, %v768
        %v774 = vmul.f32 1.0, %v773
        %v775 = vrot.slane %v619, 4
        %v776 = vadd.f32 %v619, %v775
        %v777 = vrot.slane %v776, 2
        %v778 = vadd.f32 %v776, %v777
        %v779 = vrot.slane %v778, 1
        %v780 = vadd.f32 %v778, %v779
        %v781 = vrot.slane %v620, 4
        %v782 = vadd.f32 %v620, %v781
        %v783 = vrot.slane %v782, 2
        %v784 = vadd.f32 %v782, %v783
        %v785 = vrot.slane %v784, 1
        %v786 = vadd.f32 %v784, %v785
        %v787 = vrcp.pop 8.0
        %v788 = vmul.f32 8.0, %v787
        %v789 = vsub.f32 1.0, %v788
        %v790 = vmul.f32 %v787, %v789
        %v791 = vadd.f32 %v787, %v790
        %vm792 = vweird.f32 %v787
        %v793 = vsel %vm792, %v787, %v791
        %v794 = vmul.f32 %v780, %v793
        %v795 = vmul.f32 %v786, %v793
        %797 = vrot.lane.b32.xlu0 %v794, 112
        %v798 = vpop.permute.xlu0 %797
        %800 = vrot.lane.b32.xlu0 %v794, 96
        %v801 = vpop.permute.xlu0 %800
        %803 = vrot.lane.b32.xlu0 %v794, 80
        %v804 = vpop.permute.xlu0 %803
        %806 = vrot.lane.b32.xlu0 %v794, 64
        %v807 = vpop.permute.xlu0 %806
        %809 = vrot.lane.b32.xlu0 %v794, 48
        %v810 = vpop.permute.xlu0 %809
        %812 = vrot.lane.b32.xlu0 %v794, 32
        %v813 = vpop.permute.xlu0 %812
        %815 = vrot.lane.b32.xlu0 %v794, 16
        %v816 = vpop.permute.xlu0 %815
        %819 = vrot.lane.b32.xlu0 %v795, 112
        %v820 = vpop.permute.xlu0 %819
        %822 = vrot.lane.b32.xlu0 %v795, 96
        %v823 = vpop.permute.xlu0 %822
        %825 = vrot.lane.b32.xlu0 %v795, 80
        %v826 = vpop.permute.xlu0 %825
        %828 = vrot.lane.b32.xlu0 %v795, 64
        %v829 = vpop.permute.xlu0 %828
        %831 = vrot.lane.b32.xlu0 %v795, 48
        %v832 = vpop.permute.xlu0 %831
        %834 = vrot.lane.b32.xlu0 %v795, 32
        %v835 = vpop.permute.xlu0 %834
        %837 = vrot.lane.b32.xlu0 %v795, 16
        %v838 = vpop.permute.xlu0 %837
        %v840 = vsel %vm658, %v794, %v798
        %v841 = vsel %vm660, %v840, %v801
        %v842 = vsel %vm662, %v841, %v804
        %vm843 = vcmask 1043456
        %v844 = vsel %vm843, %v842, %v807
        %vm845 = vcmask 1044480
        %v846 = vsel %vm845, %v844, %v810
        %vm847 = vcmask 1045504
        %v848 = vsel %vm847, %v846, %v813
        %vm849 = vcmask 1046528
        %v850 = vsel %vm849, %v848, %v816
        %v851 = vsel %vm658, %v795, %v820
        %v852 = vsel %vm660, %v851, %v823
        %v853 = vsel %vm662, %v852, %v826
        %v854 = vsel %vm843, %v853, %v829
        %v855 = vsel %vm845, %v854, %v832
        %v856 = vsel %vm847, %v855, %v835
        %v857 = vsel %vm849, %v856, %v838
        %v858 = vrot.slane %v619, 4
        %v859 = vmax.f32 %v619, %v858
        %v860 = vrot.slane %v859, 2
        %v861 = vmax.f32 %v859, %v860
        %v862 = vrot.slane %v861, 1
        %v863 = vmax.f32 %v861, %v862
        %v864 = vrot.slane %v620, 4
        %v865 = vmax.f32 %v620, %v864
        %v866 = vrot.slane %v865, 2
        %v867 = vmax.f32 %v865, %v866
        %v868 = vrot.slane %v867, 1
        %v869 = vmax.f32 %v867, %v868
        %871 = vrot.lane.b32.xlu0 %v863, 112
        %v872 = vpop.permute.xlu0 %871
        %874 = vrot.lane.b32.xlu0 %v863, 96
        %v875 = vpop.permute.xlu0 %874
        %877 = vrot.lane.b32.xlu0 %v863, 80
        %v878 = vpop.permute.xlu0 %877
        %880 = vrot.lane.b32.xlu0 %v863, 64
        %v881 = vpop.permute.xlu0 %880
        %883 = vrot.lane.b32.xlu0 %v863, 48
        %v884 = vpop.permute.xlu0 %883
        %886 = vrot.lane.b32.xlu0 %v863, 32
        %v887 = vpop.permute.xlu0 %886
        %889 = vrot.lane.b32.xlu0 %v863, 16
        %v890 = vpop.permute.xlu0 %889
        %893 = vrot.lane.b32.xlu0 %v869, 112
        %v894 = vpop.permute.xlu0 %893
        %896 = vrot.lane.b32.xlu0 %v869, 96
        %v897 = vpop.permute.xlu0 %896
        %899 = vrot.lane.b32.xlu0 %v869, 80
        %v900 = vpop.permute.xlu0 %899
        %902 = vrot.lane.b32.xlu0 %v869, 64
        %v903 = vpop.permute.xlu0 %902
        %905 = vrot.lane.b32.xlu0 %v869, 48
        %v906 = vpop.permute.xlu0 %905
        %908 = vrot.lane.b32.xlu0 %v869, 32
        %v909 = vpop.permute.xlu0 %908
        %911 = vrot.lane.b32.xlu0 %v869, 16
        %v912 = vpop.permute.xlu0 %911
        %v914 = vsel %vm658, %v863, %v872
        %v915 = vsel %vm660, %v914, %v875
        %v916 = vsel %vm662, %v915, %v878
        %v917 = vsel %vm843, %v916, %v881
        %v918 = vsel %vm845, %v917, %v884
        %v919 = vsel %vm847, %v918, %v887
        %v920 = vsel %vm849, %v919, %v890
        %v921 = vsel %vm658, %v869, %v894
        %v922 = vsel %vm660, %v921, %v897
        %v923 = vsel %vm662, %v922, %v900
        %v924 = vsel %vm843, %v923, %v903
        %v925 = vsel %vm845, %v924, %v906
        %v926 = vsel %vm847, %v925, %v909
        %v927 = vsel %vm849, %v926, %v912
        %v928 = vrot.slane %v621, 4
        %v929 = vadd.f32 %v621, %v928
        %v930 = vrot.slane %v929, 2
        %v931 = vadd.f32 %v929, %v930
        %v932 = vrot.slane %v931, 1
        %v933 = vadd.f32 %v931, %v932
        %v934 = vrot.slane %v622, 4
        %v935 = vadd.f32 %v622, %v934
        %v936 = vrot.slane %v935, 2
        %v937 = vadd.f32 %v935, %v936
        %v938 = vrot.slane %v937, 1
        %v939 = vadd.f32 %v937, %v938
        %v940 = vmul.f32 %v933, %v793
        %v941 = vmul.f32 %v939, %v793
        %943 = vrot.lane.b32.xlu0 %v940, 112
        %v944 = vpop.permute.xlu0 %943
        %946 = vrot.lane.b32.xlu0 %v940, 96
        %v947 = vpop.permute.xlu0 %946
        %949 = vrot.lane.b32.xlu0 %v940, 80
        %v950 = vpop.permute.xlu0 %949
        %952 = vrot.lane.b32.xlu0 %v940, 64
        %v953 = vpop.permute.xlu0 %952
        %955 = vrot.lane.b32.xlu0 %v940, 48
        %v956 = vpop.permute.xlu0 %955
        %958 = vrot.lane.b32.xlu0 %v940, 32
        %v959 = vpop.permute.xlu0 %958
        %961 = vrot.lane.b32.xlu0 %v940, 16
        %v962 = vpop.permute.xlu0 %961
        %965 = vrot.lane.b32.xlu0 %v941, 112
        %v966 = vpop.permute.xlu0 %965
        %968 = vrot.lane.b32.xlu0 %v941, 96
        %v969 = vpop.permute.xlu0 %968
        %971 = vrot.lane.b32.xlu0 %v941, 80
        %v972 = vpop.permute.xlu0 %971
        %974 = vrot.lane.b32.xlu0 %v941, 64
        %v975 = vpop.permute.xlu0 %974
        %977 = vrot.lane.b32.xlu0 %v941, 48
        %v978 = vpop.permute.xlu0 %977
        %980 = vrot.lane.b32.xlu0 %v941, 32
        %v981 = vpop.permute.xlu0 %980
        %983 = vrot.lane.b32.xlu0 %v941, 16
        %v984 = vpop.permute.xlu0 %983
        %v986 = vsel %vm658, %v940, %v944
        %v987 = vsel %vm660, %v986, %v947
        %v988 = vsel %vm662, %v987, %v950
        %v989 = vsel %vm843, %v988, %v953
        %v990 = vsel %vm845, %v989, %v956
        %v991 = vsel %vm847, %v990, %v959
        %v992 = vsel %vm849, %v991, %v962
        %v993 = vsel %vm658, %v941, %v966
        %v994 = vsel %vm660, %v993, %v969
        %v995 = vsel %vm662, %v994, %v972
        %v996 = vsel %vm843, %v995, %v975
        %v997 = vsel %vm845, %v996, %v978
        %v998 = vsel %vm847, %v997, %v981
        %v999 = vsel %vm849, %v998, %v984
        %v1000 = vrot.slane %v621, 4
        %v1001 = vmax.f32 %v621, %v1000
        %v1002 = vrot.slane %v1001, 2
        %v1003 = vmax.f32 %v1001, %v1002
        %v1004 = vrot.slane %v1003, 1
        %v1005 = vmax.f32 %v1003, %v1004
        %v1006 = vrot.slane %v622, 4
        %v1007 = vmax.f32 %v622, %v1006
        %v1008 = vrot.slane %v1007, 2
        %v1009 = vmax.f32 %v1007, %v1008
        %v1010 = vrot.slane %v1009, 1
        %v1011 = vmax.f32 %v1009, %v1010
        %1013 = vrot.lane.b32.xlu0 %v1005, 112
        %v1014 = vpop.permute.xlu0 %1013
        %1016 = vrot.lane.b32.xlu0 %v1005, 96
        %v1017 = vpop.permute.xlu0 %1016
        %1019 = vrot.lane.b32.xlu0 %v1005, 80
        %v1020 = vpop.permute.xlu0 %1019
        %1022 = vrot.lane.b32.xlu0 %v1005, 64
        %v1023 = vpop.permute.xlu0 %1022
        %1025 = vrot.lane.b32.xlu0 %v1005, 48
        %v1026 = vpop.permute.xlu0 %1025
        %1028 = vrot.lane.b32.xlu0 %v1005, 32
        %v1029 = vpop.permute.xlu0 %1028
        %1031 = vrot.lane.b32.xlu0 %v1005, 16
        %v1032 = vpop.permute.xlu0 %1031
        %1035 = vrot.lane.b32.xlu0 %v1011, 112
        %v1036 = vpop.permute.xlu0 %1035
        %1038 = vrot.lane.b32.xlu0 %v1011, 96
        %v1039 = vpop.permute.xlu0 %1038
        %1041 = vrot.lane.b32.xlu0 %v1011, 80
        %v1042 = vpop.permute.xlu0 %1041
        %1044 = vrot.lane.b32.xlu0 %v1011, 64
        %v1045 = vpop.permute.xlu0 %1044
        %1047 = vrot.lane.b32.xlu0 %v1011, 48
        %v1048 = vpop.permute.xlu0 %1047
        %1050 = vrot.lane.b32.xlu0 %v1011, 32
        %v1051 = vpop.permute.xlu0 %1050
        %1053 = vrot.lane.b32.xlu0 %v1011, 16
        %v1054 = vpop.permute.xlu0 %1053
        %v1056 = vsel %vm658, %v1005, %v1014
        %v1057 = vsel %vm660, %v1056, %v1017
        %v1058 = vsel %vm662, %v1057, %v1020
        %v1059 = vsel %vm843, %v1058, %v1023
        %v1060 = vsel %vm845, %v1059, %v1026
        %v1061 = vsel %vm847, %v1060, %v1029
        %v1062 = vsel %vm849, %v1061, %v1032
        %v1063 = vsel %vm658, %v1011, %v1036
        %v1064 = vsel %vm660, %v1063, %v1039
        %v1065 = vsel %vm662, %v1064, %v1042
        %v1066 = vsel %vm843, %v1065, %v1045
        %v1067 = vsel %vm845, %v1066, %v1048
        %v1068 = vsel %vm847, %v1067, %v1051
        %v1069 = vsel %vm849, %v1068, %v1054
        %1072 = vrot.lane.b32.xlu0 %v850, 3
        %v1073 = vpop.permute.xlu0 %1072
        %1074 = vrot.lane.b32.xlu0 %v857, 3
        %v1075 = vpop.permute.xlu0 %1074
        %vm1078 = vcmask 23552
        %v1079 = vsel %vm1078, 0.0, %v1073
        %v1080 = vsel %vm1078, 0.0, %v1075
        %vm1081 = vcmask 154624
        %v1082 = vsel %vm1081, %v1079, 0.0
        %v1083 = vsel %vm1081, %v1080, 0.0
        %1084 = vst.msk [vmem:[#allocation2 + $0x3] sm:$0xff] %vm533, %v1082
        %1085 = vst.msk [vmem:[#allocation2 + $0xb] sm:$0xff] %vm533, %v1083
        %1088 = vrot.lane.b32.xlu0 %v1082, 127
        %v1089 = vpop.permute.xlu0 %1088
        %1090 = vrot.lane.b32.xlu0 %v1083, 127
        %v1091 = vpop.permute.xlu0 %1090
        %s1094 = scalar_lea.vmem [#allocation2], 24
        %1095 = vst.msk [vmem:[%s1094 + $0x3] sm:$0xff] %vm533, %v1089
        %1096 = vst.msk [vmem:[%s1094 + $0xb] sm:$0xff] %vm533, %v1091
        %1097 = vrot.lane.b32.xlu0 %v1082, 126
        %v1098 = vpop.permute.xlu0 %1097
        %1099 = vrot.lane.b32.xlu0 %v1083, 126
        %v1100 = vpop.permute.xlu0 %1099
        %s1103 = scalar_lea.vmem [#allocation2], 48
        %1104 = vst.msk [vmem:[%s1103 + $0x3] sm:$0xff] %vm533, %v1098
        %1105 = vst.msk [vmem:[%s1103 + $0xb] sm:$0xff] %vm533, %v1100
        %1106 = vrot.lane.b32.xlu0 %v1082, 125
        %v1107 = vpop.permute.xlu0 %1106
        %1108 = vrot.lane.b32.xlu0 %v1083, 125
        %v1109 = vpop.permute.xlu0 %1108
        %s1112 = scalar_lea.vmem [#allocation2], 72
        %1113 = vst.msk [vmem:[%s1112 + $0x3] sm:$0xff] %vm533, %v1107
        %1114 = vst.msk [vmem:[%s1112 + $0xb] sm:$0xff] %vm533, %v1109
        %1115 = vrot.lane.b32.xlu0 %v1082, 124
        %v1116 = vpop.permute.xlu0 %1115
        %1117 = vrot.lane.b32.xlu0 %v1083, 124
        %v1118 = vpop.permute.xlu0 %1117
        %s1121 = scalar_lea.vmem [#allocation2], 96
        %1122 = vst.msk [vmem:[%s1121 + $0x3] sm:$0xff] %vm533, %v1116
        %1123 = vst.msk [vmem:[%s1121 + $0xb] sm:$0xff] %vm533, %v1118
        %1124 = vrot.lane.b32.xlu0 %v1082, 123
        %v1125 = vpop.permute.xlu0 %1124
        %1126 = vrot.lane.b32.xlu0 %v1083, 123
        %v1127 = vpop.permute.xlu0 %1126
        %s1130 = scalar_lea.vmem [#allocation2], 120
        %1131 = vst.msk [vmem:[%s1130 + $0x3] sm:$0xff] %vm533, %v1125
        %1132 = vst.msk [vmem:[%s1130 + $0xb] sm:$0xff] %vm533, %v1127
        %1133 = vrot.lane.b32.xlu0 %v1082, 122
        %v1134 = vpop.permute.xlu0 %1133
        %1135 = vrot.lane.b32.xlu0 %v1083, 122
        %v1136 = vpop.permute.xlu0 %1135
        %s1139 = scalar_lea.vmem [#allocation2], 144
        %1140 = vst.msk [vmem:[%s1139 + $0x3] sm:$0xff] %vm533, %v1134
        %1141 = vst.msk [vmem:[%s1139 + $0xb] sm:$0xff] %vm533, %v1136
        %1144 = vrot.lane.b32.xlu0 %v920, 3
        %v1145 = vpop.permute.xlu0 %1144
        %1146 = vrot.lane.b32.xlu0 %v927, 3
        %v1147 = vpop.permute.xlu0 %1146
        %v1150 = vsel %vm1078, 0.0, %v1145
        %v1151 = vsel %vm1078, 0.0, %v1147
        %v1152 = vsel %vm1081, %v1150, 0.0
        %v1153 = vsel %vm1081, %v1151, 0.0
        %s1154 = scalar_lea.vmem [#allocation2], 168
        %1155 = vst.msk [vmem:[%s1154 + $0x3] sm:$0xff] %vm533, %v1152
        %1156 = vst.msk [vmem:[%s1154 + $0xb] sm:$0xff] %vm533, %v1153
        %1159 = vrot.lane.b32.xlu0 %v1152, 127
        %v1160 = vpop.permute.xlu0 %1159
        %1161 = vrot.lane.b32.xlu0 %v1153, 127
        %v1162 = vpop.permute.xlu0 %1161
        %s1165 = scalar_lea.vmem [#allocation2], 192
        %1166 = vst.msk [vmem:[%s1165 + $0x3] sm:$0xff] %vm533, %v1160
        %1167 = vst.msk [vmem:[%s1165 + $0xb] sm:$0xff] %vm533, %v1162
        %1168 = vrot.lane.b32.xlu0 %v1152, 126
        %v1169 = vpop.permute.xlu0 %1168
        %1170 = vrot.lane.b32.xlu0 %v1153, 126
        %v1171 = vpop.permute.xlu0 %1170
        %s1174 = scalar_lea.vmem [#allocation2], 216
        %1175 = vst.msk [vmem:[%s1174 + $0x3] sm:$0xff] %vm533, %v1169
        %1176 = vst.msk [vmem:[%s1174 + $0xb] sm:$0xff] %vm533, %v1171
        %1177 = vrot.lane.b32.xlu0 %v1152, 125
        %v1178 = vpop.permute.xlu0 %1177
        %1179 = vrot.lane.b32.xlu0 %v1153, 125
        %v1180 = vpop.permute.xlu0 %1179
        %s1183 = scalar_lea.vmem [#allocation2], 240
        %1184 = vst.msk [vmem:[%s1183 + $0x3] sm:$0xff] %vm533, %v1178
        %1185 = vst.msk [vmem:[%s1183 + $0xb] sm:$0xff] %vm533, %v1180
        %1186 = vrot.lane.b32.xlu0 %v1152, 124
        %v1187 = vpop.permute.xlu0 %1186
        %1188 = vrot.lane.b32.xlu0 %v1153, 124
        %v1189 = vpop.permute.xlu0 %1188
        %s1192 = scalar_lea.vmem [#allocation2], 264
        %1193 = vst.msk [vmem:[%s1192 + $0x3] sm:$0xff] %vm533, %v1187
        %1194 = vst.msk [vmem:[%s1192 + $0xb] sm:$0xff] %vm533, %v1189
        %1195 = vrot.lane.b32.xlu0 %v1152, 123
        %v1196 = vpop.permute.xlu0 %1195
        %1197 = vrot.lane.b32.xlu0 %v1153, 123
        %v1198 = vpop.permute.xlu0 %1197
        %s1201 = scalar_lea.vmem [#allocation2], 288
        %1202 = vst.msk [vmem:[%s1201 + $0x3] sm:$0xff] %vm533, %v1196
        %1203 = vst.msk [vmem:[%s1201 + $0xb] sm:$0xff] %vm533, %v1198
        %1204 = vrot.lane.b32.xlu0 %v1152, 122
        %v1205 = vpop.permute.xlu0 %1204
        %1206 = vrot.lane.b32.xlu0 %v1153, 122
        %v1207 = vpop.permute.xlu0 %1206
        %s1210 = scalar_lea.vmem [#allocation2], 312
        %1211 = vst.msk [vmem:[%s1210 + $0x3] sm:$0xff] %vm533, %v1205
        %1212 = vst.msk [vmem:[%s1210 + $0xb] sm:$0xff] %vm533, %v1207
        %1215 = vrot.lane.b32.xlu0 %v992, 3
        %v1216 = vpop.permute.xlu0 %1215
        %1217 = vrot.lane.b32.xlu0 %v999, 3
        %v1218 = vpop.permute.xlu0 %1217
        %v1221 = vsel %vm1078, 0.0, %v1216
        %v1222 = vsel %vm1078, 0.0, %v1218
        %v1223 = vsel %vm1081, %v1221, 0.0
        %v1224 = vsel %vm1081, %v1222, 0.0
        %s1225 = scalar_lea.vmem [#allocation2], 336
        %1226 = vst.msk [vmem:[%s1225 + $0x3] sm:$0xff] %vm533, %v1223
        %1227 = vst.msk [vmem:[%s1225 + $0xb] sm:$0xff] %vm533, %v1224
        %1230 = vrot.lane.b32.xlu0 %v1223, 127
        %v1231 = vpop.permute.xlu0 %1230
        %1232 = vrot.lane.b32.xlu0 %v1224, 127
        %v1233 = vpop.permute.xlu0 %1232
        %s1236 = scalar_lea.vmem [#allocation2], 360
        %1237 = vst.msk [vmem:[%s1236 + $0x3] sm:$0xff] %vm533, %v1231
        %1238 = vst.msk [vmem:[%s1236 + $0xb] sm:$0xff] %vm533, %v1233
        %1239 = vrot.lane.b32.xlu0 %v1223, 126
        %v1240 = vpop.permute.xlu0 %1239
        %1241 = vrot.lane.b32.xlu0 %v1224, 126
        %v1242 = vpop.permute.xlu0 %1241
        %s1245 = scalar_lea.vmem [#allocation2], 384
        %1246 = vst.msk [vmem:[%s1245 + $0x3] sm:$0xff] %vm533, %v1240
        %1247 = vst.msk [vmem:[%s1245 + $0xb] sm:$0xff] %vm533, %v1242
        %1248 = vrot.lane.b32.xlu0 %v1223, 125
        %v1249 = vpop.permute.xlu0 %1248
        %1250 = vrot.lane.b32.xlu0 %v1224, 125
        %v1251 = vpop.permute.xlu0 %1250
        %s1254 = scalar_lea.vmem [#allocation2], 408
        %1255 = vst.msk [vmem:[%s1254 + $0x3] sm:$0xff] %vm533, %v1249
        %1256 = vst.msk [vmem:[%s1254 + $0xb] sm:$0xff] %vm533, %v1251
        %1257 = vrot.lane.b32.xlu0 %v1223, 124
        %v1258 = vpop.permute.xlu0 %1257
        %1259 = vrot.lane.b32.xlu0 %v1224, 124
        %v1260 = vpop.permute.xlu0 %1259
        %s1263 = scalar_lea.vmem [#allocation2], 432
        %1264 = vst.msk [vmem:[%s1263 + $0x3] sm:$0xff] %vm533, %v1258
        %1265 = vst.msk [vmem:[%s1263 + $0xb] sm:$0xff] %vm533, %v1260
        %1266 = vrot.lane.b32.xlu0 %v1223, 123
        %v1267 = vpop.permute.xlu0 %1266
        %1268 = vrot.lane.b32.xlu0 %v1224, 123
        %v1269 = vpop.permute.xlu0 %1268
        %s1272 = scalar_lea.vmem [#allocation2], 456
        %1273 = vst.msk [vmem:[%s1272 + $0x3] sm:$0xff] %vm533, %v1267
        %1274 = vst.msk [vmem:[%s1272 + $0xb] sm:$0xff] %vm533, %v1269
        %1275 = vrot.lane.b32.xlu0 %v1223, 122
        %v1276 = vpop.permute.xlu0 %1275
        %1277 = vrot.lane.b32.xlu0 %v1224, 122
        %v1278 = vpop.permute.xlu0 %1277
        %s1281 = scalar_lea.vmem [#allocation2], 480
        %1282 = vst.msk [vmem:[%s1281 + $0x3] sm:$0xff] %vm533, %v1276
        %1283 = vst.msk [vmem:[%s1281 + $0xb] sm:$0xff] %vm533, %v1278
        %1286 = vrot.lane.b32.xlu0 %v1062, 3
        %v1287 = vpop.permute.xlu0 %1286
        %1288 = vrot.lane.b32.xlu0 %v1069, 3
        %v1289 = vpop.permute.xlu0 %1288
        %v1292 = vsel %vm1078, 0.0, %v1287
        %v1293 = vsel %vm1078, 0.0, %v1289
        %v1294 = vsel %vm1081, %v1292, 0.0
        %v1295 = vsel %vm1081, %v1293, 0.0
        %s1296 = scalar_lea.vmem [#allocation2], 504
        %1297 = vst.msk [vmem:[%s1296 + $0x3] sm:$0xff] %vm533, %v1294
        %1298 = vst.msk [vmem:[%s1296 + $0xb] sm:$0xff] %vm533, %v1295
        %1301 = vrot.lane.b32.xlu0 %v1294, 127
        %v1302 = vpop.permute.xlu0 %1301
        %1303 = vrot.lane.b32.xlu0 %v1295, 127
        %v1304 = vpop.permute.xlu0 %1303
        %s1307 = scalar_lea.vmem [#allocation2], 528
        %1308 = vst.msk [vmem:[%s1307 + $0x3] sm:$0xff] %vm533, %v1302
        %1309 = vst.msk [vmem:[%s1307 + $0xb] sm:$0xff] %vm533, %v1304
        %1310 = vrot.lane.b32.xlu0 %v1294, 126
        %v1311 = vpop.permute.xlu0 %1310
        %1312 = vrot.lane.b32.xlu0 %v1295, 126
        %v1313 = vpop.permute.xlu0 %1312
        %s1316 = scalar_lea.vmem [#allocation2], 552
        %1317 = vst.msk [vmem:[%s1316 + $0x3] sm:$0xff] %vm533, %v1311
        %1318 = vst.msk [vmem:[%s1316 + $0xb] sm:$0xff] %vm533, %v1313
        %1319 = vrot.lane.b32.xlu0 %v1294, 125
        %v1320 = vpop.permute.xlu0 %1319
        %1321 = vrot.lane.b32.xlu0 %v1295, 125
        %v1322 = vpop.permute.xlu0 %1321
        %s1325 = scalar_lea.vmem [#allocation2], 576
        %1326 = vst.msk [vmem:[%s1325 + $0x3] sm:$0xff] %vm533, %v1320
        %1327 = vst.msk [vmem:[%s1325 + $0xb] sm:$0xff] %vm533, %v1322
        %1328 = vrot.lane.b32.xlu0 %v1294, 124
        %v1329 = vpop.permute.xlu0 %1328
        %1330 = vrot.lane.b32.xlu0 %v1295, 124
        %v1331 = vpop.permute.xlu0 %1330
        %s1334 = scalar_lea.vmem [#allocation2], 600
        %1335 = vst.msk [vmem:[%s1334 + $0x3] sm:$0xff] %vm533, %v1329
        %1336 = vst.msk [vmem:[%s1334 + $0xb] sm:$0xff] %vm533, %v1331
        %1337 = vrot.lane.b32.xlu0 %v1294, 123
        %v1338 = vpop.permute.xlu0 %1337
        %1339 = vrot.lane.b32.xlu0 %v1295, 123
        %v1340 = vpop.permute.xlu0 %1339
        %s1343 = scalar_lea.vmem [#allocation2], 624
        %1344 = vst.msk [vmem:[%s1343 + $0x3] sm:$0xff] %vm533, %v1338
        %1345 = vst.msk [vmem:[%s1343 + $0xb] sm:$0xff] %vm533, %v1340
        %1346 = vrot.lane.b32.xlu0 %v1294, 122
        %v1347 = vpop.permute.xlu0 %1346
        %1348 = vrot.lane.b32.xlu0 %v1295, 122
        %v1349 = vpop.permute.xlu0 %1348
        %s1352 = scalar_lea.vmem [#allocation2], 648
        %1353 = vst.msk [vmem:[%s1352 + $0x3] sm:$0xff] %vm533, %v1347
        %1354 = vst.msk [vmem:[%s1352 + $0xb] sm:$0xff] %vm533, %v1349
        %v1355 = vstv %s532
        %v1356 = vld [vmem:[#allocation2] sm:$0xff]
        %v1357 = vld [vmem:[#allocation2 + $0x8] sm:$0xff]
        %v1358 = vstv %s335
        %v1359 = vmul.f32 %v1358, %v1356
        %v1360 = vmul.f32 %v1358, %v1357
        %v1361 = vadd.f32 %v1355, %v1359
        %v1362 = vadd.f32 %v1355, %v1360
        %v1363 = vld [vmem:[%s1094] sm:$0xff]
        %v1364 = vld [vmem:[%s1094 + $0x8] sm:$0xff]
        %v1365 = vstv %s336
        %v1366 = vmul.f32 %v1365, %v1363
        %v1367 = vmul.f32 %v1365, %v1364
        %v1368 = vadd.f32 %v1361, %v1366
        %v1369 = vadd.f32 %v1362, %v1367
        %v1370 = vld [vmem:[%s1103] sm:$0xff]
        %v1371 = vld [vmem:[%s1103 + $0x8] sm:$0xff]
        %v1372 = vstv %s337
        %v1373 = vmul.f32 %v1372, %v1370
        %v1374 = vmul.f32 %v1372, %v1371
        %v1375 = vadd.f32 %v1368, %v1373
        %v1376 = vadd.f32 %v1369, %v1374
        %v1377 = vld [vmem:[%s1112] sm:$0xff]
        %v1378 = vld [vmem:[%s1112 + $0x8] sm:$0xff]
        %v1379 = vstv %s338
        %v1380 = vmul.f32 %v1379, %v1377
        %v1381 = vmul.f32 %v1379, %v1378
        %v1382 = vadd.f32 %v1375, %v1380
        %v1383 = vadd.f32 %v1376, %v1381
        %v1384 = vld [vmem:[%s1121] sm:$0xff]
        %v1385 = vld [vmem:[%s1121 + $0x8] sm:$0xff]
        %v1386 = vstv %s339
        %v1387 = vmul.f32 %v1386, %v1384
        %v1388 = vmul.f32 %v1386, %v1385
        %v1389 = vadd.f32 %v1382, %v1387
        %v1390 = vadd.f32 %v1383, %v1388
        %v1391 = vld [vmem:[%s1130] sm:$0xff]
        %v1392 = vld [vmem:[%s1130 + $0x8] sm:$0xff]
        %v1393 = vstv %s340
        %v1394 = vmul.f32 %v1393, %v1391
        %v1395 = vmul.f32 %v1393, %v1392
        %v1396 = vadd.f32 %v1389, %v1394
        %v1397 = vadd.f32 %v1390, %v1395
        %v1398 = vld [vmem:[%s1139] sm:$0xff]
        %v1399 = vld [vmem:[%s1139 + $0x8] sm:$0xff]
        %v1400 = vstv %s341
        %v1401 = vmul.f32 %v1400, %v1398
        %v1402 = vmul.f32 %v1400, %v1399
        %v1403 = vadd.f32 %v1396, %v1401
        %v1404 = vadd.f32 %v1397, %v1402
        %v1405 = vld [vmem:[#allocation2 + $0x1] sm:$0xff]
        %v1406 = vld [vmem:[#allocation2 + $0x9] sm:$0xff]
        %v1407 = vstv %s342
        %v1408 = vmul.f32 %v1407, %v1405
        %v1409 = vmul.f32 %v1407, %v1406
        %v1410 = vadd.f32 %v1403, %v1408
        %v1411 = vadd.f32 %v1404, %v1409
        %v1412 = vld [vmem:[%s1094 + $0x1] sm:$0xff]
        %v1413 = vld [vmem:[%s1094 + $0x9] sm:$0xff]
        %v1414 = vstv %s343
        %v1415 = vmul.f32 %v1414, %v1412
        %v1416 = vmul.f32 %v1414, %v1413
        %v1417 = vadd.f32 %v1410, %v1415
        %v1418 = vadd.f32 %v1411, %v1416
        %v1419 = vld [vmem:[%s1103 + $0x1] sm:$0xff]
        %v1420 = vld [vmem:[%s1103 + $0x9] sm:$0xff]
        %v1421 = vstv %s344
        %v1422 = vmul.f32 %v1421, %v1419
        %v1423 = vmul.f32 %v1421, %v1420
        %v1424 = vadd.f32 %v1417, %v1422
        %v1425 = vadd.f32 %v1418, %v1423
        %v1426 = vld [vmem:[%s1112 + $0x1] sm:$0xff]
        %v1427 = vld [vmem:[%s1112 + $0x9] sm:$0xff]
        %v1428 = vstv %s345
        %v1429 = vmul.f32 %v1428, %v1426
        %v1430 = vmul.f32 %v1428, %v1427
        %v1431 = vadd.f32 %v1424, %v1429
        %v1432 = vadd.f32 %v1425, %v1430
        %v1433 = vld [vmem:[%s1121 + $0x1] sm:$0xff]
        %v1434 = vld [vmem:[%s1121 + $0x9] sm:$0xff]
        %v1435 = vstv %s346
        %v1436 = vmul.f32 %v1435, %v1433
        %v1437 = vmul.f32 %v1435, %v1434
        %v1438 = vadd.f32 %v1431, %v1436
        %v1439 = vadd.f32 %v1432, %v1437
        %v1440 = vld [vmem:[%s1130 + $0x1] sm:$0xff]
        %v1441 = vld [vmem:[%s1130 + $0x9] sm:$0xff]
        %v1442 = vstv %s347
        %v1443 = vmul.f32 %v1442, %v1440
        %v1444 = vmul.f32 %v1442, %v1441
        %v1445 = vadd.f32 %v1438, %v1443
        %v1446 = vadd.f32 %v1439, %v1444
        %v1447 = vld [vmem:[%s1139 + $0x1] sm:$0xff]
        %v1448 = vld [vmem:[%s1139 + $0x9] sm:$0xff]
        %v1449 = vstv %s348
        %v1450 = vmul.f32 %v1449, %v1447
        %v1451 = vmul.f32 %v1449, %v1448
        %v1452 = vadd.f32 %v1445, %v1450
        %v1453 = vadd.f32 %v1446, %v1451
        %v1454 = vld [vmem:[#allocation2 + $0x2] sm:$0xff]
        %v1455 = vld [vmem:[#allocation2 + $0xa] sm:$0xff]
        %v1456 = vstv %s349
        %v1457 = vmul.f32 %v1456, %v1454
        %v1458 = vmul.f32 %v1456, %v1455
        %v1459 = vadd.f32 %v1452, %v1457
        %v1460 = vadd.f32 %v1453, %v1458
        %v1461 = vld [vmem:[%s1094 + $0x2] sm:$0xff]
        %v1462 = vld [vmem:[%s1094 + $0xa] sm:$0xff]
        %v1463 = vstv %s350
        %v1464 = vmul.f32 %v1463, %v1461
        %v1465 = vmul.f32 %v1463, %v1462
        %v1466 = vadd.f32 %v1459, %v1464
        %v1467 = vadd.f32 %v1460, %v1465
        %v1468 = vld [vmem:[%s1103 + $0x2] sm:$0xff]
        %v1469 = vld [vmem:[%s1103 + $0xa] sm:$0xff]
        %v1470 = vstv %s351
        %v1471 = vmul.f32 %v1470, %v1468
        %v1472 = vmul.f32 %v1470, %v1469
        %v1473 = vadd.f32 %v1466, %v1471
        %v1474 = vadd.f32 %v1467, %v1472
        %v1475 = vld [vmem:[%s1112 + $0x2] sm:$0xff]
        %v1476 = vld [vmem:[%s1112 + $0xa] sm:$0xff]
        %v1477 = vstv %s352
        %v1478 = vmul.f32 %v1477, %v1475
        %v1479 = vmul.f32 %v1477, %v1476
        %v1480 = vadd.f32 %v1473, %v1478
        %v1481 = vadd.f32 %v1474, %v1479
        %v1482 = vld [vmem:[%s1121 + $0x2] sm:$0xff]
        %v1483 = vld [vmem:[%s1121 + $0xa] sm:$0xff]
        %v1484 = vstv %s353
        %v1485 = vmul.f32 %v1484, %v1482
        %v1486 = vmul.f32 %v1484, %v1483
        %v1487 = vadd.f32 %v1480, %v1485
        %v1488 = vadd.f32 %v1481, %v1486
        %v1489 = vld [vmem:[%s1130 + $0x2] sm:$0xff]
        %v1490 = vld [vmem:[%s1130 + $0xa] sm:$0xff]
        %v1491 = vstv %s354
        %v1492 = vmul.f32 %v1491, %v1489
        %v1493 = vmul.f32 %v1491, %v1490
        %v1494 = vadd.f32 %v1487, %v1492
        %v1495 = vadd.f32 %v1488, %v1493
        %v1496 = vld [vmem:[%s1139 + $0x2] sm:$0xff]
        %v1497 = vld [vmem:[%s1139 + $0xa] sm:$0xff]
        %v1498 = vstv %s355
        %v1499 = vmul.f32 %v1498, %v1496
        %v1500 = vmul.f32 %v1498, %v1497
        %v1501 = vadd.f32 %v1494, %v1499
        %v1502 = vadd.f32 %v1495, %v1500
        %v1503 = vld [vmem:[#allocation2 + $0x3] sm:$0xff]
        %v1504 = vld [vmem:[#allocation2 + $0xb] sm:$0xff]
        %v1505 = vstv %s356
        %v1506 = vmul.f32 %v1505, %v1503
        %v1507 = vmul.f32 %v1505, %v1504
        %v1508 = vadd.f32 %v1501, %v1506
        %v1509 = vadd.f32 %v1502, %v1507
        %v1510 = vld [vmem:[%s1094 + $0x3] sm:$0xff]
        %v1511 = vld [vmem:[%s1094 + $0xb] sm:$0xff]
        %v1512 = vstv %s357
        %v1513 = vmul.f32 %v1512, %v1510
        %v1514 = vmul.f32 %v1512, %v1511
        %v1515 = vadd.f32 %v1508, %v1513
        %v1516 = vadd.f32 %v1509, %v1514
        %v1517 = vld [vmem:[%s1103 + $0x3] sm:$0xff]
        %v1518 = vld [vmem:[%s1103 + $0xb] sm:$0xff]
        %v1519 = vstv %s358
        %v1520 = vmul.f32 %v1519, %v1517
        %v1521 = vmul.f32 %v1519, %v1518
        %v1522 = vadd.f32 %v1515, %v1520
        %v1523 = vadd.f32 %v1516, %v1521
        %v1524 = vld [vmem:[%s1112 + $0x3] sm:$0xff]
        %v1525 = vld [vmem:[%s1112 + $0xb] sm:$0xff]
        %v1526 = vstv %s359
        %v1527 = vmul.f32 %v1526, %v1524
        %v1528 = vmul.f32 %v1526, %v1525
        %v1529 = vadd.f32 %v1522, %v1527
        %v1530 = vadd.f32 %v1523, %v1528
        %v1531 = vld [vmem:[%s1121 + $0x3] sm:$0xff]
        %v1532 = vld [vmem:[%s1121 + $0xb] sm:$0xff]
        %v1533 = vstv %s360
        %v1534 = vmul.f32 %v1533, %v1531
        %v1535 = vmul.f32 %v1533, %v1532
        %v1536 = vadd.f32 %v1529, %v1534
        %v1537 = vadd.f32 %v1530, %v1535
        %v1538 = vld [vmem:[%s1130 + $0x3] sm:$0xff]
        %v1539 = vld [vmem:[%s1130 + $0xb] sm:$0xff]
        %v1540 = vstv %s361
        %v1541 = vmul.f32 %v1540, %v1538
        %v1542 = vmul.f32 %v1540, %v1539
        %v1543 = vadd.f32 %v1536, %v1541
        %v1544 = vadd.f32 %v1537, %v1542
        %v1545 = vld [vmem:[%s1139 + $0x3] sm:$0xff]
        %v1546 = vld [vmem:[%s1139 + $0xb] sm:$0xff]
        %v1547 = vstv %s362
        %v1548 = vmul.f32 %v1547, %v1545
        %v1549 = vmul.f32 %v1547, %v1546
        %v1550 = vadd.f32 %v1543, %v1548
        %v1551 = vadd.f32 %v1544, %v1549
        %v1552 = vld [vmem:[#allocation2 + $0x4] sm:$0xff]
        %v1553 = vld [vmem:[#allocation2 + $0xc] sm:$0xff]
        %v1554 = vstv %s363
        %v1555 = vmul.f32 %v1554, %v1552
        %v1556 = vmul.f32 %v1554, %v1553
        %v1557 = vadd.f32 %v1550, %v1555
        %v1558 = vadd.f32 %v1551, %v1556
        %v1559 = vld [vmem:[%s1094 + $0x4] sm:$0xff]
        %v1560 = vld [vmem:[%s1094 + $0xc] sm:$0xff]
        %v1561 = vstv %s364
        %v1562 = vmul.f32 %v1561, %v1559
        %v1563 = vmul.f32 %v1561, %v1560
        %v1564 = vadd.f32 %v1557, %v1562
        %v1565 = vadd.f32 %v1558, %v1563
        %v1566 = vld [vmem:[%s1103 + $0x4] sm:$0xff]
        %v1567 = vld [vmem:[%s1103 + $0xc] sm:$0xff]
        %v1568 = vstv %s365
        %v1569 = vmul.f32 %v1568, %v1566
        %v1570 = vmul.f32 %v1568, %v1567
        %v1571 = vadd.f32 %v1564, %v1569
        %v1572 = vadd.f32 %v1565, %v1570
        %v1573 = vld [vmem:[%s1112 + $0x4] sm:$0xff]
        %v1574 = vld [vmem:[%s1112 + $0xc] sm:$0xff]
        %v1575 = vstv %s366
        %v1576 = vmul.f32 %v1575, %v1573
        %v1577 = vmul.f32 %v1575, %v1574
        %v1578 = vadd.f32 %v1571, %v1576
        %v1579 = vadd.f32 %v1572, %v1577
        %v1580 = vld [vmem:[%s1121 + $0x4] sm:$0xff]
        %v1581 = vld [vmem:[%s1121 + $0xc] sm:$0xff]
        %v1582 = vstv %s367
        %v1583 = vmul.f32 %v1582, %v1580
        %v1584 = vmul.f32 %v1582, %v1581
        %v1585 = vadd.f32 %v1578, %v1583
        %v1586 = vadd.f32 %v1579, %v1584
        %v1587 = vld [vmem:[%s1130 + $0x4] sm:$0xff]
        %v1588 = vld [vmem:[%s1130 + $0xc] sm:$0xff]
        %v1589 = vstv %s368
        %v1590 = vmul.f32 %v1589, %v1587
        %v1591 = vmul.f32 %v1589, %v1588
        %v1592 = vadd.f32 %v1585, %v1590
        %v1593 = vadd.f32 %v1586, %v1591
        %v1594 = vld [vmem:[%s1139 + $0x4] sm:$0xff]
        %v1595 = vld [vmem:[%s1139 + $0xc] sm:$0xff]
        %v1596 = vstv %s369
        %v1597 = vmul.f32 %v1596, %v1594
        %v1598 = vmul.f32 %v1596, %v1595
        %v1599 = vadd.f32 %v1592, %v1597
        %v1600 = vadd.f32 %v1593, %v1598
        %v1601 = vld [vmem:[#allocation2 + $0x5] sm:$0xff]
        %v1602 = vld [vmem:[#allocation2 + $0xd] sm:$0xff]
        %v1603 = vstv %s370
        %v1604 = vmul.f32 %v1603, %v1601
        %v1605 = vmul.f32 %v1603, %v1602
        %v1606 = vadd.f32 %v1599, %v1604
        %v1607 = vadd.f32 %v1600, %v1605
        %v1608 = vld [vmem:[%s1094 + $0x5] sm:$0xff]
        %v1609 = vld [vmem:[%s1094 + $0xd] sm:$0xff]
        %v1610 = vstv %s371
        %v1611 = vmul.f32 %v1610, %v1608
        %v1612 = vmul.f32 %v1610, %v1609
        %v1613 = vadd.f32 %v1606, %v1611
        %v1614 = vadd.f32 %v1607, %v1612
        %v1615 = vld [vmem:[%s1103 + $0x5] sm:$0xff]
        %v1616 = vld [vmem:[%s1103 + $0xd] sm:$0xff]
        %v1617 = vstv %s372
        %v1618 = vmul.f32 %v1617, %v1615
        %v1619 = vmul.f32 %v1617, %v1616
        %v1620 = vadd.f32 %v1613, %v1618
        %v1621 = vadd.f32 %v1614, %v1619
        %v1622 = vld [vmem:[%s1112 + $0x5] sm:$0xff]
        %v1623 = vld [vmem:[%s1112 + $0xd] sm:$0xff]
        %v1624 = vstv %s373
        %v1625 = vmul.f32 %v1624, %v1622
        %v1626 = vmul.f32 %v1624, %v1623
        %v1627 = vadd.f32 %v1620, %v1625
        %v1628 = vadd.f32 %v1621, %v1626
        %v1629 = vld [vmem:[%s1121 + $0x5] sm:$0xff]
        %v1630 = vld [vmem:[%s1121 + $0xd] sm:$0xff]
        %v1631 = vstv %s374
        %v1632 = vmul.f32 %v1631, %v1629
        %v1633 = vmul.f32 %v1631, %v1630
        %v1634 = vadd.f32 %v1627, %v1632
        %v1635 = vadd.f32 %v1628, %v1633
        %v1636 = vld [vmem:[%s1130 + $0x5] sm:$0xff]
        %v1637 = vld [vmem:[%s1130 + $0xd] sm:$0xff]
        %v1638 = vstv %s375
        %v1639 = vmul.f32 %v1638, %v1636
        %v1640 = vmul.f32 %v1638, %v1637
        %v1641 = vadd.f32 %v1634, %v1639
        %v1642 = vadd.f32 %v1635, %v1640
        %v1643 = vld [vmem:[%s1139 + $0x5] sm:$0xff]
        %v1644 = vld [vmem:[%s1139 + $0xd] sm:$0xff]
        %v1645 = vstv %s376
        %v1646 = vmul.f32 %v1645, %v1643
        %v1647 = vmul.f32 %v1645, %v1644
        %v1648 = vadd.f32 %v1641, %v1646
        %v1649 = vadd.f32 %v1642, %v1647
        %v1650 = vld [vmem:[#allocation2 + $0x6] sm:$0xff]
        %v1651 = vld [vmem:[#allocation2 + $0xe] sm:$0xff]
        %v1652 = vstv %s377
        %v1653 = vmul.f32 %v1652, %v1650
        %v1654 = vmul.f32 %v1652, %v1651
        %v1655 = vadd.f32 %v1648, %v1653
        %v1656 = vadd.f32 %v1649, %v1654
        %v1657 = vld [vmem:[%s1094 + $0x6] sm:$0xff]
        %v1658 = vld [vmem:[%s1094 + $0xe] sm:$0xff]
        %v1659 = vstv %s378
        %v1660 = vmul.f32 %v1659, %v1657
        %v1661 = vmul.f32 %v1659, %v1658
        %v1662 = vadd.f32 %v1655, %v1660
        %v1663 = vadd.f32 %v1656, %v1661
        %v1664 = vld [vmem:[%s1103 + $0x6] sm:$0xff]
        %v1665 = vld [vmem:[%s1103 + $0xe] sm:$0xff]
        %v1666 = vstv %s379
        %v1667 = vmul.f32 %v1666, %v1664
        %v1668 = vmul.f32 %v1666, %v1665
        %v1669 = vadd.f32 %v1662, %v1667
        %v1670 = vadd.f32 %v1663, %v1668
        %v1671 = vld [vmem:[%s1112 + $0x6] sm:$0xff]
        %v1672 = vld [vmem:[%s1112 + $0xe] sm:$0xff]
        %v1673 = vstv %s380
        %v1674 = vmul.f32 %v1673, %v1671
        %v1675 = vmul.f32 %v1673, %v1672
        %v1676 = vadd.f32 %v1669, %v1674
        %v1677 = vadd.f32 %v1670, %v1675
        %v1678 = vld [vmem:[%s1121 + $0x6] sm:$0xff]
        %v1679 = vld [vmem:[%s1121 + $0xe] sm:$0xff]
        %v1680 = vstv %s381
        %v1681 = vmul.f32 %v1680, %v1678
        %v1682 = vmul.f32 %v1680, %v1679
        %v1683 = vadd.f32 %v1676, %v1681
        %v1684 = vadd.f32 %v1677, %v1682
        %v1685 = vld [vmem:[%s1130 + $0x6] sm:$0xff]
        %v1686 = vld [vmem:[%s1130 + $0xe] sm:$0xff]
        %v1687 = vstv %s382
        %v1688 = vmul.f32 %v1687, %v1685
        %v1689 = vmul.f32 %v1687, %v1686
        %v1690 = vadd.f32 %v1683, %v1688
        %v1691 = vadd.f32 %v1684, %v1689
        %v1692 = vld [vmem:[%s1139 + $0x6] sm:$0xff]
        %v1693 = vld [vmem:[%s1139 + $0xe] sm:$0xff]
        %v1694 = vstv %s383
        %v1695 = vmul.f32 %v1694, %v1692
        %v1696 = vmul.f32 %v1694, %v1693
        %v1697 = vadd.f32 %v1690, %v1695
        %v1698 = vadd.f32 %v1691, %v1696
        %v1699 = vld [vmem:[%s1154] sm:$0xff]
        %v1700 = vld [vmem:[%s1154 + $0x8] sm:$0xff]
        %v1701 = vstv %s384
        %v1702 = vmul.f32 %v1701, %v1699
        %v1703 = vmul.f32 %v1701, %v1700
        %v1704 = vadd.f32 %v1697, %v1702
        %v1705 = vadd.f32 %v1698, %v1703
        %v1706 = vld [vmem:[%s1165] sm:$0xff]
        %v1707 = vld [vmem:[%s1165 + $0x8] sm:$0xff]
        %v1708 = vstv %s385
        %v1709 = vmul.f32 %v1708, %v1706
        %v1710 = vmul.f32 %v1708, %v1707
        %v1711 = vadd.f32 %v1704, %v1709
        %v1712 = vadd.f32 %v1705, %v1710
        %v1713 = vld [vmem:[%s1174] sm:$0xff]
        %v1714 = vld [vmem:[%s1174 + $0x8] sm:$0xff]
        %v1715 = vstv %s386
        %v1716 = vmul.f32 %v1715, %v1713
        %v1717 = vmul.f32 %v1715, %v1714
        %v1718 = vadd.f32 %v1711, %v1716
        %v1719 = vadd.f32 %v1712, %v1717
        %v1720 = vld [vmem:[%s1183] sm:$0xff]
        %v1721 = vld [vmem:[%s1183 + $0x8] sm:$0xff]
        %v1722 = vstv %s387
        %v1723 = vmul.f32 %v1722, %v1720
        %v1724 = vmul.f32 %v1722, %v1721
        %v1725 = vadd.f32 %v1718, %v1723
        %v1726 = vadd.f32 %v1719, %v1724
        %v1727 = vld [vmem:[%s1192] sm:$0xff]
        %v1728 = vld [vmem:[%s1192 + $0x8] sm:$0xff]
        %v1729 = vstv %s388
        %v1730 = vmul.f32 %v1729, %v1727
        %v1731 = vmul.f32 %v1729, %v1728
        %v1732 = vadd.f32 %v1725, %v1730
        %v1733 = vadd.f32 %v1726, %v1731
        %v1734 = vld [vmem:[%s1201] sm:$0xff]
        %v1735 = vld [vmem:[%s1201 + $0x8] sm:$0xff]
        %v1736 = vstv %s389
        %v1737 = vmul.f32 %v1736, %v1734
        %v1738 = vmul.f32 %v1736, %v1735
        %v1739 = vadd.f32 %v1732, %v1737
        %v1740 = vadd.f32 %v1733, %v1738
        %v1741 = vld [vmem:[%s1210] sm:$0xff]
        %v1742 = vld [vmem:[%s1210 + $0x8] sm:$0xff]
        %v1743 = vstv %s390
        %v1744 = vmul.f32 %v1743, %v1741
        %v1745 = vmul.f32 %v1743, %v1742
        %v1746 = vadd.f32 %v1739, %v1744
        %v1747 = vadd.f32 %v1740, %v1745
        %v1748 = vld [vmem:[%s1154 + $0x1] sm:$0xff]
        %v1749 = vld [vmem:[%s1154 + $0x9] sm:$0xff]
        %v1750 = vstv %s391
        %v1751 = vmul.f32 %v1750, %v1748
        %v1752 = vmul.f32 %v1750, %v1749
        %v1753 = vadd.f32 %v1746, %v1751
        %v1754 = vadd.f32 %v1747, %v1752
        %v1755 = vld [vmem:[%s1165 + $0x1] sm:$0xff]
        %v1756 = vld [vmem:[%s1165 + $0x9] sm:$0xff]
        %v1757 = vstv %s392
        %v1758 = vmul.f32 %v1757, %v1755
        %v1759 = vmul.f32 %v1757, %v1756
        %v1760 = vadd.f32 %v1753, %v1758
        %v1761 = vadd.f32 %v1754, %v1759
        %v1762 = vld [vmem:[%s1174 + $0x1] sm:$0xff]
        %v1763 = vld [vmem:[%s1174 + $0x9] sm:$0xff]
        %v1764 = vstv %s393
        %v1765 = vmul.f32 %v1764, %v1762
        %v1766 = vmul.f32 %v1764, %v1763
        %v1767 = vadd.f32 %v1760, %v1765
        %v1768 = vadd.f32 %v1761, %v1766
        %v1769 = vld [vmem:[%s1183 + $0x1] sm:$0xff]
        %v1770 = vld [vmem:[%s1183 + $0x9] sm:$0xff]
        %v1771 = vstv %s394
        %v1772 = vmul.f32 %v1771, %v1769
        %v1773 = vmul.f32 %v1771, %v1770
        %v1774 = vadd.f32 %v1767, %v1772
        %v1775 = vadd.f32 %v1768, %v1773
        %v1776 = vld [vmem:[%s1192 + $0x1] sm:$0xff]
        %v1777 = vld [vmem:[%s1192 + $0x9] sm:$0xff]
        %v1778 = vstv %s395
        %v1779 = vmul.f32 %v1778, %v1776
        %v1780 = vmul.f32 %v1778, %v1777
        %v1781 = vadd.f32 %v1774, %v1779
        %v1782 = vadd.f32 %v1775, %v1780
        %v1783 = vld [vmem:[%s1201 + $0x1] sm:$0xff]
        %v1784 = vld [vmem:[%s1201 + $0x9] sm:$0xff]
        %v1785 = vstv %s396
        %v1786 = vmul.f32 %v1785, %v1783
        %v1787 = vmul.f32 %v1785, %v1784
        %v1788 = vadd.f32 %v1781, %v1786
        %v1789 = vadd.f32 %v1782, %v1787
        %v1790 = vld [vmem:[%s1210 + $0x1] sm:$0xff]
        %v1791 = vld [vmem:[%s1210 + $0x9] sm:$0xff]
        %v1792 = vstv %s397
        %v1793 = vmul.f32 %v1792, %v1790
        %v1794 = vmul.f32 %v1792, %v1791
        %v1795 = vadd.f32 %v1788, %v1793
        %v1796 = vadd.f32 %v1789, %v1794
        %v1797 = vld [vmem:[%s1154 + $0x2] sm:$0xff]
        %v1798 = vld [vmem:[%s1154 + $0xa] sm:$0xff]
        %v1799 = vstv %s398
        %v1800 = vmul.f32 %v1799, %v1797
        %v1801 = vmul.f32 %v1799, %v1798
        %v1802 = vadd.f32 %v1795, %v1800
        %v1803 = vadd.f32 %v1796, %v1801
        %v1804 = vld [vmem:[%s1165 + $0x2] sm:$0xff]
        %v1805 = vld [vmem:[%s1165 + $0xa] sm:$0xff]
        %v1806 = vstv %s399
        %v1807 = vmul.f32 %v1806, %v1804
        %v1808 = vmul.f32 %v1806, %v1805
        %v1809 = vadd.f32 %v1802, %v1807
        %v1810 = vadd.f32 %v1803, %v1808
        %v1811 = vld [vmem:[%s1174 + $0x2] sm:$0xff]
        %v1812 = vld [vmem:[%s1174 + $0xa] sm:$0xff]
        %v1813 = vstv %s400
        %v1814 = vmul.f32 %v1813, %v1811
        %v1815 = vmul.f32 %v1813, %v1812
        %v1816 = vadd.f32 %v1809, %v1814
        %v1817 = vadd.f32 %v1810, %v1815
        %v1818 = vld [vmem:[%s1183 + $0x2] sm:$0xff]
        %v1819 = vld [vmem:[%s1183 + $0xa] sm:$0xff]
        %v1820 = vstv %s401
        %v1821 = vmul.f32 %v1820, %v1818
        %v1822 = vmul.f32 %v1820, %v1819
        %v1823 = vadd.f32 %v1816, %v1821
        %v1824 = vadd.f32 %v1817, %v1822
        %v1825 = vld [vmem:[%s1192 + $0x2] sm:$0xff]
        %v1826 = vld [vmem:[%s1192 + $0xa] sm:$0xff]
        %v1827 = vstv %s402
        %v1828 = vmul.f32 %v1827, %v1825
        %v1829 = vmul.f32 %v1827, %v1826
        %v1830 = vadd.f32 %v1823, %v1828
        %v1831 = vadd.f32 %v1824, %v1829
        %v1832 = vld [vmem:[%s1201 + $0x2] sm:$0xff]
        %v1833 = vld [vmem:[%s1201 + $0xa] sm:$0xff]
        %v1834 = vstv %s403
        %v1835 = vmul.f32 %v1834, %v1832
        %v1836 = vmul.f32 %v1834, %v1833
        %v1837 = vadd.f32 %v1830, %v1835
        %v1838 = vadd.f32 %v1831, %v1836
        %v1839 = vld [vmem:[%s1210 + $0x2] sm:$0xff]
        %v1840 = vld [vmem:[%s1210 + $0xa] sm:$0xff]
        %v1841 = vstv %s404
        %v1842 = vmul.f32 %v1841, %v1839
        %v1843 = vmul.f32 %v1841, %v1840
        %v1844 = vadd.f32 %v1837, %v1842
        %v1845 = vadd.f32 %v1838, %v1843
        %v1846 = vld [vmem:[%s1154 + $0x3] sm:$0xff]
        %v1847 = vld [vmem:[%s1154 + $0xb] sm:$0xff]
        %v1848 = vstv %s405
        %v1849 = vmul.f32 %v1848, %v1846
        %v1850 = vmul.f32 %v1848, %v1847
        %v1851 = vadd.f32 %v1844, %v1849
        %v1852 = vadd.f32 %v1845, %v1850
        %v1853 = vld [vmem:[%s1165 + $0x3] sm:$0xff]
        %v1854 = vld [vmem:[%s1165 + $0xb] sm:$0xff]
        %v1855 = vstv %s406
        %v1856 = vmul.f32 %v1855, %v1853
        %v1857 = vmul.f32 %v1855, %v1854
        %v1858 = vadd.f32 %v1851, %v1856
        %v1859 = vadd.f32 %v1852, %v1857
        %v1860 = vld [vmem:[%s1174 + $0x3] sm:$0xff]
        %v1861 = vld [vmem:[%s1174 + $0xb] sm:$0xff]
        %v1862 = vstv %s407
        %v1863 = vmul.f32 %v1862, %v1860
        %v1864 = vmul.f32 %v1862, %v1861
        %v1865 = vadd.f32 %v1858, %v1863
        %v1866 = vadd.f32 %v1859, %v1864
        %v1867 = vld [vmem:[%s1183 + $0x3] sm:$0xff]
        %v1868 = vld [vmem:[%s1183 + $0xb] sm:$0xff]
        %v1869 = vstv %s408
        %v1870 = vmul.f32 %v1869, %v1867
        %v1871 = vmul.f32 %v1869, %v1868
        %v1872 = vadd.f32 %v1865, %v1870
        %v1873 = vadd.f32 %v1866, %v1871
        %v1874 = vld [vmem:[%s1192 + $0x3] sm:$0xff]
        %v1875 = vld [vmem:[%s1192 + $0xb] sm:$0xff]
        %v1876 = vstv %s409
        %v1877 = vmul.f32 %v1876, %v1874
        %v1878 = vmul.f32 %v1876, %v1875
        %v1879 = vadd.f32 %v1872, %v1877
        %v1880 = vadd.f32 %v1873, %v1878
        %v1881 = vld [vmem:[%s1201 + $0x3] sm:$0xff]
        %v1882 = vld [vmem:[%s1201 + $0xb] sm:$0xff]
        %v1883 = vstv %s410
        %v1884 = vmul.f32 %v1883, %v1881
        %v1885 = vmul.f32 %v1883, %v1882
        %v1886 = vadd.f32 %v1879, %v1884
        %v1887 = vadd.f32 %v1880, %v1885
        %v1888 = vld [vmem:[%s1210 + $0x3] sm:$0xff]
        %v1889 = vld [vmem:[%s1210 + $0xb] sm:$0xff]
        %v1890 = vstv %s411
        %v1891 = vmul.f32 %v1890, %v1888
        %v1892 = vmul.f32 %v1890, %v1889
        %v1893 = vadd.f32 %v1886, %v1891
        %v1894 = vadd.f32 %v1887, %v1892
        %v1895 = vld [vmem:[%s1154 + $0x4] sm:$0xff]
        %v1896 = vld [vmem:[%s1154 + $0xc] sm:$0xff]
        %v1897 = vstv %s412
        %v1898 = vmul.f32 %v1897, %v1895
        %v1899 = vmul.f32 %v1897, %v1896
        %v1900 = vadd.f32 %v1893, %v1898
        %v1901 = vadd.f32 %v1894, %v1899
        %v1902 = vld [vmem:[%s1165 + $0x4] sm:$0xff]
        %v1903 = vld [vmem:[%s1165 + $0xc] sm:$0xff]
        %v1904 = vstv %s413
        %v1905 = vmul.f32 %v1904, %v1902
        %v1906 = vmul.f32 %v1904, %v1903
        %v1907 = vadd.f32 %v1900, %v1905
        %v1908 = vadd.f32 %v1901, %v1906
        %v1909 = vld [vmem:[%s1174 + $0x4] sm:$0xff]
        %v1910 = vld [vmem:[%s1174 + $0xc] sm:$0xff]
        %v1911 = vstv %s414
        %v1912 = vmul.f32 %v1911, %v1909
        %v1913 = vmul.f32 %v1911, %v1910
        %v1914 = vadd.f32 %v1907, %v1912
        %v1915 = vadd.f32 %v1908, %v1913
        %v1916 = vld [vmem:[%s1183 + $0x4] sm:$0xff]
        %v1917 = vld [vmem:[%s1183 + $0xc] sm:$0xff]
        %v1918 = vstv %s415
        %v1919 = vmul.f32 %v1918, %v1916
        %v1920 = vmul.f32 %v1918, %v1917
        %v1921 = vadd.f32 %v1914, %v1919
        %v1922 = vadd.f32 %v1915, %v1920
        %v1923 = vld [vmem:[%s1192 + $0x4] sm:$0xff]
        %v1924 = vld [vmem:[%s1192 + $0xc] sm:$0xff]
        %v1925 = vstv %s416
        %v1926 = vmul.f32 %v1925, %v1923
        %v1927 = vmul.f32 %v1925, %v1924
        %v1928 = vadd.f32 %v1921, %v1926
        %v1929 = vadd.f32 %v1922, %v1927
        %v1930 = vld [vmem:[%s1201 + $0x4] sm:$0xff]
        %v1931 = vld [vmem:[%s1201 + $0xc] sm:$0xff]
        %v1932 = vstv %s417
        %v1933 = vmul.f32 %v1932, %v1930
        %v1934 = vmul.f32 %v1932, %v1931
        %v1935 = vadd.f32 %v1928, %v1933
        %v1936 = vadd.f32 %v1929, %v1934
        %v1937 = vld [vmem:[%s1210 + $0x4] sm:$0xff]
        %v1938 = vld [vmem:[%s1210 + $0xc] sm:$0xff]
        %v1939 = vstv %s418
        %v1940 = vmul.f32 %v1939, %v1937
        %v1941 = vmul.f32 %v1939, %v1938
        %v1942 = vadd.f32 %v1935, %v1940
        %v1943 = vadd.f32 %v1936, %v1941
        %v1944 = vld [vmem:[%s1154 + $0x5] sm:$0xff]
        %v1945 = vld [vmem:[%s1154 + $0xd] sm:$0xff]
        %v1946 = vstv %s419
        %v1947 = vmul.f32 %v1946, %v1944
        %v1948 = vmul.f32 %v1946, %v1945
        %v1949 = vadd.f32 %v1942, %v1947
        %v1950 = vadd.f32 %v1943, %v1948
        %v1951 = vld [vmem:[%s1165 + $0x5] sm:$0xff]
        %v1952 = vld [vmem:[%s1165 + $0xd] sm:$0xff]
        %v1953 = vstv %s420
        %v1954 = vmul.f32 %v1953, %v1951
        %v1955 = vmul.f32 %v1953, %v1952
        %v1956 = vadd.f32 %v1949, %v1954
        %v1957 = vadd.f32 %v1950, %v1955
        %v1958 = vld [vmem:[%s1174 + $0x5] sm:$0xff]
        %v1959 = vld [vmem:[%s1174 + $0xd] sm:$0xff]
        %v1960 = vstv %s421
        %v1961 = vmul.f32 %v1960, %v1958
        %v1962 = vmul.f32 %v1960, %v1959
        %v1963 = vadd.f32 %v1956, %v1961
        %v1964 = vadd.f32 %v1957, %v1962
        %v1965 = vld [vmem:[%s1183 + $0x5] sm:$0xff]
        %v1966 = vld [vmem:[%s1183 + $0xd] sm:$0xff]
        %v1967 = vstv %s422
        %v1968 = vmul.f32 %v1967, %v1965
        %v1969 = vmul.f32 %v1967, %v1966
        %v1970 = vadd.f32 %v1963, %v1968
        %v1971 = vadd.f32 %v1964, %v1969
        %v1972 = vld [vmem:[%s1192 + $0x5] sm:$0xff]
        %v1973 = vld [vmem:[%s1192 + $0xd] sm:$0xff]
        %v1974 = vstv %s423
        %v1975 = vmul.f32 %v1974, %v1972
        %v1976 = vmul.f32 %v1974, %v1973
        %v1977 = vadd.f32 %v1970, %v1975
        %v1978 = vadd.f32 %v1971, %v1976
        %v1979 = vld [vmem:[%s1201 + $0x5] sm:$0xff]
        %v1980 = vld [vmem:[%s1201 + $0xd] sm:$0xff]
        %v1981 = vstv %s424
        %v1982 = vmul.f32 %v1981, %v1979
        %v1983 = vmul.f32 %v1981, %v1980
        %v1984 = vadd.f32 %v1977, %v1982
        %v1985 = vadd.f32 %v1978, %v1983
        %v1986 = vld [vmem:[%s1210 + $0x5] sm:$0xff]
        %v1987 = vld [vmem:[%s1210 + $0xd] sm:$0xff]
        %v1988 = vstv %s425
        %v1989 = vmul.f32 %v1988, %v1986
        %v1990 = vmul.f32 %v1988, %v1987
        %v1991 = vadd.f32 %v1984, %v1989
        %v1992 = vadd.f32 %v1985, %v1990
        %v1993 = vld [vmem:[%s1154 + $0x6] sm:$0xff]
        %v1994 = vld [vmem:[%s1154 + $0xe] sm:$0xff]
        %v1995 = vstv %s426
        %v1996 = vmul.f32 %v1995, %v1993
        %v1997 = vmul.f32 %v1995, %v1994
        %v1998 = vadd.f32 %v1991, %v1996
        %v1999 = vadd.f32 %v1992, %v1997
        %v2000 = vld [vmem:[%s1165 + $0x6] sm:$0xff]
        %v2001 = vld [vmem:[%s1165 + $0xe] sm:$0xff]
        %v2002 = vstv %s427
        %v2003 = vmul.f32 %v2002, %v2000
        %v2004 = vmul.f32 %v2002, %v2001
        %v2005 = vadd.f32 %v1998, %v2003
        %v2006 = vadd.f32 %v1999, %v2004
        %v2007 = vld [vmem:[%s1174 + $0x6] sm:$0xff]
        %v2008 = vld [vmem:[%s1174 + $0xe] sm:$0xff]
        %v2009 = vstv %s428
        %v2010 = vmul.f32 %v2009, %v2007
        %v2011 = vmul.f32 %v2009, %v2008
        %v2012 = vadd.f32 %v2005, %v2010
        %v2013 = vadd.f32 %v2006, %v2011
        %v2014 = vld [vmem:[%s1183 + $0x6] sm:$0xff]
        %v2015 = vld [vmem:[%s1183 + $0xe] sm:$0xff]
        %v2016 = vstv %s429
        %v2017 = vmul.f32 %v2016, %v2014
        %v2018 = vmul.f32 %v2016, %v2015
        %v2019 = vadd.f32 %v2012, %v2017
        %v2020 = vadd.f32 %v2013, %v2018
        %v2021 = vld [vmem:[%s1192 + $0x6] sm:$0xff]
        %v2022 = vld [vmem:[%s1192 + $0xe] sm:$0xff]
        %v2023 = vstv %s430
        %v2024 = vmul.f32 %v2023, %v2021
        %v2025 = vmul.f32 %v2023, %v2022
        %v2026 = vadd.f32 %v2019, %v2024
        %v2027 = vadd.f32 %v2020, %v2025
        %v2028 = vld [vmem:[%s1201 + $0x6] sm:$0xff]
        %v2029 = vld [vmem:[%s1201 + $0xe] sm:$0xff]
        %v2030 = vstv %s431
        %v2031 = vmul.f32 %v2030, %v2028
        %v2032 = vmul.f32 %v2030, %v2029
        %v2033 = vadd.f32 %v2026, %v2031
        %v2034 = vadd.f32 %v2027, %v2032
        %v2035 = vld [vmem:[%s1210 + $0x6] sm:$0xff]
        %v2036 = vld [vmem:[%s1210 + $0xe] sm:$0xff]
        %v2037 = vstv %s432
        %v2038 = vmul.f32 %v2037, %v2035
        %v2039 = vmul.f32 %v2037, %v2036
        %v2040 = vadd.f32 %v2033, %v2038
        %v2041 = vadd.f32 %v2034, %v2039
        %v2042 = vld [vmem:[%s1225] sm:$0xff]
        %v2043 = vld [vmem:[%s1225 + $0x8] sm:$0xff]
        %v2044 = vstv %s433
        %v2045 = vmul.f32 %v2044, %v2042
        %v2046 = vmul.f32 %v2044, %v2043
        %v2047 = vadd.f32 %v2040, %v2045
        %v2048 = vadd.f32 %v2041, %v2046
        %v2049 = vld [vmem:[%s1236] sm:$0xff]
        %v2050 = vld [vmem:[%s1236 + $0x8] sm:$0xff]
        %v2051 = vstv %s434
        %v2052 = vmul.f32 %v2051, %v2049
        %v2053 = vmul.f32 %v2051, %v2050
        %v2054 = vadd.f32 %v2047, %v2052
        %v2055 = vadd.f32 %v2048, %v2053
        %v2056 = vld [vmem:[%s1245] sm:$0xff]
        %v2057 = vld [vmem:[%s1245 + $0x8] sm:$0xff]
        %v2058 = vstv %s435
        %v2059 = vmul.f32 %v2058, %v2056
        %v2060 = vmul.f32 %v2058, %v2057
        %v2061 = vadd.f32 %v2054, %v2059
        %v2062 = vadd.f32 %v2055, %v2060
        %v2063 = vld [vmem:[%s1254] sm:$0xff]
        %v2064 = vld [vmem:[%s1254 + $0x8] sm:$0xff]
        %v2065 = vstv %s436
        %v2066 = vmul.f32 %v2065, %v2063
        %v2067 = vmul.f32 %v2065, %v2064
        %v2068 = vadd.f32 %v2061, %v2066
        %v2069 = vadd.f32 %v2062, %v2067
        %v2070 = vld [vmem:[%s1263] sm:$0xff]
        %v2071 = vld [vmem:[%s1263 + $0x8] sm:$0xff]
        %v2072 = vstv %s437
        %v2073 = vmul.f32 %v2072, %v2070
        %v2074 = vmul.f32 %v2072, %v2071
        %v2075 = vadd.f32 %v2068, %v2073
        %v2076 = vadd.f32 %v2069, %v2074
        %v2077 = vld [vmem:[%s1272] sm:$0xff]
        %v2078 = vld [vmem:[%s1272 + $0x8] sm:$0xff]
        %v2079 = vstv %s438
        %v2080 = vmul.f32 %v2079, %v2077
        %v2081 = vmul.f32 %v2079, %v2078
        %v2082 = vadd.f32 %v2075, %v2080
        %v2083 = vadd.f32 %v2076, %v2081
        %v2084 = vld [vmem:[%s1281] sm:$0xff]
        %v2085 = vld [vmem:[%s1281 + $0x8] sm:$0xff]
        %v2086 = vstv %s439
        %v2087 = vmul.f32 %v2086, %v2084
        %v2088 = vmul.f32 %v2086, %v2085
        %v2089 = vadd.f32 %v2082, %v2087
        %v2090 = vadd.f32 %v2083, %v2088
        %v2091 = vld [vmem:[%s1225 + $0x1] sm:$0xff]
        %v2092 = vld [vmem:[%s1225 + $0x9] sm:$0xff]
        %v2093 = vstv %s440
        %v2094 = vmul.f32 %v2093, %v2091
        %v2095 = vmul.f32 %v2093, %v2092
        %v2096 = vadd.f32 %v2089, %v2094
        %v2097 = vadd.f32 %v2090, %v2095
        %v2098 = vld [vmem:[%s1236 + $0x1] sm:$0xff]
        %v2099 = vld [vmem:[%s1236 + $0x9] sm:$0xff]
        %v2100 = vstv %s441
        %v2101 = vmul.f32 %v2100, %v2098
        %v2102 = vmul.f32 %v2100, %v2099
        %v2103 = vadd.f32 %v2096, %v2101
        %v2104 = vadd.f32 %v2097, %v2102
        %v2105 = vld [vmem:[%s1245 + $0x1] sm:$0xff]
        %v2106 = vld [vmem:[%s1245 + $0x9] sm:$0xff]
        %v2107 = vstv %s442
        %v2108 = vmul.f32 %v2107, %v2105
        %v2109 = vmul.f32 %v2107, %v2106
        %v2110 = vadd.f32 %v2103, %v2108
        %v2111 = vadd.f32 %v2104, %v2109
        %v2112 = vld [vmem:[%s1254 + $0x1] sm:$0xff]
        %v2113 = vld [vmem:[%s1254 + $0x9] sm:$0xff]
        %v2114 = vstv %s443
        %v2115 = vmul.f32 %v2114, %v2112
        %v2116 = vmul.f32 %v2114, %v2113
        %v2117 = vadd.f32 %v2110, %v2115
        %v2118 = vadd.f32 %v2111, %v2116
        %v2119 = vld [vmem:[%s1263 + $0x1] sm:$0xff]
        %v2120 = vld [vmem:[%s1263 + $0x9] sm:$0xff]
        %v2121 = vstv %s444
        %v2122 = vmul.f32 %v2121, %v2119
        %v2123 = vmul.f32 %v2121, %v2120
        %v2124 = vadd.f32 %v2117, %v2122
        %v2125 = vadd.f32 %v2118, %v2123
        %v2126 = vld [vmem:[%s1272 + $0x1] sm:$0xff]
        %v2127 = vld [vmem:[%s1272 + $0x9] sm:$0xff]
        %v2128 = vstv %s445
        %v2129 = vmul.f32 %v2128, %v2126
        %v2130 = vmul.f32 %v2128, %v2127
        %v2131 = vadd.f32 %v2124, %v2129
        %v2132 = vadd.f32 %v2125, %v2130
        %v2133 = vld [vmem:[%s1281 + $0x1] sm:$0xff]
        %v2134 = vld [vmem:[%s1281 + $0x9] sm:$0xff]
        %v2135 = vstv %s446
        %v2136 = vmul.f32 %v2135, %v2133
        %v2137 = vmul.f32 %v2135, %v2134
        %v2138 = vadd.f32 %v2131, %v2136
        %v2139 = vadd.f32 %v2132, %v2137
        %v2140 = vld [vmem:[%s1225 + $0x2] sm:$0xff]
        %v2141 = vld [vmem:[%s1225 + $0xa] sm:$0xff]
        %v2142 = vstv %s447
        %v2143 = vmul.f32 %v2142, %v2140
        %v2144 = vmul.f32 %v2142, %v2141
        %v2145 = vadd.f32 %v2138, %v2143
        %v2146 = vadd.f32 %v2139, %v2144
        %v2147 = vld [vmem:[%s1236 + $0x2] sm:$0xff]
        %v2148 = vld [vmem:[%s1236 + $0xa] sm:$0xff]
        %v2149 = vstv %s448
        %v2150 = vmul.f32 %v2149, %v2147
        %v2151 = vmul.f32 %v2149, %v2148
        %v2152 = vadd.f32 %v2145, %v2150
        %v2153 = vadd.f32 %v2146, %v2151
        %v2154 = vld [vmem:[%s1245 + $0x2] sm:$0xff]
        %v2155 = vld [vmem:[%s1245 + $0xa] sm:$0xff]
        %v2156 = vstv %s449
        %v2157 = vmul.f32 %v2156, %v2154
        %v2158 = vmul.f32 %v2156, %v2155
        %v2159 = vadd.f32 %v2152, %v2157
        %v2160 = vadd.f32 %v2153, %v2158
        %v2161 = vld [vmem:[%s1254 + $0x2] sm:$0xff]
        %v2162 = vld [vmem:[%s1254 + $0xa] sm:$0xff]
        %v2163 = vstv %s450
        %v2164 = vmul.f32 %v2163, %v2161
        %v2165 = vmul.f32 %v2163, %v2162
        %v2166 = vadd.f32 %v2159, %v2164
        %v2167 = vadd.f32 %v2160, %v2165
        %v2168 = vld [vmem:[%s1263 + $0x2] sm:$0xff]
        %v2169 = vld [vmem:[%s1263 + $0xa] sm:$0xff]
        %v2170 = vstv %s451
        %v2171 = vmul.f32 %v2170, %v2168
        %v2172 = vmul.f32 %v2170, %v2169
        %v2173 = vadd.f32 %v2166, %v2171
        %v2174 = vadd.f32 %v2167, %v2172
        %v2175 = vld [vmem:[%s1272 + $0x2] sm:$0xff]
        %v2176 = vld [vmem:[%s1272 + $0xa] sm:$0xff]
        %v2177 = vstv %s452
        %v2178 = vmul.f32 %v2177, %v2175
        %v2179 = vmul.f32 %v2177, %v2176
        %v2180 = vadd.f32 %v2173, %v2178
        %v2181 = vadd.f32 %v2174, %v2179
        %v2182 = vld [vmem:[%s1281 + $0x2] sm:$0xff]
        %v2183 = vld [vmem:[%s1281 + $0xa] sm:$0xff]
        %v2184 = vstv %s453
        %v2185 = vmul.f32 %v2184, %v2182
        %v2186 = vmul.f32 %v2184, %v2183
        %v2187 = vadd.f32 %v2180, %v2185
        %v2188 = vadd.f32 %v2181, %v2186
        %v2189 = vld [vmem:[%s1225 + $0x3] sm:$0xff]
        %v2190 = vld [vmem:[%s1225 + $0xb] sm:$0xff]
        %v2191 = vstv %s454
        %v2192 = vmul.f32 %v2191, %v2189
        %v2193 = vmul.f32 %v2191, %v2190
        %v2194 = vadd.f32 %v2187, %v2192
        %v2195 = vadd.f32 %v2188, %v2193
        %v2196 = vld [vmem:[%s1236 + $0x3] sm:$0xff]
        %v2197 = vld [vmem:[%s1236 + $0xb] sm:$0xff]
        %v2198 = vstv %s455
        %v2199 = vmul.f32 %v2198, %v2196
        %v2200 = vmul.f32 %v2198, %v2197
        %v2201 = vadd.f32 %v2194, %v2199
        %v2202 = vadd.f32 %v2195, %v2200
        %v2203 = vld [vmem:[%s1245 + $0x3] sm:$0xff]
        %v2204 = vld [vmem:[%s1245 + $0xb] sm:$0xff]
        %v2205 = vstv %s456
        %v2206 = vmul.f32 %v2205, %v2203
        %v2207 = vmul.f32 %v2205, %v2204
        %v2208 = vadd.f32 %v2201, %v2206
        %v2209 = vadd.f32 %v2202, %v2207
        %v2210 = vld [vmem:[%s1254 + $0x3] sm:$0xff]
        %v2211 = vld [vmem:[%s1254 + $0xb] sm:$0xff]
        %v2212 = vstv %s457
        %v2213 = vmul.f32 %v2212, %v2210
        %v2214 = vmul.f32 %v2212, %v2211
        %v2215 = vadd.f32 %v2208, %v2213
        %v2216 = vadd.f32 %v2209, %v2214
        %v2217 = vld [vmem:[%s1263 + $0x3] sm:$0xff]
        %v2218 = vld [vmem:[%s1263 + $0xb] sm:$0xff]
        %v2219 = vstv %s458
        %v2220 = vmul.f32 %v2219, %v2217
        %v2221 = vmul.f32 %v2219, %v2218
        %v2222 = vadd.f32 %v2215, %v2220
        %v2223 = vadd.f32 %v2216, %v2221
        %v2224 = vld [vmem:[%s1272 + $0x3] sm:$0xff]
        %v2225 = vld [vmem:[%s1272 + $0xb] sm:$0xff]
        %v2226 = vstv %s459
        %v2227 = vmul.f32 %v2226, %v2224
        %v2228 = vmul.f32 %v2226, %v2225
        %v2229 = vadd.f32 %v2222, %v2227
        %v2230 = vadd.f32 %v2223, %v2228
        %v2231 = vld [vmem:[%s1281 + $0x3] sm:$0xff]
        %v2232 = vld [vmem:[%s1281 + $0xb] sm:$0xff]
        %v2233 = vstv %s460
        %v2234 = vmul.f32 %v2233, %v2231
        %v2235 = vmul.f32 %v2233, %v2232
        %v2236 = vadd.f32 %v2229, %v2234
        %v2237 = vadd.f32 %v2230, %v2235
        %v2238 = vld [vmem:[%s1225 + $0x4] sm:$0xff]
        %v2239 = vld [vmem:[%s1225 + $0xc] sm:$0xff]
        %v2240 = vstv %s461
        %v2241 = vmul.f32 %v2240, %v2238
        %v2242 = vmul.f32 %v2240, %v2239
        %v2243 = vadd.f32 %v2236, %v2241
        %v2244 = vadd.f32 %v2237, %v2242
        %v2245 = vld [vmem:[%s1236 + $0x4] sm:$0xff]
        %v2246 = vld [vmem:[%s1236 + $0xc] sm:$0xff]
        %v2247 = vstv %s462
        %v2248 = vmul.f32 %v2247, %v2245
        %v2249 = vmul.f32 %v2247, %v2246
        %v2250 = vadd.f32 %v2243, %v2248
        %v2251 = vadd.f32 %v2244, %v2249
        %v2252 = vld [vmem:[%s1245 + $0x4] sm:$0xff]
        %v2253 = vld [vmem:[%s1245 + $0xc] sm:$0xff]
        %v2254 = vstv %s463
        %v2255 = vmul.f32 %v2254, %v2252
        %v2256 = vmul.f32 %v2254, %v2253
        %v2257 = vadd.f32 %v2250, %v2255
        %v2258 = vadd.f32 %v2251, %v2256
        %v2259 = vld [vmem:[%s1254 + $0x4] sm:$0xff]
        %v2260 = vld [vmem:[%s1254 + $0xc] sm:$0xff]
        %v2261 = vstv %s464
        %v2262 = vmul.f32 %v2261, %v2259
        %v2263 = vmul.f32 %v2261, %v2260
        %v2264 = vadd.f32 %v2257, %v2262
        %v2265 = vadd.f32 %v2258, %v2263
        %v2266 = vld [vmem:[%s1263 + $0x4] sm:$0xff]
        %v2267 = vld [vmem:[%s1263 + $0xc] sm:$0xff]
        %v2268 = vstv %s465
        %v2269 = vmul.f32 %v2268, %v2266
        %v2270 = vmul.f32 %v2268, %v2267
        %v2271 = vadd.f32 %v2264, %v2269
        %v2272 = vadd.f32 %v2265, %v2270
        %v2273 = vld [vmem:[%s1272 + $0x4] sm:$0xff]
        %v2274 = vld [vmem:[%s1272 + $0xc] sm:$0xff]
        %v2275 = vstv %s466
        %v2276 = vmul.f32 %v2275, %v2273
        %v2277 = vmul.f32 %v2275, %v2274
        %v2278 = vadd.f32 %v2271, %v2276
        %v2279 = vadd.f32 %v2272, %v2277
        %v2280 = vld [vmem:[%s1281 + $0x4] sm:$0xff]
        %v2281 = vld [vmem:[%s1281 + $0xc] sm:$0xff]
        %v2282 = vstv %s467
        %v2283 = vmul.f32 %v2282, %v2280
        %v2284 = vmul.f32 %v2282, %v2281
        %v2285 = vadd.f32 %v2278, %v2283
        %v2286 = vadd.f32 %v2279, %v2284
        %v2287 = vld [vmem:[%s1225 + $0x5] sm:$0xff]
        %v2288 = vld [vmem:[%s1225 + $0xd] sm:$0xff]
        %v2289 = vstv %s468
        %v2290 = vmul.f32 %v2289, %v2287
        %v2291 = vmul.f32 %v2289, %v2288
        %v2292 = vadd.f32 %v2285, %v2290
        %v2293 = vadd.f32 %v2286, %v2291
        %v2294 = vld [vmem:[%s1236 + $0x5] sm:$0xff]
        %v2295 = vld [vmem:[%s1236 + $0xd] sm:$0xff]
        %v2296 = vstv %s469
        %v2297 = vmul.f32 %v2296, %v2294
        %v2298 = vmul.f32 %v2296, %v2295
        %v2299 = vadd.f32 %v2292, %v2297
        %v2300 = vadd.f32 %v2293, %v2298
        %v2301 = vld [vmem:[%s1245 + $0x5] sm:$0xff]
        %v2302 = vld [vmem:[%s1245 + $0xd] sm:$0xff]
        %v2303 = vstv %s470
        %v2304 = vmul.f32 %v2303, %v2301
        %v2305 = vmul.f32 %v2303, %v2302
        %v2306 = vadd.f32 %v2299, %v2304
        %v2307 = vadd.f32 %v2300, %v2305
        %v2308 = vld [vmem:[%s1254 + $0x5] sm:$0xff]
        %v2309 = vld [vmem:[%s1254 + $0xd] sm:$0xff]
        %v2310 = vstv %s471
        %v2311 = vmul.f32 %v2310, %v2308
        %v2312 = vmul.f32 %v2310, %v2309
        %v2313 = vadd.f32 %v2306, %v2311
        %v2314 = vadd.f32 %v2307, %v2312
        %v2315 = vld [vmem:[%s1263 + $0x5] sm:$0xff]
        %v2316 = vld [vmem:[%s1263 + $0xd] sm:$0xff]
        %v2317 = vstv %s472
        %v2318 = vmul.f32 %v2317, %v2315
        %v2319 = vmul.f32 %v2317, %v2316
        %v2320 = vadd.f32 %v2313, %v2318
        %v2321 = vadd.f32 %v2314, %v2319
        %v2322 = vld [vmem:[%s1272 + $0x5] sm:$0xff]
        %v2323 = vld [vmem:[%s1272 + $0xd] sm:$0xff]
        %v2324 = vstv %s473
        %v2325 = vmul.f32 %v2324, %v2322
        %v2326 = vmul.f32 %v2324, %v2323
        %v2327 = vadd.f32 %v2320, %v2325
        %v2328 = vadd.f32 %v2321, %v2326
        %v2329 = vld [vmem:[%s1281 + $0x5] sm:$0xff]
        %v2330 = vld [vmem:[%s1281 + $0xd] sm:$0xff]
        %v2331 = vstv %s474
        %v2332 = vmul.f32 %v2331, %v2329
        %v2333 = vmul.f32 %v2331, %v2330
        %v2334 = vadd.f32 %v2327, %v2332
        %v2335 = vadd.f32 %v2328, %v2333
        %v2336 = vld [vmem:[%s1225 + $0x6] sm:$0xff]
        %v2337 = vld [vmem:[%s1225 + $0xe] sm:$0xff]
        %v2338 = vstv %s475
        %v2339 = vmul.f32 %v2338, %v2336
        %v2340 = vmul.f32 %v2338, %v2337
        %v2341 = vadd.f32 %v2334, %v2339
        %v2342 = vadd.f32 %v2335, %v2340
        %v2343 = vld [vmem:[%s1236 + $0x6] sm:$0xff]
        %v2344 = vld [vmem:[%s1236 + $0xe] sm:$0xff]
        %v2345 = vstv %s476
        %v2346 = vmul.f32 %v2345, %v2343
        %v2347 = vmul.f32 %v2345, %v2344
        %v2348 = vadd.f32 %v2341, %v2346
        %v2349 = vadd.f32 %v2342, %v2347
        %v2350 = vld [vmem:[%s1245 + $0x6] sm:$0xff]
        %v2351 = vld [vmem:[%s1245 + $0xe] sm:$0xff]
        %v2352 = vstv %s477
        %v2353 = vmul.f32 %v2352, %v2350
        %v2354 = vmul.f32 %v2352, %v2351
        %v2355 = vadd.f32 %v2348, %v2353
        %v2356 = vadd.f32 %v2349, %v2354
        %v2357 = vld [vmem:[%s1254 + $0x6] sm:$0xff]
        %v2358 = vld [vmem:[%s1254 + $0xe] sm:$0xff]
        %v2359 = vstv %s478
        %v2360 = vmul.f32 %v2359, %v2357
        %v2361 = vmul.f32 %v2359, %v2358
        %v2362 = vadd.f32 %v2355, %v2360
        %v2363 = vadd.f32 %v2356, %v2361
        %v2364 = vld [vmem:[%s1263 + $0x6] sm:$0xff]
        %v2365 = vld [vmem:[%s1263 + $0xe] sm:$0xff]
        %v2366 = vstv %s479
        %v2367 = vmul.f32 %v2366, %v2364
        %v2368 = vmul.f32 %v2366, %v2365
        %v2369 = vadd.f32 %v2362, %v2367
        %v2370 = vadd.f32 %v2363, %v2368
        %v2371 = vld [vmem:[%s1272 + $0x6] sm:$0xff]
        %v2372 = vld [vmem:[%s1272 + $0xe] sm:$0xff]
        %v2373 = vstv %s480
        %v2374 = vmul.f32 %v2373, %v2371
        %v2375 = vmul.f32 %v2373, %v2372
        %v2376 = vadd.f32 %v2369, %v2374
        %v2377 = vadd.f32 %v2370, %v2375
        %v2378 = vld [vmem:[%s1281 + $0x6] sm:$0xff]
        %v2379 = vld [vmem:[%s1281 + $0xe] sm:$0xff]
        %v2380 = vstv %s481
        %v2381 = vmul.f32 %v2380, %v2378
        %v2382 = vmul.f32 %v2380, %v2379
        %v2383 = vadd.f32 %v2376, %v2381
        %v2384 = vadd.f32 %v2377, %v2382
        %v2385 = vld [vmem:[%s1296] sm:$0xff]
        %v2386 = vld [vmem:[%s1296 + $0x8] sm:$0xff]
        %v2387 = vstv %s482
        %v2388 = vmul.f32 %v2387, %v2385
        %v2389 = vmul.f32 %v2387, %v2386
        %v2390 = vadd.f32 %v2383, %v2388
        %v2391 = vadd.f32 %v2384, %v2389
        %v2392 = vld [vmem:[%s1307] sm:$0xff]
        %v2393 = vld [vmem:[%s1307 + $0x8] sm:$0xff]
        %v2394 = vstv %s483
        %v2395 = vmul.f32 %v2394, %v2392
        %v2396 = vmul.f32 %v2394, %v2393
        %v2397 = vadd.f32 %v2390, %v2395
        %v2398 = vadd.f32 %v2391, %v2396
        %v2399 = vld [vmem:[%s1316] sm:$0xff]
        %v2400 = vld [vmem:[%s1316 + $0x8] sm:$0xff]
        %v2401 = vstv %s484
        %v2402 = vmul.f32 %v2401, %v2399
        %v2403 = vmul.f32 %v2401, %v2400
        %v2404 = vadd.f32 %v2397, %v2402
        %v2405 = vadd.f32 %v2398, %v2403
        %v2406 = vld [vmem:[%s1325] sm:$0xff]
        %v2407 = vld [vmem:[%s1325 + $0x8] sm:$0xff]
        %v2408 = vstv %s485
        %v2409 = vmul.f32 %v2408, %v2406
        %v2410 = vmul.f32 %v2408, %v2407
        %v2411 = vadd.f32 %v2404, %v2409
        %v2412 = vadd.f32 %v2405, %v2410
        %v2413 = vld [vmem:[%s1334] sm:$0xff]
        %v2414 = vld [vmem:[%s1334 + $0x8] sm:$0xff]
        %v2415 = vstv %s486
        %v2416 = vmul.f32 %v2415, %v2413
        %v2417 = vmul.f32 %v2415, %v2414
        %v2418 = vadd.f32 %v2411, %v2416
        %v2419 = vadd.f32 %v2412, %v2417
        %v2420 = vld [vmem:[%s1343] sm:$0xff]
        %v2421 = vld [vmem:[%s1343 + $0x8] sm:$0xff]
        %v2422 = vstv %s487
        %v2423 = vmul.f32 %v2422, %v2420
        %v2424 = vmul.f32 %v2422, %v2421
        %v2425 = vadd.f32 %v2418, %v2423
        %v2426 = vadd.f32 %v2419, %v2424
        %v2427 = vld [vmem:[%s1352] sm:$0xff]
        %v2428 = vld [vmem:[%s1352 + $0x8] sm:$0xff]
        %v2429 = vstv %s488
        %v2430 = vmul.f32 %v2429, %v2427
        %v2431 = vmul.f32 %v2429, %v2428
        %v2432 = vadd.f32 %v2425, %v2430
        %v2433 = vadd.f32 %v2426, %v2431
        %v2434 = vld [vmem:[%s1296 + $0x1] sm:$0xff]
        %v2435 = vld [vmem:[%s1296 + $0x9] sm:$0xff]
        %v2436 = vstv %s489
        %v2437 = vmul.f32 %v2436, %v2434
        %v2438 = vmul.f32 %v2436, %v2435
        %v2439 = vadd.f32 %v2432, %v2437
        %v2440 = vadd.f32 %v2433, %v2438
        %v2441 = vld [vmem:[%s1307 + $0x1] sm:$0xff]
        %v2442 = vld [vmem:[%s1307 + $0x9] sm:$0xff]
        %v2443 = vstv %s490
        %v2444 = vmul.f32 %v2443, %v2441
        %v2445 = vmul.f32 %v2443, %v2442
        %v2446 = vadd.f32 %v2439, %v2444
        %v2447 = vadd.f32 %v2440, %v2445
        %v2448 = vld [vmem:[%s1316 + $0x1] sm:$0xff]
        %v2449 = vld [vmem:[%s1316 + $0x9] sm:$0xff]
        %v2450 = vstv %s491
        %v2451 = vmul.f32 %v2450, %v2448
        %v2452 = vmul.f32 %v2450, %v2449
        %v2453 = vadd.f32 %v2446, %v2451
        %v2454 = vadd.f32 %v2447, %v2452
        %v2455 = vld [vmem:[%s1325 + $0x1] sm:$0xff]
        %v2456 = vld [vmem:[%s1325 + $0x9] sm:$0xff]
        %v2457 = vstv %s492
        %v2458 = vmul.f32 %v2457, %v2455
        %v2459 = vmul.f32 %v2457, %v2456
        %v2460 = vadd.f32 %v2453, %v2458
        %v2461 = vadd.f32 %v2454, %v2459
        %v2462 = vld [vmem:[%s1334 + $0x1] sm:$0xff]
        %v2463 = vld [vmem:[%s1334 + $0x9] sm:$0xff]
        %v2464 = vstv %s493
        %v2465 = vmul.f32 %v2464, %v2462
        %v2466 = vmul.f32 %v2464, %v2463
        %v2467 = vadd.f32 %v2460, %v2465
        %v2468 = vadd.f32 %v2461, %v2466
        %v2469 = vld [vmem:[%s1343 + $0x1] sm:$0xff]
        %v2470 = vld [vmem:[%s1343 + $0x9] sm:$0xff]
        %v2471 = vstv %s494
        %v2472 = vmul.f32 %v2471, %v2469
        %v2473 = vmul.f32 %v2471, %v2470
        %v2474 = vadd.f32 %v2467, %v2472
        %v2475 = vadd.f32 %v2468, %v2473
        %v2476 = vld [vmem:[%s1352 + $0x1] sm:$0xff]
        %v2477 = vld [vmem:[%s1352 + $0x9] sm:$0xff]
        %v2478 = vstv %s495
        %v2479 = vmul.f32 %v2478, %v2476
        %v2480 = vmul.f32 %v2478, %v2477
        %v2481 = vadd.f32 %v2474, %v2479
        %v2482 = vadd.f32 %v2475, %v2480
        %v2483 = vld [vmem:[%s1296 + $0x2] sm:$0xff]
        %v2484 = vld [vmem:[%s1296 + $0xa] sm:$0xff]
        %v2485 = vstv %s496
        %v2486 = vmul.f32 %v2485, %v2483
        %v2487 = vmul.f32 %v2485, %v2484
        %v2488 = vadd.f32 %v2481, %v2486
        %v2489 = vadd.f32 %v2482, %v2487
        %v2490 = vld [vmem:[%s1307 + $0x2] sm:$0xff]
        %v2491 = vld [vmem:[%s1307 + $0xa] sm:$0xff]
        %v2492 = vstv %s497
        %v2493 = vmul.f32 %v2492, %v2490
        %v2494 = vmul.f32 %v2492, %v2491
        %v2495 = vadd.f32 %v2488, %v2493
        %v2496 = vadd.f32 %v2489, %v2494
        %v2497 = vld [vmem:[%s1316 + $0x2] sm:$0xff]
        %v2498 = vld [vmem:[%s1316 + $0xa] sm:$0xff]
        %v2499 = vstv %s498
        %v2500 = vmul.f32 %v2499, %v2497
        %v2501 = vmul.f32 %v2499, %v2498
        %v2502 = vadd.f32 %v2495, %v2500
        %v2503 = vadd.f32 %v2496, %v2501
        %v2504 = vld [vmem:[%s1325 + $0x2] sm:$0xff]
        %v2505 = vld [vmem:[%s1325 + $0xa] sm:$0xff]
        %v2506 = vstv %s499
        %v2507 = vmul.f32 %v2506, %v2504
        %v2508 = vmul.f32 %v2506, %v2505
        %v2509 = vadd.f32 %v2502, %v2507
        %v2510 = vadd.f32 %v2503, %v2508
        %v2511 = vld [vmem:[%s1334 + $0x2] sm:$0xff]
        %v2512 = vld [vmem:[%s1334 + $0xa] sm:$0xff]
        %v2513 = vstv %s500
        %v2514 = vmul.f32 %v2513, %v2511
        %v2515 = vmul.f32 %v2513, %v2512
        %v2516 = vadd.f32 %v2509, %v2514
        %v2517 = vadd.f32 %v2510, %v2515
        %v2518 = vld [vmem:[%s1343 + $0x2] sm:$0xff]
        %v2519 = vld [vmem:[%s1343 + $0xa] sm:$0xff]
        %v2520 = vstv %s501
        %v2521 = vmul.f32 %v2520, %v2518
        %v2522 = vmul.f32 %v2520, %v2519
        %v2523 = vadd.f32 %v2516, %v2521
        %v2524 = vadd.f32 %v2517, %v2522
        %v2525 = vld [vmem:[%s1352 + $0x2] sm:$0xff]
        %v2526 = vld [vmem:[%s1352 + $0xa] sm:$0xff]
        %v2527 = vstv %s502
        %v2528 = vmul.f32 %v2527, %v2525
        %v2529 = vmul.f32 %v2527, %v2526
        %v2530 = vadd.f32 %v2523, %v2528
        %v2531 = vadd.f32 %v2524, %v2529
        %v2532 = vld [vmem:[%s1296 + $0x3] sm:$0xff]
        %v2533 = vld [vmem:[%s1296 + $0xb] sm:$0xff]
        %v2534 = vstv %s503
        %v2535 = vmul.f32 %v2534, %v2532
        %v2536 = vmul.f32 %v2534, %v2533
        %v2537 = vadd.f32 %v2530, %v2535
        %v2538 = vadd.f32 %v2531, %v2536
        %v2539 = vld [vmem:[%s1307 + $0x3] sm:$0xff]
        %v2540 = vld [vmem:[%s1307 + $0xb] sm:$0xff]
        %v2541 = vstv %s504
        %v2542 = vmul.f32 %v2541, %v2539
        %v2543 = vmul.f32 %v2541, %v2540
        %v2544 = vadd.f32 %v2537, %v2542
        %v2545 = vadd.f32 %v2538, %v2543
        %v2546 = vld [vmem:[%s1316 + $0x3] sm:$0xff]
        %v2547 = vld [vmem:[%s1316 + $0xb] sm:$0xff]
        %v2548 = vstv %s505
        %v2549 = vmul.f32 %v2548, %v2546
        %v2550 = vmul.f32 %v2548, %v2547
        %v2551 = vadd.f32 %v2544, %v2549
        %v2552 = vadd.f32 %v2545, %v2550
        %v2553 = vld [vmem:[%s1325 + $0x3] sm:$0xff]
        %v2554 = vld [vmem:[%s1325 + $0xb] sm:$0xff]
        %v2555 = vstv %s506
        %v2556 = vmul.f32 %v2555, %v2553
        %v2557 = vmul.f32 %v2555, %v2554
        %v2558 = vadd.f32 %v2551, %v2556
        %v2559 = vadd.f32 %v2552, %v2557
        %v2560 = vld [vmem:[%s1334 + $0x3] sm:$0xff]
        %v2561 = vld [vmem:[%s1334 + $0xb] sm:$0xff]
        %v2562 = vstv %s507
        %v2563 = vmul.f32 %v2562, %v2560
        %v2564 = vmul.f32 %v2562, %v2561
        %v2565 = vadd.f32 %v2558, %v2563
        %v2566 = vadd.f32 %v2559, %v2564
        %v2567 = vld [vmem:[%s1343 + $0x3] sm:$0xff]
        %v2568 = vld [vmem:[%s1343 + $0xb] sm:$0xff]
        %v2569 = vstv %s508
        %v2570 = vmul.f32 %v2569, %v2567
        %v2571 = vmul.f32 %v2569, %v2568
        %v2572 = vadd.f32 %v2565, %v2570
        %v2573 = vadd.f32 %v2566, %v2571
        %v2574 = vld [vmem:[%s1352 + $0x3] sm:$0xff]
        %v2575 = vld [vmem:[%s1352 + $0xb] sm:$0xff]
        %v2576 = vstv %s509
        %v2577 = vmul.f32 %v2576, %v2574
        %v2578 = vmul.f32 %v2576, %v2575
        %v2579 = vadd.f32 %v2572, %v2577
        %v2580 = vadd.f32 %v2573, %v2578
        %v2581 = vld [vmem:[%s1296 + $0x4] sm:$0xff]
        %v2582 = vld [vmem:[%s1296 + $0xc] sm:$0xff]
        %v2583 = vstv %s510
        %v2584 = vmul.f32 %v2583, %v2581
        %v2585 = vmul.f32 %v2583, %v2582
        %v2586 = vadd.f32 %v2579, %v2584
        %v2587 = vadd.f32 %v2580, %v2585
        %v2588 = vld [vmem:[%s1307 + $0x4] sm:$0xff]
        %v2589 = vld [vmem:[%s1307 + $0xc] sm:$0xff]
        %v2590 = vstv %s511
        %v2591 = vmul.f32 %v2590, %v2588
        %v2592 = vmul.f32 %v2590, %v2589
        %v2593 = vadd.f32 %v2586, %v2591
        %v2594 = vadd.f32 %v2587, %v2592
        %v2595 = vld [vmem:[%s1316 + $0x4] sm:$0xff]
        %v2596 = vld [vmem:[%s1316 + $0xc] sm:$0xff]
        %v2597 = vstv %s512
        %v2598 = vmul.f32 %v2597, %v2595
        %v2599 = vmul.f32 %v2597, %v2596
        %v2600 = vadd.f32 %v2593, %v2598
        %v2601 = vadd.f32 %v2594, %v2599
        %v2602 = vld [vmem:[%s1325 + $0x4] sm:$0xff]
        %v2603 = vld [vmem:[%s1325 + $0xc] sm:$0xff]
        %v2604 = vstv %s513
        %v2605 = vmul.f32 %v2604, %v2602
        %v2606 = vmul.f32 %v2604, %v2603
        %v2607 = vadd.f32 %v2600, %v2605
        %v2608 = vadd.f32 %v2601, %v2606
        %v2609 = vld [vmem:[%s1334 + $0x4] sm:$0xff]
        %v2610 = vld [vmem:[%s1334 + $0xc] sm:$0xff]
        %v2611 = vstv %s514
        %v2612 = vmul.f32 %v2611, %v2609
        %v2613 = vmul.f32 %v2611, %v2610
        %v2614 = vadd.f32 %v2607, %v2612
        %v2615 = vadd.f32 %v2608, %v2613
        %v2616 = vld [vmem:[%s1343 + $0x4] sm:$0xff]
        %v2617 = vld [vmem:[%s1343 + $0xc] sm:$0xff]
        %v2618 = vstv %s515
        %v2619 = vmul.f32 %v2618, %v2616
        %v2620 = vmul.f32 %v2618, %v2617
        %v2621 = vadd.f32 %v2614, %v2619
        %v2622 = vadd.f32 %v2615, %v2620
        %v2623 = vld [vmem:[%s1352 + $0x4] sm:$0xff]
        %v2624 = vld [vmem:[%s1352 + $0xc] sm:$0xff]
        %v2625 = vstv %s516
        %v2626 = vmul.f32 %v2625, %v2623
        %v2627 = vmul.f32 %v2625, %v2624
        %v2628 = vadd.f32 %v2621, %v2626
        %v2629 = vadd.f32 %v2622, %v2627
        %v2630 = vld [vmem:[%s1296 + $0x5] sm:$0xff]
        %v2631 = vld [vmem:[%s1296 + $0xd] sm:$0xff]
        %v2632 = vstv %s517
        %v2633 = vmul.f32 %v2632, %v2630
        %v2634 = vmul.f32 %v2632, %v2631
        %v2635 = vadd.f32 %v2628, %v2633
        %v2636 = vadd.f32 %v2629, %v2634
        %v2637 = vld [vmem:[%s1307 + $0x5] sm:$0xff]
        %v2638 = vld [vmem:[%s1307 + $0xd] sm:$0xff]
        %v2639 = vstv %s518
        %v2640 = vmul.f32 %v2639, %v2637
        %v2641 = vmul.f32 %v2639, %v2638
        %v2642 = vadd.f32 %v2635, %v2640
        %v2643 = vadd.f32 %v2636, %v2641
        %v2644 = vld [vmem:[%s1316 + $0x5] sm:$0xff]
        %v2645 = vld [vmem:[%s1316 + $0xd] sm:$0xff]
        %v2646 = vstv %s519
        %v2647 = vmul.f32 %v2646, %v2644
        %v2648 = vmul.f32 %v2646, %v2645
        %v2649 = vadd.f32 %v2642, %v2647
        %v2650 = vadd.f32 %v2643, %v2648
        %v2651 = vld [vmem:[%s1325 + $0x5] sm:$0xff]
        %v2652 = vld [vmem:[%s1325 + $0xd] sm:$0xff]
        %v2653 = vstv %s520
        %v2654 = vmul.f32 %v2653, %v2651
        %v2655 = vmul.f32 %v2653, %v2652
        %v2656 = vadd.f32 %v2649, %v2654
        %v2657 = vadd.f32 %v2650, %v2655
        %v2658 = vld [vmem:[%s1334 + $0x5] sm:$0xff]
        %v2659 = vld [vmem:[%s1334 + $0xd] sm:$0xff]
        %v2660 = vstv %s521
        %v2661 = vmul.f32 %v2660, %v2658
        %v2662 = vmul.f32 %v2660, %v2659
        %v2663 = vadd.f32 %v2656, %v2661
        %v2664 = vadd.f32 %v2657, %v2662
        %v2665 = vld [vmem:[%s1343 + $0x5] sm:$0xff]
        %v2666 = vld [vmem:[%s1343 + $0xd] sm:$0xff]
        %v2667 = vstv %s522
        %v2668 = vmul.f32 %v2667, %v2665
        %v2669 = vmul.f32 %v2667, %v2666
        %v2670 = vadd.f32 %v2663, %v2668
        %v2671 = vadd.f32 %v2664, %v2669
        %v2672 = vld [vmem:[%s1352 + $0x5] sm:$0xff]
        %v2673 = vld [vmem:[%s1352 + $0xd] sm:$0xff]
        %v2674 = vstv %s523
        %v2675 = vmul.f32 %v2674, %v2672
        %v2676 = vmul.f32 %v2674, %v2673
        %v2677 = vadd.f32 %v2670, %v2675
        %v2678 = vadd.f32 %v2671, %v2676
        %v2679 = vld [vmem:[%s1296 + $0x6] sm:$0xff]
        %v2680 = vld [vmem:[%s1296 + $0xe] sm:$0xff]
        %v2681 = vstv %s524
        %v2682 = vmul.f32 %v2681, %v2679
        %v2683 = vmul.f32 %v2681, %v2680
        %v2684 = vadd.f32 %v2677, %v2682
        %v2685 = vadd.f32 %v2678, %v2683
        %v2686 = vld [vmem:[%s1307 + $0x6] sm:$0xff]
        %v2687 = vld [vmem:[%s1307 + $0xe] sm:$0xff]
        %v2688 = vstv %s525
        %v2689 = vmul.f32 %v2688, %v2686
        %v2690 = vmul.f32 %v2688, %v2687
        %v2691 = vadd.f32 %v2684, %v2689
        %v2692 = vadd.f32 %v2685, %v2690
        %v2693 = vld [vmem:[%s1316 + $0x6] sm:$0xff]
        %v2694 = vld [vmem:[%s1316 + $0xe] sm:$0xff]
        %v2695 = vstv %s526
        %v2696 = vmul.f32 %v2695, %v2693
        %v2697 = vmul.f32 %v2695, %v2694
        %v2698 = vadd.f32 %v2691, %v2696
        %v2699 = vadd.f32 %v2692, %v2697
        %v2700 = vld [vmem:[%s1325 + $0x6] sm:$0xff]
        %v2701 = vld [vmem:[%s1325 + $0xe] sm:$0xff]
        %v2702 = vstv %s527
        %v2703 = vmul.f32 %v2702, %v2700
        %v2704 = vmul.f32 %v2702, %v2701
        %v2705 = vadd.f32 %v2698, %v2703
        %v2706 = vadd.f32 %v2699, %v2704
        %v2707 = vld [vmem:[%s1334 + $0x6] sm:$0xff]
        %v2708 = vld [vmem:[%s1334 + $0xe] sm:$0xff]
        %v2709 = vstv %s528
        %v2710 = vmul.f32 %v2709, %v2707
        %v2711 = vmul.f32 %v2709, %v2708
        %v2712 = vadd.f32 %v2705, %v2710
        %v2713 = vadd.f32 %v2706, %v2711
        %v2714 = vld [vmem:[%s1343 + $0x6] sm:$0xff]
        %v2715 = vld [vmem:[%s1343 + $0xe] sm:$0xff]
        %v2716 = vstv %s529
        %v2717 = vmul.f32 %v2716, %v2714
        %v2718 = vmul.f32 %v2716, %v2715
        %v2719 = vadd.f32 %v2712, %v2717
        %v2720 = vadd.f32 %v2713, %v2718
        %v2721 = vld [vmem:[%s1352 + $0x6] sm:$0xff]
        %v2722 = vld [vmem:[%s1352 + $0xe] sm:$0xff]
        %v2723 = vstv %s530
        %v2724 = vmul.f32 %v2723, %v2721
        %v2725 = vmul.f32 %v2723, %v2722
        %v2726 = vadd.f32 %v2719, %v2724
        %v2727 = vadd.f32 %v2720, %v2725
        %v2728 = vsub.f32 0.0, %v2726
        %v2729 = vsub.f32 0.0, %v2727
        %v2730 = vmul.f32 %v2728, 1.442695
        %v2731 = vpow.pop %v2730
        %v2732 = vmul.f32 %v2729, 1.442695
        %v2733 = vpow.pop %v2732
        %v2734 = vadd.f32 %v2731, 1.0
        %v2735 = vadd.f32 %v2733, 1.0
        %v2736 = vrcp.pop %v2734
        %v2737 = vmul.f32 %v2734, %v2736
        %v2738 = vsub.f32 1.0, %v2737
        %v2739 = vmul.f32 %v2736, %v2738
        %v2740 = vadd.f32 %v2736, %v2739
        %vm2741 = vweird.f32 %v2734
        %vm2742 = vweird.f32 %v2736
        %vm2743 = vmor %vm2741, %vm2742
        %v2744 = vsel %vm2743, %v2736, %v2740
        %v2745 = vand.u32 2147483647, %v2734
        %vm2746 = vcmp.eq.f32.partialorder %v2745, 8.507059e+37
        %v2747 = vand.u32 %v2734, 2147483648
        %v2748 = vor.u32 1.1754944e-38, %v2747
        %v2749 = vsel %vm2746, %v2748, %v2744
        %v2750 = vmul.f32 1.0, %v2749
        %v2751 = vrcp.pop %v2735
        %v2752 = vmul.f32 %v2735, %v2751
        %v2753 = vsub.f32 1.0, %v2752
        %v2754 = vmul.f32 %v2751, %v2753
        %v2755 = vadd.f32 %v2751, %v2754
        %vm2756 = vweird.f32 %v2735
        %vm2757 = vweird.f32 %v2751
        %vm2758 = vmor %vm2756, %vm2757
        %v2759 = vsel %vm2758, %v2751, %v2755
        %v2760 = vand.u32 2147483647, %v2735
        %vm2761 = vcmp.eq.f32.partialorder %v2760, 8.507059e+37
        %v2762 = vand.u32 %v2735, 2147483648
        %v2763 = vor.u32 1.1754944e-38, %v2762
        %v2764 = vsel %vm2761, %v2763, %v2759
        %v2765 = vmul.f32 1.0, %v2764
        %v2767 = vrot.slane %v2750, 1
        %2768 = vrot.lane.b32.xlu0 %v2767, 16
        %v2769 = vpop.permute.xlu0 %2768
        %v2771 = vrot.slane %v2750, 2
        %2772 = vrot.lane.b32.xlu0 %v2771, 32
        %v2773 = vpop.permute.xlu0 %2772
        %v2775 = vrot.slane %v2750, 3
        %2776 = vrot.lane.b32.xlu0 %v2775, 48
        %v2777 = vpop.permute.xlu0 %2776
        %v2779 = vrot.slane %v2750, 4
        %2780 = vrot.lane.b32.xlu0 %v2779, 64
        %v2781 = vpop.permute.xlu0 %2780
        %v2783 = vrot.slane %v2750, 5
        %2784 = vrot.lane.b32.xlu0 %v2783, 80
        %v2785 = vpop.permute.xlu0 %2784
        %v2787 = vrot.slane %v2750, 6
        %2788 = vrot.lane.b32.xlu0 %v2787, 96
        %v2789 = vpop.permute.xlu0 %2788
        %v2791 = vrot.slane %v2750, 7
        %2792 = vrot.lane.b32.xlu0 %v2791, 112
        %v2793 = vpop.permute.xlu0 %2792
        %v2796 = vrot.slane %v2765, 1
        %2797 = vrot.lane.b32.xlu0 %v2796, 16
        %v2798 = vpop.permute.xlu0 %2797
        %v2800 = vrot.slane %v2765, 2
        %2801 = vrot.lane.b32.xlu0 %v2800, 32
        %v2802 = vpop.permute.xlu0 %2801
        %v2804 = vrot.slane %v2765, 3
        %2805 = vrot.lane.b32.xlu0 %v2804, 48
        %v2806 = vpop.permute.xlu0 %2805
        %v2808 = vrot.slane %v2765, 4
        %2809 = vrot.lane.b32.xlu0 %v2808, 64
        %v2810 = vpop.permute.xlu0 %2809
        %v2812 = vrot.slane %v2765, 5
        %2813 = vrot.lane.b32.xlu0 %v2812, 80
        %v2814 = vpop.permute.xlu0 %2813
        %v2816 = vrot.slane %v2765, 6
        %2817 = vrot.lane.b32.xlu0 %v2816, 96
        %v2818 = vpop.permute.xlu0 %2817
        %v2820 = vrot.slane %v2765, 7
        %2821 = vrot.lane.b32.xlu0 %v2820, 112
        %v2822 = vpop.permute.xlu0 %2821
        %v2824 = vsel %vm533, %v2750, %v2769
        %vm2825 = vcmask 261120
        %v2826 = vsel %vm2825, %v2824, %v2773
        %vm2827 = vcmask 392192
        %v2828 = vsel %vm2827, %v2826, %v2777
        %vm2829 = vcmask 523264
        %v2830 = vsel %vm2829, %v2828, %v2781
        %vm2831 = vcmask 654336
        %v2832 = vsel %vm2831, %v2830, %v2785
        %vm2833 = vcmask 785408
        %v2834 = vsel %vm2833, %v2832, %v2789
        %vm2835 = vcmask 916480
        %v2836 = vsel %vm2835, %v2834, %v2793
        %v2837 = vsel %vm533, %v2765, %v2798
        %v2838 = vsel %vm2825, %v2837, %v2802
        %v2839 = vsel %vm2827, %v2838, %v2806
        %v2840 = vsel %vm2829, %v2839, %v2810
        %v2841 = vsel %vm2831, %v2840, %v2814
        %v2842 = vsel %vm2833, %v2841, %v2818
        %v2843 = vsel %vm2835, %v2842, %v2822
        %v2844 = vperm.slane %v774, 0
        %v2845 = vlaneseq
        %v2846 = vshrl.u32 %v2845, 7
        %2848 = vset.pattern.permute.xlu0 %v2846
        %2849 = vperm.xlu0 %2848, %v2844
        %v2850 = vpop.permute.xlu0 %2849
        %v2851 = vperm.slane %v2836, 0
        %v2852 = vperm.slane %v2843, 0
        %v2853 = vadd.f32 %v2850, %v2851
        %v2854 = vadd.f32 %v2850, %v2852
        %v2855 = vadd.f32 %v2853, 1.0
        %v2856 = vadd.f32 %v2854, 1.0
        %v2857 = vsub.f32 %v619, %v621
        %v2858 = vsub.f32 %v620, %v622
        %v2859 = vmul.f32 %v2855, %v2857
        %v2860 = vmul.f32 %v2856, %v2858
        %v2861 = vmul.f32 %v621, 4.0
        %v2862 = vmul.f32 %v622, 4.0
        %v2863 = vadd.f32 %v2859, %v2861
        %v2864 = vadd.f32 %v2860, %v2862
        %2865 = vst [vmem:[%s322] sm:$0xff] %v2863
        %2866 = vst [vmem:[%s322 + $0x8] sm:$0xff] %v2864
        %s2867 = sand.u32 %s151, 1
        %s2868 = scalar_lea.sflag [#allocation5], %s2867
        %s2869 = sand.u32 %s151, 1
        %s2870 = smul.addr %s2869, 16
        %s2871 = scalar_lea.vmem [#allocation14], %s2870
        // Predicated region
        $region61: #{tpu_custom_call.1} parent=39 // pred_check
          %p2872 = pneg %p161
        $region62: #{tpu_custom_call.1} parent=39 // pred_check_branch
          %2874 = sbr.rel (%p2872) target = $region64
        $region63: #{tpu_custom_call.1} parent=39 // pred_region
          %2876 = vsyncadd %s2868, 0
          %s2877 = smul.addr %s28, 2
          %s2878 = smul.addr %s2877, 8
          %s2879 = scalar_lea.hbm %s5, %s2878
          %s2881 = sshll.u32 %s2871, 4
          %s2882 = int_to_ptr.vmem [resolvable:$true] %s2881
          %s2883 = sshll.u32 %s2879, 4
          %s2884 = int_to_ptr.hbm [resolvable:$true] %s2883
          %2886 = dma.vmem_to_hbm [thread:$0]  %s2882, 256, %s2884, %s2868
        $region64: #{tpu_custom_call.1} parent=39 // pred_fallthru
          _
      $region40: #{tpu_custom_call.1} parent=5 // pred_fallthru
        _
      %p2887 = scmp.le.s32.totalorder 2, %s23
      // Predicated region
      $region65: #{tpu_custom_call.1} parent=5 // pred_check
        %p2888 = pneg %p2887
      $region66: #{tpu_custom_call.1} parent=5 // pred_check_branch
        %2890 = sbr.rel (%p2888) target = $region68
      $region67: #{tpu_custom_call.1} parent=5 // pred_region
        %s2891 = ssub.s32 %s23, 2
        // Predicated region
        $region69: #{tpu_custom_call.1} parent=67 // pred_check
          %p2892 = pneg %p167
        $region70: #{tpu_custom_call.1} parent=67 // pred_check_branch
          %2894 = sbr.rel (%p2892) target = $region72
        $region71: #{tpu_custom_call.1} parent=67 // pred_region
          %s2895 = sand.u32 %s152, 1
          %s2896 = scalar_lea.sflag [#allocation5], %s2895
          %s2897 = sand.u32 %s152, 1
          %s2898 = smul.addr %s2897, 16
          %s2899 = scalar_lea.vmem [#allocation14], %s2898
          %2901 = dma.done %s2896, 256
        $region72: #{tpu_custom_call.1} parent=67 // pred_fallthru
          _
      $region68: #{tpu_custom_call.1} parent=5 // pred_fallthru
        _
    $region6: #{tpu_custom_call.1} parent=1 // loop_footer
      %s27 = sadd.s32 1, %s23
    $region7: #{tpu_custom_call.1} parent=1 // loop_footer_branch
      %22 = sbr.rel target = $region3
    $region8: #{tpu_custom_call.1} parent=1 // loop_exit
      _
    %2902 = vsyncpa [#allocation4], 1
    %s2903 = scalar_lea.sflag [#allocation4], 1
    %2904 = vsyncpa %s2903, 1
    %2905 = vsyncpa [#allocation9], 1
    %s2906 = scalar_lea.sflag [#allocation9], 1
    %2907 = vsyncpa %s2906, 1
    %2908 = vsyncpa [#allocation5], 1
    %s2909 = scalar_lea.sflag [#allocation5], 1
    %2910 = vsyncpa %s2909, 1
    %2911 = vsyncpa [#allocation6], 1
    %s2912 = scalar_lea.sflag [#allocation6], 1
    %2913 = vsyncpa %s2912, 1
    %2914 = vsyncpa [#allocation7], 1
    %s2915 = scalar_lea.sflag [#allocation7], 1
    %2916 = vsyncpa %s2915, 1
    %2917 = vsyncpa [#allocation13], 1

</llo_original>
